<compile_context>
chip_gen: v5e
topology: v5e:2x2
jax: 0.10.0
libtpu: 0.0.40
codegen_flags: <defaults>
</compile_context>

<pallas_src>
import functools

import jax
import jax.numpy as jnp
from jax import lax
from jax.experimental import pallas as pl
from jax.experimental.pallas import tpu as pltpu

LANE = 128
_EPS = 1e-5


def _round_up(x, m):
    return (x + m - 1) // m * m


# -----------------------------------------------------------------------------
# Kernel 1: 3x3 "same" conv (+ optional fused BN+ReLU on its input) + BN stats
# -----------------------------------------------------------------------------
def _conv_kernel(*refs, H, W, Wp, fuse_bn):
    """One padded image per grid step.

    Activations are stored as (L, C) with L = (H+4)*Wp: the zero-padded image
    (2 rows top/bottom, 2 cols left, Wp-W-2 cols right) flattened row-major,
    channels on the 128-lane axis.  The 9 conv taps are shifted (H*Wp, C)
    windows of that flat slab feeding MXU matmuls with f32 accumulation.
    """
    if fuse_bn:
        (x_ref, scale_ref, shift_ref, bias_ref, w_ref,
         y_ref, sum_ref, sq_ref, a_scr) = refs
    else:
        (x_ref, bias_ref, w_ref, y_ref, sum_ref, sq_ref) = refs

    Hm = H * Wp                 # flat rows that hold real conv outputs
    top = 2 * Wp                # flat rows of top (and bottom) zero padding
    cin = x_ref.shape[-1]
    cout = w_ref.shape[-1]

    def col_interior(width):
        # column-within-padded-row mask, built in-kernel (no mask input)
        c = lax.broadcasted_iota(jnp.int32, (Wp, width), 0)
        return (c >= 2) & (c < 2 + W)

    if fuse_bn:
        # BN (precomputed scale/shift) + ReLU of the previous conv output,
        # fused into this conv's prologue.  Pad columns are re-zeroed so the
        # scratch doubles as this conv's zero padding.
        xm = x_ref[0, pl.ds(top, Hm), :].astype(jnp.float32)      # (Hm, cin)
        z = jnp.maximum(xm * scale_ref[...] + shift_ref[...], 0.0)
        z = jnp.where(col_interior(cin), z.reshape(H, Wp, cin), 0.0)
        zeros_in = jnp.zeros((top, cin), jnp.bfloat16)
        a_scr[pl.ds(0, top), :] = zeros_in
        a_scr[pl.ds(top, Hm), :] = z.reshape(Hm, cin).astype(jnp.bfloat16)
        a_scr[pl.ds(top + Hm, top), :] = zeros_in

        def tap(start):
            return a_scr[pl.ds(start, Hm), :]
    else:
        # Input already bf16 + zero padded: read tap windows directly, no copy.
        def tap(start):
            return x_ref[0, pl.ds(start, Hm), :]

    # 9-tap conv, straight-line accumulation chain (MRB-friendly on v7x).
    # TODO(synk): share the dx=+/-1 shifted operands across the three dy taps
    # and stack tap pairs along K for the 256-wide MXU on v6e/v7x.
    acc = jnp.zeros((Hm, cout), jnp.float32)
    t = 0
    for dy in range(3):
        for dx in range(3):
            start = top + (dy - 1) * Wp + (dx - 1)
            acc = acc + jnp.dot(tap(start), w_ref[t],
                                preferred_element_type=jnp.float32)
            t += 1
    acc = acc + bias_ref[...]                                     # conv bias

    # Zero the horizontal-padding columns (they hold row-wrapped garbage) so
    # the stored activation doubles as the next stage's zero padding and the
    # BN statistics only count interior pixels.
    y3 = jnp.where(col_interior(cout), acc.reshape(H, Wp, cout), 0.0)

    # Per-image partial BN statistics, from the f32 accumulator.
    sum_ref[0] = jnp.sum(jnp.sum(y3, axis=0), axis=0, keepdims=True)
    sq_ref[0] = jnp.sum(jnp.sum(y3 * y3, axis=0), axis=0, keepdims=True)

    # Direct, 8-row-aligned slice stores (no concatenate), bf16 activation.
    zeros_out = jnp.zeros((top, cout), y_ref.dtype)
    y_ref[0, pl.ds(0, top), :] = zeros_out
    y_ref[0, pl.ds(top, Hm), :] = y3.reshape(Hm, cout).astype(y_ref.dtype)
    y_ref[0, pl.ds(top + Hm, top), :] = zeros_out


def _conv_bn_stage(x_flat, w9, bias, *, H, W, Wp, scale=None, shift=None):
    """x_flat: (N, L, Cin_p) bf16; w9: (9, Cin_p, Cout_p) bf16; bias: (1, Cout_p).

    Returns (y (N, L, Cout_p) bf16, sums (N,1,Cout_p) f32, sumsqs (N,1,Cout_p) f32).
    """
    N, L, cin = x_flat.shape
    cout = w9.shape[-1]
    fuse_bn = scale is not None

    kernel = functools.partial(_conv_kernel, H=H, W=W, Wp=Wp, fuse_bn=fuse_bn)

    in_specs = [pl.BlockSpec((1, L, cin), lambda n: (n, 0, 0))]
    inputs = [x_flat]
    if fuse_bn:
        in_specs += [pl.BlockSpec((1, cin), lambda n: (0, 0)),
                     pl.BlockSpec((1, cin), lambda n: (0, 0))]
        inputs += [scale.reshape(1, cin).astype(jnp.float32),
                   shift.reshape(1, cin).astype(jnp.float32)]
    in_specs += [pl.BlockSpec((1, cout), lambda n: (0, 0)),
                 pl.BlockSpec((9, cin, cout), lambda n: (0, 0, 0))]
    inputs += [bias.astype(jnp.float32), w9]

    out_shape = (jax.ShapeDtypeStruct((N, L, cout), jnp.bfloat16),
                 jax.ShapeDtypeStruct((N, 1, cout), jnp.float32),
                 jax.ShapeDtypeStruct((N, 1, cout), jnp.float32))
    out_specs = (pl.BlockSpec((1, L, cout), lambda n: (n, 0, 0)),
                 pl.BlockSpec((1, 1, cout), lambda n: (n, 0, 0)),
                 pl.BlockSpec((1, 1, cout), lambda n: (n, 0, 0)))

    scratch = [pltpu.VMEM((L, cin), jnp.bfloat16)] if fuse_bn else []

    # Explicit VMEM budget from the actual block sizes (double-buffered blocks
    # + weights + scratch) with headroom, clamped for the smallest (v7x) VMEM.
    block_bytes = (L * cin * 2 + L * cout * 2 + 2 * cout * 4 + cout * 4 +
                   9 * cin * cout * 2 + (2 * cin * 4 if fuse_bn else 0))
    scratch_bytes = L * cin * 2 if fuse_bn else 0
    vmem_limit = int(min(max(2 * block_bytes + scratch_bytes + (4 << 20),
                             32 << 20), 56 << 20))

    # TODO(synk): add within-image row tiling (halo DMA) and a Cout-tile grid
    # axis for large H/W/C so blocks fit v7x's 64 MiB VMEM and both of its
    # TensorCores get work at N=1.
    return pl.pallas_call(
        kernel,
        grid=(N,),
        in_specs=in_specs,
        out_specs=out_specs,
        out_shape=out_shape,
        scratch_shapes=scratch,
        compiler_params=pltpu.CompilerParams(
            dimension_semantics=("parallel",),
            vmem_limit_bytes=vmem_limit),
    )(*inputs)


def _bn_scale_shift(sums, sumsqs, gamma_p, beta_p, count, eps=_EPS):
    """Tiny (C,)-sized combine of the per-image partial stats (XLA)."""
    mean = jnp.sum(sums, axis=0)[0] / count
    ex2 = jnp.sum(sumsqs, axis=0)[0] / count
    var = jnp.maximum(ex2 - mean * mean, 0.0)      # biased (training) variance
    scale = gamma_p * lax.rsqrt(var + eps)
    shift = beta_p - mean * scale
    return scale, shift


# -----------------------------------------------------------------------------
# Kernel 2: BN + MaxPool 2x2 + ReLU (ReLU hoisted after the max), fused
# -----------------------------------------------------------------------------
def _bn_relu_pool_kernel(x_ref, scale_ref, shift_ref, o_ref, *, H, W, Wp):
    Ho = H // 2
    C = o_ref.shape[-1]
    top = 2 * Wp

    xm = x_ref[0, pl.ds(top, H * Wp), :].astype(jnp.float32)      # (H*Wp, C)
    xm = xm * scale_ref[...] + shift_ref[...]                     # BN affine
    xr = xm.reshape(Ho, 2 * Wp, C)                                # row pairs
    vm = jnp.maximum(xr[:, :Wp, :], xr[:, Wp:, :])                # vertical max
    # horizontal adjacent max; pooled values live at the even columns of hm
    hm = jnp.maximum(vm[:, 2:2 + W, :], vm[:, 3:3 + W, :])        # (Ho, W, C)
    o_ref[0] = jnp.maximum(hm, 0.0)                               # ReLU last


def _bn_relu_maxpool(y_flat, scale, shift, *, H, W, Wp):
    N, L, cout = y_flat.shape
    Ho = H // 2
    kernel = functools.partial(_bn_relu_pool_kernel, H=H, W=W, Wp=Wp)
    block_bytes = L * cout * 2 + Ho * W * cout * 4 + 2 * cout * 4
    vmem_limit = int(min(max(2 * block_bytes + (4 << 20), 32 << 20), 56 << 20))
    return pl.pallas_call(
        kernel,
        grid=(N,),
        in_specs=[pl.BlockSpec((1, L, cout), lambda n: (n, 0, 0)),
                  pl.BlockSpec((1, cout), lambda n: (0, 0)),
                  pl.BlockSpec((1, cout), lambda n: (0, 0))],
        out_specs=pl.BlockSpec((1, Ho, W, cout), lambda n: (n, 0, 0, 0)),
        out_shape=jax.ShapeDtypeStruct((N, Ho, W, cout), jnp.float32),
        compiler_params=pltpu.CompilerParams(
            dimension_semantics=("parallel",),
            vmem_limit_bytes=vmem_limit),
    )(y_flat, scale.reshape(1, cout).astype(jnp.float32),
      shift.reshape(1, cout).astype(jnp.float32))


# -----------------------------------------------------------------------------
# ConvBlock2 forward (NCHW in, NCHW out -- matches the PyTorch module)
# -----------------------------------------------------------------------------
def conv_block2(x_nchw, params, *, eps=_EPS):
    N, Cin, H, W = x_nchw.shape
    Cout = params["w1"].shape[0]
    assert H % 2 == 0 and W % 2 == 0, "MaxPool2d(2) needs even spatial dims"

    cin_p = _round_up(Cin, LANE) if Cin >= 64 else _round_up(Cin, 16)
    cout_p = _round_up(Cout, LANE)

    Wp = _round_up(W + 4, 8)          # sublane-aligned padded row stride
    L = (H + 4) * Wp                  # flat rows of one padded image
    count = N * H * W

    # ---- glue on the (small) block input: NCHW -> padded NHWC, flat bf16
    xh = jnp.transpose(x_nchw, (0, 2, 3, 1))                        # (N,H,W,Cin)
    xh = jnp.pad(xh, ((0, 0), (2, 2), (2, Wp - W - 2), (0, cin_p - Cin)))
    x_flat = xh.reshape(N, L, cin_p).astype(jnp.bfloat16)           # (N, L, cin_p)

    def prep_w(w_oihw, ci_p, co_p):
        co, ci, _, _ = w_oihw.shape
        w = jnp.transpose(w_oihw, (2, 3, 1, 0))                     # (3,3,Cin,Cout)
        w = jnp.pad(w, ((0, 0), (0, 0), (0, ci_p - ci), (0, co_p - co)))
        return w.reshape(9, ci_p, co_p).astype(jnp.bfloat16)

    def prep_vec(v, co_p):
        return jnp.pad(v, (0, co_p - v.shape[0]))

    w1 = prep_w(params["w1"], cin_p, cout_p)
    w2 = prep_w(params["w2"], cout_p, cout_p)
    b1 = prep_vec(params["b1"], cout_p).reshape(1, cout_p)
    b2 = prep_vec(params["b2"], cout_p).reshape(1, cout_p)
    g1 = prep_vec(params["g1"], cout_p)
    be1 = prep_vec(params["beta1"], cout_p)
    g2 = prep_vec(params["g2"], cout_p)
    be2 = prep_vec(params["beta2"], cout_p)

    # ---- stage 1: conv1 (+bias), BN1 partial stats fused into the epilogue
    y1, s1, q1 = _conv_bn_stage(x_flat, w1, b1, H=H, W=W, Wp=Wp)
    sc1, sh1 = _bn_scale_shift(s1, q1, g1, be1, count, eps)

    # ---- stage 2: BN1+ReLU fused into conv2's prologue; BN2 stats in epilogue
    y2, s2, q2 = _conv_bn_stage(y1, w2, b2, H=H, W=W, Wp=Wp, scale=sc1, shift=sh1)
    sc2, sh2 = _bn_scale_shift(s2, q2, g2, be2, count, eps)

    # ---- stage 3: BN2 + MaxPool 2x2 + ReLU, fused
    pooled = _bn_relu_maxpool(y2, sc2, sh2, H=H, W=W, Wp=Wp)   # (N, H/2, W, cout_p)

    # Stride-2 column pick of the (tiny) pooled tensor done in XLA.
    # TODO(synk): fold this compression into the pool kernel once the needed
    # value reshape/reduce pattern is worth the lowering risk.
    out = pooled[:, :, 0::2, :Cout]                             # (N, H/2, W/2, Cout)
    return jnp.transpose(out, (0, 3, 1, 2))                     # NHWC -> NCHW


def init_params(key, in_dim, out_dim):
    k1, k2, k3, k4 = jax.random.split(key, 4)
    s1 = 1.0 / jnp.sqrt(in_dim * 9.0)
    s2 = 1.0 / jnp.sqrt(out_dim * 9.0)
    return {
        "w1": jax.random.uniform(k1, (out_dim, in_dim, 3, 3), jnp.float32, -s1, s1),
        "b1": jax.random.uniform(k2, (out_dim,), jnp.float32, -s1, s1),
        "g1": jnp.ones((out_dim,), jnp.float32),
        "beta1": jnp.zeros((out_dim,), jnp.float32),
        "w2": jax.random.uniform(k3, (out_dim, out_dim, 3, 3), jnp.float32, -s2, s2),
        "b2": jax.random.uniform(k4, (out_dim,), jnp.float32, -s2, s2),
        "g2": jnp.ones((out_dim,), jnp.float32),
        "beta2": jnp.zeros((out_dim,), jnp.float32),
    }


# -----------------------------------------------------------------------------
# Pure-JAX reference (same bf16-MXU / f32-accumulation / bf16-activation policy)
# -----------------------------------------------------------------------------
def ref_forward(x, params, *, eps=_EPS):
    def conv(x, w, b):
        y = lax.conv_general_dilated(
            x.astype(jnp.bfloat16), w.astype(jnp.bfloat16),
            window_strides=(1, 1), padding=((1, 1), (1, 1)),
            dimension_numbers=("NCHW", "OIHW", "NCHW"),
            preferred_element_type=jnp.float32)
        return y + b[None, :, None, None]

    def bn_relu(y, g, be):
        # stats in f32; the normalized activation was stored in bf16 (kernel policy)
        m = jnp.mean(y, axis=(0, 2, 3), keepdims=True)
        v = jnp.mean((y - m) ** 2, axis=(0, 2, 3), keepdims=True)
        yr = y.astype(jnp.bfloat16).astype(jnp.float32)
        z = (yr - m) * lax.rsqrt(v + eps) * g[None, :, None, None] \
            + be[None, :, None, None]
        return jnp.maximum(z, 0.0)

    h = bn_relu(conv(x, params["w1"], params["b1"]), params["g1"], params["beta1"])
    h = bn_relu(conv(h, params["w2"], params["b2"]), params["g2"], params["beta2"])
    N, C, H, W = h.shape
    return h.reshape(N, C, H // 2, 2, W // 2, 2).max(axis=(3, 5))


if __name__ == "__main__":
    key = jax.random.PRNGKey(0)
    kx, kp = jax.random.split(key)

    in_dim, out_dim = 4, 8
    x = jax.random.normal(kx, (2, in_dim, 16, 16), jnp.float32)     # NCHW
    params = init_params(kp, in_dim, out_dim)

    fwd = jax.jit(conv_block2)
    out = jax.block_until_ready(fwd(x, params))

    assert out.shape == (2, out_dim, 8, 8), out.shape
    ref = ref_forward(x, params)
    err = float(jnp.max(jnp.abs(out - ref)))
    # bf16 MXU inputs + bf16-stored inter-stage activations (matched in the
    # reference); tolerance covers residual rounding/accumulation-order drift.
    assert jnp.allclose(out, ref, atol=2e-2, rtol=2e-2), f"max abs err {err}"

    print("KERNEL_OK")
</pallas_src>

<mosaic_0001>
module attributes {stable_mosaic.version = 11 : i64} {
  func.func @_conv_kernel(%arg0: i32, %arg1: memref<1x480x16xbf16, #tpu.memory_space<vmem>>, %arg2: memref<1x128xf32, #tpu.memory_space<vmem>>, %arg3: memref<9x16x128xbf16, #tpu.memory_space<vmem>>, %arg4: memref<1x480x128xbf16, #tpu.memory_space<vmem>>, %arg5: memref<1x1x128xf32, #tpu.memory_space<vmem>>, %arg6: memref<1x1x128xf32, #tpu.memory_space<vmem>>) attributes {dimension_semantics = [#tpu.dimension_semantics<parallel>], iteration_bounds = array<i64: 2>, scalar_prefetch = 0 : i64, scratch_operands = 0 : i64, tpu.core_type = #tpu.core_type<tc>, window_params = [{transform_indices = @transform_0, window_bounds = array<i64: 1, 480, 16>}, {pipeline_mode = #tpu.pipeline_mode<synchronous>, transform_indices = @transform_1, window_bounds = array<i64: 1, 128>}, {pipeline_mode = #tpu.pipeline_mode<synchronous>, transform_indices = @transform_2, window_bounds = array<i64: 9, 16, 128>}, {transform_indices = @transform_3, window_bounds = array<i64: 1, 480, 128>}, {transform_indices = @transform_4, window_bounds = array<i64: 1, 1, 128>}, {transform_indices = @transform_5, window_bounds = array<i64: 1, 1, 128>}]} {
    %cst = arith.constant 0.000000e+00 : f32
    %0 = vector.broadcast %cst : f32 to vector<384x128xf32>
    %c0 = arith.constant 0 : index
    %c23 = arith.constant 23 : index
    %c0_0 = arith.constant 0 : index
    %1 = vector.load %arg1[%c0, %c23, %c0_0] : memref<1x480x16xbf16, #tpu.memory_space<vmem>>, vector<1x384x16xbf16>
    %2 = vector.shape_cast %1 : vector<1x384x16xbf16> to vector<384x16xbf16>
    %c0_1 = arith.constant 0 : index
    %c0_2 = arith.constant 0 : index
    %c0_3 = arith.constant 0 : index
    %3 = vector.load %arg3[%c0_1, %c0_2, %c0_3] : memref<9x16x128xbf16, #tpu.memory_space<vmem>>, vector<1x16x128xbf16>
    %4 = vector.shape_cast %3 : vector<1x16x128xbf16> to vector<16x128xbf16>
    %cst_4 = arith.constant dense<0.000000e+00> : vector<384x128xf32>
    %5 = tpu.matmul %2, %4, %cst_4 {dimension_numbers = #tpu.dot_dimension_numbers<[1], [0], [0], [1], [0, 0, 1, 1], [], []>} : vector<384x16xbf16>, vector<16x128xbf16>, vector<384x128xf32> -> vector<384x128xf32>
    %6 = arith.addf %0, %5 : vector<384x128xf32>
    %c0_5 = arith.constant 0 : index
    %c24 = arith.constant 24 : index
    %c0_6 = arith.constant 0 : index
    %7 = vector.load %arg1[%c0_5, %c24, %c0_6] : memref<1x480x16xbf16, #tpu.memory_space<vmem>>, vector<1x384x16xbf16>
    %8 = vector.shape_cast %7 : vector<1x384x16xbf16> to vector<384x16xbf16>
    %c1 = arith.constant 1 : index
    %c0_7 = arith.constant 0 : index
    %c0_8 = arith.constant 0 : index
    %9 = vector.load %arg3[%c1, %c0_7, %c0_8] : memref<9x16x128xbf16, #tpu.memory_space<vmem>>, vector<1x16x128xbf16>
    %10 = vector.shape_cast %9 : vector<1x16x128xbf16> to vector<16x128xbf16>
    %cst_9 = arith.constant dense<0.000000e+00> : vector<384x128xf32>
    %11 = tpu.matmul %8, %10, %cst_9 {dimension_numbers = #tpu.dot_dimension_numbers<[1], [0], [0], [1], [0, 0, 1, 1], [], []>} : vector<384x16xbf16>, vector<16x128xbf16>, vector<384x128xf32> -> vector<384x128xf32>
    %12 = arith.addf %6, %11 : vector<384x128xf32>
    %c0_10 = arith.constant 0 : index
    %c25 = arith.constant 25 : index
    %c0_11 = arith.constant 0 : index
    %13 = vector.load %arg1[%c0_10, %c25, %c0_11] : memref<1x480x16xbf16, #tpu.memory_space<vmem>>, vector<1x384x16xbf16>
    %14 = vector.shape_cast %13 : vector<1x384x16xbf16> to vector<384x16xbf16>
    %c2 = arith.constant 2 : index
    %c0_12 = arith.constant 0 : index
    %c0_13 = arith.constant 0 : index
    %15 = vector.load %arg3[%c2, %c0_12, %c0_13] : memref<9x16x128xbf16, #tpu.memory_space<vmem>>, vector<1x16x128xbf16>
    %16 = vector.shape_cast %15 : vector<1x16x128xbf16> to vector<16x128xbf16>
    %cst_14 = arith.constant dense<0.000000e+00> : vector<384x128xf32>
    %17 = tpu.matmul %14, %16, %cst_14 {dimension_numbers = #tpu.dot_dimension_numbers<[1], [0], [0], [1], [0, 0, 1, 1], [], []>} : vector<384x16xbf16>, vector<16x128xbf16>, vector<384x128xf32> -> vector<384x128xf32>
    %18 = arith.addf %12, %17 : vector<384x128xf32>
    %c0_15 = arith.constant 0 : index
    %c47 = arith.constant 47 : index
    %c0_16 = arith.constant 0 : index
    %19 = vector.load %arg1[%c0_15, %c47, %c0_16] : memref<1x480x16xbf16, #tpu.memory_space<vmem>>, vector<1x384x16xbf16>
    %20 = vector.shape_cast %19 : vector<1x384x16xbf16> to vector<384x16xbf16>
    %c3 = arith.constant 3 : index
    %c0_17 = arith.constant 0 : index
    %c0_18 = arith.constant 0 : index
    %21 = vector.load %arg3[%c3, %c0_17, %c0_18] : memref<9x16x128xbf16, #tpu.memory_space<vmem>>, vector<1x16x128xbf16>
    %22 = vector.shape_cast %21 : vector<1x16x128xbf16> to vector<16x128xbf16>
    %cst_19 = arith.constant dense<0.000000e+00> : vector<384x128xf32>
    %23 = tpu.matmul %20, %22, %cst_19 {dimension_numbers = #tpu.dot_dimension_numbers<[1], [0], [0], [1], [0, 0, 1, 1], [], []>} : vector<384x16xbf16>, vector<16x128xbf16>, vector<384x128xf32> -> vector<384x128xf32>
    %24 = arith.addf %18, %23 : vector<384x128xf32>
    %c0_20 = arith.constant 0 : index
    %c48 = arith.constant 48 : index
    %c0_21 = arith.constant 0 : index
    %25 = vector.load %arg1[%c0_20, %c48, %c0_21] : memref<1x480x16xbf16, #tpu.memory_space<vmem>>, vector<1x384x16xbf16>
    %26 = vector.shape_cast %25 : vector<1x384x16xbf16> to vector<384x16xbf16>
    %c4 = arith.constant 4 : index
    %c0_22 = arith.constant 0 : index
    %c0_23 = arith.constant 0 : index
    %27 = vector.load %arg3[%c4, %c0_22, %c0_23] : memref<9x16x128xbf16, #tpu.memory_space<vmem>>, vector<1x16x128xbf16>
    %28 = vector.shape_cast %27 : vector<1x16x128xbf16> to vector<16x128xbf16>
    %cst_24 = arith.constant dense<0.000000e+00> : vector<384x128xf32>
    %29 = tpu.matmul %26, %28, %cst_24 {dimension_numbers = #tpu.dot_dimension_numbers<[1], [0], [0], [1], [0, 0, 1, 1], [], []>} : vector<384x16xbf16>, vector<16x128xbf16>, vector<384x128xf32> -> vector<384x128xf32>
    %30 = arith.addf %24, %29 : vector<384x128xf32>
    %c0_25 = arith.constant 0 : index
    %c49 = arith.constant 49 : index
    %c0_26 = arith.constant 0 : index
    %31 = vector.load %arg1[%c0_25, %c49, %c0_26] : memref<1x480x16xbf16, #tpu.memory_space<vmem>>, vector<1x384x16xbf16>
    %32 = vector.shape_cast %31 : vector<1x384x16xbf16> to vector<384x16xbf16>
    %c5 = arith.constant 5 : index
    %c0_27 = arith.constant 0 : index
    %c0_28 = arith.constant 0 : index
    %33 = vector.load %arg3[%c5, %c0_27, %c0_28] : memref<9x16x128xbf16, #tpu.memory_space<vmem>>, vector<1x16x128xbf16>
    %34 = vector.shape_cast %33 : vector<1x16x128xbf16> to vector<16x128xbf16>
    %cst_29 = arith.constant dense<0.000000e+00> : vector<384x128xf32>
    %35 = tpu.matmul %32, %34, %cst_29 {dimension_numbers = #tpu.dot_dimension_numbers<[1], [0], [0], [1], [0, 0, 1, 1], [], []>} : vector<384x16xbf16>, vector<16x128xbf16>, vector<384x128xf32> -> vector<384x128xf32>
    %36 = arith.addf %30, %35 : vector<384x128xf32>
    %c0_30 = arith.constant 0 : index
    %c71 = arith.constant 71 : index
    %c0_31 = arith.constant 0 : index
    %37 = vector.load %arg1[%c0_30, %c71, %c0_31] : memref<1x480x16xbf16, #tpu.memory_space<vmem>>, vector<1x384x16xbf16>
    %38 = vector.shape_cast %37 : vector<1x384x16xbf16> to vector<384x16xbf16>
    %c6 = arith.constant 6 : index
    %c0_32 = arith.constant 0 : index
    %c0_33 = arith.constant 0 : index
    %39 = vector.load %arg3[%c6, %c0_32, %c0_33] : memref<9x16x128xbf16, #tpu.memory_space<vmem>>, vector<1x16x128xbf16>
    %40 = vector.shape_cast %39 : vector<1x16x128xbf16> to vector<16x128xbf16>
    %cst_34 = arith.constant dense<0.000000e+00> : vector<384x128xf32>
    %41 = tpu.matmul %38, %40, %cst_34 {dimension_numbers = #tpu.dot_dimension_numbers<[1], [0], [0], [1], [0, 0, 1, 1], [], []>} : vector<384x16xbf16>, vector<16x128xbf16>, vector<384x128xf32> -> vector<384x128xf32>
    %42 = arith.addf %36, %41 : vector<384x128xf32>
    %c0_35 = arith.constant 0 : index
    %c72 = arith.constant 72 : index
    %c0_36 = arith.constant 0 : index
    %43 = vector.load %arg1[%c0_35, %c72, %c0_36] : memref<1x480x16xbf16, #tpu.memory_space<vmem>>, vector<1x384x16xbf16>
    %44 = vector.shape_cast %43 : vector<1x384x16xbf16> to vector<384x16xbf16>
    %c7 = arith.constant 7 : index
    %c0_37 = arith.constant 0 : index
    %c0_38 = arith.constant 0 : index
    %45 = vector.load %arg3[%c7, %c0_37, %c0_38] : memref<9x16x128xbf16, #tpu.memory_space<vmem>>, vector<1x16x128xbf16>
    %46 = vector.shape_cast %45 : vector<1x16x128xbf16> to vector<16x128xbf16>
    %cst_39 = arith.constant dense<0.000000e+00> : vector<384x128xf32>
    %47 = tpu.matmul %44, %46, %cst_39 {dimension_numbers = #tpu.dot_dimension_numbers<[1], [0], [0], [1], [0, 0, 1, 1], [], []>} : vector<384x16xbf16>, vector<16x128xbf16>, vector<384x128xf32> -> vector<384x128xf32>
    %48 = arith.addf %42, %47 : vector<384x128xf32>
    %c0_40 = arith.constant 0 : index
    %c73 = arith.constant 73 : index
    %c0_41 = arith.constant 0 : index
    %49 = vector.load %arg1[%c0_40, %c73, %c0_41] : memref<1x480x16xbf16, #tpu.memory_space<vmem>>, vector<1x384x16xbf16>
    %50 = vector.shape_cast %49 : vector<1x384x16xbf16> to vector<384x16xbf16>
    %c8 = arith.constant 8 : index
    %c0_42 = arith.constant 0 : index
    %c0_43 = arith.constant 0 : index
    %51 = vector.load %arg3[%c8, %c0_42, %c0_43] : memref<9x16x128xbf16, #tpu.memory_space<vmem>>, vector<1x16x128xbf16>
    %52 = vector.shape_cast %51 : vector<1x16x128xbf16> to vector<16x128xbf16>
    %cst_44 = arith.constant dense<0.000000e+00> : vector<384x128xf32>
    %53 = tpu.matmul %50, %52, %cst_44 {dimension_numbers = #tpu.dot_dimension_numbers<[1], [0], [0], [1], [0, 0, 1, 1], [], []>} : vector<384x16xbf16>, vector<16x128xbf16>, vector<384x128xf32> -> vector<384x128xf32>
    %54 = arith.addf %48, %53 : vector<384x128xf32>
    %c0_45 = arith.constant 0 : index
    %c0_46 = arith.constant 0 : index
    %55 = vector.load %arg2[%c0_45, %c0_46] : memref<1x128xf32, #tpu.memory_space<vmem>>, vector<1x128xf32>
    %56 = vector.broadcast %55 : vector<1x128xf32> to vector<384x128xf32>
    %57 = arith.addf %54, %56 : vector<384x128xf32>
    %58 = tpu.iota {dimensions = array<i32: 0>} : vector<24x128xi32>
    %c2_i32 = arith.constant 2 : i32
    %59 = vector.broadcast %c2_i32 : i32 to vector<24x128xi32>
    %60 = arith.cmpi sge, %58, %59 : vector<24x128xi32>
    %c18_i32 = arith.constant 18 : i32
    %61 = vector.broadcast %c18_i32 : i32 to vector<24x128xi32>
    %62 = arith.cmpi slt, %58, %61 : vector<24x128xi32>
    %63 = arith.andi %60, %62 : vector<24x128xi1>
    %64 = vector.shape_cast %57 : vector<384x128xf32> to vector<16x24x128xf32>
    %cst_47 = arith.constant 0.000000e+00 : f32
    %65 = vector.shape_cast %63 : vector<24x128xi1> to vector<1x24x128xi1>
    %66 = vector.broadcast %65 : vector<1x24x128xi1> to vector<16x24x128xi1>
    %67 = vector.broadcast %cst_47 : f32 to vector<16x24x128xf32>
    %68 = arith.select %66, %64, %67 : vector<16x24x128xi1>, vector<16x24x128xf32>
    %cst_48 = arith.constant dense<0.000000e+00> : vector<24x128xf32>
    %69 = vector.multi_reduction <add>, %68, %cst_48 [0] : vector<16x24x128xf32> to vector<24x128xf32>
    %cst_49 = arith.constant dense<0.000000e+00> : vector<128xf32>
    %70 = vector.multi_reduction <add>, %69, %cst_49 [0] : vector<24x128xf32> to vector<128xf32>
    %71 = vector.shape_cast %70 : vector<128xf32> to vector<1x128xf32>
    %c0_50 = arith.constant 0 : index
    %c0_51 = arith.constant 0 : index
    %c0_52 = arith.constant 0 : index
    %72 = vector.load %arg5[%c0_50, %c0_51, %c0_52] : memref<1x1x128xf32, #tpu.memory_space<vmem>>, vector<1x1x128xf32>
    %73 = vector.shape_cast %72 : vector<1x1x128xf32> to vector<1x128xf32>
    %74 = vector.shape_cast %71 : vector<1x128xf32> to vector<1x1x128xf32>
    tpu.vector_store %arg5[%c0_50, %c0_51, %c0_52], %74 {strides = array<i32>} : memref<1x1x128xf32, #tpu.memory_space<vmem>>, vector<1x1x128xf32>,
    %75 = arith.mulf %68, %68 : vector<16x24x128xf32>
    %cst_53 = arith.constant dense<0.000000e+00> : vector<24x128xf32>
    %76 = vector.multi_reduction <add>, %75, %cst_53 [0] : vector<16x24x128xf32> to vector<24x128xf32>
    %cst_54 = arith.constant dense<0.000000e+00> : vector<128xf32>
    %77 = vector.multi_reduction <add>, %76, %cst_54 [0] : vector<24x128xf32> to vector<128xf32>
    %78 = vector.shape_cast %77 : vector<128xf32> to vector<1x128xf32>
    %c0_55 = arith.constant 0 : index
    %c0_56 = arith.constant 0 : index
    %c0_57 = arith.constant 0 : index
    %79 = vector.load %arg6[%c0_55, %c0_56, %c0_57] : memref<1x1x128xf32, #tpu.memory_space<vmem>>, vector<1x1x128xf32>
    %80 = vector.shape_cast %79 : vector<1x1x128xf32> to vector<1x128xf32>
    %81 = vector.shape_cast %78 : vector<1x128xf32> to vector<1x1x128xf32>
    tpu.vector_store %arg6[%c0_55, %c0_56, %c0_57], %81 {strides = array<i32>} : memref<1x1x128xf32, #tpu.memory_space<vmem>>, vector<1x1x128xf32>,
    %cst_58 = arith.constant 0.000000e+00 : bf16
    %82 = vector.broadcast %cst_58 : bf16 to vector<48x128xbf16>
    %c0_59 = arith.constant 0 : index
    %c0_60 = arith.constant 0 : index
    %c0_61 = arith.constant 0 : index
    %83 = vector.load %arg4[%c0_59, %c0_60, %c0_61] : memref<1x480x128xbf16, #tpu.memory_space<vmem>>, vector<1x48x128xbf16>
    %84 = vector.shape_cast %83 : vector<1x48x128xbf16> to vector<48x128xbf16>
    %85 = vector.shape_cast %82 : vector<48x128xbf16> to vector<1x48x128xbf16>
    tpu.vector_store %arg4[%c0_59, %c0_60, %c0_61], %85 {strides = array<i32>} : memref<1x480x128xbf16, #tpu.memory_space<vmem>>, vector<1x48x128xbf16>,
    %86 = vector.shape_cast %68 : vector<16x24x128xf32> to vector<384x128xf32>
    %87 = arith.truncf %86 : vector<384x128xf32> to vector<384x128xbf16>
    %c0_62 = arith.constant 0 : index
    %c48_63 = arith.constant 48 : index
    %c0_64 = arith.constant 0 : index
    %88 = vector.load %arg4[%c0_62, %c48_63, %c0_64] : memref<1x480x128xbf16, #tpu.memory_space<vmem>>, vector<1x384x128xbf16>
    %89 = vector.shape_cast %88 : vector<1x384x128xbf16> to vector<384x128xbf16>
    %90 = vector.shape_cast %87 : vector<384x128xbf16> to vector<1x384x128xbf16>
    tpu.vector_store %arg4[%c0_62, %c48_63, %c0_64], %90 {strides = array<i32>} : memref<1x480x128xbf16, #tpu.memory_space<vmem>>, vector<1x384x128xbf16>,
    %c0_65 = arith.constant 0 : index
    %c432 = arith.constant 432 : index
    %c0_66 = arith.constant 0 : index
    %91 = vector.load %arg4[%c0_65, %c432, %c0_66] : memref<1x480x128xbf16, #tpu.memory_space<vmem>>, vector<1x48x128xbf16>
    %92 = vector.shape_cast %91 : vector<1x48x128xbf16> to vector<48x128xbf16>
    %93 = vector.shape_cast %82 : vector<48x128xbf16> to vector<1x48x128xbf16>
    tpu.vector_store %arg4[%c0_65, %c432, %c0_66], %93 {strides = array<i32>} : memref<1x480x128xbf16, #tpu.memory_space<vmem>>, vector<1x48x128xbf16>,
    return
  }
  func.func @transform_0(%arg0: i32) -> (i32, i32, i32) {
    %c0_i32 = arith.constant 0 : i32
    %c0_i32_0 = arith.constant 0 : i32
    %c0_i32_1 = arith.constant 0 : i32
    return %arg0, %c0_i32, %c0_i32_0 : i32, i32, i32
  }
  func.func @transform_1(%arg0: i32) -> (i32, i32) {
    %c0_i32 = arith.constant 0 : i32
    %c0_i32_0 = arith.constant 0 : i32
    %c0_i32_1 = arith.constant 0 : i32
    return %c0_i32, %c0_i32_0 : i32, i32
  }
  func.func @transform_2(%arg0: i32) -> (i32, i32, i32) {
    %c0_i32 = arith.constant 0 : i32
    %c0_i32_0 = arith.constant 0 : i32
    %c0_i32_1 = arith.constant 0 : i32
    %c0_i32_2 = arith.constant 0 : i32
    return %c0_i32, %c0_i32_0, %c0_i32_1 : i32, i32, i32
  }
  func.func @transform_3(%arg0: i32) -> (i32, i32, i32) {
    %c0_i32 = arith.constant 0 : i32
    %c0_i32_0 = arith.constant 0 : i32
    %c0_i32_1 = arith.constant 0 : i32
    return %arg0, %c0_i32, %c0_i32_0 : i32, i32, i32
  }
  func.func @transform_4(%arg0: i32) -> (i32, i32, i32) {
    %c0_i32 = arith.constant 0 : i32
    %c0_i32_0 = arith.constant 0 : i32
    %c0_i32_1 = arith.constant 0 : i32
    return %arg0, %c0_i32, %c0_i32_0 : i32, i32, i32
  }
  func.func @transform_5(%arg0: i32) -> (i32, i32, i32) {
    %c0_i32 = arith.constant 0 : i32
    %c0_i32_0 = arith.constant 0 : i32
    %c0_i32_1 = arith.constant 0 : i32
    return %arg0, %c0_i32, %c0_i32_0 : i32, i32, i32
  }
}

module attributes {stable_mosaic.version = 11 : i64} {
  func.func @_conv_kernel(%arg0: i32, %arg1: memref<1x480x128xbf16, #tpu.memory_space<vmem>>, %arg2: memref<1x128xf32, #tpu.memory_space<vmem>>, %arg3: memref<1x128xf32, #tpu.memory_space<vmem>>, %arg4: memref<1x128xf32, #tpu.memory_space<vmem>>, %arg5: memref<9x128x128xbf16, #tpu.memory_space<vmem>>, %arg6: memref<1x480x128xbf16, #tpu.memory_space<vmem>>, %arg7: memref<1x1x128xf32, #tpu.memory_space<vmem>>, %arg8: memref<1x1x128xf32, #tpu.memory_space<vmem>>, %arg9: memref<480x128xbf16, #tpu.memory_space<vmem>>) attributes {dimension_semantics = [#tpu.dimension_semantics<parallel>], iteration_bounds = array<i64: 2>, scalar_prefetch = 0 : i64, scratch_operands = 1 : i64, tpu.core_type = #tpu.core_type<tc>, window_params = [{transform_indices = @transform_0, window_bounds = array<i64: 1, 480, 128>}, {pipeline_mode = #tpu.pipeline_mode<synchronous>, transform_indices = @transform_1, window_bounds = array<i64: 1, 128>}, {pipeline_mode = #tpu.pipeline_mode<synchronous>, transform_indices = @transform_2, window_bounds = array<i64: 1, 128>}, {pipeline_mode = #tpu.pipeline_mode<synchronous>, transform_indices = @transform_3, window_bounds = array<i64: 1, 128>}, {pipeline_mode = #tpu.pipeline_mode<synchronous>, transform_indices = @transform_4, window_bounds = array<i64: 9, 128, 128>}, {transform_indices = @transform_5, window_bounds = array<i64: 1, 480, 128>}, {transform_indices = @transform_6, window_bounds = array<i64: 1, 1, 128>}, {transform_indices = @transform_7, window_bounds = array<i64: 1, 1, 128>}]} {
    %c0 = arith.constant 0 : index
    %c48 = arith.constant 48 : index
    %c0_0 = arith.constant 0 : index
    %0 = vector.load %arg1[%c0, %c48, %c0_0] : memref<1x480x128xbf16, #tpu.memory_space<vmem>>, vector<1x384x128xbf16>
    %1 = vector.shape_cast %0 : vector<1x384x128xbf16> to vector<384x128xbf16>
    %2 = arith.extf %1 : vector<384x128xbf16> to vector<384x128xf32>
    %c0_1 = arith.constant 0 : index
    %c0_2 = arith.constant 0 : index
    %3 = vector.load %arg2[%c0_1, %c0_2] : memref<1x128xf32, #tpu.memory_space<vmem>>, vector<1x128xf32>
    %4 = vector.broadcast %3 : vector<1x128xf32> to vector<384x128xf32>
    %5 = arith.mulf %2, %4 : vector<384x128xf32>
    %c0_3 = arith.constant 0 : index
    %c0_4 = arith.constant 0 : index
    %6 = vector.load %arg3[%c0_3, %c0_4] : memref<1x128xf32, #tpu.memory_space<vmem>>, vector<1x128xf32>
    %7 = vector.broadcast %6 : vector<1x128xf32> to vector<384x128xf32>
    %8 = arith.addf %5, %7 : vector<384x128xf32>
    %cst = arith.constant 0.000000e+00 : f32
    %9 = vector.broadcast %cst : f32 to vector<384x128xf32>
    %10 = arith.maximumf %8, %9 : vector<384x128xf32>
    %11 = tpu.iota {dimensions = array<i32: 0>} : vector<24x128xi32>
    %c2_i32 = arith.constant 2 : i32
    %12 = vector.broadcast %c2_i32 : i32 to vector<24x128xi32>
    %13 = arith.cmpi sge, %11, %12 : vector<24x128xi32>
    %c18_i32 = arith.constant 18 : i32
    %14 = vector.broadcast %c18_i32 : i32 to vector<24x128xi32>
    %15 = arith.cmpi slt, %11, %14 : vector<24x128xi32>
    %16 = arith.andi %13, %15 : vector<24x128xi1>
    %17 = vector.shape_cast %10 : vector<384x128xf32> to vector<16x24x128xf32>
    %cst_5 = arith.constant 0.000000e+00 : f32
    %18 = vector.shape_cast %16 : vector<24x128xi1> to vector<1x24x128xi1>
    %19 = vector.broadcast %18 : vector<1x24x128xi1> to vector<16x24x128xi1>
    %20 = vector.broadcast %cst_5 : f32 to vector<16x24x128xf32>
    %21 = arith.select %19, %17, %20 : vector<16x24x128xi1>, vector<16x24x128xf32>
    %cst_6 = arith.constant 0.000000e+00 : bf16
    %22 = vector.broadcast %cst_6 : bf16 to vector<48x128xbf16>
    %c0_7 = arith.constant 0 : index
    %c0_8 = arith.constant 0 : index
    %23 = vector.load %arg9[%c0_7, %c0_8] : memref<480x128xbf16, #tpu.memory_space<vmem>>, vector<48x128xbf16>
    tpu.vector_store %arg9[%c0_7, %c0_8], %22 {strides = array<i32>} : memref<480x128xbf16, #tpu.memory_space<vmem>>, vector<48x128xbf16>,
    %24 = vector.shape_cast %21 : vector<16x24x128xf32> to vector<384x128xf32>
    %25 = arith.truncf %24 : vector<384x128xf32> to vector<384x128xbf16>
    %c48_9 = arith.constant 48 : index
    %c0_10 = arith.constant 0 : index
    %26 = vector.load %arg9[%c48_9, %c0_10] : memref<480x128xbf16, #tpu.memory_space<vmem>>, vector<384x128xbf16>
    tpu.vector_store %arg9[%c48_9, %c0_10], %25 {strides = array<i32>} : memref<480x128xbf16, #tpu.memory_space<vmem>>, vector<384x128xbf16>,
    %c432 = arith.constant 432 : index
    %c0_11 = arith.constant 0 : index
    %27 = vector.load %arg9[%c432, %c0_11] : memref<480x128xbf16, #tpu.memory_space<vmem>>, vector<48x128xbf16>
    tpu.vector_store %arg9[%c432, %c0_11], %22 {strides = array<i32>} : memref<480x128xbf16, #tpu.memory_space<vmem>>, vector<48x128xbf16>,
    %cst_12 = arith.constant 0.000000e+00 : f32
    %28 = vector.broadcast %cst_12 : f32 to vector<384x128xf32>
    %c23 = arith.constant 23 : index
    %c0_13 = arith.constant 0 : index
    %29 = vector.load %arg9[%c23, %c0_13] : memref<480x128xbf16, #tpu.memory_space<vmem>>, vector<384x128xbf16>
    %c0_14 = arith.constant 0 : index
    %c0_15 = arith.constant 0 : index
    %c0_16 = arith.constant 0 : index
    %30 = vector.load %arg5[%c0_14, %c0_15, %c0_16] : memref<9x128x128xbf16, #tpu.memory_space<vmem>>, vector<1x128x128xbf16>
    %31 = vector.shape_cast %30 : vector<1x128x128xbf16> to vector<128x128xbf16>
    %cst_17 = arith.constant dense<0.000000e+00> : vector<384x128xf32>
    %32 = tpu.matmul %29, %31, %cst_17 {dimension_numbers = #tpu.dot_dimension_numbers<[1], [0], [0], [1], [0, 0, 1, 1], [], []>} : vector<384x128xbf16>, vector<128x128xbf16>, vector<384x128xf32> -> vector<384x128xf32>
    %33 = arith.addf %28, %32 : vector<384x128xf32>
    %c24 = arith.constant 24 : index
    %c0_18 = arith.constant 0 : index
    %34 = vector.load %arg9[%c24, %c0_18] : memref<480x128xbf16, #tpu.memory_space<vmem>>, vector<384x128xbf16>
    %c1 = arith.constant 1 : index
    %c0_19 = arith.constant 0 : index
    %c0_20 = arith.constant 0 : index
    %35 = vector.load %arg5[%c1, %c0_19, %c0_20] : memref<9x128x128xbf16, #tpu.memory_space<vmem>>, vector<1x128x128xbf16>
    %36 = vector.shape_cast %35 : vector<1x128x128xbf16> to vector<128x128xbf16>
    %cst_21 = arith.constant dense<0.000000e+00> : vector<384x128xf32>
    %37 = tpu.matmul %34, %36, %cst_21 {dimension_numbers = #tpu.dot_dimension_numbers<[1], [0], [0], [1], [0, 0, 1, 1], [], []>} : vector<384x128xbf16>, vector<128x128xbf16>, vector<384x128xf32> -> vector<384x128xf32>
    %38 = arith.addf %33, %37 : vector<384x128xf32>
    %c25 = arith.constant 25 : index
    %c0_22 = arith.constant 0 : index
    %39 = vector.load %arg9[%c25, %c0_22] : memref<480x128xbf16, #tpu.memory_space<vmem>>, vector<384x128xbf16>
    %c2 = arith.constant 2 : index
    %c0_23 = arith.constant 0 : index
    %c0_24 = arith.constant 0 : index
    %40 = vector.load %arg5[%c2, %c0_23, %c0_24] : memref<9x128x128xbf16, #tpu.memory_space<vmem>>, vector<1x128x128xbf16>
    %41 = vector.shape_cast %40 : vector<1x128x128xbf16> to vector<128x128xbf16>
    %cst_25 = arith.constant dense<0.000000e+00> : vector<384x128xf32>
    %42 = tpu.matmul %39, %41, %cst_25 {dimension_numbers = #tpu.dot_dimension_numbers<[1], [0], [0], [1], [0, 0, 1, 1], [], []>} : vector<384x128xbf16>, vector<128x128xbf16>, vector<384x128xf32> -> vector<384x128xf32>
    %43 = arith.addf %38, %42 : vector<384x128xf32>
    %c47 = arith.constant 47 : index
    %c0_26 = arith.constant 0 : index
    %44 = vector.load %arg9[%c47, %c0_26] : memref<480x128xbf16, #tpu.memory_space<vmem>>, vector<384x128xbf16>
    %c3 = arith.constant 3 : index
    %c0_27 = arith.constant 0 : index
    %c0_28 = arith.constant 0 : index
    %45 = vector.load %arg5[%c3, %c0_27, %c0_28] : memref<9x128x128xbf16, #tpu.memory_space<vmem>>, vector<1x128x128xbf16>
    %46 = vector.shape_cast %45 : vector<1x128x128xbf16> to vector<128x128xbf16>
    %cst_29 = arith.constant dense<0.000000e+00> : vector<384x128xf32>
    %47 = tpu.matmul %44, %46, %cst_29 {dimension_numbers = #tpu.dot_dimension_numbers<[1], [0], [0], [1], [0, 0, 1, 1], [], []>} : vector<384x128xbf16>, vector<128x128xbf16>, vector<384x128xf32> -> vector<384x128xf32>
    %48 = arith.addf %43, %47 : vector<384x128xf32>
    %c48_30 = arith.constant 48 : index
    %c0_31 = arith.constant 0 : index
    %49 = vector.load %arg9[%c48_30, %c0_31] : memref<480x128xbf16, #tpu.memory_space<vmem>>, vector<384x128xbf16>
    %c4 = arith.constant 4 : index
    %c0_32 = arith.constant 0 : index
    %c0_33 = arith.constant 0 : index
    %50 = vector.load %arg5[%c4, %c0_32, %c0_33] : memref<9x128x128xbf16, #tpu.memory_space<vmem>>, vector<1x128x128xbf16>
    %51 = vector.shape_cast %50 : vector<1x128x128xbf16> to vector<128x128xbf16>
    %cst_34 = arith.constant dense<0.000000e+00> : vector<384x128xf32>
    %52 = tpu.matmul %49, %51, %cst_34 {dimension_numbers = #tpu.dot_dimension_numbers<[1], [0], [0], [1], [0, 0, 1, 1], [], []>} : vector<384x128xbf16>, vector<128x128xbf16>, vector<384x128xf32> -> vector<384x128xf32>
    %53 = arith.addf %48, %52 : vector<384x128xf32>
    %c49 = arith.constant 49 : index
    %c0_35 = arith.constant 0 : index
    %54 = vector.load %arg9[%c49, %c0_35] : memref<480x128xbf16, #tpu.memory_space<vmem>>, vector<384x128xbf16>
    %c5 = arith.constant 5 : index
    %c0_36 = arith.constant 0 : index
    %c0_37 = arith.constant 0 : index
    %55 = vector.load %arg5[%c5, %c0_36, %c0_37] : memref<9x128x128xbf16, #tpu.memory_space<vmem>>, vector<1x128x128xbf16>
    %56 = vector.shape_cast %55 : vector<1x128x128xbf16> to vector<128x128xbf16>
    %cst_38 = arith.constant dense<0.000000e+00> : vector<384x128xf32>
    %57 = tpu.matmul %54, %56, %cst_38 {dimension_numbers = #tpu.dot_dimension_numbers<[1], [0], [0], [1], [0, 0, 1, 1], [], []>} : vector<384x128xbf16>, vector<128x128xbf16>, vector<384x128xf32> -> vector<384x128xf32>
    %58 = arith.addf %53, %57 : vector<384x128xf32>
    %c71 = arith.constant 71 : index
    %c0_39 = arith.constant 0 : index
    %59 = vector.load %arg9[%c71, %c0_39] : memref<480x128xbf16, #tpu.memory_space<vmem>>, vector<384x128xbf16>
    %c6 = arith.constant 6 : index
    %c0_40 = arith.constant 0 : index
    %c0_41 = arith.constant 0 : index
    %60 = vector.load %arg5[%c6, %c0_40, %c0_41] : memref<9x128x128xbf16, #tpu.memory_space<vmem>>, vector<1x128x128xbf16>
    %61 = vector.shape_cast %60 : vector<1x128x128xbf16> to vector<128x128xbf16>
    %cst_42 = arith.constant dense<0.000000e+00> : vector<384x128xf32>
    %62 = tpu.matmul %59, %61, %cst_42 {dimension_numbers = #tpu.dot_dimension_numbers<[1], [0], [0], [1], [0, 0, 1, 1], [], []>} : vector<384x128xbf16>, vector<128x128xbf16>, vector<384x128xf32> -> vector<384x128xf32>
    %63 = arith.addf %58, %62 : vector<384x128xf32>
    %c72 = arith.constant 72 : index
    %c0_43 = arith.constant 0 : index
    %64 = vector.load %arg9[%c72, %c0_43] : memref<480x128xbf16, #tpu.memory_space<vmem>>, vector<384x128xbf16>
    %c7 = arith.constant 7 : index
    %c0_44 = arith.constant 0 : index
    %c0_45 = arith.constant 0 : index
    %65 = vector.load %arg5[%c7, %c0_44, %c0_45] : memref<9x128x128xbf16, #tpu.memory_space<vmem>>, vector<1x128x128xbf16>
    %66 = vector.shape_cast %65 : vector<1x128x128xbf16> to vector<128x128xbf16>
    %cst_46 = arith.constant dense<0.000000e+00> : vector<384x128xf32>
    %67 = tpu.matmul %64, %66, %cst_46 {dimension_numbers = #tpu.dot_dimension_numbers<[1], [0], [0], [1], [0, 0, 1, 1], [], []>} : vector<384x128xbf16>, vector<128x128xbf16>, vector<384x128xf32> -> vector<384x128xf32>
    %68 = arith.addf %63, %67 : vector<384x128xf32>
    %c73 = arith.constant 73 : index
    %c0_47 = arith.constant 0 : index
    %69 = vector.load %arg9[%c73, %c0_47] : memref<480x128xbf16, #tpu.memory_space<vmem>>, vector<384x128xbf16>
    %c8 = arith.constant 8 : index
    %c0_48 = arith.constant 0 : index
    %c0_49 = arith.constant 0 : index
    %70 = vector.load %arg5[%c8, %c0_48, %c0_49] : memref<9x128x128xbf16, #tpu.memory_space<vmem>>, vector<1x128x128xbf16>
    %71 = vector.shape_cast %70 : vector<1x128x128xbf16> to vector<128x128xbf16>
    %cst_50 = arith.constant dense<0.000000e+00> : vector<384x128xf32>
    %72 = tpu.matmul %69, %71, %cst_50 {dimension_numbers = #tpu.dot_dimension_numbers<[1], [0], [0], [1], [0, 0, 1, 1], [], []>} : vector<384x128xbf16>, vector<128x128xbf16>, vector<384x128xf32> -> vector<384x128xf32>
    %73 = arith.addf %68, %72 : vector<384x128xf32>
    %c0_51 = arith.constant 0 : index
    %c0_52 = arith.constant 0 : index
    %74 = vector.load %arg4[%c0_51, %c0_52] : memref<1x128xf32, #tpu.memory_space<vmem>>, vector<1x128xf32>
    %75 = vector.broadcast %74 : vector<1x128xf32> to vector<384x128xf32>
    %76 = arith.addf %73, %75 : vector<384x128xf32>
    %77 = tpu.iota {dimensions = array<i32: 0>} : vector<24x128xi32>
    %c2_i32_53 = arith.constant 2 : i32
    %78 = vector.broadcast %c2_i32_53 : i32 to vector<24x128xi32>
    %79 = arith.cmpi sge, %77, %78 : vector<24x128xi32>
    %c18_i32_54 = arith.constant 18 : i32
    %80 = vector.broadcast %c18_i32_54 : i32 to vector<24x128xi32>
    %81 = arith.cmpi slt, %77, %80 : vector<24x128xi32>
    %82 = arith.andi %79, %81 : vector<24x128xi1>
    %83 = vector.shape_cast %76 : vector<384x128xf32> to vector<16x24x128xf32>
    %cst_55 = arith.constant 0.000000e+00 : f32
    %84 = vector.shape_cast %82 : vector<24x128xi1> to vector<1x24x128xi1>
    %85 = vector.broadcast %84 : vector<1x24x128xi1> to vector<16x24x128xi1>
    %86 = vector.broadcast %cst_55 : f32 to vector<16x24x128xf32>
    %87 = arith.select %85, %83, %86 : vector<16x24x128xi1>, vector<16x24x128xf32>
    %cst_56 = arith.constant dense<0.000000e+00> : vector<24x128xf32>
    %88 = vector.multi_reduction <add>, %87, %cst_56 [0] : vector<16x24x128xf32> to vector<24x128xf32>
    %cst_57 = arith.constant dense<0.000000e+00> : vector<128xf32>
    %89 = vector.multi_reduction <add>, %88, %cst_57 [0] : vector<24x128xf32> to vector<128xf32>
    %90 = vector.shape_cast %89 : vector<128xf32> to vector<1x128xf32>
    %c0_58 = arith.constant 0 : index
    %c0_59 = arith.constant 0 : index
    %c0_60 = arith.constant 0 : index
    %91 = vector.load %arg7[%c0_58, %c0_59, %c0_60] : memref<1x1x128xf32, #tpu.memory_space<vmem>>, vector<1x1x128xf32>
    %92 = vector.shape_cast %91 : vector<1x1x128xf32> to vector<1x128xf32>
    %93 = vector.shape_cast %90 : vector<1x128xf32> to vector<1x1x128xf32>
    tpu.vector_store %arg7[%c0_58, %c0_59, %c0_60], %93 {strides = array<i32>} : memref<1x1x128xf32, #tpu.memory_space<vmem>>, vector<1x1x128xf32>,
    %94 = arith.mulf %87, %87 : vector<16x24x128xf32>
    %cst_61 = arith.constant dense<0.000000e+00> : vector<24x128xf32>
    %95 = vector.multi_reduction <add>, %94, %cst_61 [0] : vector<16x24x128xf32> to vector<24x128xf32>
    %cst_62 = arith.constant dense<0.000000e+00> : vector<128xf32>
    %96 = vector.multi_reduction <add>, %95, %cst_62 [0] : vector<24x128xf32> to vector<128xf32>
    %97 = vector.shape_cast %96 : vector<128xf32> to vector<1x128xf32>
    %c0_63 = arith.constant 0 : index
    %c0_64 = arith.constant 0 : index
    %c0_65 = arith.constant 0 : index
    %98 = vector.load %arg8[%c0_63, %c0_64, %c0_65] : memref<1x1x128xf32, #tpu.memory_space<vmem>>, vector<1x1x128xf32>
    %99 = vector.shape_cast %98 : vector<1x1x128xf32> to vector<1x128xf32>
    %100 = vector.shape_cast %97 : vector<1x128xf32> to vector<1x1x128xf32>
    tpu.vector_store %arg8[%c0_63, %c0_64, %c0_65], %100 {strides = array<i32>} : memref<1x1x128xf32, #tpu.memory_space<vmem>>, vector<1x1x128xf32>,
    %cst_66 = arith.constant 0.000000e+00 : bf16
    %101 = vector.broadcast %cst_66 : bf16 to vector<48x128xbf16>
    %c0_67 = arith.constant 0 : index
    %c0_68 = arith.constant 0 : index
    %c0_69 = arith.constant 0 : index
    %102 = vector.load %arg6[%c0_67, %c0_68, %c0_69] : memref<1x480x128xbf16, #tpu.memory_space<vmem>>, vector<1x48x128xbf16>
    %103 = vector.shape_cast %102 : vector<1x48x128xbf16> to vector<48x128xbf16>
    %104 = vector.shape_cast %101 : vector<48x128xbf16> to vector<1x48x128xbf16>
    tpu.vector_store %arg6[%c0_67, %c0_68, %c0_69], %104 {strides = array<i32>} : memref<1x480x128xbf16, #tpu.memory_space<vmem>>, vector<1x48x128xbf16>,
    %105 = vector.shape_cast %87 : vector<16x24x128xf32> to vector<384x128xf32>
    %106 = arith.truncf %105 : vector<384x128xf32> to vector<384x128xbf16>
    %c0_70 = arith.constant 0 : index
    %c48_71 = arith.constant 48 : index
    %c0_72 = arith.constant 0 : index
    %107 = vector.load %arg6[%c0_70, %c48_71, %c0_72] : memref<1x480x128xbf16, #tpu.memory_space<vmem>>, vector<1x384x128xbf16>
    %108 = vector.shape_cast %107 : vector<1x384x128xbf16> to vector<384x128xbf16>
    %109 = vector.shape_cast %106 : vector<384x128xbf16> to vector<1x384x128xbf16>
    tpu.vector_store %arg6[%c0_70, %c48_71, %c0_72], %109 {strides = array<i32>} : memref<1x480x128xbf16, #tpu.memory_space<vmem>>, vector<1x384x128xbf16>,
    %c0_73 = arith.constant 0 : index
    %c432_74 = arith.constant 432 : index
    %c0_75 = arith.constant 0 : index
    %110 = vector.load %arg6[%c0_73, %c432_74, %c0_75] : memref<1x480x128xbf16, #tpu.memory_space<vmem>>, vector<1x48x128xbf16>
    %111 = vector.shape_cast %110 : vector<1x48x128xbf16> to vector<48x128xbf16>
    %112 = vector.shape_cast %101 : vector<48x128xbf16> to vector<1x48x128xbf16>
    tpu.vector_store %arg6[%c0_73, %c432_74, %c0_75], %112 {strides = array<i32>} : memref<1x480x128xbf16, #tpu.memory_space<vmem>>, vector<1x48x128xbf16>,
    return
  }
  func.func @transform_0(%arg0: i32) -> (i32, i32, i32) {
    %c0_i32 = arith.constant 0 : i32
    %c0_i32_0 = arith.constant 0 : i32
    %c0_i32_1 = arith.constant 0 : i32
    return %arg0, %c0_i32, %c0_i32_0 : i32, i32, i32
  }
  func.func @transform_1(%arg0: i32) -> (i32, i32) {
    %c0_i32 = arith.constant 0 : i32
    %c0_i32_0 = arith.constant 0 : i32
    %c0_i32_1 = arith.constant 0 : i32
    return %c0_i32, %c0_i32_0 : i32, i32
  }
  func.func @transform_2(%arg0: i32) -> (i32, i32) {
    %c0_i32 = arith.constant 0 : i32
    %c0_i32_0 = arith.constant 0 : i32
    %c0_i32_1 = arith.constant 0 : i32
    return %c0_i32, %c0_i32_0 : i32, i32
  }
  func.func @transform_3(%arg0: i32) -> (i32, i32) {
    %c0_i32 = arith.constant 0 : i32
    %c0_i32_0 = arith.constant 0 : i32
    %c0_i32_1 = arith.constant 0 : i32
    return %c0_i32, %c0_i32_0 : i32, i32
  }
  func.func @transform_4(%arg0: i32) -> (i32, i32, i32) {
    %c0_i32 = arith.constant 0 : i32
    %c0_i32_0 = arith.constant 0 : i32
    %c0_i32_1 = arith.constant 0 : i32
    %c0_i32_2 = arith.constant 0 : i32
    return %c0_i32, %c0_i32_0, %c0_i32_1 : i32, i32, i32
  }
  func.func @transform_5(%arg0: i32) -> (i32, i32, i32) {
    %c0_i32 = arith.constant 0 : i32
    %c0_i32_0 = arith.constant 0 : i32
    %c0_i32_1 = arith.constant 0 : i32
    return %arg0, %c0_i32, %c0_i32_0 : i32, i32, i32
  }
  func.func @transform_6(%arg0: i32) -> (i32, i32, i32) {
    %c0_i32 = arith.constant 0 : i32
    %c0_i32_0 = arith.constant 0 : i32
    %c0_i32_1 = arith.constant 0 : i32
    return %arg0, %c0_i32, %c0_i32_0 : i32, i32, i32
  }
  func.func @transform_7(%arg0: i32) -> (i32, i32, i32) {
    %c0_i32 = arith.constant 0 : i32
    %c0_i32_0 = arith.constant 0 : i32
    %c0_i32_1 = arith.constant 0 : i32
    return %arg0, %c0_i32, %c0_i32_0 : i32, i32, i32
  }
}

module attributes {stable_mosaic.version = 11 : i64} {
  func.func @_bn_relu_pool_kernel(%arg0: i32, %arg1: memref<1x480x128xbf16, #tpu.memory_space<vmem>>, %arg2: memref<1x128xf32, #tpu.memory_space<vmem>>, %arg3: memref<1x128xf32, #tpu.memory_space<vmem>>, %arg4: memref<1x8x16x128xf32, #tpu.memory_space<vmem>>) attributes {dimension_semantics = [#tpu.dimension_semantics<parallel>], iteration_bounds = array<i64: 2>, scalar_prefetch = 0 : i64, scratch_operands = 0 : i64, tpu.core_type = #tpu.core_type<tc>, window_params = [{transform_indices = @transform_0, window_bounds = array<i64: 1, 480, 128>}, {pipeline_mode = #tpu.pipeline_mode<synchronous>, transform_indices = @transform_1, window_bounds = array<i64: 1, 128>}, {pipeline_mode = #tpu.pipeline_mode<synchronous>, transform_indices = @transform_2, window_bounds = array<i64: 1, 128>}, {transform_indices = @transform_3, window_bounds = array<i64: 1, 8, 16, 128>}]} {
    %c0 = arith.constant 0 : index
    %c48 = arith.constant 48 : index
    %c0_0 = arith.constant 0 : index
    %0 = vector.load %arg1[%c0, %c48, %c0_0] : memref<1x480x128xbf16, #tpu.memory_space<vmem>>, vector<1x384x128xbf16>
    %1 = vector.shape_cast %0 : vector<1x384x128xbf16> to vector<384x128xbf16>
    %2 = arith.extf %1 : vector<384x128xbf16> to vector<384x128xf32>
    %c0_1 = arith.constant 0 : index
    %c0_2 = arith.constant 0 : index
    %3 = vector.load %arg2[%c0_1, %c0_2] : memref<1x128xf32, #tpu.memory_space<vmem>>, vector<1x128xf32>
    %4 = vector.broadcast %3 : vector<1x128xf32> to vector<384x128xf32>
    %5 = arith.mulf %2, %4 : vector<384x128xf32>
    %c0_3 = arith.constant 0 : index
    %c0_4 = arith.constant 0 : index
    %6 = vector.load %arg3[%c0_3, %c0_4] : memref<1x128xf32, #tpu.memory_space<vmem>>, vector<1x128xf32>
    %7 = vector.broadcast %6 : vector<1x128xf32> to vector<384x128xf32>
    %8 = arith.addf %5, %7 : vector<384x128xf32>
    %9 = vector.shape_cast %8 : vector<384x128xf32> to vector<8x48x128xf32>
    %10 = vector.extract_strided_slice %9 {offsets = [0, 0, 0], sizes = [8, 24, 128], strides = [1, 1, 1]} : vector<8x48x128xf32> to vector<8x24x128xf32>
    %11 = vector.extract_strided_slice %9 {offsets = [0, 24, 0], sizes = [8, 24, 128], strides = [1, 1, 1]} : vector<8x48x128xf32> to vector<8x24x128xf32>
    %12 = arith.maximumf %10, %11 : vector<8x24x128xf32>
    %13 = vector.extract_strided_slice %12 {offsets = [0, 2, 0], sizes = [8, 16, 128], strides = [1, 1, 1]} : vector<8x24x128xf32> to vector<8x16x128xf32>
    %14 = vector.extract_strided_slice %12 {offsets = [0, 3, 0], sizes = [8, 16, 128], strides = [1, 1, 1]} : vector<8x24x128xf32> to vector<8x16x128xf32>
    %15 = arith.maximumf %13, %14 : vector<8x16x128xf32>
    %cst = arith.constant 0.000000e+00 : f32
    %16 = vector.broadcast %cst : f32 to vector<8x16x128xf32>
    %17 = arith.maximumf %15, %16 : vector<8x16x128xf32>
    %c0_5 = arith.constant 0 : index
    %c0_6 = arith.constant 0 : index
    %c0_7 = arith.constant 0 : index
    %c0_8 = arith.constant 0 : index
    %18 = vector.load %arg4[%c0_5, %c0_6, %c0_7, %c0_8] : memref<1x8x16x128xf32, #tpu.memory_space<vmem>>, vector<1x8x16x128xf32>
    %19 = vector.shape_cast %18 : vector<1x8x16x128xf32> to vector<8x16x128xf32>
    %20 = vector.shape_cast %17 : vector<8x16x128xf32> to vector<1x8x16x128xf32>
    tpu.vector_store %arg4[%c0_5, %c0_6, %c0_7, %c0_8], %20 {strides = array<i32>} : memref<1x8x16x128xf32, #tpu.memory_space<vmem>>, vector<1x8x16x128xf32>,
    return
  }
  func.func @transform_0(%arg0: i32) -> (i32, i32, i32) {
    %c0_i32 = arith.constant 0 : i32
    %c0_i32_0 = arith.constant 0 : i32
    %c0_i32_1 = arith.constant 0 : i32
    return %arg0, %c0_i32, %c0_i32_0 : i32, i32, i32
  }
  func.func @transform_1(%arg0: i32) -> (i32, i32) {
    %c0_i32 = arith.constant 0 : i32
    %c0_i32_0 = arith.constant 0 : i32
    %c0_i32_1 = arith.constant 0 : i32
    return %c0_i32, %c0_i32_0 : i32, i32
  }
  func.func @transform_2(%arg0: i32) -> (i32, i32) {
    %c0_i32 = arith.constant 0 : i32
    %c0_i32_0 = arith.constant 0 : i32
    %c0_i32_1 = arith.constant 0 : i32
    return %c0_i32, %c0_i32_0 : i32, i32
  }
  func.func @transform_3(%arg0: i32) -> (i32, i32, i32, i32) {
    %c0_i32 = arith.constant 0 : i32
    %c0_i32_0 = arith.constant 0 : i32
    %c0_i32_1 = arith.constant 0 : i32
    %c0_i32_2 = arith.constant 0 : i32
    return %arg0, %c0_i32, %c0_i32_0, %c0_i32_1 : i32, i32, i32, i32
  }
}

</mosaic_0001>

<llo_original>
// kernel: conv_block2.5
$region0: #{conv_block2.5}
  #allocation0 [shape = 'u32[]', space=smem, size = 0x4, offset = 0x4, fixed_abs, tag = 'smem constant byte address 0x4 - core index']
  #allocation1 [shape = 'u32[72,128]{1,0:T(1,128)}', space=vmem, size = 0x9000, scoped, tag = 'internal scratch']
  %s0 = inlined_call_operand.vmem [shape: bf16[2,480,128], index: 0, kind: input, shape index: {}]
  %s1 = inlined_call_operand.vmem [shape: f32[1,128], index: 1, kind: input, shape index: {}]
  %s2 = inlined_call_operand.vmem [shape: f32[1,128], index: 2, kind: input, shape index: {}]
  %s3 = inlined_call_operand.vmem [shape: f32[2,8,16,128], index: 3, kind: output, shape index: {}]
  %s4 = sld [smem:[#allocation0]]
  $region45: #{conv_block2.5} parent=0
    _
  %s6 = ssub.s32 1, %s4
  %s7 = scalar_select 0, %s6, %s4
  loop: start=0, step=1, limit=4
  $region2: #{conv_block2.5} parent=0 // loop_pre_header
    _
  $region3: #{conv_block2.5} parent=0 // loop_header
    %s9 = sphi 0, %s13
    %p10 = scmp.ge.s32.totalorder %s9, 4
    %s19 = sphi 0, %s21
    %s22 = sphi 0, %s19
    %s23 = sphi 0, %s22
    %s39 = sphi 0, %s23
    %s43 = sphi 0, %s43
    %s45 = sphi 0, %s43
    %s46 = sphi 0, %s45
    %s60 = sphi 0, %s46
    %s64 = sphi 0, %s64
    %s66 = sphi 0, %s64
    %s67 = sphi 0, %s66
    %s81 = sphi 0, %s67
    %s87 = sphi 0, %s89
    %s90 = sphi 0, %s87
    %s91 = sphi 0, %s90
    %s107 = sphi 0, %s91
  $region4: #{conv_block2.5} parent=0 // loop_header_branch
    %12 = sbr.rel (%p10) target = $region8
  $region5: #{conv_block2.5} parent=0 // loop_body
    %s14 = ssub.s32 %s9, 1
    %s15 = ssub.s32 %s9, 2
    %s16 = sadd.s32 %s9, 1
    %s17 = ssub.s32 %s9, %s16
    %p18 = scmp.eq.s32.totalorder %s17, 0
    %s20 = sadd.s32 %s19, 1
    %s21 = scalar_select %p18, %s19, %s20
    %p24 = pneg %p18
    %p25 = scmp.eq.s32.totalorder %s9, 1
    %p26 = por %p24, %p25
    %p27 = scmp.ne.s32.totalorder %s19, %s22
    %p28 = scmp.eq.s32.totalorder %s9, 0
    %p29 = por %p27, %p28
    %p30 = scmp.ne.s32.totalorder %s19, %s22
    %p31 = scmp.eq.s32.totalorder %s14, 1
    %p32 = por %p30, %p31
    %p33 = scmp.ne.s32.totalorder %s22, %s23
    %p34 = scmp.eq.s32.totalorder %s14, 0
    %p35 = por %p33, %p34
    %p36 = scmp.ne.s32.totalorder %s22, %s23
    %p37 = scmp.eq.s32.totalorder %s15, 1
    %p38 = por %p36, %p37
    %p40 = scmp.ne.s32.totalorder %s23, %s39
    %p41 = scmp.eq.s32.totalorder %s15, 0
    %p42 = por %p40, %p41
    %s44 = sadd.s32 %s43, 1
    %p47 = scmp.eq.s32.totalorder %s9, 1
    %p48 = scmp.ne.s32.totalorder %s43, %s45
    %p49 = scmp.eq.s32.totalorder %s9, 0
    %p50 = por %p48, %p49
    %p51 = scmp.ne.s32.totalorder %s43, %s45
    %p52 = scmp.eq.s32.totalorder %s14, 1
    %p53 = por %p51, %p52
    %p54 = scmp.ne.s32.totalorder %s45, %s46
    %p55 = scmp.eq.s32.totalorder %s14, 0
    %p56 = por %p54, %p55
    %p57 = scmp.ne.s32.totalorder %s45, %s46
    %p58 = scmp.eq.s32.totalorder %s15, 1
    %p59 = por %p57, %p58
    %p61 = scmp.ne.s32.totalorder %s46, %s60
    %p62 = scmp.eq.s32.totalorder %s15, 0
    %p63 = por %p61, %p62
    %s65 = sadd.s32 %s64, 1
    %p68 = scmp.eq.s32.totalorder %s9, 1
    %p69 = scmp.ne.s32.totalorder %s64, %s66
    %p70 = scmp.eq.s32.totalorder %s9, 0
    %p71 = por %p69, %p70
    %p72 = scmp.ne.s32.totalorder %s64, %s66
    %p73 = scmp.eq.s32.totalorder %s14, 1
    %p74 = por %p72, %p73
    %p75 = scmp.ne.s32.totalorder %s66, %s67
    %p76 = scmp.eq.s32.totalorder %s14, 0
    %p77 = por %p75, %p76
    %p78 = scmp.ne.s32.totalorder %s66, %s67
    %p79 = scmp.eq.s32.totalorder %s15, 1
    %p80 = por %p78, %p79
    %p82 = scmp.ne.s32.totalorder %s67, %s81
    %p83 = scmp.eq.s32.totalorder %s15, 0
    %p84 = por %p82, %p83
    %s85 = ssub.s32 %s9, %s16
    %p86 = scmp.eq.s32.totalorder %s85, 0
    %s88 = sadd.s32 %s87, 1
    %s89 = scalar_select %p86, %s87, %s88
    %p92 = pneg %p86
    %p93 = scmp.eq.s32.totalorder %s9, 1
    %p94 = por %p92, %p93
    %p95 = scmp.ne.s32.totalorder %s87, %s90
    %p96 = scmp.eq.s32.totalorder %s9, 0
    %p97 = por %p95, %p96
    %p98 = scmp.ne.s32.totalorder %s87, %s90
    %p99 = scmp.eq.s32.totalorder %s14, 1
    %p100 = por %p98, %p99
    %p101 = scmp.ne.s32.totalorder %s90, %s91
    %p102 = scmp.eq.s32.totalorder %s14, 0
    %p103 = por %p101, %p102
    %p104 = scmp.ne.s32.totalorder %s90, %s91
    %p105 = scmp.eq.s32.totalorder %s15, 1
    %p106 = por %p104, %p105
    %p108 = scmp.ne.s32.totalorder %s91, %s107
    %p109 = scmp.eq.s32.totalorder %s15, 0
    %p110 = por %p108, %p109
    %p111 = scmp.le.s32.totalorder 1, %s9
    %p112 = scmp.lt.s32.totalorder %s9, 3
    %p113 = pnand %p111, %p112
    %p114 = pneg %p113
    // Predicated region
    $region9: #{conv_block2.5} parent=5 // pred_check
      _
    $region10: #{conv_block2.5} parent=5 // pred_check_branch
      %116 = sbr.rel (%p113) target = $region12
    $region11: #{conv_block2.5} parent=5 // pred_region
      %s117 = ssub.s32 %s9, 1
      // Predicated region
      $region13: #{conv_block2.5} parent=11 // pred_check
        %p118 = pneg %p56
      $region14: #{conv_block2.5} parent=11 // pred_check_branch
        %120 = sbr.rel (%p118) target = $region16
      $region15: #{conv_block2.5} parent=11 // pred_region
        _
      $region16: #{conv_block2.5} parent=11 // pred_fallthru
        _
      // Predicated region
      $region17: #{conv_block2.5} parent=11 // pred_check
        %p121 = pneg %p77
      $region18: #{conv_block2.5} parent=11 // pred_check_branch
        %123 = sbr.rel (%p121) target = $region20
      $region19: #{conv_block2.5} parent=11 // pred_region
        _
      $region20: #{conv_block2.5} parent=11 // pred_fallthru
        _
    $region12: #{conv_block2.5} parent=5 // pred_fallthru
      _
    %p124 = scmp.lt.s32.totalorder %s9, 2
    // Predicated region
    $region21: #{conv_block2.5} parent=5 // pred_check
      %p125 = pneg %p124
    $region22: #{conv_block2.5} parent=5 // pred_check_branch
      %127 = sbr.rel (%p125) target = $region24
    $region23: #{conv_block2.5} parent=5 // pred_region
      // Predicated region
      $region25: #{conv_block2.5} parent=23 // pred_check
        %p128 = pneg %p29
      $region26: #{conv_block2.5} parent=23 // pred_check_branch
        %130 = sbr.rel (%p128) target = $region28
      $region27: #{conv_block2.5} parent=23 // pred_region
        %p131 = scmp.lt.s32.totalorder %s9, 1
        %s132 = scalar_select %p131, %s9, 1
        %s133 = smul.addr %s132, 60
        %s134 = smul.addr %s133, 4
        %s135 = scalar_lea.vmem %s0, %s134
      $region28: #{conv_block2.5} parent=23 // pred_fallthru
        _
    $region24: #{conv_block2.5} parent=5 // pred_fallthru
      _
    %p136 = scmp.le.s32.totalorder 1, %s9
    %p137 = scmp.lt.s32.totalorder %s9, 3
    %p138 = pnand %p136, %p137
    %p139 = pneg %p138
    // Predicated region
    $region29: #{conv_block2.5} parent=5 // pred_check
      _
    $region30: #{conv_block2.5} parent=5 // pred_check_branch
      %141 = sbr.rel (%p138) target = $region32
    $region31: #{conv_block2.5} parent=5 // pred_region
      %s142 = ssub.s32 %s9, 1
      %p143 = scmp.lt.s32.totalorder %s14, 1
      %s144 = scalar_select %p143, %s14, 1
      %s145 = smul.addr %s144, 60
      %s146 = smul.addr %s145, 4
      %s147 = scalar_lea.vmem %s0, %s146
      %p148 = pneg %p35
      %p149 = pneg %p32
      %p150 = pneg %p56
      %p151 = pneg %p53
      %p152 = pneg %p77
      %p153 = pneg %p74
      %p154 = pneg %p103
      %p155 = pneg %p100
      %p156 = scmp.lt.s32.totalorder %s14, 1
      %s157 = scalar_select %p156, %s14, 1
      %s158 = smul.addr %s157, 16
      %s159 = smul.addr %s158, 8
      %s160 = scalar_lea.vmem %s3, %s159
      %p161 = scmp.lt.s32.totalorder %s14, 1
      %s162 = scalar_select %p161, %s14, 1
      %s163 = smul.addr %s162, 60
      %s164 = smul.addr %s163, 4
      %s165 = scalar_lea.vmem %s0, %s164
      %p166 = scmp.lt.s32.totalorder %s14, 1
      %s167 = scalar_select %p166, %s14, 1
      %s168 = smul.addr %s167, 16
      %s169 = smul.addr %s168, 8
      %s170 = scalar_lea.vmem %s3, %s169
      %v171 = vld [vmem:[%s165 + $0x18] sm:$0xf]
      %v172 = vld [vmem:[%s165 + $0x1c] sm:$0xf]
      %v173 = vld [vmem:[%s165 + $0x20] sm:$0xf]
      %v174 = vld [vmem:[%s165 + $0x24] sm:$0xf]
      %v175 = vld [vmem:[%s165 + $0x28] sm:$0xf]
      %v176 = vld [vmem:[%s165 + $0x2c] sm:$0xf]
      %v177 = vld [vmem:[%s165 + $0x30] sm:$0xf]
      %v178 = vld [vmem:[%s165 + $0x34] sm:$0xf]
      %v179 = vld [vmem:[%s165 + $0x38] sm:$0xf]
      %v180 = vld [vmem:[%s165 + $0x3c] sm:$0xf]
      %v181 = vld [vmem:[%s165 + $0x40] sm:$0xf]
      %v182 = vld [vmem:[%s165 + $0x44] sm:$0xf]
      %v183 = vld [vmem:[%s165 + $0x48] sm:$0xf]
      %v184 = vld [vmem:[%s165 + $0x4c] sm:$0xf]
      %v185 = vld [vmem:[%s165 + $0x50] sm:$0xf]
      %v186 = vld [vmem:[%s165 + $0x54] sm:$0xf]
      %v187 = vld [vmem:[%s165 + $0x58] sm:$0xf]
      %v188 = vld [vmem:[%s165 + $0x5c] sm:$0xf]
      %v189 = vld [vmem:[%s165 + $0x60] sm:$0xf]
      %v190 = vld [vmem:[%s165 + $0x64] sm:$0xf]
      %v191 = vld [vmem:[%s165 + $0x68] sm:$0xf]
      %v192 = vld [vmem:[%s165 + $0x6c] sm:$0xf]
      %v193 = vld [vmem:[%s165 + $0x70] sm:$0xf]
      %v194 = vld [vmem:[%s165 + $0x74] sm:$0xf]
      %v195 = vld [vmem:[%s165 + $0x78] sm:$0xf]
      %v196 = vld [vmem:[%s165 + $0x7c] sm:$0xf]
      %v197 = vld [vmem:[%s165 + $0x80] sm:$0xf]
      %v198 = vld [vmem:[%s165 + $0x84] sm:$0xf]
      %v199 = vld [vmem:[%s165 + $0x88] sm:$0xf]
      %v200 = vld [vmem:[%s165 + $0x8c] sm:$0xf]
      %v201 = vld [vmem:[%s165 + $0x90] sm:$0xf]
      %v202 = vld [vmem:[%s165 + $0x94] sm:$0xf]
      %v203 = vld [vmem:[%s165 + $0x98] sm:$0xf]
      %v204 = vld [vmem:[%s165 + $0x9c] sm:$0xf]
      %v205 = vld [vmem:[%s165 + $0xa0] sm:$0xf]
      %v206 = vld [vmem:[%s165 + $0xa4] sm:$0xf]
      %v207 = vld [vmem:[%s165 + $0xa8] sm:$0xf]
      %v208 = vld [vmem:[%s165 + $0xac] sm:$0xf]
      %v209 = vld [vmem:[%s165 + $0xb0] sm:$0xf]
      %v210 = vld [vmem:[%s165 + $0xb4] sm:$0xf]
      %v211 = vld [vmem:[%s165 + $0xb8] sm:$0xf]
      %v212 = vld [vmem:[%s165 + $0xbc] sm:$0xf]
      %v213 = vld [vmem:[%s165 + $0xc0] sm:$0xf]
      %v214 = vld [vmem:[%s165 + $0xc4] sm:$0xf]
      %v215 = vld [vmem:[%s165 + $0xc8] sm:$0xf]
      %v216 = vld [vmem:[%s165 + $0xcc] sm:$0xf]
      %v217 = vld [vmem:[%s165 + $0xd0] sm:$0xf]
      %v218 = vld [vmem:[%s165 + $0xd4] sm:$0xf]
      %v219 = vunpack.c.l.bf16 %v171
      %v220 = vunpack.c.l.bf16 %v172
      %v221 = vunpack.c.l.bf16 %v173
      %v222 = vunpack.c.l.bf16 %v174
      %v223 = vunpack.c.l.bf16 %v175
      %v224 = vunpack.c.l.bf16 %v176
      %v225 = vunpack.c.l.bf16 %v177
      %v226 = vunpack.c.l.bf16 %v178
      %v227 = vunpack.c.l.bf16 %v179
      %v228 = vunpack.c.l.bf16 %v180
      %v229 = vunpack.c.l.bf16 %v181
      %v230 = vunpack.c.l.bf16 %v182
      %v231 = vunpack.c.l.bf16 %v183
      %v232 = vunpack.c.l.bf16 %v184
      %v233 = vunpack.c.l.bf16 %v185
      %v234 = vunpack.c.l.bf16 %v186
      %v235 = vunpack.c.l.bf16 %v187
      %v236 = vunpack.c.l.bf16 %v188
      %v237 = vunpack.c.l.bf16 %v189
      %v238 = vunpack.c.l.bf16 %v190
      %v239 = vunpack.c.l.bf16 %v191
      %v240 = vunpack.c.l.bf16 %v192
      %v241 = vunpack.c.l.bf16 %v193
      %v242 = vunpack.c.l.bf16 %v194
      %v243 = vunpack.c.l.bf16 %v195
      %v244 = vunpack.c.l.bf16 %v196
      %v245 = vunpack.c.l.bf16 %v197
      %v246 = vunpack.c.l.bf16 %v198
      %v247 = vunpack.c.l.bf16 %v199
      %v248 = vunpack.c.l.bf16 %v200
      %v249 = vunpack.c.l.bf16 %v201
      %v250 = vunpack.c.l.bf16 %v202
      %v251 = vunpack.c.l.bf16 %v203
      %v252 = vunpack.c.l.bf16 %v204
      %v253 = vunpack.c.l.bf16 %v205
      %v254 = vunpack.c.l.bf16 %v206
      %v255 = vunpack.c.l.bf16 %v207
      %v256 = vunpack.c.l.bf16 %v208
      %v257 = vunpack.c.l.bf16 %v209
      %v258 = vunpack.c.l.bf16 %v210
      %v259 = vunpack.c.l.bf16 %v211
      %v260 = vunpack.c.l.bf16 %v212
      %v261 = vunpack.c.l.bf16 %v213
      %v262 = vunpack.c.l.bf16 %v214
      %v263 = vunpack.c.l.bf16 %v215
      %v264 = vunpack.c.l.bf16 %v216
      %v265 = vunpack.c.l.bf16 %v217
      %v266 = vunpack.c.l.bf16 %v218
      %v267 = vld [vmem:[%s1] sm:$0x1]
      %v269 = vperm.slane %v267, 0
      %v271 = vmul.f32 %v219, %v269
      %v272 = vmul.f32 %v220, %v269
      %v273 = vmul.f32 %v221, %v269
      %v274 = vmul.f32 %v222, %v269
      %v275 = vmul.f32 %v223, %v269
      %v276 = vmul.f32 %v224, %v269
      %v277 = vmul.f32 %v225, %v269
      %v278 = vmul.f32 %v226, %v269
      %v279 = vmul.f32 %v227, %v269
      %v280 = vmul.f32 %v228, %v269
      %v281 = vmul.f32 %v229, %v269
      %v282 = vmul.f32 %v230, %v269
      %v283 = vmul.f32 %v231, %v269
      %v284 = vmul.f32 %v232, %v269
      %v285 = vmul.f32 %v233, %v269
      %v286 = vmul.f32 %v234, %v269
      %v287 = vmul.f32 %v235, %v269
      %v288 = vmul.f32 %v236, %v269
      %v289 = vmul.f32 %v237, %v269
      %v290 = vmul.f32 %v238, %v269
      %v291 = vmul.f32 %v239, %v269
      %v292 = vmul.f32 %v240, %v269
      %v293 = vmul.f32 %v241, %v269
      %v294 = vmul.f32 %v242, %v269
      %v295 = vmul.f32 %v243, %v269
      %v296 = vmul.f32 %v244, %v269
      %v297 = vmul.f32 %v245, %v269
      %v298 = vmul.f32 %v246, %v269
      %v299 = vmul.f32 %v247, %v269
      %v300 = vmul.f32 %v248, %v269
      %v301 = vmul.f32 %v249, %v269
      %v302 = vmul.f32 %v250, %v269
      %v303 = vmul.f32 %v251, %v269
      %v304 = vmul.f32 %v252, %v269
      %v305 = vmul.f32 %v253, %v269
      %v306 = vmul.f32 %v254, %v269
      %v307 = vmul.f32 %v255, %v269
      %v308 = vmul.f32 %v256, %v269
      %v309 = vmul.f32 %v257, %v269
      %v310 = vmul.f32 %v258, %v269
      %v311 = vmul.f32 %v259, %v269
      %v312 = vmul.f32 %v260, %v269
      %v313 = vmul.f32 %v261, %v269
      %v314 = vmul.f32 %v262, %v269
      %v315 = vmul.f32 %v263, %v269
      %v316 = vmul.f32 %v264, %v269
      %v317 = vmul.f32 %v265, %v269
      %v318 = vmul.f32 %v266, %v269
      %v319 = vld [vmem:[%s2] sm:$0x1]
      %v321 = vperm.slane %v319, 0
      %v323 = vadd.f32 %v271, %v321
      %v324 = vadd.f32 %v272, %v321
      %v325 = vadd.f32 %v273, %v321
      %v326 = vadd.f32 %v274, %v321
      %v327 = vadd.f32 %v275, %v321
      %v328 = vadd.f32 %v276, %v321
      %v329 = vadd.f32 %v277, %v321
      %v330 = vadd.f32 %v278, %v321
      %v331 = vadd.f32 %v279, %v321
      %v332 = vadd.f32 %v280, %v321
      %v333 = vadd.f32 %v281, %v321
      %v334 = vadd.f32 %v282, %v321
      %v335 = vadd.f32 %v283, %v321
      %v336 = vadd.f32 %v284, %v321
      %v337 = vadd.f32 %v285, %v321
      %v338 = vadd.f32 %v286, %v321
      %v339 = vadd.f32 %v287, %v321
      %v340 = vadd.f32 %v288, %v321
      %v341 = vadd.f32 %v289, %v321
      %v342 = vadd.f32 %v290, %v321
      %v343 = vadd.f32 %v291, %v321
      %v344 = vadd.f32 %v292, %v321
      %v345 = vadd.f32 %v293, %v321
      %v346 = vadd.f32 %v294, %v321
      %v347 = vadd.f32 %v295, %v321
      %v348 = vadd.f32 %v296, %v321
      %v349 = vadd.f32 %v297, %v321
      %v350 = vadd.f32 %v298, %v321
      %v351 = vadd.f32 %v299, %v321
      %v352 = vadd.f32 %v300, %v321
      %v353 = vadd.f32 %v301, %v321
      %v354 = vadd.f32 %v302, %v321
      %v355 = vadd.f32 %v303, %v321
      %v356 = vadd.f32 %v304, %v321
      %v357 = vadd.f32 %v305, %v321
      %v358 = vadd.f32 %v306, %v321
      %v359 = vadd.f32 %v307, %v321
      %v360 = vadd.f32 %v308, %v321
      %v361 = vadd.f32 %v309, %v321
      %v362 = vadd.f32 %v310, %v321
      %v363 = vadd.f32 %v311, %v321
      %v364 = vadd.f32 %v312, %v321
      %v365 = vadd.f32 %v313, %v321
      %v366 = vadd.f32 %v314, %v321
      %v367 = vadd.f32 %v315, %v321
      %v368 = vadd.f32 %v316, %v321
      %v369 = vadd.f32 %v317, %v321
      %v370 = vadd.f32 %v318, %v321
      %v371 = vmax.f32 %v323, %v326
      %v372 = vmax.f32 %v324, %v327
      %v373 = vmax.f32 %v325, %v328
      %v374 = vmax.f32 %v329, %v332
      %v375 = vmax.f32 %v330, %v333
      %v376 = vmax.f32 %v331, %v334
      %v377 = vmax.f32 %v335, %v338
      %v378 = vmax.f32 %v336, %v339
      %v379 = vmax.f32 %v337, %v340
      %v380 = vmax.f32 %v341, %v344
      %v381 = vmax.f32 %v342, %v345
      %v382 = vmax.f32 %v343, %v346
      %v383 = vmax.f32 %v347, %v350
      %v384 = vmax.f32 %v348, %v351
      %v385 = vmax.f32 %v349, %v352
      %v386 = vmax.f32 %v353, %v356
      %v387 = vmax.f32 %v354, %v357
      %v388 = vmax.f32 %v355, %v358
      %v389 = vmax.f32 %v359, %v362
      %v390 = vmax.f32 %v360, %v363
      %v391 = vmax.f32 %v361, %v364
      %v392 = vmax.f32 %v365, %v368
      %v393 = vmax.f32 %v366, %v369
      %v394 = vmax.f32 %v367, %v370
      %vm419 = vcmask 1046528
      %v420 = vrot.slane %v371, 1
      %v421 = vrot.slane %v372, 1
      %v422 = vsel %vm419, %v420, %v421
      %v423 = vrot.slane %v373, 1
      %v424 = vsel %vm419, %v421, %v423
      %v425 = vrot.slane %v374, 1
      %v426 = vrot.slane %v375, 1
      %v427 = vsel %vm419, %v425, %v426
      %v428 = vrot.slane %v376, 1
      %v429 = vsel %vm419, %v426, %v428
      %v430 = vrot.slane %v377, 1
      %v431 = vrot.slane %v378, 1
      %v432 = vsel %vm419, %v430, %v431
      %v433 = vrot.slane %v379, 1
      %v434 = vsel %vm419, %v431, %v433
      %v435 = vrot.slane %v380, 1
      %v436 = vrot.slane %v381, 1
      %v437 = vsel %vm419, %v435, %v436
      %v438 = vrot.slane %v382, 1
      %v439 = vsel %vm419, %v436, %v438
      %v440 = vrot.slane %v383, 1
      %v441 = vrot.slane %v384, 1
      %v442 = vsel %vm419, %v440, %v441
      %v443 = vrot.slane %v385, 1
      %v444 = vsel %vm419, %v441, %v443
      %v445 = vrot.slane %v386, 1
      %v446 = vrot.slane %v387, 1
      %v447 = vsel %vm419, %v445, %v446
      %v448 = vrot.slane %v388, 1
      %v449 = vsel %vm419, %v446, %v448
      %v450 = vrot.slane %v389, 1
      %v451 = vrot.slane %v390, 1
      %v452 = vsel %vm419, %v450, %v451
      %v453 = vrot.slane %v391, 1
      %v454 = vsel %vm419, %v451, %v453
      %v455 = vrot.slane %v392, 1
      %v456 = vrot.slane %v393, 1
      %v457 = vsel %vm419, %v455, %v456
      %v458 = vrot.slane %v394, 1
      %v459 = vsel %vm419, %v456, %v458
      %v484 = vmax.f32 %v371, %v422
      %v485 = vmax.f32 %v372, %v424
      %v486 = vmax.f32 %v373, %v423
      %v487 = vmax.f32 %v374, %v427
      %v488 = vmax.f32 %v375, %v429
      %v489 = vmax.f32 %v376, %v428
      %v490 = vmax.f32 %v377, %v432
      %v491 = vmax.f32 %v378, %v434
      %v492 = vmax.f32 %v379, %v433
      %v493 = vmax.f32 %v380, %v437
      %v494 = vmax.f32 %v381, %v439
      %v495 = vmax.f32 %v382, %v438
      %v496 = vmax.f32 %v383, %v442
      %v497 = vmax.f32 %v384, %v444
      %v498 = vmax.f32 %v385, %v443
      %v499 = vmax.f32 %v386, %v447
      %v500 = vmax.f32 %v387, %v449
      %v501 = vmax.f32 %v388, %v448
      %v502 = vmax.f32 %v389, %v452
      %v503 = vmax.f32 %v390, %v454
      %v504 = vmax.f32 %v391, %v453
      %v505 = vmax.f32 %v392, %v457
      %v506 = vmax.f32 %v393, %v459
      %v507 = vmax.f32 %v394, %v458
      %v508 = vmax.f32 %v484, 0.0
      %v509 = vmax.f32 %v485, 0.0
      %v510 = vmax.f32 %v486, 0.0
      %v511 = vmax.f32 %v487, 0.0
      %v512 = vmax.f32 %v488, 0.0
      %v513 = vmax.f32 %v489, 0.0
      %v514 = vmax.f32 %v490, 0.0
      %v515 = vmax.f32 %v491, 0.0
      %v516 = vmax.f32 %v492, 0.0
      %v517 = vmax.f32 %v493, 0.0
      %v518 = vmax.f32 %v494, 0.0
      %v519 = vmax.f32 %v495, 0.0
      %v520 = vmax.f32 %v496, 0.0
      %v521 = vmax.f32 %v497, 0.0
      %v522 = vmax.f32 %v498, 0.0
      %v523 = vmax.f32 %v499, 0.0
      %v524 = vmax.f32 %v500, 0.0
      %v525 = vmax.f32 %v501, 0.0
      %v526 = vmax.f32 %v502, 0.0
      %v527 = vmax.f32 %v503, 0.0
      %v528 = vmax.f32 %v504, 0.0
      %v529 = vmax.f32 %v505, 0.0
      %v530 = vmax.f32 %v506, 0.0
      %v531 = vmax.f32 %v507, 0.0
      %532 = vst [vmem:[%s170 - $0x2] sm:$0xfc] %v508
      %533 = vst [vmem:[%s170 + $0x6] sm:$0xff] %v509
      %534 = vst [vmem:[%s170 + $0xe] sm:$0x3] %v510
      %535 = vst [vmem:[%s170 + $0xe] sm:$0xfc] %v511
      %536 = vst [vmem:[%s170 + $0x16] sm:$0xff] %v512
      %537 = vst [vmem:[%s170 + $0x1e] sm:$0x3] %v513
      %538 = vst [vmem:[%s170 + $0x1e] sm:$0xfc] %v514
      %539 = vst [vmem:[%s170 + $0x26] sm:$0xff] %v515
      %540 = vst [vmem:[%s170 + $0x2e] sm:$0x3] %v516
      %541 = vst [vmem:[%s170 + $0x2e] sm:$0xfc] %v517
      %542 = vst [vmem:[%s170 + $0x36] sm:$0xff] %v518
      %543 = vst [vmem:[%s170 + $0x3e] sm:$0x3] %v519
      %544 = vst [vmem:[%s170 + $0x3e] sm:$0xfc] %v520
      %545 = vst [vmem:[%s170 + $0x46] sm:$0xff] %v521
      %546 = vst [vmem:[%s170 + $0x4e] sm:$0x3] %v522
      %547 = vst [vmem:[%s170 + $0x4e] sm:$0xfc] %v523
      %548 = vst [vmem:[%s170 + $0x56] sm:$0xff] %v524
      %549 = vst [vmem:[%s170 + $0x5e] sm:$0x3] %v525
      %550 = vst [vmem:[%s170 + $0x5e] sm:$0xfc] %v526
      %551 = vst [vmem:[%s170 + $0x66] sm:$0xff] %v527
      %552 = vst [vmem:[%s170 + $0x6e] sm:$0x3] %v528
      %553 = vst [vmem:[%s170 + $0x6e] sm:$0xfc] %v529
      %554 = vst [vmem:[%s170 + $0x76] sm:$0xff] %v530
      %555 = vst [vmem:[%s170 + $0x7e] sm:$0x3] %v531
      %p556 = scmp.lt.s32.totalorder %s14, 1
      %s557 = scalar_select %p556, %s14, 1
      %s558 = smul.addr %s557, 16
      %s559 = smul.addr %s558, 8
      %s560 = scalar_lea.vmem %s3, %s559
      // Predicated region
      $region33: #{conv_block2.5} parent=31 // pred_check
        %p561 = pneg %p100
      $region34: #{conv_block2.5} parent=31 // pred_check_branch
        %563 = sbr.rel (%p561) target = $region36
      $region35: #{conv_block2.5} parent=31 // pred_region
        _
      $region36: #{conv_block2.5} parent=31 // pred_fallthru
        _
    $region32: #{conv_block2.5} parent=5 // pred_fallthru
      _
    %p564 = scmp.le.s32.totalorder 2, %s9
    // Predicated region
    $region37: #{conv_block2.5} parent=5 // pred_check
      %p565 = pneg %p564
    $region38: #{conv_block2.5} parent=5 // pred_check_branch
      %567 = sbr.rel (%p565) target = $region40
    $region39: #{conv_block2.5} parent=5 // pred_region
      %s568 = ssub.s32 %s9, 2
      // Predicated region
      $region41: #{conv_block2.5} parent=39 // pred_check
        %p569 = pneg %p106
      $region42: #{conv_block2.5} parent=39 // pred_check_branch
        %571 = sbr.rel (%p569) target = $region44
      $region43: #{conv_block2.5} parent=39 // pred_region
        %p572 = scmp.lt.s32.totalorder %s15, 1
        %s573 = scalar_select %p572, %s15, 1
        %s574 = smul.addr %s573, 16
        %s575 = smul.addr %s574, 8
        %s576 = scalar_lea.vmem %s3, %s575
      $region44: #{conv_block2.5} parent=39 // pred_fallthru
        _
    $region40: #{conv_block2.5} parent=5 // pred_fallthru
      _
  $region6: #{conv_block2.5} parent=0 // loop_footer
    %s13 = sadd.s32 1, %s9
  $region7: #{conv_block2.5} parent=0 // loop_footer_branch
    %8 = sbr.rel target = $region3
  $region8: #{conv_block2.5} parent=0 // loop_exit
    _

// kernel: conv_block2.3
$region0: #{conv_block2.3}
  #allocation0 [shape = 'u32[]', space=smem, size = 0x4, offset = 0x4, fixed_abs, tag = 'smem constant byte address 0x4 - core index']
  #allocation1 [shape = 'u32[72,128]{1,0:T(1,128)}', space=vmem, size = 0x9000, scoped, tag = 'internal scratch']
  %s0 = inlined_call_operand.vmem [shape: bf16[2,480,16], index: 0, kind: input, shape index: {}]
  %s1 = inlined_call_operand.vmem [shape: f32[1,128], index: 1, kind: input, shape index: {}]
  %s2 = inlined_call_operand.vmem [shape: bf16[9,16,128], index: 2, kind: input, shape index: {}]
  %s3 = inlined_call_operand.vmem [shape: bf16[2,480,128], index: 3, kind: output, shape index: {0}]
  %s4 = inlined_call_operand.vmem [shape: f32[2,1,128], index: 4, kind: output, shape index: {1}]
  %s5 = inlined_call_operand.vmem [shape: f32[2,1,128], index: 5, kind: output, shape index: {2}]
  %6 = xla_tuple %s3, %s4, %s5
  %s7 = sld [smem:[#allocation0]]
  $region61: #{conv_block2.3} parent=0
    _
  %s9 = ssub.s32 1, %s7
  %s10 = scalar_select 0, %s9, %s7
  loop: start=0, step=1, limit=4
  $region2: #{conv_block2.3} parent=0 // loop_pre_header
    _
  $region3: #{conv_block2.3} parent=0 // loop_header
    %s12 = sphi 0, %s16
    %p13 = scmp.ge.s32.totalorder %s12, 4
    %s22 = sphi 0, %s24
    %s25 = sphi 0, %s22
    %s26 = sphi 0, %s25
    %s42 = sphi 0, %s26
    %s46 = sphi 0, %s46
    %s48 = sphi 0, %s46
    %s49 = sphi 0, %s48
    %s63 = sphi 0, %s49
    %s67 = sphi 0, %s67
    %s69 = sphi 0, %s67
    %s70 = sphi 0, %s69
    %s84 = sphi 0, %s70
    %s90 = sphi 0, %s92
    %s93 = sphi 0, %s90
    %s94 = sphi 0, %s93
    %s110 = sphi 0, %s94
    %s116 = sphi 0, %s118
    %s119 = sphi 0, %s116
    %s120 = sphi 0, %s119
    %s136 = sphi 0, %s120
    %s142 = sphi 0, %s144
    %s145 = sphi 0, %s142
    %s146 = sphi 0, %s145
    %s162 = sphi 0, %s146
  $region4: #{conv_block2.3} parent=0 // loop_header_branch
    %15 = sbr.rel (%p13) target = $region8
  $region5: #{conv_block2.3} parent=0 // loop_body
    %s17 = ssub.s32 %s12, 1
    %s18 = ssub.s32 %s12, 2
    %s19 = sadd.s32 %s12, 1
    %s20 = ssub.s32 %s12, %s19
    %p21 = scmp.eq.s32.totalorder %s20, 0
    %s23 = sadd.s32 %s22, 1
    %s24 = scalar_select %p21, %s22, %s23
    %p27 = pneg %p21
    %p28 = scmp.eq.s32.totalorder %s12, 1
    %p29 = por %p27, %p28
    %p30 = scmp.ne.s32.totalorder %s22, %s25
    %p31 = scmp.eq.s32.totalorder %s12, 0
    %p32 = por %p30, %p31
    %p33 = scmp.ne.s32.totalorder %s22, %s25
    %p34 = scmp.eq.s32.totalorder %s17, 1
    %p35 = por %p33, %p34
    %p36 = scmp.ne.s32.totalorder %s25, %s26
    %p37 = scmp.eq.s32.totalorder %s17, 0
    %p38 = por %p36, %p37
    %p39 = scmp.ne.s32.totalorder %s25, %s26
    %p40 = scmp.eq.s32.totalorder %s18, 1
    %p41 = por %p39, %p40
    %p43 = scmp.ne.s32.totalorder %s26, %s42
    %p44 = scmp.eq.s32.totalorder %s18, 0
    %p45 = por %p43, %p44
    %s47 = sadd.s32 %s46, 1
    %p50 = scmp.eq.s32.totalorder %s12, 1
    %p51 = scmp.ne.s32.totalorder %s46, %s48
    %p52 = scmp.eq.s32.totalorder %s12, 0
    %p53 = por %p51, %p52
    %p54 = scmp.ne.s32.totalorder %s46, %s48
    %p55 = scmp.eq.s32.totalorder %s17, 1
    %p56 = por %p54, %p55
    %p57 = scmp.ne.s32.totalorder %s48, %s49
    %p58 = scmp.eq.s32.totalorder %s17, 0
    %p59 = por %p57, %p58
    %p60 = scmp.ne.s32.totalorder %s48, %s49
    %p61 = scmp.eq.s32.totalorder %s18, 1
    %p62 = por %p60, %p61
    %p64 = scmp.ne.s32.totalorder %s49, %s63
    %p65 = scmp.eq.s32.totalorder %s18, 0
    %p66 = por %p64, %p65
    %s68 = sadd.s32 %s67, 1
    %p71 = scmp.eq.s32.totalorder %s12, 1
    %p72 = scmp.ne.s32.totalorder %s67, %s69
    %p73 = scmp.eq.s32.totalorder %s12, 0
    %p74 = por %p72, %p73
    %p75 = scmp.ne.s32.totalorder %s67, %s69
    %p76 = scmp.eq.s32.totalorder %s17, 1
    %p77 = por %p75, %p76
    %p78 = scmp.ne.s32.totalorder %s69, %s70
    %p79 = scmp.eq.s32.totalorder %s17, 0
    %p80 = por %p78, %p79
    %p81 = scmp.ne.s32.totalorder %s69, %s70
    %p82 = scmp.eq.s32.totalorder %s18, 1
    %p83 = por %p81, %p82
    %p85 = scmp.ne.s32.totalorder %s70, %s84
    %p86 = scmp.eq.s32.totalorder %s18, 0
    %p87 = por %p85, %p86
    %s88 = ssub.s32 %s12, %s19
    %p89 = scmp.eq.s32.totalorder %s88, 0
    %s91 = sadd.s32 %s90, 1
    %s92 = scalar_select %p89, %s90, %s91
    %p95 = pneg %p89
    %p96 = scmp.eq.s32.totalorder %s12, 1
    %p97 = por %p95, %p96
    %p98 = scmp.ne.s32.totalorder %s90, %s93
    %p99 = scmp.eq.s32.totalorder %s12, 0
    %p100 = por %p98, %p99
    %p101 = scmp.ne.s32.totalorder %s90, %s93
    %p102 = scmp.eq.s32.totalorder %s17, 1
    %p103 = por %p101, %p102
    %p104 = scmp.ne.s32.totalorder %s93, %s94
    %p105 = scmp.eq.s32.totalorder %s17, 0
    %p106 = por %p104, %p105
    %p107 = scmp.ne.s32.totalorder %s93, %s94
    %p108 = scmp.eq.s32.totalorder %s18, 1
    %p109 = por %p107, %p108
    %p111 = scmp.ne.s32.totalorder %s94, %s110
    %p112 = scmp.eq.s32.totalorder %s18, 0
    %p113 = por %p111, %p112
    %s114 = ssub.s32 %s12, %s19
    %p115 = scmp.eq.s32.totalorder %s114, 0
    %s117 = sadd.s32 %s116, 1
    %s118 = scalar_select %p115, %s116, %s117
    %p121 = pneg %p115
    %p122 = scmp.eq.s32.totalorder %s12, 1
    %p123 = por %p121, %p122
    %p124 = scmp.ne.s32.totalorder %s116, %s119
    %p125 = scmp.eq.s32.totalorder %s12, 0
    %p126 = por %p124, %p125
    %p127 = scmp.ne.s32.totalorder %s116, %s119
    %p128 = scmp.eq.s32.totalorder %s17, 1
    %p129 = por %p127, %p128
    %p130 = scmp.ne.s32.totalorder %s119, %s120
    %p131 = scmp.eq.s32.totalorder %s17, 0
    %p132 = por %p130, %p131
    %p133 = scmp.ne.s32.totalorder %s119, %s120
    %p134 = scmp.eq.s32.totalorder %s18, 1
    %p135 = por %p133, %p134
    %p137 = scmp.ne.s32.totalorder %s120, %s136
    %p138 = scmp.eq.s32.totalorder %s18, 0
    %p139 = por %p137, %p138
    %s140 = ssub.s32 %s12, %s19
    %p141 = scmp.eq.s32.totalorder %s140, 0
    %s143 = sadd.s32 %s142, 1
    %s144 = scalar_select %p141, %s142, %s143
    %p147 = pneg %p141
    %p148 = scmp.eq.s32.totalorder %s12, 1
    %p149 = por %p147, %p148
    %p150 = scmp.ne.s32.totalorder %s142, %s145
    %p151 = scmp.eq.s32.totalorder %s12, 0
    %p152 = por %p150, %p151
    %p153 = scmp.ne.s32.totalorder %s142, %s145
    %p154 = scmp.eq.s32.totalorder %s17, 1
    %p155 = por %p153, %p154
    %p156 = scmp.ne.s32.totalorder %s145, %s146
    %p157 = scmp.eq.s32.totalorder %s17, 0
    %p158 = por %p156, %p157
    %p159 = scmp.ne.s32.totalorder %s145, %s146
    %p160 = scmp.eq.s32.totalorder %s18, 1
    %p161 = por %p159, %p160
    %p163 = scmp.ne.s32.totalorder %s146, %s162
    %p164 = scmp.eq.s32.totalorder %s18, 0
    %p165 = por %p163, %p164
    %p166 = scmp.le.s32.totalorder 1, %s12
    %p167 = scmp.lt.s32.totalorder %s12, 3
    %p168 = pnand %p166, %p167
    %p169 = pneg %p168
    // Predicated region
    $region9: #{conv_block2.3} parent=5 // pred_check
      _
    $region10: #{conv_block2.3} parent=5 // pred_check_branch
      %171 = sbr.rel (%p168) target = $region12
    $region11: #{conv_block2.3} parent=5 // pred_region
      %s172 = ssub.s32 %s12, 1
      // Predicated region
      $region13: #{conv_block2.3} parent=11 // pred_check
        %p173 = pneg %p59
      $region14: #{conv_block2.3} parent=11 // pred_check_branch
        %175 = sbr.rel (%p173) target = $region16
      $region15: #{conv_block2.3} parent=11 // pred_region
        _
      $region16: #{conv_block2.3} parent=11 // pred_fallthru
        _
      // Predicated region
      $region17: #{conv_block2.3} parent=11 // pred_check
        %p176 = pneg %p80
      $region18: #{conv_block2.3} parent=11 // pred_check_branch
        %178 = sbr.rel (%p176) target = $region20
      $region19: #{conv_block2.3} parent=11 // pred_region
        _
      $region20: #{conv_block2.3} parent=11 // pred_fallthru
        _
    $region12: #{conv_block2.3} parent=5 // pred_fallthru
      _
    %p179 = scmp.lt.s32.totalorder %s12, 2
    // Predicated region
    $region21: #{conv_block2.3} parent=5 // pred_check
      %p180 = pneg %p179
    $region22: #{conv_block2.3} parent=5 // pred_check_branch
      %182 = sbr.rel (%p180) target = $region24
    $region23: #{conv_block2.3} parent=5 // pred_region
      // Predicated region
      $region25: #{conv_block2.3} parent=23 // pred_check
        %p183 = pneg %p32
      $region26: #{conv_block2.3} parent=23 // pred_check_branch
        %185 = sbr.rel (%p183) target = $region28
      $region27: #{conv_block2.3} parent=23 // pred_region
        %p186 = scmp.lt.s32.totalorder %s12, 1
        %s187 = scalar_select %p186, %s12, 1
        %s188 = smul.addr %s187, 60
        %s189 = smul.addr %s188, 4
        %s190 = scalar_lea.vmem %s0, %s189
      $region28: #{conv_block2.3} parent=23 // pred_fallthru
        _
    $region24: #{conv_block2.3} parent=5 // pred_fallthru
      _
    %p191 = scmp.le.s32.totalorder 1, %s12
    %p192 = scmp.lt.s32.totalorder %s12, 3
    %p193 = pnand %p191, %p192
    %p194 = pneg %p193
    // Predicated region
    $region29: #{conv_block2.3} parent=5 // pred_check
      _
    $region30: #{conv_block2.3} parent=5 // pred_check_branch
      %196 = sbr.rel (%p193) target = $region32
    $region31: #{conv_block2.3} parent=5 // pred_region
      %s197 = ssub.s32 %s12, 1
      %p198 = scmp.lt.s32.totalorder %s17, 1
      %s199 = scalar_select %p198, %s17, 1
      %s200 = smul.addr %s199, 60
      %s201 = smul.addr %s200, 4
      %s202 = scalar_lea.vmem %s0, %s201
      %p203 = pneg %p38
      %p204 = pneg %p35
      %p205 = pneg %p59
      %p206 = pneg %p56
      %p207 = pneg %p80
      %p208 = pneg %p77
      %p209 = pneg %p106
      %p210 = pneg %p103
      %p211 = scmp.lt.s32.totalorder %s17, 1
      %s212 = scalar_select %p211, %s17, 1
      %s213 = smul.addr %s212, 60
      %s214 = smul.addr %s213, 4
      %s215 = scalar_lea.vmem %s3, %s214
      %p216 = pneg %p132
      %p217 = pneg %p129
      %p218 = scmp.lt.s32.totalorder %s17, 1
      %s219 = scalar_select %p218, %s17, 1
      %s220 = scalar_lea.vmem %s4, %s219
      %p221 = pneg %p158
      %p222 = pneg %p155
      %p223 = scmp.lt.s32.totalorder %s17, 1
      %s224 = scalar_select %p223, %s17, 1
      %s225 = scalar_lea.vmem %s5, %s224
      %p226 = scmp.lt.s32.totalorder %s17, 1
      %s227 = scalar_select %p226, %s17, 1
      %s228 = smul.addr %s227, 60
      %s229 = smul.addr %s228, 4
      %s230 = scalar_lea.vmem %s0, %s229
      %p231 = scmp.lt.s32.totalorder %s17, 1
      %s232 = scalar_select %p231, %s17, 1
      %s233 = smul.addr %s232, 60
      %s234 = smul.addr %s233, 4
      %s235 = scalar_lea.vmem %s3, %s234
      %p236 = scmp.lt.s32.totalorder %s17, 1
      %s237 = scalar_select %p236, %s17, 1
      %s238 = scalar_lea.vmem %s4, %s237
      %p239 = scmp.lt.s32.totalorder %s17, 1
      %s240 = scalar_select %p239, %s17, 1
      %s241 = scalar_lea.vmem %s5, %s240
      %v243 = vld [vmem:[%s230 + $0x8] sm:$0x8]
      %v244 = vld [vmem:[%s230 + $0xc] sm:$0xf]
      %v245 = vld [vmem:[%s230 + $0x10] sm:$0xf]
      %v246 = vld [vmem:[%s230 + $0x14] sm:$0xf]
      %v247 = vld [vmem:[%s230 + $0x18] sm:$0xf]
      %v248 = vld [vmem:[%s230 + $0x1c] sm:$0xf]
      %v249 = vld [vmem:[%s230 + $0x20] sm:$0xf]
      %v250 = vld [vmem:[%s230 + $0x24] sm:$0xf]
      %v251 = vld [vmem:[%s230 + $0x28] sm:$0xf]
      %v252 = vld [vmem:[%s230 + $0x2c] sm:$0xf]
      %v253 = vld [vmem:[%s230 + $0x30] sm:$0xf]
      %v254 = vld [vmem:[%s230 + $0x34] sm:$0xf]
      %v255 = vld [vmem:[%s230 + $0x38] sm:$0xf]
      %v256 = vld [vmem:[%s230 + $0x3c] sm:$0xf]
      %v257 = vld [vmem:[%s230 + $0x40] sm:$0xf]
      %v258 = vld [vmem:[%s230 + $0x44] sm:$0xf]
      %v259 = vld [vmem:[%s230 + $0x48] sm:$0xf]
      %v260 = vld [vmem:[%s230 + $0x4c] sm:$0xf]
      %v261 = vld [vmem:[%s230 + $0x50] sm:$0xf]
      %v262 = vld [vmem:[%s230 + $0x54] sm:$0xf]
      %v263 = vld [vmem:[%s230 + $0x58] sm:$0xf]
      %v264 = vld [vmem:[%s230 + $0x5c] sm:$0xf]
      %v265 = vld [vmem:[%s230 + $0x60] sm:$0xf]
      %v266 = vld [vmem:[%s230 + $0x64] sm:$0xf]
      %v267 = vld [vmem:[%s230 + $0x68] sm:$0xf]
      %v268 = vld [vmem:[%s230 + $0x6c] sm:$0xf]
      %v269 = vld [vmem:[%s230 + $0x70] sm:$0xf]
      %v270 = vld [vmem:[%s230 + $0x74] sm:$0xf]
      %v271 = vld [vmem:[%s230 + $0x78] sm:$0xf]
      %v272 = vld [vmem:[%s230 + $0x7c] sm:$0xf]
      %v273 = vld [vmem:[%s230 + $0x80] sm:$0xf]
      %v274 = vld [vmem:[%s230 + $0x84] sm:$0xf]
      %v275 = vld [vmem:[%s230 + $0x88] sm:$0xf]
      %v276 = vld [vmem:[%s230 + $0x8c] sm:$0xf]
      %v277 = vld [vmem:[%s230 + $0x90] sm:$0xf]
      %v278 = vld [vmem:[%s230 + $0x94] sm:$0xf]
      %v279 = vld [vmem:[%s230 + $0x98] sm:$0xf]
      %v280 = vld [vmem:[%s230 + $0x9c] sm:$0xf]
      %v281 = vld [vmem:[%s230 + $0xa0] sm:$0xf]
      %v282 = vld [vmem:[%s230 + $0xa4] sm:$0xf]
      %v283 = vld [vmem:[%s230 + $0xa8] sm:$0xf]
      %v284 = vld [vmem:[%s230 + $0xac] sm:$0xf]
      %v285 = vld [vmem:[%s230 + $0xb0] sm:$0xf]
      %v286 = vld [vmem:[%s230 + $0xb4] sm:$0xf]
      %v287 = vld [vmem:[%s230 + $0xb8] sm:$0xf]
      %v288 = vld [vmem:[%s230 + $0xbc] sm:$0xf]
      %v289 = vld [vmem:[%s230 + $0xc0] sm:$0xf]
      %v290 = vld [vmem:[%s230 + $0xc4] sm:$0xf]
      %v291 = vld [vmem:[%s230 + $0xc8] sm:$0xf]
      %v292 = vld [vmem:[%s2] sm:$0xf]
      %v293 = vld [vmem:[%s2 + $0x4] sm:$0xf]
      %s294 = scalar_lea.vmem %s2, 8
      %v295 = vld [vmem:[%s294] sm:$0xf]
      %v296 = vld [vmem:[%s294 + $0x4] sm:$0xf]
      %v345 = vunpack.c.l.b16 %v244
      %v346 = vunpack.c.l.b16 %v245
      %v347 = vunpack.c.l.b16 %v246
      %v348 = vunpack.c.l.b16 %v247
      %v349 = vunpack.c.l.b16 %v248
      %v350 = vunpack.c.l.b16 %v249
      %v351 = vunpack.c.l.b16 %v250
      %v352 = vunpack.c.l.b16 %v251
      %v353 = vunpack.c.l.b16 %v252
      %v354 = vunpack.c.l.b16 %v253
      %v355 = vunpack.c.l.b16 %v254
      %v356 = vunpack.c.l.b16 %v255
      %v357 = vunpack.c.l.b16 %v256
      %v358 = vunpack.c.l.b16 %v257
      %v359 = vunpack.c.l.b16 %v258
      %v360 = vunpack.c.l.b16 %v259
      %v361 = vunpack.c.l.b16 %v260
      %v362 = vunpack.c.l.b16 %v261
      %v363 = vunpack.c.l.b16 %v262
      %v364 = vunpack.c.l.b16 %v263
      %v365 = vunpack.c.l.b16 %v264
      %v366 = vunpack.c.l.b16 %v265
      %v367 = vunpack.c.l.b16 %v266
      %v368 = vunpack.c.l.b16 %v267
      %v369 = vunpack.c.l.b16 %v268
      %v370 = vunpack.c.l.b16 %v269
      %v371 = vunpack.c.l.b16 %v270
      %v372 = vunpack.c.l.b16 %v271
      %v373 = vunpack.c.l.b16 %v272
      %v374 = vunpack.c.l.b16 %v273
      %v375 = vunpack.c.l.b16 %v274
      %v376 = vunpack.c.l.b16 %v275
      %v377 = vunpack.c.l.b16 %v276
      %v378 = vunpack.c.l.b16 %v277
      %v379 = vunpack.c.l.b16 %v278
      %v380 = vunpack.c.l.b16 %v279
      %v381 = vunpack.c.l.b16 %v280
      %v382 = vunpack.c.l.b16 %v281
      %v383 = vunpack.c.l.b16 %v282
      %v384 = vunpack.c.l.b16 %v283
      %v385 = vunpack.c.l.b16 %v284
      %v386 = vunpack.c.l.b16 %v285
      %v387 = vunpack.c.l.b16 %v286
      %v388 = vunpack.c.l.b16 %v287
      %v389 = vunpack.c.l.b16 %v288
      %v390 = vunpack.c.l.b16 %v289
      %v391 = vunpack.c.l.b16 %v290
      %v392 = vunpack.c.l.b16 %v291
      %v393 = vpack.c.b16 %v346, %v345
      %v394 = vpack.c.b16 %v348, %v347
      %v395 = vpack.c.b16 %v350, %v349
      %v396 = vpack.c.b16 %v352, %v351
      %v397 = vpack.c.b16 %v354, %v353
      %v398 = vpack.c.b16 %v356, %v355
      %v399 = vpack.c.b16 %v358, %v357
      %v400 = vpack.c.b16 %v360, %v359
      %v401 = vpack.c.b16 %v362, %v361
      %v402 = vpack.c.b16 %v364, %v363
      %v403 = vpack.c.b16 %v366, %v365
      %v404 = vpack.c.b16 %v368, %v367
      %v405 = vpack.c.b16 %v370, %v369
      %v406 = vpack.c.b16 %v372, %v371
      %v407 = vpack.c.b16 %v374, %v373
      %v408 = vpack.c.b16 %v376, %v375
      %v409 = vpack.c.b16 %v378, %v377
      %v410 = vpack.c.b16 %v380, %v379
      %v411 = vpack.c.b16 %v382, %v381
      %v412 = vpack.c.b16 %v384, %v383
      %v413 = vpack.c.b16 %v386, %v385
      %v414 = vpack.c.b16 %v388, %v387
      %v415 = vpack.c.b16 %v390, %v389
      %v416 = vpack.c.b16 %v392, %v391
      %v419 = vunpack.c.l.b16 %v295
      %v420 = vunpack.c.l.b16 %v296
      %v421 = vpack.c.b16 %v420, %v419
      %vm423 = vcmask 130048
      %v425 = vsel %vm423, %v393, 0
      %v428 = vsel %vm423, %v394, 0
      %v431 = vsel %vm423, %v395, 0
      %v434 = vsel %vm423, %v396, 0
      %v437 = vsel %vm423, %v397, 0
      %v440 = vsel %vm423, %v398, 0
      %v443 = vsel %vm423, %v399, 0
      %v446 = vsel %vm423, %v400, 0
      %v449 = vsel %vm423, %v401, 0
      %v452 = vsel %vm423, %v402, 0
      %v455 = vsel %vm423, %v403, 0
      %v458 = vsel %vm423, %v404, 0
      %v461 = vsel %vm423, %v405, 0
      %v464 = vsel %vm423, %v406, 0
      %v467 = vsel %vm423, %v407, 0
      %v470 = vsel %vm423, %v408, 0
      %v473 = vsel %vm423, %v409, 0
      %v476 = vsel %vm423, %v410, 0
      %v479 = vsel %vm423, %v411, 0
      %v482 = vsel %vm423, %v412, 0
      %v485 = vsel %vm423, %v413, 0
      %v488 = vsel %vm423, %v414, 0
      %v491 = vsel %vm423, %v415, 0
      %v494 = vsel %vm423, %v416, 0
      %496 = vmatpush.bf16.msra.mxu0 0
      %497 = vmatpush.bf16.msra.mxu0 0
      %498 = vmatpush.bf16.msra.mxu0 0
      %499 = vmatpush.bf16.msra.mxu0 0
      %500 = vmatpush.bf16.msra.mxu0 0
      %501 = vmatpush.bf16.msra.mxu0 0
      %502 = vmatpush.bf16.msra.mxu0 0
      %503 = vmatpush.bf16.msra.mxu0 %v421
      %504 = vmatmul.bf16.gmra.mxu0 %v425
      %v505 = vpop.f32.mrf.mxu0
      %v506 = vadd.f32 0.0, %v505
      %v507 = vpop.f32.mrf.mxu0
      %v508 = vadd.f32 0.0, %v507
      %509 = vmatmul.bf16.gmra.mxu0 %v428
      %v510 = vpop.f32.mrf.mxu0
      %v511 = vadd.f32 0.0, %v510
      %v512 = vpop.f32.mrf.mxu0
      %v513 = vadd.f32 0.0, %v512
      %514 = vmatmul.bf16.gmra.mxu0 %v431
      %v515 = vpop.f32.mrf.mxu0
      %v516 = vadd.f32 0.0, %v515
      %v517 = vpop.f32.mrf.mxu0
      %v518 = vadd.f32 0.0, %v517
      %519 = vmatmul.bf16.gmra.mxu0 %v434
      %v520 = vpop.f32.mrf.mxu0
      %v521 = vadd.f32 0.0, %v520
      %v522 = vpop.f32.mrf.mxu0
      %v523 = vadd.f32 0.0, %v522
      %524 = vmatmul.bf16.gmra.mxu0 %v437
      %v525 = vpop.f32.mrf.mxu0
      %v526 = vadd.f32 0.0, %v525
      %v527 = vpop.f32.mrf.mxu0
      %v528 = vadd.f32 0.0, %v527
      %529 = vmatmul.bf16.gmra.mxu0 %v440
      %v530 = vpop.f32.mrf.mxu0
      %v531 = vadd.f32 0.0, %v530
      %v532 = vpop.f32.mrf.mxu0
      %v533 = vadd.f32 0.0, %v532
      %534 = vmatmul.bf16.gmra.mxu0 %v443
      %v535 = vpop.f32.mrf.mxu0
      %v536 = vadd.f32 0.0, %v535
      %v537 = vpop.f32.mrf.mxu0
      %v538 = vadd.f32 0.0, %v537
      %539 = vmatmul.bf16.gmra.mxu0 %v446
      %v540 = vpop.f32.mrf.mxu0
      %v541 = vadd.f32 0.0, %v540
      %v542 = vpop.f32.mrf.mxu0
      %v543 = vadd.f32 0.0, %v542
      %544 = vmatmul.bf16.gmra.mxu0 %v449
      %v545 = vpop.f32.mrf.mxu0
      %v546 = vadd.f32 0.0, %v545
      %v547 = vpop.f32.mrf.mxu0
      %v548 = vadd.f32 0.0, %v547
      %549 = vmatmul.bf16.gmra.mxu0 %v452
      %v550 = vpop.f32.mrf.mxu0
      %v551 = vadd.f32 0.0, %v550
      %v552 = vpop.f32.mrf.mxu0
      %v553 = vadd.f32 0.0, %v552
      %554 = vmatmul.bf16.gmra.mxu0 %v455
      %v555 = vpop.f32.mrf.mxu0
      %v556 = vadd.f32 0.0, %v555
      %v557 = vpop.f32.mrf.mxu0
      %v558 = vadd.f32 0.0, %v557
      %559 = vmatmul.bf16.gmra.mxu0 %v458
      %v560 = vpop.f32.mrf.mxu0
      %v561 = vadd.f32 0.0, %v560
      %v562 = vpop.f32.mrf.mxu0
      %v563 = vadd.f32 0.0, %v562
      %564 = vmatmul.bf16.gmra.mxu0 %v461
      %v565 = vpop.f32.mrf.mxu0
      %v566 = vadd.f32 0.0, %v565
      %v567 = vpop.f32.mrf.mxu0
      %v568 = vadd.f32 0.0, %v567
      %569 = vmatmul.bf16.gmra.mxu0 %v464
      %v570 = vpop.f32.mrf.mxu0
      %v571 = vadd.f32 0.0, %v570
      %v572 = vpop.f32.mrf.mxu0
      %v573 = vadd.f32 0.0, %v572
      %574 = vmatmul.bf16.gmra.mxu0 %v467
      %v575 = vpop.f32.mrf.mxu0
      %v576 = vadd.f32 0.0, %v575
      %v577 = vpop.f32.mrf.mxu0
      %v578 = vadd.f32 0.0, %v577
      %579 = vmatmul.bf16.gmra.mxu0 %v470
      %v580 = vpop.f32.mrf.mxu0
      %v581 = vadd.f32 0.0, %v580
      %v582 = vpop.f32.mrf.mxu0
      %v583 = vadd.f32 0.0, %v582
      %584 = vmatmul.bf16.gmra.mxu0 %v473
      %v585 = vpop.f32.mrf.mxu0
      %v586 = vadd.f32 0.0, %v585
      %v587 = vpop.f32.mrf.mxu0
      %v588 = vadd.f32 0.0, %v587
      %589 = vmatmul.bf16.gmra.mxu0 %v476
      %v590 = vpop.f32.mrf.mxu0
      %v591 = vadd.f32 0.0, %v590
      %v592 = vpop.f32.mrf.mxu0
      %v593 = vadd.f32 0.0, %v592
      %594 = vmatmul.bf16.gmra.mxu0 %v479
      %v595 = vpop.f32.mrf.mxu0
      %v596 = vadd.f32 0.0, %v595
      %v597 = vpop.f32.mrf.mxu0
      %v598 = vadd.f32 0.0, %v597
      %599 = vmatmul.bf16.gmra.mxu0 %v482
      %v600 = vpop.f32.mrf.mxu0
      %v601 = vadd.f32 0.0, %v600
      %v602 = vpop.f32.mrf.mxu0
      %v603 = vadd.f32 0.0, %v602
      %604 = vmatmul.bf16.gmra.mxu0 %v485
      %v605 = vpop.f32.mrf.mxu0
      %v606 = vadd.f32 0.0, %v605
      %v607 = vpop.f32.mrf.mxu0
      %v608 = vadd.f32 0.0, %v607
      %609 = vmatmul.bf16.gmra.mxu0 %v488
      %v610 = vpop.f32.mrf.mxu0
      %v611 = vadd.f32 0.0, %v610
      %v612 = vpop.f32.mrf.mxu0
      %v613 = vadd.f32 0.0, %v612
      %614 = vmatmul.bf16.gmra.mxu0 %v491
      %v615 = vpop.f32.mrf.mxu0
      %v616 = vadd.f32 0.0, %v615
      %v617 = vpop.f32.mrf.mxu0
      %v618 = vadd.f32 0.0, %v617
      %619 = vmatmul.bf16.gmra.mxu0 %v494
      %v620 = vpop.f32.mrf.mxu0
      %v621 = vadd.f32 0.0, %v620
      %v622 = vpop.f32.mrf.mxu0
      %v623 = vadd.f32 0.0, %v622
      %624 = vdwg.mxu0
      %v626 = vunpack.c.l.b16 %v243
      %v627 = vpack.c.b16 %v345, %v626
      %v628 = vpack.c.b16 %v347, %v346
      %v629 = vpack.c.b16 %v349, %v348
      %v630 = vpack.c.b16 %v351, %v350
      %v631 = vpack.c.b16 %v353, %v352
      %v632 = vpack.c.b16 %v355, %v354
      %v633 = vpack.c.b16 %v357, %v356
      %v634 = vpack.c.b16 %v359, %v358
      %v635 = vpack.c.b16 %v361, %v360
      %v636 = vpack.c.b16 %v363, %v362
      %v637 = vpack.c.b16 %v365, %v364
      %v638 = vpack.c.b16 %v367, %v366
      %v639 = vpack.c.b16 %v369, %v368
      %v640 = vpack.c.b16 %v371, %v370
      %v641 = vpack.c.b16 %v373, %v372
      %v642 = vpack.c.b16 %v375, %v374
      %v643 = vpack.c.b16 %v377, %v376
      %v644 = vpack.c.b16 %v379, %v378
      %v645 = vpack.c.b16 %v381, %v380
      %v646 = vpack.c.b16 %v383, %v382
      %v647 = vpack.c.b16 %v385, %v384
      %v648 = vpack.c.b16 %v387, %v386
      %v649 = vpack.c.b16 %v389, %v388
      %v650 = vpack.c.b16 %v391, %v390
      %v651 = vpack.c.b16 %v392, %v392
      %vm652 = vsmask.f32 4352
      %v654 = vshrl.u32 %v627, 16
      %v656 = vrot.slane %v654, 3
      %v657 = vshll.u32 %v627, 16
      %v659 = vrot.slane %v657, 4
      %v660 = vor.u32 %v656, %v659
      %v662 = vshrl.u32 %v628, 16
      %v664 = vrot.slane %v662, 3
      %v665 = vshll.u32 %v628, 16
      %v667 = vrot.slane %v665, 4
      %v668 = vor.u32 %v664, %v667
      %v669 = vsel %vm652, %v660, %v668
      %v671 = vshrl.u32 %v629, 16
      %v673 = vrot.slane %v671, 3
      %v674 = vshll.u32 %v629, 16
      %v676 = vrot.slane %v674, 4
      %v677 = vor.u32 %v673, %v676
      %v678 = vsel %vm652, %v668, %v677
      %v680 = vshrl.u32 %v630, 16
      %v682 = vrot.slane %v680, 3
      %v683 = vshll.u32 %v630, 16
      %v685 = vrot.slane %v683, 4
      %v686 = vor.u32 %v682, %v685
      %v687 = vsel %vm652, %v677, %v686
      %v689 = vshrl.u32 %v631, 16
      %v691 = vrot.slane %v689, 3
      %v692 = vshll.u32 %v631, 16
      %v694 = vrot.slane %v692, 4
      %v695 = vor.u32 %v691, %v694
      %v696 = vsel %vm652, %v686, %v695
      %v698 = vshrl.u32 %v632, 16
      %v700 = vrot.slane %v698, 3
      %v701 = vshll.u32 %v632, 16
      %v703 = vrot.slane %v701, 4
      %v704 = vor.u32 %v700, %v703
      %v705 = vsel %vm652, %v695, %v704
      %v707 = vshrl.u32 %v633, 16
      %v709 = vrot.slane %v707, 3
      %v710 = vshll.u32 %v633, 16
      %v712 = vrot.slane %v710, 4
      %v713 = vor.u32 %v709, %v712
      %v714 = vsel %vm652, %v704, %v713
      %v716 = vshrl.u32 %v634, 16
      %v718 = vrot.slane %v716, 3
      %v719 = vshll.u32 %v634, 16
      %v721 = vrot.slane %v719, 4
      %v722 = vor.u32 %v718, %v721
      %v723 = vsel %vm652, %v713, %v722
      %v725 = vshrl.u32 %v635, 16
      %v727 = vrot.slane %v725, 3
      %v728 = vshll.u32 %v635, 16
      %v730 = vrot.slane %v728, 4
      %v731 = vor.u32 %v727, %v730
      %v732 = vsel %vm652, %v722, %v731
      %v734 = vshrl.u32 %v636, 16
      %v736 = vrot.slane %v734, 3
      %v737 = vshll.u32 %v636, 16
      %v739 = vrot.slane %v737, 4
      %v740 = vor.u32 %v736, %v739
      %v741 = vsel %vm652, %v731, %v740
      %v743 = vshrl.u32 %v637, 16
      %v745 = vrot.slane %v743, 3
      %v746 = vshll.u32 %v637, 16
      %v748 = vrot.slane %v746, 4
      %v749 = vor.u32 %v745, %v748
      %v750 = vsel %vm652, %v740, %v749
      %v752 = vshrl.u32 %v638, 16
      %v754 = vrot.slane %v752, 3
      %v755 = vshll.u32 %v638, 16
      %v757 = vrot.slane %v755, 4
      %v758 = vor.u32 %v754, %v757
      %v759 = vsel %vm652, %v749, %v758
      %v761 = vshrl.u32 %v639, 16
      %v763 = vrot.slane %v761, 3
      %v764 = vshll.u32 %v639, 16
      %v766 = vrot.slane %v764, 4
      %v767 = vor.u32 %v763, %v766
      %v768 = vsel %vm652, %v758, %v767
      %v770 = vshrl.u32 %v640, 16
      %v772 = vrot.slane %v770, 3
      %v773 = vshll.u32 %v640, 16
      %v775 = vrot.slane %v773, 4
      %v776 = vor.u32 %v772, %v775
      %v777 = vsel %vm652, %v767, %v776
      %v779 = vshrl.u32 %v641, 16
      %v781 = vrot.slane %v779, 3
      %v782 = vshll.u32 %v641, 16
      %v784 = vrot.slane %v782, 4
      %v785 = vor.u32 %v781, %v784
      %v786 = vsel %vm652, %v776, %v785
      %v788 = vshrl.u32 %v642, 16
      %v790 = vrot.slane %v788, 3
      %v791 = vshll.u32 %v642, 16
      %v793 = vrot.slane %v791, 4
      %v794 = vor.u32 %v790, %v793
      %v795 = vsel %vm652, %v785, %v794
      %v797 = vshrl.u32 %v643, 16
      %v799 = vrot.slane %v797, 3
      %v800 = vshll.u32 %v643, 16
      %v802 = vrot.slane %v800, 4
      %v803 = vor.u32 %v799, %v802
      %v804 = vsel %vm652, %v794, %v803
      %v806 = vshrl.u32 %v644, 16
      %v808 = vrot.slane %v806, 3
      %v809 = vshll.u32 %v644, 16
      %v811 = vrot.slane %v809, 4
      %v812 = vor.u32 %v808, %v811
      %v813 = vsel %vm652, %v803, %v812
      %v815 = vshrl.u32 %v645, 16
      %v817 = vrot.slane %v815, 3
      %v818 = vshll.u32 %v645, 16
      %v820 = vrot.slane %v818, 4
      %v821 = vor.u32 %v817, %v820
      %v822 = vsel %vm652, %v812, %v821
      %v824 = vshrl.u32 %v646, 16
      %v826 = vrot.slane %v824, 3
      %v827 = vshll.u32 %v646, 16
      %v829 = vrot.slane %v827, 4
      %v830 = vor.u32 %v826, %v829
      %v831 = vsel %vm652, %v821, %v830
      %v833 = vshrl.u32 %v647, 16
      %v835 = vrot.slane %v833, 3
      %v836 = vshll.u32 %v647, 16
      %v838 = vrot.slane %v836, 4
      %v839 = vor.u32 %v835, %v838
      %v840 = vsel %vm652, %v830, %v839
      %v842 = vshrl.u32 %v648, 16
      %v844 = vrot.slane %v842, 3
      %v845 = vshll.u32 %v648, 16
      %v847 = vrot.slane %v845, 4
      %v848 = vor.u32 %v844, %v847
      %v849 = vsel %vm652, %v839, %v848
      %v851 = vshrl.u32 %v649, 16
      %v853 = vrot.slane %v851, 3
      %v854 = vshll.u32 %v649, 16
      %v856 = vrot.slane %v854, 4
      %v857 = vor.u32 %v853, %v856
      %v858 = vsel %vm652, %v848, %v857
      %v860 = vshrl.u32 %v650, 16
      %v862 = vrot.slane %v860, 3
      %v863 = vshll.u32 %v650, 16
      %v865 = vrot.slane %v863, 4
      %v866 = vor.u32 %v862, %v865
      %v867 = vsel %vm652, %v857, %v866
      %v869 = vshrl.u32 %v651, 16
      %v871 = vrot.slane %v869, 3
      %v872 = vshll.u32 %v651, 16
      %v874 = vrot.slane %v872, 4
      %v875 = vor.u32 %v871, %v874
      %v876 = vsel %vm652, %v866, %v875
      %v879 = vunpack.c.l.b16 %v292
      %v880 = vunpack.c.l.b16 %v293
      %v881 = vpack.c.b16 %v880, %v879
      %v884 = vsel %vm423, %v669, 0
      %v887 = vsel %vm423, %v678, 0
      %v890 = vsel %vm423, %v687, 0
      %v893 = vsel %vm423, %v696, 0
      %v896 = vsel %vm423, %v705, 0
      %v899 = vsel %vm423, %v714, 0
      %v902 = vsel %vm423, %v723, 0
      %v905 = vsel %vm423, %v732, 0
      %v908 = vsel %vm423, %v741, 0
      %v911 = vsel %vm423, %v750, 0
      %v914 = vsel %vm423, %v759, 0
      %v917 = vsel %vm423, %v768, 0
      %v920 = vsel %vm423, %v777, 0
      %v923 = vsel %vm423, %v786, 0
      %v926 = vsel %vm423, %v795, 0
      %v929 = vsel %vm423, %v804, 0
      %v932 = vsel %vm423, %v813, 0
      %v935 = vsel %vm423, %v822, 0
      %v938 = vsel %vm423, %v831, 0
      %v941 = vsel %vm423, %v840, 0
      %v944 = vsel %vm423, %v849, 0
      %v947 = vsel %vm423, %v858, 0
      %v950 = vsel %vm423, %v867, 0
      %v953 = vsel %vm423, %v876, 0
      %955 = vmatpush.bf16.msra.mxu0 0
      %956 = vmatpush.bf16.msra.mxu0 0
      %957 = vmatpush.bf16.msra.mxu0 0
      %958 = vmatpush.bf16.msra.mxu0 0
      %959 = vmatpush.bf16.msra.mxu0 0
      %960 = vmatpush.bf16.msra.mxu0 0
      %961 = vmatpush.bf16.msra.mxu0 0
      %962 = vmatpush.bf16.msra.mxu0 %v881
      %963 = vmatmul.bf16.gmra.mxu0 %v884
      %v964 = vpop.f32.mrf.mxu0
      %v965 = vadd.f32 %v506, %v964
      %v966 = vpop.f32.mrf.mxu0
      %v967 = vadd.f32 %v508, %v966
      %968 = vmatmul.bf16.gmra.mxu0 %v887
      %v969 = vpop.f32.mrf.mxu0
      %v970 = vadd.f32 %v511, %v969
      %v971 = vpop.f32.mrf.mxu0
      %v972 = vadd.f32 %v513, %v971
      %973 = vmatmul.bf16.gmra.mxu0 %v890
      %v974 = vpop.f32.mrf.mxu0
      %v975 = vadd.f32 %v516, %v974
      %v976 = vpop.f32.mrf.mxu0
      %v977 = vadd.f32 %v518, %v976
      %978 = vmatmul.bf16.gmra.mxu0 %v893
      %v979 = vpop.f32.mrf.mxu0
      %v980 = vadd.f32 %v521, %v979
      %v981 = vpop.f32.mrf.mxu0
      %v982 = vadd.f32 %v523, %v981
      %983 = vmatmul.bf16.gmra.mxu0 %v896
      %v984 = vpop.f32.mrf.mxu0
      %v985 = vadd.f32 %v526, %v984
      %v986 = vpop.f32.mrf.mxu0
      %v987 = vadd.f32 %v528, %v986
      %988 = vmatmul.bf16.gmra.mxu0 %v899
      %v989 = vpop.f32.mrf.mxu0
      %v990 = vadd.f32 %v531, %v989
      %v991 = vpop.f32.mrf.mxu0
      %v992 = vadd.f32 %v533, %v991
      %993 = vmatmul.bf16.gmra.mxu0 %v902
      %v994 = vpop.f32.mrf.mxu0
      %v995 = vadd.f32 %v536, %v994
      %v996 = vpop.f32.mrf.mxu0
      %v997 = vadd.f32 %v538, %v996
      %998 = vmatmul.bf16.gmra.mxu0 %v905
      %v999 = vpop.f32.mrf.mxu0
      %v1000 = vadd.f32 %v541, %v999
      %v1001 = vpop.f32.mrf.mxu0
      %v1002 = vadd.f32 %v543, %v1001
      %1003 = vmatmul.bf16.gmra.mxu0 %v908
      %v1004 = vpop.f32.mrf.mxu0
      %v1005 = vadd.f32 %v546, %v1004
      %v1006 = vpop.f32.mrf.mxu0
      %v1007 = vadd.f32 %v548, %v1006
      %1008 = vmatmul.bf16.gmra.mxu0 %v911
      %v1009 = vpop.f32.mrf.mxu0
      %v1010 = vadd.f32 %v551, %v1009
      %v1011 = vpop.f32.mrf.mxu0
      %v1012 = vadd.f32 %v553, %v1011
      %1013 = vmatmul.bf16.gmra.mxu0 %v914
      %v1014 = vpop.f32.mrf.mxu0
      %v1015 = vadd.f32 %v556, %v1014
      %v1016 = vpop.f32.mrf.mxu0
      %v1017 = vadd.f32 %v558, %v1016
      %1018 = vmatmul.bf16.gmra.mxu0 %v917
      %v1019 = vpop.f32.mrf.mxu0
      %v1020 = vadd.f32 %v561, %v1019
      %v1021 = vpop.f32.mrf.mxu0
      %v1022 = vadd.f32 %v563, %v1021
      %1023 = vmatmul.bf16.gmra.mxu0 %v920
      %v1024 = vpop.f32.mrf.mxu0
      %v1025 = vadd.f32 %v566, %v1024
      %v1026 = vpop.f32.mrf.mxu0
      %v1027 = vadd.f32 %v568, %v1026
      %1028 = vmatmul.bf16.gmra.mxu0 %v923
      %v1029 = vpop.f32.mrf.mxu0
      %v1030 = vadd.f32 %v571, %v1029
      %v1031 = vpop.f32.mrf.mxu0
      %v1032 = vadd.f32 %v573, %v1031
      %1033 = vmatmul.bf16.gmra.mxu0 %v926
      %v1034 = vpop.f32.mrf.mxu0
      %v1035 = vadd.f32 %v576, %v1034
      %v1036 = vpop.f32.mrf.mxu0
      %v1037 = vadd.f32 %v578, %v1036
      %1038 = vmatmul.bf16.gmra.mxu0 %v929
      %v1039 = vpop.f32.mrf.mxu0
      %v1040 = vadd.f32 %v581, %v1039
      %v1041 = vpop.f32.mrf.mxu0
      %v1042 = vadd.f32 %v583, %v1041
      %1043 = vmatmul.bf16.gmra.mxu0 %v932
      %v1044 = vpop.f32.mrf.mxu0
      %v1045 = vadd.f32 %v586, %v1044
      %v1046 = vpop.f32.mrf.mxu0
      %v1047 = vadd.f32 %v588, %v1046
      %1048 = vmatmul.bf16.gmra.mxu0 %v935
      %v1049 = vpop.f32.mrf.mxu0
      %v1050 = vadd.f32 %v591, %v1049
      %v1051 = vpop.f32.mrf.mxu0
      %v1052 = vadd.f32 %v593, %v1051
      %1053 = vmatmul.bf16.gmra.mxu0 %v938
      %v1054 = vpop.f32.mrf.mxu0
      %v1055 = vadd.f32 %v596, %v1054
      %v1056 = vpop.f32.mrf.mxu0
      %v1057 = vadd.f32 %v598, %v1056
      %1058 = vmatmul.bf16.gmra.mxu0 %v941
      %v1059 = vpop.f32.mrf.mxu0
      %v1060 = vadd.f32 %v601, %v1059
      %v1061 = vpop.f32.mrf.mxu0
      %v1062 = vadd.f32 %v603, %v1061
      %1063 = vmatmul.bf16.gmra.mxu0 %v944
      %v1064 = vpop.f32.mrf.mxu0
      %v1065 = vadd.f32 %v606, %v1064
      %v1066 = vpop.f32.mrf.mxu0
      %v1067 = vadd.f32 %v608, %v1066
      %1068 = vmatmul.bf16.gmra.mxu0 %v947
      %v1069 = vpop.f32.mrf.mxu0
      %v1070 = vadd.f32 %v611, %v1069
      %v1071 = vpop.f32.mrf.mxu0
      %v1072 = vadd.f32 %v613, %v1071
      %1073 = vmatmul.bf16.gmra.mxu0 %v950
      %v1074 = vpop.f32.mrf.mxu0
      %v1075 = vadd.f32 %v616, %v1074
      %v1076 = vpop.f32.mrf.mxu0
      %v1077 = vadd.f32 %v618, %v1076
      %1078 = vmatmul.bf16.gmra.mxu0 %v953
      %v1079 = vpop.f32.mrf.mxu0
      %v1080 = vadd.f32 %v621, %v1079
      %v1081 = vpop.f32.mrf.mxu0
      %v1082 = vadd.f32 %v623, %v1081
      %1083 = vdwg.mxu0
      %v1084 = vld [vmem:[%s230 + $0xc] sm:$0xf]
      %v1085 = vld [vmem:[%s230 + $0x10] sm:$0xf]
      %v1086 = vld [vmem:[%s230 + $0x14] sm:$0xf]
      %v1087 = vld [vmem:[%s230 + $0x18] sm:$0xf]
      %v1088 = vld [vmem:[%s230 + $0x1c] sm:$0xf]
      %v1089 = vld [vmem:[%s230 + $0x20] sm:$0xf]
      %v1090 = vld [vmem:[%s230 + $0x24] sm:$0xf]
      %v1091 = vld [vmem:[%s230 + $0x28] sm:$0xf]
      %v1092 = vld [vmem:[%s230 + $0x2c] sm:$0xf]
      %v1093 = vld [vmem:[%s230 + $0x30] sm:$0xf]
      %v1094 = vld [vmem:[%s230 + $0x34] sm:$0xf]
      %v1095 = vld [vmem:[%s230 + $0x38] sm:$0xf]
      %v1096 = vld [vmem:[%s230 + $0x3c] sm:$0xf]
      %v1097 = vld [vmem:[%s230 + $0x40] sm:$0xf]
      %v1098 = vld [vmem:[%s230 + $0x44] sm:$0xf]
      %v1099 = vld [vmem:[%s230 + $0x48] sm:$0xf]
      %v1100 = vld [vmem:[%s230 + $0x4c] sm:$0xf]
      %v1101 = vld [vmem:[%s230 + $0x50] sm:$0xf]
      %v1102 = vld [vmem:[%s230 + $0x54] sm:$0xf]
      %v1103 = vld [vmem:[%s230 + $0x58] sm:$0xf]
      %v1104 = vld [vmem:[%s230 + $0x5c] sm:$0xf]
      %v1105 = vld [vmem:[%s230 + $0x60] sm:$0xf]
      %v1106 = vld [vmem:[%s230 + $0x64] sm:$0xf]
      %v1107 = vld [vmem:[%s230 + $0x68] sm:$0xf]
      %v1108 = vld [vmem:[%s230 + $0x6c] sm:$0xf]
      %v1109 = vld [vmem:[%s230 + $0x70] sm:$0xf]
      %v1110 = vld [vmem:[%s230 + $0x74] sm:$0xf]
      %v1111 = vld [vmem:[%s230 + $0x78] sm:$0xf]
      %v1112 = vld [vmem:[%s230 + $0x7c] sm:$0xf]
      %v1113 = vld [vmem:[%s230 + $0x80] sm:$0xf]
      %v1114 = vld [vmem:[%s230 + $0x84] sm:$0xf]
      %v1115 = vld [vmem:[%s230 + $0x88] sm:$0xf]
      %v1116 = vld [vmem:[%s230 + $0x8c] sm:$0xf]
      %v1117 = vld [vmem:[%s230 + $0x90] sm:$0xf]
      %v1118 = vld [vmem:[%s230 + $0x94] sm:$0xf]
      %v1119 = vld [vmem:[%s230 + $0x98] sm:$0xf]
      %v1120 = vld [vmem:[%s230 + $0x9c] sm:$0xf]
      %v1121 = vld [vmem:[%s230 + $0xa0] sm:$0xf]
      %v1122 = vld [vmem:[%s230 + $0xa4] sm:$0xf]
      %v1123 = vld [vmem:[%s230 + $0xa8] sm:$0xf]
      %v1124 = vld [vmem:[%s230 + $0xac] sm:$0xf]
      %v1125 = vld [vmem:[%s230 + $0xb0] sm:$0xf]
      %v1126 = vld [vmem:[%s230 + $0xb4] sm:$0xf]
      %v1127 = vld [vmem:[%s230 + $0xb8] sm:$0xf]
      %v1128 = vld [vmem:[%s230 + $0xbc] sm:$0xf]
      %v1129 = vld [vmem:[%s230 + $0xc0] sm:$0xf]
      %v1130 = vld [vmem:[%s230 + $0xc4] sm:$0xf]
      %v1131 = vld [vmem:[%s230 + $0xc8] sm:$0xf]
      %v1132 = vld [vmem:[%s230 + $0xcc] sm:$0x1]
      %s1133 = scalar_lea.vmem %s2, 16
      %v1134 = vld [vmem:[%s1133] sm:$0xf]
      %v1135 = vld [vmem:[%s1133 + $0x4] sm:$0xf]
      %v1185 = vunpack.c.l.b16 %v1084
      %v1186 = vunpack.c.l.b16 %v1085
      %v1187 = vunpack.c.l.b16 %v1086
      %v1188 = vunpack.c.l.b16 %v1087
      %v1189 = vunpack.c.l.b16 %v1088
      %v1190 = vunpack.c.l.b16 %v1089
      %v1191 = vunpack.c.l.b16 %v1090
      %v1192 = vunpack.c.l.b16 %v1091
      %v1193 = vunpack.c.l.b16 %v1092
      %v1194 = vunpack.c.l.b16 %v1093
      %v1195 = vunpack.c.l.b16 %v1094
      %v1196 = vunpack.c.l.b16 %v1095
      %v1197 = vunpack.c.l.b16 %v1096
      %v1198 = vunpack.c.l.b16 %v1097
      %v1199 = vunpack.c.l.b16 %v1098
      %v1200 = vunpack.c.l.b16 %v1099
      %v1201 = vunpack.c.l.b16 %v1100
      %v1202 = vunpack.c.l.b16 %v1101
      %v1203 = vunpack.c.l.b16 %v1102
      %v1204 = vunpack.c.l.b16 %v1103
      %v1205 = vunpack.c.l.b16 %v1104
      %v1206 = vunpack.c.l.b16 %v1105
      %v1207 = vunpack.c.l.b16 %v1106
      %v1208 = vunpack.c.l.b16 %v1107
      %v1209 = vunpack.c.l.b16 %v1108
      %v1210 = vunpack.c.l.b16 %v1109
      %v1211 = vunpack.c.l.b16 %v1110
      %v1212 = vunpack.c.l.b16 %v1111
      %v1213 = vunpack.c.l.b16 %v1112
      %v1214 = vunpack.c.l.b16 %v1113
      %v1215 = vunpack.c.l.b16 %v1114
      %v1216 = vunpack.c.l.b16 %v1115
      %v1217 = vunpack.c.l.b16 %v1116
      %v1218 = vunpack.c.l.b16 %v1117
      %v1219 = vunpack.c.l.b16 %v1118
      %v1220 = vunpack.c.l.b16 %v1119
      %v1221 = vunpack.c.l.b16 %v1120
      %v1222 = vunpack.c.l.b16 %v1121
      %v1223 = vunpack.c.l.b16 %v1122
      %v1224 = vunpack.c.l.b16 %v1123
      %v1225 = vunpack.c.l.b16 %v1124
      %v1226 = vunpack.c.l.b16 %v1125
      %v1227 = vunpack.c.l.b16 %v1126
      %v1228 = vunpack.c.l.b16 %v1127
      %v1229 = vunpack.c.l.b16 %v1128
      %v1230 = vunpack.c.l.b16 %v1129
      %v1231 = vunpack.c.l.b16 %v1130
      %v1232 = vunpack.c.l.b16 %v1131
      %v1233 = vunpack.c.l.b16 %v1132
      %v1234 = vpack.c.b16 %v1186, %v1185
      %v1235 = vpack.c.b16 %v1188, %v1187
      %v1236 = vpack.c.b16 %v1190, %v1189
      %v1237 = vpack.c.b16 %v1192, %v1191
      %v1238 = vpack.c.b16 %v1194, %v1193
      %v1239 = vpack.c.b16 %v1196, %v1195
      %v1240 = vpack.c.b16 %v1198, %v1197
      %v1241 = vpack.c.b16 %v1200, %v1199
      %v1242 = vpack.c.b16 %v1202, %v1201
      %v1243 = vpack.c.b16 %v1204, %v1203
      %v1244 = vpack.c.b16 %v1206, %v1205
      %v1245 = vpack.c.b16 %v1208, %v1207
      %v1246 = vpack.c.b16 %v1210, %v1209
      %v1247 = vpack.c.b16 %v1212, %v1211
      %v1248 = vpack.c.b16 %v1214, %v1213
      %v1249 = vpack.c.b16 %v1216, %v1215
      %v1250 = vpack.c.b16 %v1218, %v1217
      %v1251 = vpack.c.b16 %v1220, %v1219
      %v1252 = vpack.c.b16 %v1222, %v1221
      %v1253 = vpack.c.b16 %v1224, %v1223
      %v1254 = vpack.c.b16 %v1226, %v1225
      %v1255 = vpack.c.b16 %v1228, %v1227
      %v1256 = vpack.c.b16 %v1230, %v1229
      %v1257 = vpack.c.b16 %v1232, %v1231
      %v1258 = vpack.c.b16 %v1233, %v1233
      %vm1259 = vsmask.f32 7424
      %v1261 = vshrl.u32 %v1234, 16
      %v1263 = vshll.u32 %v1234, 16
      %v1265 = vrot.slane %v1263, 1
      %v1266 = vor.u32 %v1261, %v1265
      %v1268 = vshll.u32 %v1235, 16
      %v1270 = vrot.slane %v1268, 1
      %v1271 = vsel %vm1259, %v1266, %v1270
      %v1272 = vshrl.u32 %v1235, 16
      %v1274 = vor.u32 %v1272, %v1270
      %v1276 = vshll.u32 %v1236, 16
      %v1278 = vrot.slane %v1276, 1
      %v1279 = vsel %vm1259, %v1274, %v1278
      %v1280 = vshrl.u32 %v1236, 16
      %v1282 = vor.u32 %v1280, %v1278
      %v1284 = vshll.u32 %v1237, 16
      %v1286 = vrot.slane %v1284, 1
      %v1287 = vsel %vm1259, %v1282, %v1286
      %v1288 = vshrl.u32 %v1237, 16
      %v1290 = vor.u32 %v1288, %v1286
      %v1292 = vshll.u32 %v1238, 16
      %v1294 = vrot.slane %v1292, 1
      %v1295 = vsel %vm1259, %v1290, %v1294
      %v1296 = vshrl.u32 %v1238, 16
      %v1298 = vor.u32 %v1296, %v1294
      %v1300 = vshll.u32 %v1239, 16
      %v1302 = vrot.slane %v1300, 1
      %v1303 = vsel %vm1259, %v1298, %v1302
      %v1304 = vshrl.u32 %v1239, 16
      %v1306 = vor.u32 %v1304, %v1302
      %v1308 = vshll.u32 %v1240, 16
      %v1310 = vrot.slane %v1308, 1
      %v1311 = vsel %vm1259, %v1306, %v1310
      %v1312 = vshrl.u32 %v1240, 16
      %v1314 = vor.u32 %v1312, %v1310
      %v1316 = vshll.u32 %v1241, 16
      %v1318 = vrot.slane %v1316, 1
      %v1319 = vsel %vm1259, %v1314, %v1318
      %v1320 = vshrl.u32 %v1241, 16
      %v1322 = vor.u32 %v1320, %v1318
      %v1324 = vshll.u32 %v1242, 16
      %v1326 = vrot.slane %v1324, 1
      %v1327 = vsel %vm1259, %v1322, %v1326
      %v1328 = vshrl.u32 %v1242, 16
      %v1330 = vor.u32 %v1328, %v1326
      %v1332 = vshll.u32 %v1243, 16
      %v1334 = vrot.slane %v1332, 1
      %v1335 = vsel %vm1259, %v1330, %v1334
      %v1336 = vshrl.u32 %v1243, 16
      %v1338 = vor.u32 %v1336, %v1334
      %v1340 = vshll.u32 %v1244, 16
      %v1342 = vrot.slane %v1340, 1
      %v1343 = vsel %vm1259, %v1338, %v1342
      %v1344 = vshrl.u32 %v1244, 16
      %v1346 = vor.u32 %v1344, %v1342
      %v1348 = vshll.u32 %v1245, 16
      %v1350 = vrot.slane %v1348, 1
      %v1351 = vsel %vm1259, %v1346, %v1350
      %v1352 = vshrl.u32 %v1245, 16
      %v1354 = vor.u32 %v1352, %v1350
      %v1356 = vshll.u32 %v1246, 16
      %v1358 = vrot.slane %v1356, 1
      %v1359 = vsel %vm1259, %v1354, %v1358
      %v1360 = vshrl.u32 %v1246, 16
      %v1362 = vor.u32 %v1360, %v1358
      %v1364 = vshll.u32 %v1247, 16
      %v1366 = vrot.slane %v1364, 1
      %v1367 = vsel %vm1259, %v1362, %v1366
      %v1368 = vshrl.u32 %v1247, 16
      %v1370 = vor.u32 %v1368, %v1366
      %v1372 = vshll.u32 %v1248, 16
      %v1374 = vrot.slane %v1372, 1
      %v1375 = vsel %vm1259, %v1370, %v1374
      %v1376 = vshrl.u32 %v1248, 16
      %v1378 = vor.u32 %v1376, %v1374
      %v1380 = vshll.u32 %v1249, 16
      %v1382 = vrot.slane %v1380, 1
      %v1383 = vsel %vm1259, %v1378, %v1382
      %v1384 = vshrl.u32 %v1249, 16
      %v1386 = vor.u32 %v1384, %v1382
      %v1388 = vshll.u32 %v1250, 16
      %v1390 = vrot.slane %v1388, 1
      %v1391 = vsel %vm1259, %v1386, %v1390
      %v1392 = vshrl.u32 %v1250, 16
      %v1394 = vor.u32 %v1392, %v1390
      %v1396 = vshll.u32 %v1251, 16
      %v1398 = vrot.slane %v1396, 1
      %v1399 = vsel %vm1259, %v1394, %v1398
      %v1400 = vshrl.u32 %v1251, 16
      %v1402 = vor.u32 %v1400, %v1398
      %v1404 = vshll.u32 %v1252, 16
      %v1406 = vrot.slane %v1404, 1
      %v1407 = vsel %vm1259, %v1402, %v1406
      %v1408 = vshrl.u32 %v1252, 16
      %v1410 = vor.u32 %v1408, %v1406
      %v1412 = vshll.u32 %v1253, 16
      %v1414 = vrot.slane %v1412, 1
      %v1415 = vsel %vm1259, %v1410, %v1414
      %v1416 = vshrl.u32 %v1253, 16
      %v1418 = vor.u32 %v1416, %v1414
      %v1420 = vshll.u32 %v1254, 16
      %v1422 = vrot.slane %v1420, 1
      %v1423 = vsel %vm1259, %v1418, %v1422
      %v1424 = vshrl.u32 %v1254, 16
      %v1426 = vor.u32 %v1424, %v1422
      %v1428 = vshll.u32 %v1255, 16
      %v1430 = vrot.slane %v1428, 1
      %v1431 = vsel %vm1259, %v1426, %v1430
      %v1432 = vshrl.u32 %v1255, 16
      %v1434 = vor.u32 %v1432, %v1430
      %v1436 = vshll.u32 %v1256, 16
      %v1438 = vrot.slane %v1436, 1
      %v1439 = vsel %vm1259, %v1434, %v1438
      %v1440 = vshrl.u32 %v1256, 16
      %v1442 = vor.u32 %v1440, %v1438
      %v1444 = vshll.u32 %v1257, 16
      %v1446 = vrot.slane %v1444, 1
      %v1447 = vsel %vm1259, %v1442, %v1446
      %v1448 = vshrl.u32 %v1257, 16
      %v1450 = vor.u32 %v1448, %v1446
      %v1452 = vshll.u32 %v1258, 16
      %v1454 = vrot.slane %v1452, 1
      %v1455 = vsel %vm1259, %v1450, %v1454
      %v1458 = vunpack.c.l.b16 %v1134
      %v1459 = vunpack.c.l.b16 %v1135
      %v1460 = vpack.c.b16 %v1459, %v1458
      %v1463 = vsel %vm423, %v1271, 0
      %v1466 = vsel %vm423, %v1279, 0
      %v1469 = vsel %vm423, %v1287, 0
      %v1472 = vsel %vm423, %v1295, 0
      %v1475 = vsel %vm423, %v1303, 0
      %v1478 = vsel %vm423, %v1311, 0
      %v1481 = vsel %vm423, %v1319, 0
      %v1484 = vsel %vm423, %v1327, 0
      %v1487 = vsel %vm423, %v1335, 0
      %v1490 = vsel %vm423, %v1343, 0
      %v1493 = vsel %vm423, %v1351, 0
      %v1496 = vsel %vm423, %v1359, 0
      %v1499 = vsel %vm423, %v1367, 0
      %v1502 = vsel %vm423, %v1375, 0
      %v1505 = vsel %vm423, %v1383, 0
      %v1508 = vsel %vm423, %v1391, 0
      %v1511 = vsel %vm423, %v1399, 0
      %v1514 = vsel %vm423, %v1407, 0
      %v1517 = vsel %vm423, %v1415, 0
      %v1520 = vsel %vm423, %v1423, 0
      %v1523 = vsel %vm423, %v1431, 0
      %v1526 = vsel %vm423, %v1439, 0
      %v1529 = vsel %vm423, %v1447, 0
      %v1532 = vsel %vm423, %v1455, 0
      %1534 = vmatpush.bf16.msra.mxu0 0
      %1535 = vmatpush.bf16.msra.mxu0 0
      %1536 = vmatpush.bf16.msra.mxu0 0
      %1537 = vmatpush.bf16.msra.mxu0 0
      %1538 = vmatpush.bf16.msra.mxu0 0
      %1539 = vmatpush.bf16.msra.mxu0 0
      %1540 = vmatpush.bf16.msra.mxu0 0
      %1541 = vmatpush.bf16.msra.mxu0 %v1460
      %1542 = vmatmul.bf16.gmra.mxu0 %v1463
      %v1543 = vpop.f32.mrf.mxu0
      %v1544 = vadd.f32 0.0, %v1543
      %v1545 = vpop.f32.mrf.mxu0
      %v1546 = vadd.f32 0.0, %v1545
      %1547 = vmatmul.bf16.gmra.mxu0 %v1466
      %v1548 = vpop.f32.mrf.mxu0
      %v1549 = vadd.f32 0.0, %v1548
      %v1550 = vpop.f32.mrf.mxu0
      %v1551 = vadd.f32 0.0, %v1550
      %1552 = vmatmul.bf16.gmra.mxu0 %v1469
      %v1553 = vpop.f32.mrf.mxu0
      %v1554 = vadd.f32 0.0, %v1553
      %v1555 = vpop.f32.mrf.mxu0
      %v1556 = vadd.f32 0.0, %v1555
      %1557 = vmatmul.bf16.gmra.mxu0 %v1472
      %v1558 = vpop.f32.mrf.mxu0
      %v1559 = vadd.f32 0.0, %v1558
      %v1560 = vpop.f32.mrf.mxu0
      %v1561 = vadd.f32 0.0, %v1560
      %1562 = vmatmul.bf16.gmra.mxu0 %v1475
      %v1563 = vpop.f32.mrf.mxu0
      %v1564 = vadd.f32 0.0, %v1563
      %v1565 = vpop.f32.mrf.mxu0
      %v1566 = vadd.f32 0.0, %v1565
      %1567 = vmatmul.bf16.gmra.mxu0 %v1478
      %v1568 = vpop.f32.mrf.mxu0
      %v1569 = vadd.f32 0.0, %v1568
      %v1570 = vpop.f32.mrf.mxu0
      %v1571 = vadd.f32 0.0, %v1570
      %1572 = vmatmul.bf16.gmra.mxu0 %v1481
      %v1573 = vpop.f32.mrf.mxu0
      %v1574 = vadd.f32 0.0, %v1573
      %v1575 = vpop.f32.mrf.mxu0
      %v1576 = vadd.f32 0.0, %v1575
      %1577 = vmatmul.bf16.gmra.mxu0 %v1484
      %v1578 = vpop.f32.mrf.mxu0
      %v1579 = vadd.f32 0.0, %v1578
      %v1580 = vpop.f32.mrf.mxu0
      %v1581 = vadd.f32 0.0, %v1580
      %1582 = vmatmul.bf16.gmra.mxu0 %v1487
      %v1583 = vpop.f32.mrf.mxu0
      %v1584 = vadd.f32 0.0, %v1583
      %v1585 = vpop.f32.mrf.mxu0
      %v1586 = vadd.f32 0.0, %v1585
      %1587 = vmatmul.bf16.gmra.mxu0 %v1490
      %v1588 = vpop.f32.mrf.mxu0
      %v1589 = vadd.f32 0.0, %v1588
      %v1590 = vpop.f32.mrf.mxu0
      %v1591 = vadd.f32 0.0, %v1590
      %1592 = vmatmul.bf16.gmra.mxu0 %v1493
      %v1593 = vpop.f32.mrf.mxu0
      %v1594 = vadd.f32 0.0, %v1593
      %v1595 = vpop.f32.mrf.mxu0
      %v1596 = vadd.f32 0.0, %v1595
      %1597 = vmatmul.bf16.gmra.mxu0 %v1496
      %v1598 = vpop.f32.mrf.mxu0
      %v1599 = vadd.f32 0.0, %v1598
      %v1600 = vpop.f32.mrf.mxu0
      %v1601 = vadd.f32 0.0, %v1600
      %1602 = vmatmul.bf16.gmra.mxu0 %v1499
      %v1603 = vpop.f32.mrf.mxu0
      %v1604 = vadd.f32 0.0, %v1603
      %v1605 = vpop.f32.mrf.mxu0
      %v1606 = vadd.f32 0.0, %v1605
      %1607 = vmatmul.bf16.gmra.mxu0 %v1502
      %v1608 = vpop.f32.mrf.mxu0
      %v1609 = vadd.f32 0.0, %v1608
      %v1610 = vpop.f32.mrf.mxu0
      %v1611 = vadd.f32 0.0, %v1610
      %1612 = vmatmul.bf16.gmra.mxu0 %v1505
      %v1613 = vpop.f32.mrf.mxu0
      %v1614 = vadd.f32 0.0, %v1613
      %v1615 = vpop.f32.mrf.mxu0
      %v1616 = vadd.f32 0.0, %v1615
      %1617 = vmatmul.bf16.gmra.mxu0 %v1508
      %v1618 = vpop.f32.mrf.mxu0
      %v1619 = vadd.f32 0.0, %v1618
      %v1620 = vpop.f32.mrf.mxu0
      %v1621 = vadd.f32 0.0, %v1620
      %1622 = vmatmul.bf16.gmra.mxu0 %v1511
      %v1623 = vpop.f32.mrf.mxu0
      %v1624 = vadd.f32 0.0, %v1623
      %v1625 = vpop.f32.mrf.mxu0
      %v1626 = vadd.f32 0.0, %v1625
      %1627 = vmatmul.bf16.gmra.mxu0 %v1514
      %v1628 = vpop.f32.mrf.mxu0
      %v1629 = vadd.f32 0.0, %v1628
      %v1630 = vpop.f32.mrf.mxu0
      %v1631 = vadd.f32 0.0, %v1630
      %1632 = vmatmul.bf16.gmra.mxu0 %v1517
      %v1633 = vpop.f32.mrf.mxu0
      %v1634 = vadd.f32 0.0, %v1633
      %v1635 = vpop.f32.mrf.mxu0
      %v1636 = vadd.f32 0.0, %v1635
      %1637 = vmatmul.bf16.gmra.mxu0 %v1520
      %v1638 = vpop.f32.mrf.mxu0
      %v1639 = vadd.f32 0.0, %v1638
      %v1640 = vpop.f32.mrf.mxu0
      %v1641 = vadd.f32 0.0, %v1640
      %1642 = vmatmul.bf16.gmra.mxu0 %v1523
      %v1643 = vpop.f32.mrf.mxu0
      %v1644 = vadd.f32 0.0, %v1643
      %v1645 = vpop.f32.mrf.mxu0
      %v1646 = vadd.f32 0.0, %v1645
      %1647 = vmatmul.bf16.gmra.mxu0 %v1526
      %v1648 = vpop.f32.mrf.mxu0
      %v1649 = vadd.f32 0.0, %v1648
      %v1650 = vpop.f32.mrf.mxu0
      %v1651 = vadd.f32 0.0, %v1650
      %1652 = vmatmul.bf16.gmra.mxu0 %v1529
      %v1653 = vpop.f32.mrf.mxu0
      %v1654 = vadd.f32 0.0, %v1653
      %v1655 = vpop.f32.mrf.mxu0
      %v1656 = vadd.f32 0.0, %v1655
      %1657 = vmatmul.bf16.gmra.mxu0 %v1532
      %v1658 = vpop.f32.mrf.mxu0
      %v1659 = vadd.f32 0.0, %v1658
      %v1660 = vpop.f32.mrf.mxu0
      %v1661 = vadd.f32 0.0, %v1660
      %1662 = vdwg.mxu0
      %v1663 = vadd.f32 %v965, %v1544
      %v1664 = vadd.f32 %v967, %v1546
      %v1665 = vadd.f32 %v970, %v1549
      %v1666 = vadd.f32 %v972, %v1551
      %v1667 = vadd.f32 %v975, %v1554
      %v1668 = vadd.f32 %v977, %v1556
      %v1669 = vadd.f32 %v980, %v1559
      %v1670 = vadd.f32 %v982, %v1561
      %v1671 = vadd.f32 %v985, %v1564
      %v1672 = vadd.f32 %v987, %v1566
      %v1673 = vadd.f32 %v990, %v1569
      %v1674 = vadd.f32 %v992, %v1571
      %v1675 = vadd.f32 %v995, %v1574
      %v1676 = vadd.f32 %v997, %v1576
      %v1677 = vadd.f32 %v1000, %v1579
      %v1678 = vadd.f32 %v1002, %v1581
      %v1679 = vadd.f32 %v1005, %v1584
      %v1680 = vadd.f32 %v1007, %v1586
      %v1681 = vadd.f32 %v1010, %v1589
      %v1682 = vadd.f32 %v1012, %v1591
      %v1683 = vadd.f32 %v1015, %v1594
      %v1684 = vadd.f32 %v1017, %v1596
      %v1685 = vadd.f32 %v1020, %v1599
      %v1686 = vadd.f32 %v1022, %v1601
      %v1687 = vadd.f32 %v1025, %v1604
      %v1688 = vadd.f32 %v1027, %v1606
      %v1689 = vadd.f32 %v1030, %v1609
      %v1690 = vadd.f32 %v1032, %v1611
      %v1691 = vadd.f32 %v1035, %v1614
      %v1692 = vadd.f32 %v1037, %v1616
      %v1693 = vadd.f32 %v1040, %v1619
      %v1694 = vadd.f32 %v1042, %v1621
      %v1695 = vadd.f32 %v1045, %v1624
      %v1696 = vadd.f32 %v1047, %v1626
      %v1697 = vadd.f32 %v1050, %v1629
      %v1698 = vadd.f32 %v1052, %v1631
      %v1699 = vadd.f32 %v1055, %v1634
      %v1700 = vadd.f32 %v1057, %v1636
      %v1701 = vadd.f32 %v1060, %v1639
      %v1702 = vadd.f32 %v1062, %v1641
      %v1703 = vadd.f32 %v1065, %v1644
      %v1704 = vadd.f32 %v1067, %v1646
      %v1705 = vadd.f32 %v1070, %v1649
      %v1706 = vadd.f32 %v1072, %v1651
      %v1707 = vadd.f32 %v1075, %v1654
      %v1708 = vadd.f32 %v1077, %v1656
      %v1709 = vadd.f32 %v1080, %v1659
      %v1710 = vadd.f32 %v1082, %v1661
      %v1711 = vld [vmem:[%s230 + $0x14] sm:$0x8]
      %v1712 = vld [vmem:[%s230 + $0x18] sm:$0xf]
      %v1713 = vld [vmem:[%s230 + $0x1c] sm:$0xf]
      %v1714 = vld [vmem:[%s230 + $0x20] sm:$0xf]
      %v1715 = vld [vmem:[%s230 + $0x24] sm:$0xf]
      %v1716 = vld [vmem:[%s230 + $0x28] sm:$0xf]
      %v1717 = vld [vmem:[%s230 + $0x2c] sm:$0xf]
      %v1718 = vld [vmem:[%s230 + $0x30] sm:$0xf]
      %v1719 = vld [vmem:[%s230 + $0x34] sm:$0xf]
      %v1720 = vld [vmem:[%s230 + $0x38] sm:$0xf]
      %v1721 = vld [vmem:[%s230 + $0x3c] sm:$0xf]
      %v1722 = vld [vmem:[%s230 + $0x40] sm:$0xf]
      %v1723 = vld [vmem:[%s230 + $0x44] sm:$0xf]
      %v1724 = vld [vmem:[%s230 + $0x48] sm:$0xf]
      %v1725 = vld [vmem:[%s230 + $0x4c] sm:$0xf]
      %v1726 = vld [vmem:[%s230 + $0x50] sm:$0xf]
      %v1727 = vld [vmem:[%s230 + $0x54] sm:$0xf]
      %v1728 = vld [vmem:[%s230 + $0x58] sm:$0xf]
      %v1729 = vld [vmem:[%s230 + $0x5c] sm:$0xf]
      %v1730 = vld [vmem:[%s230 + $0x60] sm:$0xf]
      %v1731 = vld [vmem:[%s230 + $0x64] sm:$0xf]
      %v1732 = vld [vmem:[%s230 + $0x68] sm:$0xf]
      %v1733 = vld [vmem:[%s230 + $0x6c] sm:$0xf]
      %v1734 = vld [vmem:[%s230 + $0x70] sm:$0xf]
      %v1735 = vld [vmem:[%s230 + $0x74] sm:$0xf]
      %v1736 = vld [vmem:[%s230 + $0x78] sm:$0xf]
      %v1737 = vld [vmem:[%s230 + $0x7c] sm:$0xf]
      %v1738 = vld [vmem:[%s230 + $0x80] sm:$0xf]
      %v1739 = vld [vmem:[%s230 + $0x84] sm:$0xf]
      %v1740 = vld [vmem:[%s230 + $0x88] sm:$0xf]
      %v1741 = vld [vmem:[%s230 + $0x8c] sm:$0xf]
      %v1742 = vld [vmem:[%s230 + $0x90] sm:$0xf]
      %v1743 = vld [vmem:[%s230 + $0x94] sm:$0xf]
      %v1744 = vld [vmem:[%s230 + $0x98] sm:$0xf]
      %v1745 = vld [vmem:[%s230 + $0x9c] sm:$0xf]
      %v1746 = vld [vmem:[%s230 + $0xa0] sm:$0xf]
      %v1747 = vld [vmem:[%s230 + $0xa4] sm:$0xf]
      %v1748 = vld [vmem:[%s230 + $0xa8] sm:$0xf]
      %v1749 = vld [vmem:[%s230 + $0xac] sm:$0xf]
      %v1750 = vld [vmem:[%s230 + $0xb0] sm:$0xf]
      %v1751 = vld [vmem:[%s230 + $0xb4] sm:$0xf]
      %v1752 = vld [vmem:[%s230 + $0xb8] sm:$0xf]
      %v1753 = vld [vmem:[%s230 + $0xbc] sm:$0xf]
      %v1754 = vld [vmem:[%s230 + $0xc0] sm:$0xf]
      %v1755 = vld [vmem:[%s230 + $0xc4] sm:$0xf]
      %v1756 = vld [vmem:[%s230 + $0xc8] sm:$0xf]
      %v1757 = vld [vmem:[%s230 + $0xcc] sm:$0xf]
      %v1758 = vld [vmem:[%s230 + $0xd0] sm:$0xf]
      %v1759 = vld [vmem:[%s230 + $0xd4] sm:$0xf]
      %s1760 = scalar_lea.vmem %s2, 24
      %v1761 = vld [vmem:[%s1760] sm:$0xf]
      %v1762 = vld [vmem:[%s1760 + $0x4] sm:$0xf]
      %v1812 = vunpack.c.l.b16 %v1711
      %v1813 = vunpack.c.l.b16 %v1712
      %v1814 = vunpack.c.l.b16 %v1713
      %v1815 = vunpack.c.l.b16 %v1714
      %v1816 = vunpack.c.l.b16 %v1715
      %v1817 = vunpack.c.l.b16 %v1716
      %v1818 = vunpack.c.l.b16 %v1717
      %v1819 = vunpack.c.l.b16 %v1718
      %v1820 = vunpack.c.l.b16 %v1719
      %v1821 = vunpack.c.l.b16 %v1720
      %v1822 = vunpack.c.l.b16 %v1721
      %v1823 = vunpack.c.l.b16 %v1722
      %v1824 = vunpack.c.l.b16 %v1723
      %v1825 = vunpack.c.l.b16 %v1724
      %v1826 = vunpack.c.l.b16 %v1725
      %v1827 = vunpack.c.l.b16 %v1726
      %v1828 = vunpack.c.l.b16 %v1727
      %v1829 = vunpack.c.l.b16 %v1728
      %v1830 = vunpack.c.l.b16 %v1729
      %v1831 = vunpack.c.l.b16 %v1730
      %v1832 = vunpack.c.l.b16 %v1731
      %v1833 = vunpack.c.l.b16 %v1732
      %v1834 = vunpack.c.l.b16 %v1733
      %v1835 = vunpack.c.l.b16 %v1734
      %v1836 = vunpack.c.l.b16 %v1735
      %v1837 = vunpack.c.l.b16 %v1736
      %v1838 = vunpack.c.l.b16 %v1737
      %v1839 = vunpack.c.l.b16 %v1738
      %v1840 = vunpack.c.l.b16 %v1739
      %v1841 = vunpack.c.l.b16 %v1740
      %v1842 = vunpack.c.l.b16 %v1741
      %v1843 = vunpack.c.l.b16 %v1742
      %v1844 = vunpack.c.l.b16 %v1743
      %v1845 = vunpack.c.l.b16 %v1744
      %v1846 = vunpack.c.l.b16 %v1745
      %v1847 = vunpack.c.l.b16 %v1746
      %v1848 = vunpack.c.l.b16 %v1747
      %v1849 = vunpack.c.l.b16 %v1748
      %v1850 = vunpack.c.l.b16 %v1749
      %v1851 = vunpack.c.l.b16 %v1750
      %v1852 = vunpack.c.l.b16 %v1751
      %v1853 = vunpack.c.l.b16 %v1752
      %v1854 = vunpack.c.l.b16 %v1753
      %v1855 = vunpack.c.l.b16 %v1754
      %v1856 = vunpack.c.l.b16 %v1755
      %v1857 = vunpack.c.l.b16 %v1756
      %v1858 = vunpack.c.l.b16 %v1757
      %v1859 = vunpack.c.l.b16 %v1758
      %v1860 = vunpack.c.l.b16 %v1759
      %v1861 = vpack.c.b16 %v1813, %v1812
      %v1862 = vpack.c.b16 %v1815, %v1814
      %v1863 = vpack.c.b16 %v1817, %v1816
      %v1864 = vpack.c.b16 %v1819, %v1818
      %v1865 = vpack.c.b16 %v1821, %v1820
      %v1866 = vpack.c.b16 %v1823, %v1822
      %v1867 = vpack.c.b16 %v1825, %v1824
      %v1868 = vpack.c.b16 %v1827, %v1826
      %v1869 = vpack.c.b16 %v1829, %v1828
      %v1870 = vpack.c.b16 %v1831, %v1830
      %v1871 = vpack.c.b16 %v1833, %v1832
      %v1872 = vpack.c.b16 %v1835, %v1834
      %v1873 = vpack.c.b16 %v1837, %v1836
      %v1874 = vpack.c.b16 %v1839, %v1838
      %v1875 = vpack.c.b16 %v1841, %v1840
      %v1876 = vpack.c.b16 %v1843, %v1842
      %v1877 = vpack.c.b16 %v1845, %v1844
      %v1878 = vpack.c.b16 %v1847, %v1846
      %v1879 = vpack.c.b16 %v1849, %v1848
      %v1880 = vpack.c.b16 %v1851, %v1850
      %v1881 = vpack.c.b16 %v1853, %v1852
      %v1882 = vpack.c.b16 %v1855, %v1854
      %v1883 = vpack.c.b16 %v1857, %v1856
      %v1884 = vpack.c.b16 %v1859, %v1858
      %v1885 = vpack.c.b16 %v1860, %v1860
      %v1887 = vshrl.u32 %v1861, 16
      %v1889 = vrot.slane %v1887, 3
      %v1890 = vshll.u32 %v1861, 16
      %v1892 = vrot.slane %v1890, 4
      %v1893 = vor.u32 %v1889, %v1892
      %v1895 = vshrl.u32 %v1862, 16
      %v1897 = vrot.slane %v1895, 3
      %v1898 = vshll.u32 %v1862, 16
      %v1900 = vrot.slane %v1898, 4
      %v1901 = vor.u32 %v1897, %v1900
      %v1902 = vsel %vm652, %v1893, %v1901
      %v1904 = vshrl.u32 %v1863, 16
      %v1906 = vrot.slane %v1904, 3
      %v1907 = vshll.u32 %v1863, 16
      %v1909 = vrot.slane %v1907, 4
      %v1910 = vor.u32 %v1906, %v1909
      %v1911 = vsel %vm652, %v1901, %v1910
      %v1913 = vshrl.u32 %v1864, 16
      %v1915 = vrot.slane %v1913, 3
      %v1916 = vshll.u32 %v1864, 16
      %v1918 = vrot.slane %v1916, 4
      %v1919 = vor.u32 %v1915, %v1918
      %v1920 = vsel %vm652, %v1910, %v1919
      %v1922 = vshrl.u32 %v1865, 16
      %v1924 = vrot.slane %v1922, 3
      %v1925 = vshll.u32 %v1865, 16
      %v1927 = vrot.slane %v1925, 4
      %v1928 = vor.u32 %v1924, %v1927
      %v1929 = vsel %vm652, %v1919, %v1928
      %v1931 = vshrl.u32 %v1866, 16
      %v1933 = vrot.slane %v1931, 3
      %v1934 = vshll.u32 %v1866, 16
      %v1936 = vrot.slane %v1934, 4
      %v1937 = vor.u32 %v1933, %v1936
      %v1938 = vsel %vm652, %v1928, %v1937
      %v1940 = vshrl.u32 %v1867, 16
      %v1942 = vrot.slane %v1940, 3
      %v1943 = vshll.u32 %v1867, 16
      %v1945 = vrot.slane %v1943, 4
      %v1946 = vor.u32 %v1942, %v1945
      %v1947 = vsel %vm652, %v1937, %v1946
      %v1949 = vshrl.u32 %v1868, 16
      %v1951 = vrot.slane %v1949, 3
      %v1952 = vshll.u32 %v1868, 16
      %v1954 = vrot.slane %v1952, 4
      %v1955 = vor.u32 %v1951, %v1954
      %v1956 = vsel %vm652, %v1946, %v1955
      %v1958 = vshrl.u32 %v1869, 16
      %v1960 = vrot.slane %v1958, 3
      %v1961 = vshll.u32 %v1869, 16
      %v1963 = vrot.slane %v1961, 4
      %v1964 = vor.u32 %v1960, %v1963
      %v1965 = vsel %vm652, %v1955, %v1964
      %v1967 = vshrl.u32 %v1870, 16
      %v1969 = vrot.slane %v1967, 3
      %v1970 = vshll.u32 %v1870, 16
      %v1972 = vrot.slane %v1970, 4
      %v1973 = vor.u32 %v1969, %v1972
      %v1974 = vsel %vm652, %v1964, %v1973
      %v1976 = vshrl.u32 %v1871, 16
      %v1978 = vrot.slane %v1976, 3
      %v1979 = vshll.u32 %v1871, 16
      %v1981 = vrot.slane %v1979, 4
      %v1982 = vor.u32 %v1978, %v1981
      %v1983 = vsel %vm652, %v1973, %v1982
      %v1985 = vshrl.u32 %v1872, 16
      %v1987 = vrot.slane %v1985, 3
      %v1988 = vshll.u32 %v1872, 16
      %v1990 = vrot.slane %v1988, 4
      %v1991 = vor.u32 %v1987, %v1990
      %v1992 = vsel %vm652, %v1982, %v1991
      %v1994 = vshrl.u32 %v1873, 16
      %v1996 = vrot.slane %v1994, 3
      %v1997 = vshll.u32 %v1873, 16
      %v1999 = vrot.slane %v1997, 4
      %v2000 = vor.u32 %v1996, %v1999
      %v2001 = vsel %vm652, %v1991, %v2000
      %v2003 = vshrl.u32 %v1874, 16
      %v2005 = vrot.slane %v2003, 3
      %v2006 = vshll.u32 %v1874, 16
      %v2008 = vrot.slane %v2006, 4
      %v2009 = vor.u32 %v2005, %v2008
      %v2010 = vsel %vm652, %v2000, %v2009
      %v2012 = vshrl.u32 %v1875, 16
      %v2014 = vrot.slane %v2012, 3
      %v2015 = vshll.u32 %v1875, 16
      %v2017 = vrot.slane %v2015, 4
      %v2018 = vor.u32 %v2014, %v2017
      %v2019 = vsel %vm652, %v2009, %v2018
      %v2021 = vshrl.u32 %v1876, 16
      %v2023 = vrot.slane %v2021, 3
      %v2024 = vshll.u32 %v1876, 16
      %v2026 = vrot.slane %v2024, 4
      %v2027 = vor.u32 %v2023, %v2026
      %v2028 = vsel %vm652, %v2018, %v2027
      %v2030 = vshrl.u32 %v1877, 16
      %v2032 = vrot.slane %v2030, 3
      %v2033 = vshll.u32 %v1877, 16
      %v2035 = vrot.slane %v2033, 4
      %v2036 = vor.u32 %v2032, %v2035
      %v2037 = vsel %vm652, %v2027, %v2036
      %v2039 = vshrl.u32 %v1878, 16
      %v2041 = vrot.slane %v2039, 3
      %v2042 = vshll.u32 %v1878, 16
      %v2044 = vrot.slane %v2042, 4
      %v2045 = vor.u32 %v2041, %v2044
      %v2046 = vsel %vm652, %v2036, %v2045
      %v2048 = vshrl.u32 %v1879, 16
      %v2050 = vrot.slane %v2048, 3
      %v2051 = vshll.u32 %v1879, 16
      %v2053 = vrot.slane %v2051, 4
      %v2054 = vor.u32 %v2050, %v2053
      %v2055 = vsel %vm652, %v2045, %v2054
      %v2057 = vshrl.u32 %v1880, 16
      %v2059 = vrot.slane %v2057, 3
      %v2060 = vshll.u32 %v1880, 16
      %v2062 = vrot.slane %v2060, 4
      %v2063 = vor.u32 %v2059, %v2062
      %v2064 = vsel %vm652, %v2054, %v2063
      %v2066 = vshrl.u32 %v1881, 16
      %v2068 = vrot.slane %v2066, 3
      %v2069 = vshll.u32 %v1881, 16
      %v2071 = vrot.slane %v2069, 4
      %v2072 = vor.u32 %v2068, %v2071
      %v2073 = vsel %vm652, %v2063, %v2072
      %v2075 = vshrl.u32 %v1882, 16
      %v2077 = vrot.slane %v2075, 3
      %v2078 = vshll.u32 %v1882, 16
      %v2080 = vrot.slane %v2078, 4
      %v2081 = vor.u32 %v2077, %v2080
      %v2082 = vsel %vm652, %v2072, %v2081
      %v2084 = vshrl.u32 %v1883, 16
      %v2086 = vrot.slane %v2084, 3
      %v2087 = vshll.u32 %v1883, 16
      %v2089 = vrot.slane %v2087, 4
      %v2090 = vor.u32 %v2086, %v2089
      %v2091 = vsel %vm652, %v2081, %v2090
      %v2093 = vshrl.u32 %v1884, 16
      %v2095 = vrot.slane %v2093, 3
      %v2096 = vshll.u32 %v1884, 16
      %v2098 = vrot.slane %v2096, 4
      %v2099 = vor.u32 %v2095, %v2098
      %v2100 = vsel %vm652, %v2090, %v2099
      %v2102 = vshrl.u32 %v1885, 16
      %v2104 = vrot.slane %v2102, 3
      %v2105 = vshll.u32 %v1885, 16
      %v2107 = vrot.slane %v2105, 4
      %v2108 = vor.u32 %v2104, %v2107
      %v2109 = vsel %vm652, %v2099, %v2108
      %v2112 = vunpack.c.l.b16 %v1761
      %v2113 = vunpack.c.l.b16 %v1762
      %v2114 = vpack.c.b16 %v2113, %v2112
      %v2117 = vsel %vm423, %v1902, 0
      %v2120 = vsel %vm423, %v1911, 0
      %v2123 = vsel %vm423, %v1920, 0
      %v2126 = vsel %vm423, %v1929, 0
      %v2129 = vsel %vm423, %v1938, 0
      %v2132 = vsel %vm423, %v1947, 0
      %v2135 = vsel %vm423, %v1956, 0
      %v2138 = vsel %vm423, %v1965, 0
      %v2141 = vsel %vm423, %v1974, 0
      %v2144 = vsel %vm423, %v1983, 0
      %v2147 = vsel %vm423, %v1992, 0
      %v2150 = vsel %vm423, %v2001, 0
      %v2153 = vsel %vm423, %v2010, 0
      %v2156 = vsel %vm423, %v2019, 0
      %v2159 = vsel %vm423, %v2028, 0
      %v2162 = vsel %vm423, %v2037, 0
      %v2165 = vsel %vm423, %v2046, 0
      %v2168 = vsel %vm423, %v2055, 0
      %v2171 = vsel %vm423, %v2064, 0
      %v2174 = vsel %vm423, %v2073, 0
      %v2177 = vsel %vm423, %v2082, 0
      %v2180 = vsel %vm423, %v2091, 0
      %v2183 = vsel %vm423, %v2100, 0
      %v2186 = vsel %vm423, %v2109, 0
      %2188 = vmatpush.bf16.msra.mxu0 0
      %2189 = vmatpush.bf16.msra.mxu0 0
      %2190 = vmatpush.bf16.msra.mxu0 0
      %2191 = vmatpush.bf16.msra.mxu0 0
      %2192 = vmatpush.bf16.msra.mxu0 0
      %2193 = vmatpush.bf16.msra.mxu0 0
      %2194 = vmatpush.bf16.msra.mxu0 0
      %2195 = vmatpush.bf16.msra.mxu0 %v2114
      %2196 = vmatmul.bf16.gmra.mxu0 %v2117
      %v2197 = vpop.f32.mrf.mxu0
      %v2198 = vadd.f32 0.0, %v2197
      %v2199 = vpop.f32.mrf.mxu0
      %v2200 = vadd.f32 0.0, %v2199
      %2201 = vmatmul.bf16.gmra.mxu0 %v2120
      %v2202 = vpop.f32.mrf.mxu0
      %v2203 = vadd.f32 0.0, %v2202
      %v2204 = vpop.f32.mrf.mxu0
      %v2205 = vadd.f32 0.0, %v2204
      %2206 = vmatmul.bf16.gmra.mxu0 %v2123
      %v2207 = vpop.f32.mrf.mxu0
      %v2208 = vadd.f32 0.0, %v2207
      %v2209 = vpop.f32.mrf.mxu0
      %v2210 = vadd.f32 0.0, %v2209
      %2211 = vmatmul.bf16.gmra.mxu0 %v2126
      %v2212 = vpop.f32.mrf.mxu0
      %v2213 = vadd.f32 0.0, %v2212
      %v2214 = vpop.f32.mrf.mxu0
      %v2215 = vadd.f32 0.0, %v2214
      %2216 = vmatmul.bf16.gmra.mxu0 %v2129
      %v2217 = vpop.f32.mrf.mxu0
      %v2218 = vadd.f32 0.0, %v2217
      %v2219 = vpop.f32.mrf.mxu0
      %v2220 = vadd.f32 0.0, %v2219
      %2221 = vmatmul.bf16.gmra.mxu0 %v2132
      %v2222 = vpop.f32.mrf.mxu0
      %v2223 = vadd.f32 0.0, %v2222
      %v2224 = vpop.f32.mrf.mxu0
      %v2225 = vadd.f32 0.0, %v2224
      %2226 = vmatmul.bf16.gmra.mxu0 %v2135
      %v2227 = vpop.f32.mrf.mxu0
      %v2228 = vadd.f32 0.0, %v2227
      %v2229 = vpop.f32.mrf.mxu0
      %v2230 = vadd.f32 0.0, %v2229
      %2231 = vmatmul.bf16.gmra.mxu0 %v2138
      %v2232 = vpop.f32.mrf.mxu0
      %v2233 = vadd.f32 0.0, %v2232
      %v2234 = vpop.f32.mrf.mxu0
      %v2235 = vadd.f32 0.0, %v2234
      %2236 = vmatmul.bf16.gmra.mxu0 %v2141
      %v2237 = vpop.f32.mrf.mxu0
      %v2238 = vadd.f32 0.0, %v2237
      %v2239 = vpop.f32.mrf.mxu0
      %v2240 = vadd.f32 0.0, %v2239
      %2241 = vmatmul.bf16.gmra.mxu0 %v2144
      %v2242 = vpop.f32.mrf.mxu0
      %v2243 = vadd.f32 0.0, %v2242
      %v2244 = vpop.f32.mrf.mxu0
      %v2245 = vadd.f32 0.0, %v2244
      %2246 = vmatmul.bf16.gmra.mxu0 %v2147
      %v2247 = vpop.f32.mrf.mxu0
      %v2248 = vadd.f32 0.0, %v2247
      %v2249 = vpop.f32.mrf.mxu0
      %v2250 = vadd.f32 0.0, %v2249
      %2251 = vmatmul.bf16.gmra.mxu0 %v2150
      %v2252 = vpop.f32.mrf.mxu0
      %v2253 = vadd.f32 0.0, %v2252
      %v2254 = vpop.f32.mrf.mxu0
      %v2255 = vadd.f32 0.0, %v2254
      %2256 = vmatmul.bf16.gmra.mxu0 %v2153
      %v2257 = vpop.f32.mrf.mxu0
      %v2258 = vadd.f32 0.0, %v2257
      %v2259 = vpop.f32.mrf.mxu0
      %v2260 = vadd.f32 0.0, %v2259
      %2261 = vmatmul.bf16.gmra.mxu0 %v2156
      %v2262 = vpop.f32.mrf.mxu0
      %v2263 = vadd.f32 0.0, %v2262
      %v2264 = vpop.f32.mrf.mxu0
      %v2265 = vadd.f32 0.0, %v2264
      %2266 = vmatmul.bf16.gmra.mxu0 %v2159
      %v2267 = vpop.f32.mrf.mxu0
      %v2268 = vadd.f32 0.0, %v2267
      %v2269 = vpop.f32.mrf.mxu0
      %v2270 = vadd.f32 0.0, %v2269
      %2271 = vmatmul.bf16.gmra.mxu0 %v2162
      %v2272 = vpop.f32.mrf.mxu0
      %v2273 = vadd.f32 0.0, %v2272
      %v2274 = vpop.f32.mrf.mxu0
      %v2275 = vadd.f32 0.0, %v2274
      %2276 = vmatmul.bf16.gmra.mxu0 %v2165
      %v2277 = vpop.f32.mrf.mxu0
      %v2278 = vadd.f32 0.0, %v2277
      %v2279 = vpop.f32.mrf.mxu0
      %v2280 = vadd.f32 0.0, %v2279
      %2281 = vmatmul.bf16.gmra.mxu0 %v2168
      %v2282 = vpop.f32.mrf.mxu0
      %v2283 = vadd.f32 0.0, %v2282
      %v2284 = vpop.f32.mrf.mxu0
      %v2285 = vadd.f32 0.0, %v2284
      %2286 = vmatmul.bf16.gmra.mxu0 %v2171
      %v2287 = vpop.f32.mrf.mxu0
      %v2288 = vadd.f32 0.0, %v2287
      %v2289 = vpop.f32.mrf.mxu0
      %v2290 = vadd.f32 0.0, %v2289
      %2291 = vmatmul.bf16.gmra.mxu0 %v2174
      %v2292 = vpop.f32.mrf.mxu0
      %v2293 = vadd.f32 0.0, %v2292
      %v2294 = vpop.f32.mrf.mxu0
      %v2295 = vadd.f32 0.0, %v2294
      %2296 = vmatmul.bf16.gmra.mxu0 %v2177
      %v2297 = vpop.f32.mrf.mxu0
      %v2298 = vadd.f32 0.0, %v2297
      %v2299 = vpop.f32.mrf.mxu0
      %v2300 = vadd.f32 0.0, %v2299
      %2301 = vmatmul.bf16.gmra.mxu0 %v2180
      %v2302 = vpop.f32.mrf.mxu0
      %v2303 = vadd.f32 0.0, %v2302
      %v2304 = vpop.f32.mrf.mxu0
      %v2305 = vadd.f32 0.0, %v2304
      %2306 = vmatmul.bf16.gmra.mxu0 %v2183
      %v2307 = vpop.f32.mrf.mxu0
      %v2308 = vadd.f32 0.0, %v2307
      %v2309 = vpop.f32.mrf.mxu0
      %v2310 = vadd.f32 0.0, %v2309
      %2311 = vmatmul.bf16.gmra.mxu0 %v2186
      %v2312 = vpop.f32.mrf.mxu0
      %v2313 = vadd.f32 0.0, %v2312
      %v2314 = vpop.f32.mrf.mxu0
      %v2315 = vadd.f32 0.0, %v2314
      %2316 = vdwg.mxu0
      %v2317 = vadd.f32 %v1663, %v2198
      %v2318 = vadd.f32 %v1664, %v2200
      %v2319 = vadd.f32 %v1665, %v2203
      %v2320 = vadd.f32 %v1666, %v2205
      %v2321 = vadd.f32 %v1667, %v2208
      %v2322 = vadd.f32 %v1668, %v2210
      %v2323 = vadd.f32 %v1669, %v2213
      %v2324 = vadd.f32 %v1670, %v2215
      %v2325 = vadd.f32 %v1671, %v2218
      %v2326 = vadd.f32 %v1672, %v2220
      %v2327 = vadd.f32 %v1673, %v2223
      %v2328 = vadd.f32 %v1674, %v2225
      %v2329 = vadd.f32 %v1675, %v2228
      %v2330 = vadd.f32 %v1676, %v2230
      %v2331 = vadd.f32 %v1677, %v2233
      %v2332 = vadd.f32 %v1678, %v2235
      %v2333 = vadd.f32 %v1679, %v2238
      %v2334 = vadd.f32 %v1680, %v2240
      %v2335 = vadd.f32 %v1681, %v2243
      %v2336 = vadd.f32 %v1682, %v2245
      %v2337 = vadd.f32 %v1683, %v2248
      %v2338 = vadd.f32 %v1684, %v2250
      %v2339 = vadd.f32 %v1685, %v2253
      %v2340 = vadd.f32 %v1686, %v2255
      %v2341 = vadd.f32 %v1687, %v2258
      %v2342 = vadd.f32 %v1688, %v2260
      %v2343 = vadd.f32 %v1689, %v2263
      %v2344 = vadd.f32 %v1690, %v2265
      %v2345 = vadd.f32 %v1691, %v2268
      %v2346 = vadd.f32 %v1692, %v2270
      %v2347 = vadd.f32 %v1693, %v2273
      %v2348 = vadd.f32 %v1694, %v2275
      %v2349 = vadd.f32 %v1695, %v2278
      %v2350 = vadd.f32 %v1696, %v2280
      %v2351 = vadd.f32 %v1697, %v2283
      %v2352 = vadd.f32 %v1698, %v2285
      %v2353 = vadd.f32 %v1699, %v2288
      %v2354 = vadd.f32 %v1700, %v2290
      %v2355 = vadd.f32 %v1701, %v2293
      %v2356 = vadd.f32 %v1702, %v2295
      %v2357 = vadd.f32 %v1703, %v2298
      %v2358 = vadd.f32 %v1704, %v2300
      %v2359 = vadd.f32 %v1705, %v2303
      %v2360 = vadd.f32 %v1706, %v2305
      %v2361 = vadd.f32 %v1707, %v2308
      %v2362 = vadd.f32 %v1708, %v2310
      %v2363 = vadd.f32 %v1709, %v2313
      %v2364 = vadd.f32 %v1710, %v2315
      %s2365 = scalar_lea.vmem %s2, 32
      %v2366 = vld [vmem:[%s2365] sm:$0xf]
      %v2367 = vld [vmem:[%s2365 + $0x4] sm:$0xf]
      %v2368 = vpack.c.b16 %v1814, %v1813
      %v2369 = vpack.c.b16 %v1816, %v1815
      %v2370 = vpack.c.b16 %v1818, %v1817
      %v2371 = vpack.c.b16 %v1820, %v1819
      %v2372 = vpack.c.b16 %v1822, %v1821
      %v2373 = vpack.c.b16 %v1824, %v1823
      %v2374 = vpack.c.b16 %v1826, %v1825
      %v2375 = vpack.c.b16 %v1828, %v1827
      %v2376 = vpack.c.b16 %v1830, %v1829
      %v2377 = vpack.c.b16 %v1832, %v1831
      %v2378 = vpack.c.b16 %v1834, %v1833
      %v2379 = vpack.c.b16 %v1836, %v1835
      %v2380 = vpack.c.b16 %v1838, %v1837
      %v2381 = vpack.c.b16 %v1840, %v1839
      %v2382 = vpack.c.b16 %v1842, %v1841
      %v2383 = vpack.c.b16 %v1844, %v1843
      %v2384 = vpack.c.b16 %v1846, %v1845
      %v2385 = vpack.c.b16 %v1848, %v1847
      %v2386 = vpack.c.b16 %v1850, %v1849
      %v2387 = vpack.c.b16 %v1852, %v1851
      %v2388 = vpack.c.b16 %v1854, %v1853
      %v2389 = vpack.c.b16 %v1856, %v1855
      %v2390 = vpack.c.b16 %v1858, %v1857
      %v2391 = vpack.c.b16 %v1860, %v1859
      %v2394 = vunpack.c.l.b16 %v2366
      %v2395 = vunpack.c.l.b16 %v2367
      %v2396 = vpack.c.b16 %v2395, %v2394
      %v2399 = vsel %vm423, %v2368, 0
      %v2402 = vsel %vm423, %v2369, 0
      %v2405 = vsel %vm423, %v2370, 0
      %v2408 = vsel %vm423, %v2371, 0
      %v2411 = vsel %vm423, %v2372, 0
      %v2414 = vsel %vm423, %v2373, 0
      %v2417 = vsel %vm423, %v2374, 0
      %v2420 = vsel %vm423, %v2375, 0
      %v2423 = vsel %vm423, %v2376, 0
      %v2426 = vsel %vm423, %v2377, 0
      %v2429 = vsel %vm423, %v2378, 0
      %v2432 = vsel %vm423, %v2379, 0
      %v2435 = vsel %vm423, %v2380, 0
      %v2438 = vsel %vm423, %v2381, 0
      %v2441 = vsel %vm423, %v2382, 0
      %v2444 = vsel %vm423, %v2383, 0
      %v2447 = vsel %vm423, %v2384, 0
      %v2450 = vsel %vm423, %v2385, 0
      %v2453 = vsel %vm423, %v2386, 0
      %v2456 = vsel %vm423, %v2387, 0
      %v2459 = vsel %vm423, %v2388, 0
      %v2462 = vsel %vm423, %v2389, 0
      %v2465 = vsel %vm423, %v2390, 0
      %v2468 = vsel %vm423, %v2391, 0
      %2470 = vmatpush.bf16.msra.mxu0 0
      %2471 = vmatpush.bf16.msra.mxu0 0
      %2472 = vmatpush.bf16.msra.mxu0 0
      %2473 = vmatpush.bf16.msra.mxu0 0
      %2474 = vmatpush.bf16.msra.mxu0 0
      %2475 = vmatpush.bf16.msra.mxu0 0
      %2476 = vmatpush.bf16.msra.mxu0 0
      %2477 = vmatpush.bf16.msra.mxu0 %v2396
      %2478 = vmatmul.bf16.gmra.mxu0 %v2399
      %v2479 = vpop.f32.mrf.mxu0
      %v2480 = vadd.f32 0.0, %v2479
      %v2481 = vpop.f32.mrf.mxu0
      %v2482 = vadd.f32 0.0, %v2481
      %2483 = vmatmul.bf16.gmra.mxu0 %v2402
      %v2484 = vpop.f32.mrf.mxu0
      %v2485 = vadd.f32 0.0, %v2484
      %v2486 = vpop.f32.mrf.mxu0
      %v2487 = vadd.f32 0.0, %v2486
      %2488 = vmatmul.bf16.gmra.mxu0 %v2405
      %v2489 = vpop.f32.mrf.mxu0
      %v2490 = vadd.f32 0.0, %v2489
      %v2491 = vpop.f32.mrf.mxu0
      %v2492 = vadd.f32 0.0, %v2491
      %2493 = vmatmul.bf16.gmra.mxu0 %v2408
      %v2494 = vpop.f32.mrf.mxu0
      %v2495 = vadd.f32 0.0, %v2494
      %v2496 = vpop.f32.mrf.mxu0
      %v2497 = vadd.f32 0.0, %v2496
      %2498 = vmatmul.bf16.gmra.mxu0 %v2411
      %v2499 = vpop.f32.mrf.mxu0
      %v2500 = vadd.f32 0.0, %v2499
      %v2501 = vpop.f32.mrf.mxu0
      %v2502 = vadd.f32 0.0, %v2501
      %2503 = vmatmul.bf16.gmra.mxu0 %v2414
      %v2504 = vpop.f32.mrf.mxu0
      %v2505 = vadd.f32 0.0, %v2504
      %v2506 = vpop.f32.mrf.mxu0
      %v2507 = vadd.f32 0.0, %v2506
      %2508 = vmatmul.bf16.gmra.mxu0 %v2417
      %v2509 = vpop.f32.mrf.mxu0
      %v2510 = vadd.f32 0.0, %v2509
      %v2511 = vpop.f32.mrf.mxu0
      %v2512 = vadd.f32 0.0, %v2511
      %2513 = vmatmul.bf16.gmra.mxu0 %v2420
      %v2514 = vpop.f32.mrf.mxu0
      %v2515 = vadd.f32 0.0, %v2514
      %v2516 = vpop.f32.mrf.mxu0
      %v2517 = vadd.f32 0.0, %v2516
      %2518 = vmatmul.bf16.gmra.mxu0 %v2423
      %v2519 = vpop.f32.mrf.mxu0
      %v2520 = vadd.f32 0.0, %v2519
      %v2521 = vpop.f32.mrf.mxu0
      %v2522 = vadd.f32 0.0, %v2521
      %2523 = vmatmul.bf16.gmra.mxu0 %v2426
      %v2524 = vpop.f32.mrf.mxu0
      %v2525 = vadd.f32 0.0, %v2524
      %v2526 = vpop.f32.mrf.mxu0
      %v2527 = vadd.f32 0.0, %v2526
      %2528 = vmatmul.bf16.gmra.mxu0 %v2429
      %v2529 = vpop.f32.mrf.mxu0
      %v2530 = vadd.f32 0.0, %v2529
      %v2531 = vpop.f32.mrf.mxu0
      %v2532 = vadd.f32 0.0, %v2531
      %2533 = vmatmul.bf16.gmra.mxu0 %v2432
      %v2534 = vpop.f32.mrf.mxu0
      %v2535 = vadd.f32 0.0, %v2534
      %v2536 = vpop.f32.mrf.mxu0
      %v2537 = vadd.f32 0.0, %v2536
      %2538 = vmatmul.bf16.gmra.mxu0 %v2435
      %v2539 = vpop.f32.mrf.mxu0
      %v2540 = vadd.f32 0.0, %v2539
      %v2541 = vpop.f32.mrf.mxu0
      %v2542 = vadd.f32 0.0, %v2541
      %2543 = vmatmul.bf16.gmra.mxu0 %v2438
      %v2544 = vpop.f32.mrf.mxu0
      %v2545 = vadd.f32 0.0, %v2544
      %v2546 = vpop.f32.mrf.mxu0
      %v2547 = vadd.f32 0.0, %v2546
      %2548 = vmatmul.bf16.gmra.mxu0 %v2441
      %v2549 = vpop.f32.mrf.mxu0
      %v2550 = vadd.f32 0.0, %v2549
      %v2551 = vpop.f32.mrf.mxu0
      %v2552 = vadd.f32 0.0, %v2551
      %2553 = vmatmul.bf16.gmra.mxu0 %v2444
      %v2554 = vpop.f32.mrf.mxu0
      %v2555 = vadd.f32 0.0, %v2554
      %v2556 = vpop.f32.mrf.mxu0
      %v2557 = vadd.f32 0.0, %v2556
      %2558 = vmatmul.bf16.gmra.mxu0 %v2447
      %v2559 = vpop.f32.mrf.mxu0
      %v2560 = vadd.f32 0.0, %v2559
      %v2561 = vpop.f32.mrf.mxu0
      %v2562 = vadd.f32 0.0, %v2561
      %2563 = vmatmul.bf16.gmra.mxu0 %v2450
      %v2564 = vpop.f32.mrf.mxu0
      %v2565 = vadd.f32 0.0, %v2564
      %v2566 = vpop.f32.mrf.mxu0
      %v2567 = vadd.f32 0.0, %v2566
      %2568 = vmatmul.bf16.gmra.mxu0 %v2453
      %v2569 = vpop.f32.mrf.mxu0
      %v2570 = vadd.f32 0.0, %v2569
      %v2571 = vpop.f32.mrf.mxu0
      %v2572 = vadd.f32 0.0, %v2571
      %2573 = vmatmul.bf16.gmra.mxu0 %v2456
      %v2574 = vpop.f32.mrf.mxu0
      %v2575 = vadd.f32 0.0, %v2574
      %v2576 = vpop.f32.mrf.mxu0
      %v2577 = vadd.f32 0.0, %v2576
      %2578 = vmatmul.bf16.gmra.mxu0 %v2459
      %v2579 = vpop.f32.mrf.mxu0
      %v2580 = vadd.f32 0.0, %v2579
      %v2581 = vpop.f32.mrf.mxu0
      %v2582 = vadd.f32 0.0, %v2581
      %2583 = vmatmul.bf16.gmra.mxu0 %v2462
      %v2584 = vpop.f32.mrf.mxu0
      %v2585 = vadd.f32 0.0, %v2584
      %v2586 = vpop.f32.mrf.mxu0
      %v2587 = vadd.f32 0.0, %v2586
      %2588 = vmatmul.bf16.gmra.mxu0 %v2465
      %v2589 = vpop.f32.mrf.mxu0
      %v2590 = vadd.f32 0.0, %v2589
      %v2591 = vpop.f32.mrf.mxu0
      %v2592 = vadd.f32 0.0, %v2591
      %2593 = vmatmul.bf16.gmra.mxu0 %v2468
      %v2594 = vpop.f32.mrf.mxu0
      %v2595 = vadd.f32 0.0, %v2594
      %v2596 = vpop.f32.mrf.mxu0
      %v2597 = vadd.f32 0.0, %v2596
      %2598 = vdwg.mxu0
      %v2599 = vadd.f32 %v2317, %v2480
      %v2600 = vadd.f32 %v2318, %v2482
      %v2601 = vadd.f32 %v2319, %v2485
      %v2602 = vadd.f32 %v2320, %v2487
      %v2603 = vadd.f32 %v2321, %v2490
      %v2604 = vadd.f32 %v2322, %v2492
      %v2605 = vadd.f32 %v2323, %v2495
      %v2606 = vadd.f32 %v2324, %v2497
      %v2607 = vadd.f32 %v2325, %v2500
      %v2608 = vadd.f32 %v2326, %v2502
      %v2609 = vadd.f32 %v2327, %v2505
      %v2610 = vadd.f32 %v2328, %v2507
      %v2611 = vadd.f32 %v2329, %v2510
      %v2612 = vadd.f32 %v2330, %v2512
      %v2613 = vadd.f32 %v2331, %v2515
      %v2614 = vadd.f32 %v2332, %v2517
      %v2615 = vadd.f32 %v2333, %v2520
      %v2616 = vadd.f32 %v2334, %v2522
      %v2617 = vadd.f32 %v2335, %v2525
      %v2618 = vadd.f32 %v2336, %v2527
      %v2619 = vadd.f32 %v2337, %v2530
      %v2620 = vadd.f32 %v2338, %v2532
      %v2621 = vadd.f32 %v2339, %v2535
      %v2622 = vadd.f32 %v2340, %v2537
      %v2623 = vadd.f32 %v2341, %v2540
      %v2624 = vadd.f32 %v2342, %v2542
      %v2625 = vadd.f32 %v2343, %v2545
      %v2626 = vadd.f32 %v2344, %v2547
      %v2627 = vadd.f32 %v2345, %v2550
      %v2628 = vadd.f32 %v2346, %v2552
      %v2629 = vadd.f32 %v2347, %v2555
      %v2630 = vadd.f32 %v2348, %v2557
      %v2631 = vadd.f32 %v2349, %v2560
      %v2632 = vadd.f32 %v2350, %v2562
      %v2633 = vadd.f32 %v2351, %v2565
      %v2634 = vadd.f32 %v2352, %v2567
      %v2635 = vadd.f32 %v2353, %v2570
      %v2636 = vadd.f32 %v2354, %v2572
      %v2637 = vadd.f32 %v2355, %v2575
      %v2638 = vadd.f32 %v2356, %v2577
      %v2639 = vadd.f32 %v2357, %v2580
      %v2640 = vadd.f32 %v2358, %v2582
      %v2641 = vadd.f32 %v2359, %v2585
      %v2642 = vadd.f32 %v2360, %v2587
      %v2643 = vadd.f32 %v2361, %v2590
      %v2644 = vadd.f32 %v2362, %v2592
      %v2645 = vadd.f32 %v2363, %v2595
      %v2646 = vadd.f32 %v2364, %v2597
      %v2647 = vld [vmem:[%s230 + $0x18] sm:$0xf]
      %v2648 = vld [vmem:[%s230 + $0x1c] sm:$0xf]
      %v2649 = vld [vmem:[%s230 + $0x20] sm:$0xf]
      %v2650 = vld [vmem:[%s230 + $0x24] sm:$0xf]
      %v2651 = vld [vmem:[%s230 + $0x28] sm:$0xf]
      %v2652 = vld [vmem:[%s230 + $0x2c] sm:$0xf]
      %v2653 = vld [vmem:[%s230 + $0x30] sm:$0xf]
      %v2654 = vld [vmem:[%s230 + $0x34] sm:$0xf]
      %v2655 = vld [vmem:[%s230 + $0x38] sm:$0xf]
      %v2656 = vld [vmem:[%s230 + $0x3c] sm:$0xf]
      %v2657 = vld [vmem:[%s230 + $0x40] sm:$0xf]
      %v2658 = vld [vmem:[%s230 + $0x44] sm:$0xf]
      %v2659 = vld [vmem:[%s230 + $0x48] sm:$0xf]
      %v2660 = vld [vmem:[%s230 + $0x4c] sm:$0xf]
      %v2661 = vld [vmem:[%s230 + $0x50] sm:$0xf]
      %v2662 = vld [vmem:[%s230 + $0x54] sm:$0xf]
      %v2663 = vld [vmem:[%s230 + $0x58] sm:$0xf]
      %v2664 = vld [vmem:[%s230 + $0x5c] sm:$0xf]
      %v2665 = vld [vmem:[%s230 + $0x60] sm:$0xf]
      %v2666 = vld [vmem:[%s230 + $0x64] sm:$0xf]
      %v2667 = vld [vmem:[%s230 + $0x68] sm:$0xf]
      %v2668 = vld [vmem:[%s230 + $0x6c] sm:$0xf]
      %v2669 = vld [vmem:[%s230 + $0x70] sm:$0xf]
      %v2670 = vld [vmem:[%s230 + $0x74] sm:$0xf]
      %v2671 = vld [vmem:[%s230 + $0x78] sm:$0xf]
      %v2672 = vld [vmem:[%s230 + $0x7c] sm:$0xf]
      %v2673 = vld [vmem:[%s230 + $0x80] sm:$0xf]
      %v2674 = vld [vmem:[%s230 + $0x84] sm:$0xf]
      %v2675 = vld [vmem:[%s230 + $0x88] sm:$0xf]
      %v2676 = vld [vmem:[%s230 + $0x8c] sm:$0xf]
      %v2677 = vld [vmem:[%s230 + $0x90] sm:$0xf]
      %v2678 = vld [vmem:[%s230 + $0x94] sm:$0xf]
      %v2679 = vld [vmem:[%s230 + $0x98] sm:$0xf]
      %v2680 = vld [vmem:[%s230 + $0x9c] sm:$0xf]
      %v2681 = vld [vmem:[%s230 + $0xa0] sm:$0xf]
      %v2682 = vld [vmem:[%s230 + $0xa4] sm:$0xf]
      %v2683 = vld [vmem:[%s230 + $0xa8] sm:$0xf]
      %v2684 = vld [vmem:[%s230 + $0xac] sm:$0xf]
      %v2685 = vld [vmem:[%s230 + $0xb0] sm:$0xf]
      %v2686 = vld [vmem:[%s230 + $0xb4] sm:$0xf]
      %v2687 = vld [vmem:[%s230 + $0xb8] sm:$0xf]
      %v2688 = vld [vmem:[%s230 + $0xbc] sm:$0xf]
      %v2689 = vld [vmem:[%s230 + $0xc0] sm:$0xf]
      %v2690 = vld [vmem:[%s230 + $0xc4] sm:$0xf]
      %v2691 = vld [vmem:[%s230 + $0xc8] sm:$0xf]
      %v2692 = vld [vmem:[%s230 + $0xcc] sm:$0xf]
      %v2693 = vld [vmem:[%s230 + $0xd0] sm:$0xf]
      %v2694 = vld [vmem:[%s230 + $0xd4] sm:$0xf]
      %v2695 = vld [vmem:[%s230 + $0xd8] sm:$0x1]
      %s2696 = scalar_lea.vmem %s2, 40
      %v2697 = vld [vmem:[%s2696] sm:$0xf]
      %v2698 = vld [vmem:[%s2696 + $0x4] sm:$0xf]
      %v2748 = vunpack.c.l.b16 %v2647
      %v2749 = vunpack.c.l.b16 %v2648
      %v2750 = vunpack.c.l.b16 %v2649
      %v2751 = vunpack.c.l.b16 %v2650
      %v2752 = vunpack.c.l.b16 %v2651
      %v2753 = vunpack.c.l.b16 %v2652
      %v2754 = vunpack.c.l.b16 %v2653
      %v2755 = vunpack.c.l.b16 %v2654
      %v2756 = vunpack.c.l.b16 %v2655
      %v2757 = vunpack.c.l.b16 %v2656
      %v2758 = vunpack.c.l.b16 %v2657
      %v2759 = vunpack.c.l.b16 %v2658
      %v2760 = vunpack.c.l.b16 %v2659
      %v2761 = vunpack.c.l.b16 %v2660
      %v2762 = vunpack.c.l.b16 %v2661
      %v2763 = vunpack.c.l.b16 %v2662
      %v2764 = vunpack.c.l.b16 %v2663
      %v2765 = vunpack.c.l.b16 %v2664
      %v2766 = vunpack.c.l.b16 %v2665
      %v2767 = vunpack.c.l.b16 %v2666
      %v2768 = vunpack.c.l.b16 %v2667
      %v2769 = vunpack.c.l.b16 %v2668
      %v2770 = vunpack.c.l.b16 %v2669
      %v2771 = vunpack.c.l.b16 %v2670
      %v2772 = vunpack.c.l.b16 %v2671
      %v2773 = vunpack.c.l.b16 %v2672
      %v2774 = vunpack.c.l.b16 %v2673
      %v2775 = vunpack.c.l.b16 %v2674
      %v2776 = vunpack.c.l.b16 %v2675
      %v2777 = vunpack.c.l.b16 %v2676
      %v2778 = vunpack.c.l.b16 %v2677
      %v2779 = vunpack.c.l.b16 %v2678
      %v2780 = vunpack.c.l.b16 %v2679
      %v2781 = vunpack.c.l.b16 %v2680
      %v2782 = vunpack.c.l.b16 %v2681
      %v2783 = vunpack.c.l.b16 %v2682
      %v2784 = vunpack.c.l.b16 %v2683
      %v2785 = vunpack.c.l.b16 %v2684
      %v2786 = vunpack.c.l.b16 %v2685
      %v2787 = vunpack.c.l.b16 %v2686
      %v2788 = vunpack.c.l.b16 %v2687
      %v2789 = vunpack.c.l.b16 %v2688
      %v2790 = vunpack.c.l.b16 %v2689
      %v2791 = vunpack.c.l.b16 %v2690
      %v2792 = vunpack.c.l.b16 %v2691
      %v2793 = vunpack.c.l.b16 %v2692
      %v2794 = vunpack.c.l.b16 %v2693
      %v2795 = vunpack.c.l.b16 %v2694
      %v2796 = vunpack.c.l.b16 %v2695
      %v2797 = vpack.c.b16 %v2749, %v2748
      %v2798 = vpack.c.b16 %v2751, %v2750
      %v2799 = vpack.c.b16 %v2753, %v2752
      %v2800 = vpack.c.b16 %v2755, %v2754
      %v2801 = vpack.c.b16 %v2757, %v2756
      %v2802 = vpack.c.b16 %v2759, %v2758
      %v2803 = vpack.c.b16 %v2761, %v2760
      %v2804 = vpack.c.b16 %v2763, %v2762
      %v2805 = vpack.c.b16 %v2765, %v2764
      %v2806 = vpack.c.b16 %v2767, %v2766
      %v2807 = vpack.c.b16 %v2769, %v2768
      %v2808 = vpack.c.b16 %v2771, %v2770
      %v2809 = vpack.c.b16 %v2773, %v2772
      %v2810 = vpack.c.b16 %v2775, %v2774
      %v2811 = vpack.c.b16 %v2777, %v2776
      %v2812 = vpack.c.b16 %v2779, %v2778
      %v2813 = vpack.c.b16 %v2781, %v2780
      %v2814 = vpack.c.b16 %v2783, %v2782
      %v2815 = vpack.c.b16 %v2785, %v2784
      %v2816 = vpack.c.b16 %v2787, %v2786
      %v2817 = vpack.c.b16 %v2789, %v2788
      %v2818 = vpack.c.b16 %v2791, %v2790
      %v2819 = vpack.c.b16 %v2793, %v2792
      %v2820 = vpack.c.b16 %v2795, %v2794
      %v2821 = vpack.c.b16 %v2796, %v2796
      %v2823 = vshrl.u32 %v2797, 16
      %v2825 = vshll.u32 %v2797, 16
      %v2827 = vrot.slane %v2825, 1
      %v2828 = vor.u32 %v2823, %v2827
      %v2830 = vshll.u32 %v2798, 16
      %v2832 = vrot.slane %v2830, 1
      %v2833 = vsel %vm1259, %v2828, %v2832
      %v2834 = vshrl.u32 %v2798, 16
      %v2836 = vor.u32 %v2834, %v2832
      %v2838 = vshll.u32 %v2799, 16
      %v2840 = vrot.slane %v2838, 1
      %v2841 = vsel %vm1259, %v2836, %v2840
      %v2842 = vshrl.u32 %v2799, 16
      %v2844 = vor.u32 %v2842, %v2840
      %v2846 = vshll.u32 %v2800, 16
      %v2848 = vrot.slane %v2846, 1
      %v2849 = vsel %vm1259, %v2844, %v2848
      %v2850 = vshrl.u32 %v2800, 16
      %v2852 = vor.u32 %v2850, %v2848
      %v2854 = vshll.u32 %v2801, 16
      %v2856 = vrot.slane %v2854, 1
      %v2857 = vsel %vm1259, %v2852, %v2856
      %v2858 = vshrl.u32 %v2801, 16
      %v2860 = vor.u32 %v2858, %v2856
      %v2862 = vshll.u32 %v2802, 16
      %v2864 = vrot.slane %v2862, 1
      %v2865 = vsel %vm1259, %v2860, %v2864
      %v2866 = vshrl.u32 %v2802, 16
      %v2868 = vor.u32 %v2866, %v2864
      %v2870 = vshll.u32 %v2803, 16
      %v2872 = vrot.slane %v2870, 1
      %v2873 = vsel %vm1259, %v2868, %v2872
      %v2874 = vshrl.u32 %v2803, 16
      %v2876 = vor.u32 %v2874, %v2872
      %v2878 = vshll.u32 %v2804, 16
      %v2880 = vrot.slane %v2878, 1
      %v2881 = vsel %vm1259, %v2876, %v2880
      %v2882 = vshrl.u32 %v2804, 16
      %v2884 = vor.u32 %v2882, %v2880
      %v2886 = vshll.u32 %v2805, 16
      %v2888 = vrot.slane %v2886, 1
      %v2889 = vsel %vm1259, %v2884, %v2888
      %v2890 = vshrl.u32 %v2805, 16
      %v2892 = vor.u32 %v2890, %v2888
      %v2894 = vshll.u32 %v2806, 16
      %v2896 = vrot.slane %v2894, 1
      %v2897 = vsel %vm1259, %v2892, %v2896
      %v2898 = vshrl.u32 %v2806, 16
      %v2900 = vor.u32 %v2898, %v2896
      %v2902 = vshll.u32 %v2807, 16
      %v2904 = vrot.slane %v2902, 1
      %v2905 = vsel %vm1259, %v2900, %v2904
      %v2906 = vshrl.u32 %v2807, 16
      %v2908 = vor.u32 %v2906, %v2904
      %v2910 = vshll.u32 %v2808, 16
      %v2912 = vrot.slane %v2910, 1
      %v2913 = vsel %vm1259, %v2908, %v2912
      %v2914 = vshrl.u32 %v2808, 16
      %v2916 = vor.u32 %v2914, %v2912
      %v2918 = vshll.u32 %v2809, 16
      %v2920 = vrot.slane %v2918, 1
      %v2921 = vsel %vm1259, %v2916, %v2920
      %v2922 = vshrl.u32 %v2809, 16
      %v2924 = vor.u32 %v2922, %v2920
      %v2926 = vshll.u32 %v2810, 16
      %v2928 = vrot.slane %v2926, 1
      %v2929 = vsel %vm1259, %v2924, %v2928
      %v2930 = vshrl.u32 %v2810, 16
      %v2932 = vor.u32 %v2930, %v2928
      %v2934 = vshll.u32 %v2811, 16
      %v2936 = vrot.slane %v2934, 1
      %v2937 = vsel %vm1259, %v2932, %v2936
      %v2938 = vshrl.u32 %v2811, 16
      %v2940 = vor.u32 %v2938, %v2936
      %v2942 = vshll.u32 %v2812, 16
      %v2944 = vrot.slane %v2942, 1
      %v2945 = vsel %vm1259, %v2940, %v2944
      %v2946 = vshrl.u32 %v2812, 16
      %v2948 = vor.u32 %v2946, %v2944
      %v2950 = vshll.u32 %v2813, 16
      %v2952 = vrot.slane %v2950, 1
      %v2953 = vsel %vm1259, %v2948, %v2952
      %v2954 = vshrl.u32 %v2813, 16
      %v2956 = vor.u32 %v2954, %v2952
      %v2958 = vshll.u32 %v2814, 16
      %v2960 = vrot.slane %v2958, 1
      %v2961 = vsel %vm1259, %v2956, %v2960
      %v2962 = vshrl.u32 %v2814, 16
      %v2964 = vor.u32 %v2962, %v2960
      %v2966 = vshll.u32 %v2815, 16
      %v2968 = vrot.slane %v2966, 1
      %v2969 = vsel %vm1259, %v2964, %v2968
      %v2970 = vshrl.u32 %v2815, 16
      %v2972 = vor.u32 %v2970, %v2968
      %v2974 = vshll.u32 %v2816, 16
      %v2976 = vrot.slane %v2974, 1
      %v2977 = vsel %vm1259, %v2972, %v2976
      %v2978 = vshrl.u32 %v2816, 16
      %v2980 = vor.u32 %v2978, %v2976
      %v2982 = vshll.u32 %v2817, 16
      %v2984 = vrot.slane %v2982, 1
      %v2985 = vsel %vm1259, %v2980, %v2984
      %v2986 = vshrl.u32 %v2817, 16
      %v2988 = vor.u32 %v2986, %v2984
      %v2990 = vshll.u32 %v2818, 16
      %v2992 = vrot.slane %v2990, 1
      %v2993 = vsel %vm1259, %v2988, %v2992
      %v2994 = vshrl.u32 %v2818, 16
      %v2996 = vor.u32 %v2994, %v2992
      %v2998 = vshll.u32 %v2819, 16
      %v3000 = vrot.slane %v2998, 1
      %v3001 = vsel %vm1259, %v2996, %v3000
      %v3002 = vshrl.u32 %v2819, 16
      %v3004 = vor.u32 %v3002, %v3000
      %v3006 = vshll.u32 %v2820, 16
      %v3008 = vrot.slane %v3006, 1
      %v3009 = vsel %vm1259, %v3004, %v3008
      %v3010 = vshrl.u32 %v2820, 16
      %v3012 = vor.u32 %v3010, %v3008
      %v3014 = vshll.u32 %v2821, 16
      %v3016 = vrot.slane %v3014, 1
      %v3017 = vsel %vm1259, %v3012, %v3016
      %v3020 = vunpack.c.l.b16 %v2697
      %v3021 = vunpack.c.l.b16 %v2698
      %v3022 = vpack.c.b16 %v3021, %v3020
      %v3025 = vsel %vm423, %v2833, 0
      %v3028 = vsel %vm423, %v2841, 0
      %v3031 = vsel %vm423, %v2849, 0
      %v3034 = vsel %vm423, %v2857, 0
      %v3037 = vsel %vm423, %v2865, 0
      %v3040 = vsel %vm423, %v2873, 0
      %v3043 = vsel %vm423, %v2881, 0
      %v3046 = vsel %vm423, %v2889, 0
      %v3049 = vsel %vm423, %v2897, 0
      %v3052 = vsel %vm423, %v2905, 0
      %v3055 = vsel %vm423, %v2913, 0
      %v3058 = vsel %vm423, %v2921, 0
      %v3061 = vsel %vm423, %v2929, 0
      %v3064 = vsel %vm423, %v2937, 0
      %v3067 = vsel %vm423, %v2945, 0
      %v3070 = vsel %vm423, %v2953, 0
      %v3073 = vsel %vm423, %v2961, 0
      %v3076 = vsel %vm423, %v2969, 0
      %v3079 = vsel %vm423, %v2977, 0
      %v3082 = vsel %vm423, %v2985, 0
      %v3085 = vsel %vm423, %v2993, 0
      %v3088 = vsel %vm423, %v3001, 0
      %v3091 = vsel %vm423, %v3009, 0
      %v3094 = vsel %vm423, %v3017, 0
      %3096 = vmatpush.bf16.msra.mxu0 0
      %3097 = vmatpush.bf16.msra.mxu0 0
      %3098 = vmatpush.bf16.msra.mxu0 0
      %3099 = vmatpush.bf16.msra.mxu0 0
      %3100 = vmatpush.bf16.msra.mxu0 0
      %3101 = vmatpush.bf16.msra.mxu0 0
      %3102 = vmatpush.bf16.msra.mxu0 0
      %3103 = vmatpush.bf16.msra.mxu0 %v3022
      %3104 = vmatmul.bf16.gmra.mxu0 %v3025
      %v3105 = vpop.f32.mrf.mxu0
      %v3106 = vadd.f32 0.0, %v3105
      %v3107 = vpop.f32.mrf.mxu0
      %v3108 = vadd.f32 0.0, %v3107
      %3109 = vmatmul.bf16.gmra.mxu0 %v3028
      %v3110 = vpop.f32.mrf.mxu0
      %v3111 = vadd.f32 0.0, %v3110
      %v3112 = vpop.f32.mrf.mxu0
      %v3113 = vadd.f32 0.0, %v3112
      %3114 = vmatmul.bf16.gmra.mxu0 %v3031
      %v3115 = vpop.f32.mrf.mxu0
      %v3116 = vadd.f32 0.0, %v3115
      %v3117 = vpop.f32.mrf.mxu0
      %v3118 = vadd.f32 0.0, %v3117
      %3119 = vmatmul.bf16.gmra.mxu0 %v3034
      %v3120 = vpop.f32.mrf.mxu0
      %v3121 = vadd.f32 0.0, %v3120
      %v3122 = vpop.f32.mrf.mxu0
      %v3123 = vadd.f32 0.0, %v3122
      %3124 = vmatmul.bf16.gmra.mxu0 %v3037
      %v3125 = vpop.f32.mrf.mxu0
      %v3126 = vadd.f32 0.0, %v3125
      %v3127 = vpop.f32.mrf.mxu0
      %v3128 = vadd.f32 0.0, %v3127
      %3129 = vmatmul.bf16.gmra.mxu0 %v3040
      %v3130 = vpop.f32.mrf.mxu0
      %v3131 = vadd.f32 0.0, %v3130
      %v3132 = vpop.f32.mrf.mxu0
      %v3133 = vadd.f32 0.0, %v3132
      %3134 = vmatmul.bf16.gmra.mxu0 %v3043
      %v3135 = vpop.f32.mrf.mxu0
      %v3136 = vadd.f32 0.0, %v3135
      %v3137 = vpop.f32.mrf.mxu0
      %v3138 = vadd.f32 0.0, %v3137
      %3139 = vmatmul.bf16.gmra.mxu0 %v3046
      %v3140 = vpop.f32.mrf.mxu0
      %v3141 = vadd.f32 0.0, %v3140
      %v3142 = vpop.f32.mrf.mxu0
      %v3143 = vadd.f32 0.0, %v3142
      %3144 = vmatmul.bf16.gmra.mxu0 %v3049
      %v3145 = vpop.f32.mrf.mxu0
      %v3146 = vadd.f32 0.0, %v3145
      %v3147 = vpop.f32.mrf.mxu0
      %v3148 = vadd.f32 0.0, %v3147
      %3149 = vmatmul.bf16.gmra.mxu0 %v3052
      %v3150 = vpop.f32.mrf.mxu0
      %v3151 = vadd.f32 0.0, %v3150
      %v3152 = vpop.f32.mrf.mxu0
      %v3153 = vadd.f32 0.0, %v3152
      %3154 = vmatmul.bf16.gmra.mxu0 %v3055
      %v3155 = vpop.f32.mrf.mxu0
      %v3156 = vadd.f32 0.0, %v3155
      %v3157 = vpop.f32.mrf.mxu0
      %v3158 = vadd.f32 0.0, %v3157
      %3159 = vmatmul.bf16.gmra.mxu0 %v3058
      %v3160 = vpop.f32.mrf.mxu0
      %v3161 = vadd.f32 0.0, %v3160
      %v3162 = vpop.f32.mrf.mxu0
      %v3163 = vadd.f32 0.0, %v3162
      %3164 = vmatmul.bf16.gmra.mxu0 %v3061
      %v3165 = vpop.f32.mrf.mxu0
      %v3166 = vadd.f32 0.0, %v3165
      %v3167 = vpop.f32.mrf.mxu0
      %v3168 = vadd.f32 0.0, %v3167
      %3169 = vmatmul.bf16.gmra.mxu0 %v3064
      %v3170 = vpop.f32.mrf.mxu0
      %v3171 = vadd.f32 0.0, %v3170
      %v3172 = vpop.f32.mrf.mxu0
      %v3173 = vadd.f32 0.0, %v3172
      %3174 = vmatmul.bf16.gmra.mxu0 %v3067
      %v3175 = vpop.f32.mrf.mxu0
      %v3176 = vadd.f32 0.0, %v3175
      %v3177 = vpop.f32.mrf.mxu0
      %v3178 = vadd.f32 0.0, %v3177
      %3179 = vmatmul.bf16.gmra.mxu0 %v3070
      %v3180 = vpop.f32.mrf.mxu0
      %v3181 = vadd.f32 0.0, %v3180
      %v3182 = vpop.f32.mrf.mxu0
      %v3183 = vadd.f32 0.0, %v3182
      %3184 = vmatmul.bf16.gmra.mxu0 %v3073
      %v3185 = vpop.f32.mrf.mxu0
      %v3186 = vadd.f32 0.0, %v3185
      %v3187 = vpop.f32.mrf.mxu0
      %v3188 = vadd.f32 0.0, %v3187
      %3189 = vmatmul.bf16.gmra.mxu0 %v3076
      %v3190 = vpop.f32.mrf.mxu0
      %v3191 = vadd.f32 0.0, %v3190
      %v3192 = vpop.f32.mrf.mxu0
      %v3193 = vadd.f32 0.0, %v3192
      %3194 = vmatmul.bf16.gmra.mxu0 %v3079
      %v3195 = vpop.f32.mrf.mxu0
      %v3196 = vadd.f32 0.0, %v3195
      %v3197 = vpop.f32.mrf.mxu0
      %v3198 = vadd.f32 0.0, %v3197
      %3199 = vmatmul.bf16.gmra.mxu0 %v3082
      %v3200 = vpop.f32.mrf.mxu0
      %v3201 = vadd.f32 0.0, %v3200
      %v3202 = vpop.f32.mrf.mxu0
      %v3203 = vadd.f32 0.0, %v3202
      %3204 = vmatmul.bf16.gmra.mxu0 %v3085
      %v3205 = vpop.f32.mrf.mxu0
      %v3206 = vadd.f32 0.0, %v3205
      %v3207 = vpop.f32.mrf.mxu0
      %v3208 = vadd.f32 0.0, %v3207
      %3209 = vmatmul.bf16.gmra.mxu0 %v3088
      %v3210 = vpop.f32.mrf.mxu0
      %v3211 = vadd.f32 0.0, %v3210
      %v3212 = vpop.f32.mrf.mxu0
      %v3213 = vadd.f32 0.0, %v3212
      %3214 = vmatmul.bf16.gmra.mxu0 %v3091
      %v3215 = vpop.f32.mrf.mxu0
      %v3216 = vadd.f32 0.0, %v3215
      %v3217 = vpop.f32.mrf.mxu0
      %v3218 = vadd.f32 0.0, %v3217
      %3219 = vmatmul.bf16.gmra.mxu0 %v3094
      %v3220 = vpop.f32.mrf.mxu0
      %v3221 = vadd.f32 0.0, %v3220
      %v3222 = vpop.f32.mrf.mxu0
      %v3223 = vadd.f32 0.0, %v3222
      %3224 = vdwg.mxu0
      %v3225 = vadd.f32 %v2599, %v3106
      %v3226 = vadd.f32 %v2600, %v3108
      %v3227 = vadd.f32 %v2601, %v3111
      %v3228 = vadd.f32 %v2602, %v3113
      %v3229 = vadd.f32 %v2603, %v3116
      %v3230 = vadd.f32 %v2604, %v3118
      %v3231 = vadd.f32 %v2605, %v3121
      %v3232 = vadd.f32 %v2606, %v3123
      %v3233 = vadd.f32 %v2607, %v3126
      %v3234 = vadd.f32 %v2608, %v3128
      %v3235 = vadd.f32 %v2609, %v3131
      %v3236 = vadd.f32 %v2610, %v3133
      %v3237 = vadd.f32 %v2611, %v3136
      %v3238 = vadd.f32 %v2612, %v3138
      %v3239 = vadd.f32 %v2613, %v3141
      %v3240 = vadd.f32 %v2614, %v3143
      %v3241 = vadd.f32 %v2615, %v3146
      %v3242 = vadd.f32 %v2616, %v3148
      %v3243 = vadd.f32 %v2617, %v3151
      %v3244 = vadd.f32 %v2618, %v3153
      %v3245 = vadd.f32 %v2619, %v3156
      %v3246 = vadd.f32 %v2620, %v3158
      %v3247 = vadd.f32 %v2621, %v3161
      %v3248 = vadd.f32 %v2622, %v3163
      %v3249 = vadd.f32 %v2623, %v3166
      %v3250 = vadd.f32 %v2624, %v3168
      %v3251 = vadd.f32 %v2625, %v3171
      %v3252 = vadd.f32 %v2626, %v3173
      %v3253 = vadd.f32 %v2627, %v3176
      %v3254 = vadd.f32 %v2628, %v3178
      %v3255 = vadd.f32 %v2629, %v3181
      %v3256 = vadd.f32 %v2630, %v3183
      %v3257 = vadd.f32 %v2631, %v3186
      %v3258 = vadd.f32 %v2632, %v3188
      %v3259 = vadd.f32 %v2633, %v3191
      %v3260 = vadd.f32 %v2634, %v3193
      %v3261 = vadd.f32 %v2635, %v3196
      %v3262 = vadd.f32 %v2636, %v3198
      %v3263 = vadd.f32 %v2637, %v3201
      %v3264 = vadd.f32 %v2638, %v3203
      %v3265 = vadd.f32 %v2639, %v3206
      %v3266 = vadd.f32 %v2640, %v3208
      %v3267 = vadd.f32 %v2641, %v3211
      %v3268 = vadd.f32 %v2642, %v3213
      %v3269 = vadd.f32 %v2643, %v3216
      %v3270 = vadd.f32 %v2644, %v3218
      %v3271 = vadd.f32 %v2645, %v3221
      %v3272 = vadd.f32 %v2646, %v3223
      %v3273 = vld [vmem:[%s230 + $0x20] sm:$0x8]
      %v3274 = vld [vmem:[%s230 + $0x24] sm:$0xf]
      %v3275 = vld [vmem:[%s230 + $0x28] sm:$0xf]
      %v3276 = vld [vmem:[%s230 + $0x2c] sm:$0xf]
      %v3277 = vld [vmem:[%s230 + $0x30] sm:$0xf]
      %v3278 = vld [vmem:[%s230 + $0x34] sm:$0xf]
      %v3279 = vld [vmem:[%s230 + $0x38] sm:$0xf]
      %v3280 = vld [vmem:[%s230 + $0x3c] sm:$0xf]
      %v3281 = vld [vmem:[%s230 + $0x40] sm:$0xf]
      %v3282 = vld [vmem:[%s230 + $0x44] sm:$0xf]
      %v3283 = vld [vmem:[%s230 + $0x48] sm:$0xf]
      %v3284 = vld [vmem:[%s230 + $0x4c] sm:$0xf]
      %v3285 = vld [vmem:[%s230 + $0x50] sm:$0xf]
      %v3286 = vld [vmem:[%s230 + $0x54] sm:$0xf]
      %v3287 = vld [vmem:[%s230 + $0x58] sm:$0xf]
      %v3288 = vld [vmem:[%s230 + $0x5c] sm:$0xf]
      %v3289 = vld [vmem:[%s230 + $0x60] sm:$0xf]
      %v3290 = vld [vmem:[%s230 + $0x64] sm:$0xf]
      %v3291 = vld [vmem:[%s230 + $0x68] sm:$0xf]
      %v3292 = vld [vmem:[%s230 + $0x6c] sm:$0xf]
      %v3293 = vld [vmem:[%s230 + $0x70] sm:$0xf]
      %v3294 = vld [vmem:[%s230 + $0x74] sm:$0xf]
      %v3295 = vld [vmem:[%s230 + $0x78] sm:$0xf]
      %v3296 = vld [vmem:[%s230 + $0x7c] sm:$0xf]
      %v3297 = vld [vmem:[%s230 + $0x80] sm:$0xf]
      %v3298 = vld [vmem:[%s230 + $0x84] sm:$0xf]
      %v3299 = vld [vmem:[%s230 + $0x88] sm:$0xf]
      %v3300 = vld [vmem:[%s230 + $0x8c] sm:$0xf]
      %v3301 = vld [vmem:[%s230 + $0x90] sm:$0xf]
      %v3302 = vld [vmem:[%s230 + $0x94] sm:$0xf]
      %v3303 = vld [vmem:[%s230 + $0x98] sm:$0xf]
      %v3304 = vld [vmem:[%s230 + $0x9c] sm:$0xf]
      %v3305 = vld [vmem:[%s230 + $0xa0] sm:$0xf]
      %v3306 = vld [vmem:[%s230 + $0xa4] sm:$0xf]
      %v3307 = vld [vmem:[%s230 + $0xa8] sm:$0xf]
      %v3308 = vld [vmem:[%s230 + $0xac] sm:$0xf]
      %v3309 = vld [vmem:[%s230 + $0xb0] sm:$0xf]
      %v3310 = vld [vmem:[%s230 + $0xb4] sm:$0xf]
      %v3311 = vld [vmem:[%s230 + $0xb8] sm:$0xf]
      %v3312 = vld [vmem:[%s230 + $0xbc] sm:$0xf]
      %v3313 = vld [vmem:[%s230 + $0xc0] sm:$0xf]
      %v3314 = vld [vmem:[%s230 + $0xc4] sm:$0xf]
      %v3315 = vld [vmem:[%s230 + $0xc8] sm:$0xf]
      %v3316 = vld [vmem:[%s230 + $0xcc] sm:$0xf]
      %v3317 = vld [vmem:[%s230 + $0xd0] sm:$0xf]
      %v3318 = vld [vmem:[%s230 + $0xd4] sm:$0xf]
      %v3319 = vld [vmem:[%s230 + $0xd8] sm:$0xf]
      %v3320 = vld [vmem:[%s230 + $0xdc] sm:$0xf]
      %v3321 = vld [vmem:[%s230 + $0xe0] sm:$0xf]
      %s3322 = scalar_lea.vmem %s2, 48
      %v3323 = vld [vmem:[%s3322] sm:$0xf]
      %v3324 = vld [vmem:[%s3322 + $0x4] sm:$0xf]
      %v3374 = vunpack.c.l.b16 %v3273
      %v3375 = vunpack.c.l.b16 %v3274
      %v3376 = vunpack.c.l.b16 %v3275
      %v3377 = vunpack.c.l.b16 %v3276
      %v3378 = vunpack.c.l.b16 %v3277
      %v3379 = vunpack.c.l.b16 %v3278
      %v3380 = vunpack.c.l.b16 %v3279
      %v3381 = vunpack.c.l.b16 %v3280
      %v3382 = vunpack.c.l.b16 %v3281
      %v3383 = vunpack.c.l.b16 %v3282
      %v3384 = vunpack.c.l.b16 %v3283
      %v3385 = vunpack.c.l.b16 %v3284
      %v3386 = vunpack.c.l.b16 %v3285
      %v3387 = vunpack.c.l.b16 %v3286
      %v3388 = vunpack.c.l.b16 %v3287
      %v3389 = vunpack.c.l.b16 %v3288
      %v3390 = vunpack.c.l.b16 %v3289
      %v3391 = vunpack.c.l.b16 %v3290
      %v3392 = vunpack.c.l.b16 %v3291
      %v3393 = vunpack.c.l.b16 %v3292
      %v3394 = vunpack.c.l.b16 %v3293
      %v3395 = vunpack.c.l.b16 %v3294
      %v3396 = vunpack.c.l.b16 %v3295
      %v3397 = vunpack.c.l.b16 %v3296
      %v3398 = vunpack.c.l.b16 %v3297
      %v3399 = vunpack.c.l.b16 %v3298
      %v3400 = vunpack.c.l.b16 %v3299
      %v3401 = vunpack.c.l.b16 %v3300
      %v3402 = vunpack.c.l.b16 %v3301
      %v3403 = vunpack.c.l.b16 %v3302
      %v3404 = vunpack.c.l.b16 %v3303
      %v3405 = vunpack.c.l.b16 %v3304
      %v3406 = vunpack.c.l.b16 %v3305
      %v3407 = vunpack.c.l.b16 %v3306
      %v3408 = vunpack.c.l.b16 %v3307
      %v3409 = vunpack.c.l.b16 %v3308
      %v3410 = vunpack.c.l.b16 %v3309
      %v3411 = vunpack.c.l.b16 %v3310
      %v3412 = vunpack.c.l.b16 %v3311
      %v3413 = vunpack.c.l.b16 %v3312
      %v3414 = vunpack.c.l.b16 %v3313
      %v3415 = vunpack.c.l.b16 %v3314
      %v3416 = vunpack.c.l.b16 %v3315
      %v3417 = vunpack.c.l.b16 %v3316
      %v3418 = vunpack.c.l.b16 %v3317
      %v3419 = vunpack.c.l.b16 %v3318
      %v3420 = vunpack.c.l.b16 %v3319
      %v3421 = vunpack.c.l.b16 %v3320
      %v3422 = vunpack.c.l.b16 %v3321
      %v3423 = vpack.c.b16 %v3375, %v3374
      %v3424 = vpack.c.b16 %v3377, %v3376
      %v3425 = vpack.c.b16 %v3379, %v3378
      %v3426 = vpack.c.b16 %v3381, %v3380
      %v3427 = vpack.c.b16 %v3383, %v3382
      %v3428 = vpack.c.b16 %v3385, %v3384
      %v3429 = vpack.c.b16 %v3387, %v3386
      %v3430 = vpack.c.b16 %v3389, %v3388
      %v3431 = vpack.c.b16 %v3391, %v3390
      %v3432 = vpack.c.b16 %v3393, %v3392
      %v3433 = vpack.c.b16 %v3395, %v3394
      %v3434 = vpack.c.b16 %v3397, %v3396
      %v3435 = vpack.c.b16 %v3399, %v3398
      %v3436 = vpack.c.b16 %v3401, %v3400
      %v3437 = vpack.c.b16 %v3403, %v3402
      %v3438 = vpack.c.b16 %v3405, %v3404
      %v3439 = vpack.c.b16 %v3407, %v3406
      %v3440 = vpack.c.b16 %v3409, %v3408
      %v3441 = vpack.c.b16 %v3411, %v3410
      %v3442 = vpack.c.b16 %v3413, %v3412
      %v3443 = vpack.c.b16 %v3415, %v3414
      %v3444 = vpack.c.b16 %v3417, %v3416
      %v3445 = vpack.c.b16 %v3419, %v3418
      %v3446 = vpack.c.b16 %v3421, %v3420
      %v3447 = vpack.c.b16 %v3422, %v3422
      %v3449 = vshrl.u32 %v3423, 16
      %v3451 = vrot.slane %v3449, 3
      %v3452 = vshll.u32 %v3423, 16
      %v3454 = vrot.slane %v3452, 4
      %v3455 = vor.u32 %v3451, %v3454
      %v3457 = vshrl.u32 %v3424, 16
      %v3459 = vrot.slane %v3457, 3
      %v3460 = vshll.u32 %v3424, 16
      %v3462 = vrot.slane %v3460, 4
      %v3463 = vor.u32 %v3459, %v3462
      %v3464 = vsel %vm652, %v3455, %v3463
      %v3466 = vshrl.u32 %v3425, 16
      %v3468 = vrot.slane %v3466, 3
      %v3469 = vshll.u32 %v3425, 16
      %v3471 = vrot.slane %v3469, 4
      %v3472 = vor.u32 %v3468, %v3471
      %v3473 = vsel %vm652, %v3463, %v3472
      %v3475 = vshrl.u32 %v3426, 16
      %v3477 = vrot.slane %v3475, 3
      %v3478 = vshll.u32 %v3426, 16
      %v3480 = vrot.slane %v3478, 4
      %v3481 = vor.u32 %v3477, %v3480
      %v3482 = vsel %vm652, %v3472, %v3481
      %v3484 = vshrl.u32 %v3427, 16
      %v3486 = vrot.slane %v3484, 3
      %v3487 = vshll.u32 %v3427, 16
      %v3489 = vrot.slane %v3487, 4
      %v3490 = vor.u32 %v3486, %v3489
      %v3491 = vsel %vm652, %v3481, %v3490
      %v3493 = vshrl.u32 %v3428, 16
      %v3495 = vrot.slane %v3493, 3
      %v3496 = vshll.u32 %v3428, 16
      %v3498 = vrot.slane %v3496, 4
      %v3499 = vor.u32 %v3495, %v3498
      %v3500 = vsel %vm652, %v3490, %v3499
      %v3502 = vshrl.u32 %v3429, 16
      %v3504 = vrot.slane %v3502, 3
      %v3505 = vshll.u32 %v3429, 16
      %v3507 = vrot.slane %v3505, 4
      %v3508 = vor.u32 %v3504, %v3507
      %v3509 = vsel %vm652, %v3499, %v3508
      %v3511 = vshrl.u32 %v3430, 16
      %v3513 = vrot.slane %v3511, 3
      %v3514 = vshll.u32 %v3430, 16
      %v3516 = vrot.slane %v3514, 4
      %v3517 = vor.u32 %v3513, %v3516
      %v3518 = vsel %vm652, %v3508, %v3517
      %v3520 = vshrl.u32 %v3431, 16
      %v3522 = vrot.slane %v3520, 3
      %v3523 = vshll.u32 %v3431, 16
      %v3525 = vrot.slane %v3523, 4
      %v3526 = vor.u32 %v3522, %v3525
      %v3527 = vsel %vm652, %v3517, %v3526
      %v3529 = vshrl.u32 %v3432, 16
      %v3531 = vrot.slane %v3529, 3
      %v3532 = vshll.u32 %v3432, 16
      %v3534 = vrot.slane %v3532, 4
      %v3535 = vor.u32 %v3531, %v3534
      %v3536 = vsel %vm652, %v3526, %v3535
      %v3538 = vshrl.u32 %v3433, 16
      %v3540 = vrot.slane %v3538, 3
      %v3541 = vshll.u32 %v3433, 16
      %v3543 = vrot.slane %v3541, 4
      %v3544 = vor.u32 %v3540, %v3543
      %v3545 = vsel %vm652, %v3535, %v3544
      %v3547 = vshrl.u32 %v3434, 16
      %v3549 = vrot.slane %v3547, 3
      %v3550 = vshll.u32 %v3434, 16
      %v3552 = vrot.slane %v3550, 4
      %v3553 = vor.u32 %v3549, %v3552
      %v3554 = vsel %vm652, %v3544, %v3553
      %v3556 = vshrl.u32 %v3435, 16
      %v3558 = vrot.slane %v3556, 3
      %v3559 = vshll.u32 %v3435, 16
      %v3561 = vrot.slane %v3559, 4
      %v3562 = vor.u32 %v3558, %v3561
      %v3563 = vsel %vm652, %v3553, %v3562
      %v3565 = vshrl.u32 %v3436, 16
      %v3567 = vrot.slane %v3565, 3
      %v3568 = vshll.u32 %v3436, 16
      %v3570 = vrot.slane %v3568, 4
      %v3571 = vor.u32 %v3567, %v3570
      %v3572 = vsel %vm652, %v3562, %v3571
      %v3574 = vshrl.u32 %v3437, 16
      %v3576 = vrot.slane %v3574, 3
      %v3577 = vshll.u32 %v3437, 16
      %v3579 = vrot.slane %v3577, 4
      %v3580 = vor.u32 %v3576, %v3579
      %v3581 = vsel %vm652, %v3571, %v3580
      %v3583 = vshrl.u32 %v3438, 16
      %v3585 = vrot.slane %v3583, 3
      %v3586 = vshll.u32 %v3438, 16
      %v3588 = vrot.slane %v3586, 4
      %v3589 = vor.u32 %v3585, %v3588
      %v3590 = vsel %vm652, %v3580, %v3589
      %v3592 = vshrl.u32 %v3439, 16
      %v3594 = vrot.slane %v3592, 3
      %v3595 = vshll.u32 %v3439, 16
      %v3597 = vrot.slane %v3595, 4
      %v3598 = vor.u32 %v3594, %v3597
      %v3599 = vsel %vm652, %v3589, %v3598
      %v3601 = vshrl.u32 %v3440, 16
      %v3603 = vrot.slane %v3601, 3
      %v3604 = vshll.u32 %v3440, 16
      %v3606 = vrot.slane %v3604, 4
      %v3607 = vor.u32 %v3603, %v3606
      %v3608 = vsel %vm652, %v3598, %v3607
      %v3610 = vshrl.u32 %v3441, 16
      %v3612 = vrot.slane %v3610, 3
      %v3613 = vshll.u32 %v3441, 16
      %v3615 = vrot.slane %v3613, 4
      %v3616 = vor.u32 %v3612, %v3615
      %v3617 = vsel %vm652, %v3607, %v3616
      %v3619 = vshrl.u32 %v3442, 16
      %v3621 = vrot.slane %v3619, 3
      %v3622 = vshll.u32 %v3442, 16
      %v3624 = vrot.slane %v3622, 4
      %v3625 = vor.u32 %v3621, %v3624
      %v3626 = vsel %vm652, %v3616, %v3625
      %v3628 = vshrl.u32 %v3443, 16
      %v3630 = vrot.slane %v3628, 3
      %v3631 = vshll.u32 %v3443, 16
      %v3633 = vrot.slane %v3631, 4
      %v3634 = vor.u32 %v3630, %v3633
      %v3635 = vsel %vm652, %v3625, %v3634
      %v3637 = vshrl.u32 %v3444, 16
      %v3639 = vrot.slane %v3637, 3
      %v3640 = vshll.u32 %v3444, 16
      %v3642 = vrot.slane %v3640, 4
      %v3643 = vor.u32 %v3639, %v3642
      %v3644 = vsel %vm652, %v3634, %v3643
      %v3646 = vshrl.u32 %v3445, 16
      %v3648 = vrot.slane %v3646, 3
      %v3649 = vshll.u32 %v3445, 16
      %v3651 = vrot.slane %v3649, 4
      %v3652 = vor.u32 %v3648, %v3651
      %v3653 = vsel %vm652, %v3643, %v3652
      %v3655 = vshrl.u32 %v3446, 16
      %v3657 = vrot.slane %v3655, 3
      %v3658 = vshll.u32 %v3446, 16
      %v3660 = vrot.slane %v3658, 4
      %v3661 = vor.u32 %v3657, %v3660
      %v3662 = vsel %vm652, %v3652, %v3661
      %v3664 = vshrl.u32 %v3447, 16
      %v3666 = vrot.slane %v3664, 3
      %v3667 = vshll.u32 %v3447, 16
      %v3669 = vrot.slane %v3667, 4
      %v3670 = vor.u32 %v3666, %v3669
      %v3671 = vsel %vm652, %v3661, %v3670
      %v3674 = vunpack.c.l.b16 %v3323
      %v3675 = vunpack.c.l.b16 %v3324
      %v3676 = vpack.c.b16 %v3675, %v3674
      %v3679 = vsel %vm423, %v3464, 0
      %v3682 = vsel %vm423, %v3473, 0
      %v3685 = vsel %vm423, %v3482, 0
      %v3688 = vsel %vm423, %v3491, 0
      %v3691 = vsel %vm423, %v3500, 0
      %v3694 = vsel %vm423, %v3509, 0
      %v3697 = vsel %vm423, %v3518, 0
      %v3700 = vsel %vm423, %v3527, 0
      %v3703 = vsel %vm423, %v3536, 0
      %v3706 = vsel %vm423, %v3545, 0
      %v3709 = vsel %vm423, %v3554, 0
      %v3712 = vsel %vm423, %v3563, 0
      %v3715 = vsel %vm423, %v3572, 0
      %v3718 = vsel %vm423, %v3581, 0
      %v3721 = vsel %vm423, %v3590, 0
      %v3724 = vsel %vm423, %v3599, 0
      %v3727 = vsel %vm423, %v3608, 0
      %v3730 = vsel %vm423, %v3617, 0
      %v3733 = vsel %vm423, %v3626, 0
      %v3736 = vsel %vm423, %v3635, 0
      %v3739 = vsel %vm423, %v3644, 0
      %v3742 = vsel %vm423, %v3653, 0
      %v3745 = vsel %vm423, %v3662, 0
      %v3748 = vsel %vm423, %v3671, 0
      %3750 = vmatpush.bf16.msra.mxu0 0
      %3751 = vmatpush.bf16.msra.mxu0 0
      %3752 = vmatpush.bf16.msra.mxu0 0
      %3753 = vmatpush.bf16.msra.mxu0 0
      %3754 = vmatpush.bf16.msra.mxu0 0
      %3755 = vmatpush.bf16.msra.mxu0 0
      %3756 = vmatpush.bf16.msra.mxu0 0
      %3757 = vmatpush.bf16.msra.mxu0 %v3676
      %3758 = vmatmul.bf16.gmra.mxu0 %v3679
      %v3759 = vpop.f32.mrf.mxu0
      %v3760 = vadd.f32 0.0, %v3759
      %v3761 = vpop.f32.mrf.mxu0
      %v3762 = vadd.f32 0.0, %v3761
      %3763 = vmatmul.bf16.gmra.mxu0 %v3682
      %v3764 = vpop.f32.mrf.mxu0
      %v3765 = vadd.f32 0.0, %v3764
      %v3766 = vpop.f32.mrf.mxu0
      %v3767 = vadd.f32 0.0, %v3766
      %3768 = vmatmul.bf16.gmra.mxu0 %v3685
      %v3769 = vpop.f32.mrf.mxu0
      %v3770 = vadd.f32 0.0, %v3769
      %v3771 = vpop.f32.mrf.mxu0
      %v3772 = vadd.f32 0.0, %v3771
      %3773 = vmatmul.bf16.gmra.mxu0 %v3688
      %v3774 = vpop.f32.mrf.mxu0
      %v3775 = vadd.f32 0.0, %v3774
      %v3776 = vpop.f32.mrf.mxu0
      %v3777 = vadd.f32 0.0, %v3776
      %3778 = vmatmul.bf16.gmra.mxu0 %v3691
      %v3779 = vpop.f32.mrf.mxu0
      %v3780 = vadd.f32 0.0, %v3779
      %v3781 = vpop.f32.mrf.mxu0
      %v3782 = vadd.f32 0.0, %v3781
      %3783 = vmatmul.bf16.gmra.mxu0 %v3694
      %v3784 = vpop.f32.mrf.mxu0
      %v3785 = vadd.f32 0.0, %v3784
      %v3786 = vpop.f32.mrf.mxu0
      %v3787 = vadd.f32 0.0, %v3786
      %3788 = vmatmul.bf16.gmra.mxu0 %v3697
      %v3789 = vpop.f32.mrf.mxu0
      %v3790 = vadd.f32 0.0, %v3789
      %v3791 = vpop.f32.mrf.mxu0
      %v3792 = vadd.f32 0.0, %v3791
      %3793 = vmatmul.bf16.gmra.mxu0 %v3700
      %v3794 = vpop.f32.mrf.mxu0
      %v3795 = vadd.f32 0.0, %v3794
      %v3796 = vpop.f32.mrf.mxu0
      %v3797 = vadd.f32 0.0, %v3796
      %3798 = vmatmul.bf16.gmra.mxu0 %v3703
      %v3799 = vpop.f32.mrf.mxu0
      %v3800 = vadd.f32 0.0, %v3799
      %v3801 = vpop.f32.mrf.mxu0
      %v3802 = vadd.f32 0.0, %v3801
      %3803 = vmatmul.bf16.gmra.mxu0 %v3706
      %v3804 = vpop.f32.mrf.mxu0
      %v3805 = vadd.f32 0.0, %v3804
      %v3806 = vpop.f32.mrf.mxu0
      %v3807 = vadd.f32 0.0, %v3806
      %3808 = vmatmul.bf16.gmra.mxu0 %v3709
      %v3809 = vpop.f32.mrf.mxu0
      %v3810 = vadd.f32 0.0, %v3809
      %v3811 = vpop.f32.mrf.mxu0
      %v3812 = vadd.f32 0.0, %v3811
      %3813 = vmatmul.bf16.gmra.mxu0 %v3712
      %v3814 = vpop.f32.mrf.mxu0
      %v3815 = vadd.f32 0.0, %v3814
      %v3816 = vpop.f32.mrf.mxu0
      %v3817 = vadd.f32 0.0, %v3816
      %3818 = vmatmul.bf16.gmra.mxu0 %v3715
      %v3819 = vpop.f32.mrf.mxu0
      %v3820 = vadd.f32 0.0, %v3819
      %v3821 = vpop.f32.mrf.mxu0
      %v3822 = vadd.f32 0.0, %v3821
      %3823 = vmatmul.bf16.gmra.mxu0 %v3718
      %v3824 = vpop.f32.mrf.mxu0
      %v3825 = vadd.f32 0.0, %v3824
      %v3826 = vpop.f32.mrf.mxu0
      %v3827 = vadd.f32 0.0, %v3826
      %3828 = vmatmul.bf16.gmra.mxu0 %v3721
      %v3829 = vpop.f32.mrf.mxu0
      %v3830 = vadd.f32 0.0, %v3829
      %v3831 = vpop.f32.mrf.mxu0
      %v3832 = vadd.f32 0.0, %v3831
      %3833 = vmatmul.bf16.gmra.mxu0 %v3724
      %v3834 = vpop.f32.mrf.mxu0
      %v3835 = vadd.f32 0.0, %v3834
      %v3836 = vpop.f32.mrf.mxu0
      %v3837 = vadd.f32 0.0, %v3836
      %3838 = vmatmul.bf16.gmra.mxu0 %v3727
      %v3839 = vpop.f32.mrf.mxu0
      %v3840 = vadd.f32 0.0, %v3839
      %v3841 = vpop.f32.mrf.mxu0
      %v3842 = vadd.f32 0.0, %v3841
      %3843 = vmatmul.bf16.gmra.mxu0 %v3730
      %v3844 = vpop.f32.mrf.mxu0
      %v3845 = vadd.f32 0.0, %v3844
      %v3846 = vpop.f32.mrf.mxu0
      %v3847 = vadd.f32 0.0, %v3846
      %3848 = vmatmul.bf16.gmra.mxu0 %v3733
      %v3849 = vpop.f32.mrf.mxu0
      %v3850 = vadd.f32 0.0, %v3849
      %v3851 = vpop.f32.mrf.mxu0
      %v3852 = vadd.f32 0.0, %v3851
      %3853 = vmatmul.bf16.gmra.mxu0 %v3736
      %v3854 = vpop.f32.mrf.mxu0
      %v3855 = vadd.f32 0.0, %v3854
      %v3856 = vpop.f32.mrf.mxu0
      %v3857 = vadd.f32 0.0, %v3856
      %3858 = vmatmul.bf16.gmra.mxu0 %v3739
      %v3859 = vpop.f32.mrf.mxu0
      %v3860 = vadd.f32 0.0, %v3859
      %v3861 = vpop.f32.mrf.mxu0
      %v3862 = vadd.f32 0.0, %v3861
      %3863 = vmatmul.bf16.gmra.mxu0 %v3742
      %v3864 = vpop.f32.mrf.mxu0
      %v3865 = vadd.f32 0.0, %v3864
      %v3866 = vpop.f32.mrf.mxu0
      %v3867 = vadd.f32 0.0, %v3866
      %3868 = vmatmul.bf16.gmra.mxu0 %v3745
      %v3869 = vpop.f32.mrf.mxu0
      %v3870 = vadd.f32 0.0, %v3869
      %v3871 = vpop.f32.mrf.mxu0
      %v3872 = vadd.f32 0.0, %v3871
      %3873 = vmatmul.bf16.gmra.mxu0 %v3748
      %v3874 = vpop.f32.mrf.mxu0
      %v3875 = vadd.f32 0.0, %v3874
      %v3876 = vpop.f32.mrf.mxu0
      %v3877 = vadd.f32 0.0, %v3876
      %3878 = vdwg.mxu0
      %v3879 = vadd.f32 %v3225, %v3760
      %v3880 = vadd.f32 %v3226, %v3762
      %v3881 = vadd.f32 %v3227, %v3765
      %v3882 = vadd.f32 %v3228, %v3767
      %v3883 = vadd.f32 %v3229, %v3770
      %v3884 = vadd.f32 %v3230, %v3772
      %v3885 = vadd.f32 %v3231, %v3775
      %v3886 = vadd.f32 %v3232, %v3777
      %v3887 = vadd.f32 %v3233, %v3780
      %v3888 = vadd.f32 %v3234, %v3782
      %v3889 = vadd.f32 %v3235, %v3785
      %v3890 = vadd.f32 %v3236, %v3787
      %v3891 = vadd.f32 %v3237, %v3790
      %v3892 = vadd.f32 %v3238, %v3792
      %v3893 = vadd.f32 %v3239, %v3795
      %v3894 = vadd.f32 %v3240, %v3797
      %v3895 = vadd.f32 %v3241, %v3800
      %v3896 = vadd.f32 %v3242, %v3802
      %v3897 = vadd.f32 %v3243, %v3805
      %v3898 = vadd.f32 %v3244, %v3807
      %v3899 = vadd.f32 %v3245, %v3810
      %v3900 = vadd.f32 %v3246, %v3812
      %v3901 = vadd.f32 %v3247, %v3815
      %v3902 = vadd.f32 %v3248, %v3817
      %v3903 = vadd.f32 %v3249, %v3820
      %v3904 = vadd.f32 %v3250, %v3822
      %v3905 = vadd.f32 %v3251, %v3825
      %v3906 = vadd.f32 %v3252, %v3827
      %v3907 = vadd.f32 %v3253, %v3830
      %v3908 = vadd.f32 %v3254, %v3832
      %v3909 = vadd.f32 %v3255, %v3835
      %v3910 = vadd.f32 %v3256, %v3837
      %v3911 = vadd.f32 %v3257, %v3840
      %v3912 = vadd.f32 %v3258, %v3842
      %v3913 = vadd.f32 %v3259, %v3845
      %v3914 = vadd.f32 %v3260, %v3847
      %v3915 = vadd.f32 %v3261, %v3850
      %v3916 = vadd.f32 %v3262, %v3852
      %v3917 = vadd.f32 %v3263, %v3855
      %v3918 = vadd.f32 %v3264, %v3857
      %v3919 = vadd.f32 %v3265, %v3860
      %v3920 = vadd.f32 %v3266, %v3862
      %v3921 = vadd.f32 %v3267, %v3865
      %v3922 = vadd.f32 %v3268, %v3867
      %v3923 = vadd.f32 %v3269, %v3870
      %v3924 = vadd.f32 %v3270, %v3872
      %v3925 = vadd.f32 %v3271, %v3875
      %v3926 = vadd.f32 %v3272, %v3877
      %s3927 = scalar_lea.vmem %s2, 56
      %v3928 = vld [vmem:[%s3927] sm:$0xf]
      %v3929 = vld [vmem:[%s3927 + $0x4] sm:$0xf]
      %v3930 = vpack.c.b16 %v3376, %v3375
      %v3931 = vpack.c.b16 %v3378, %v3377
      %v3932 = vpack.c.b16 %v3380, %v3379
      %v3933 = vpack.c.b16 %v3382, %v3381
      %v3934 = vpack.c.b16 %v3384, %v3383
      %v3935 = vpack.c.b16 %v3386, %v3385
      %v3936 = vpack.c.b16 %v3388, %v3387
      %v3937 = vpack.c.b16 %v3390, %v3389
      %v3938 = vpack.c.b16 %v3392, %v3391
      %v3939 = vpack.c.b16 %v3394, %v3393
      %v3940 = vpack.c.b16 %v3396, %v3395
      %v3941 = vpack.c.b16 %v3398, %v3397
      %v3942 = vpack.c.b16 %v3400, %v3399
      %v3943 = vpack.c.b16 %v3402, %v3401
      %v3944 = vpack.c.b16 %v3404, %v3403
      %v3945 = vpack.c.b16 %v3406, %v3405
      %v3946 = vpack.c.b16 %v3408, %v3407
      %v3947 = vpack.c.b16 %v3410, %v3409
      %v3948 = vpack.c.b16 %v3412, %v3411
      %v3949 = vpack.c.b16 %v3414, %v3413
      %v3950 = vpack.c.b16 %v3416, %v3415
      %v3951 = vpack.c.b16 %v3418, %v3417
      %v3952 = vpack.c.b16 %v3420, %v3419
      %v3953 = vpack.c.b16 %v3422, %v3421
      %v3956 = vunpack.c.l.b16 %v3928
      %v3957 = vunpack.c.l.b16 %v3929
      %v3958 = vpack.c.b16 %v3957, %v3956
      %v3961 = vsel %vm423, %v3930, 0
      %v3964 = vsel %vm423, %v3931, 0
      %v3967 = vsel %vm423, %v3932, 0
      %v3970 = vsel %vm423, %v3933, 0
      %v3973 = vsel %vm423, %v3934, 0
      %v3976 = vsel %vm423, %v3935, 0
      %v3979 = vsel %vm423, %v3936, 0
      %v3982 = vsel %vm423, %v3937, 0
      %v3985 = vsel %vm423, %v3938, 0
      %v3988 = vsel %vm423, %v3939, 0
      %v3991 = vsel %vm423, %v3940, 0
      %v3994 = vsel %vm423, %v3941, 0
      %v3997 = vsel %vm423, %v3942, 0
      %v4000 = vsel %vm423, %v3943, 0
      %v4003 = vsel %vm423, %v3944, 0
      %v4006 = vsel %vm423, %v3945, 0
      %v4009 = vsel %vm423, %v3946, 0
      %v4012 = vsel %vm423, %v3947, 0
      %v4015 = vsel %vm423, %v3948, 0
      %v4018 = vsel %vm423, %v3949, 0
      %v4021 = vsel %vm423, %v3950, 0
      %v4024 = vsel %vm423, %v3951, 0
      %v4027 = vsel %vm423, %v3952, 0
      %v4030 = vsel %vm423, %v3953, 0
      %4032 = vmatpush.bf16.msra.mxu0 0
      %4033 = vmatpush.bf16.msra.mxu0 0
      %4034 = vmatpush.bf16.msra.mxu0 0
      %4035 = vmatpush.bf16.msra.mxu0 0
      %4036 = vmatpush.bf16.msra.mxu0 0
      %4037 = vmatpush.bf16.msra.mxu0 0
      %4038 = vmatpush.bf16.msra.mxu0 0
      %4039 = vmatpush.bf16.msra.mxu0 %v3958
      %4040 = vmatmul.bf16.gmra.mxu0 %v3961
      %v4041 = vpop.f32.mrf.mxu0
      %v4042 = vadd.f32 0.0, %v4041
      %v4043 = vpop.f32.mrf.mxu0
      %v4044 = vadd.f32 0.0, %v4043
      %4045 = vmatmul.bf16.gmra.mxu0 %v3964
      %v4046 = vpop.f32.mrf.mxu0
      %v4047 = vadd.f32 0.0, %v4046
      %v4048 = vpop.f32.mrf.mxu0
      %v4049 = vadd.f32 0.0, %v4048
      %4050 = vmatmul.bf16.gmra.mxu0 %v3967
      %v4051 = vpop.f32.mrf.mxu0
      %v4052 = vadd.f32 0.0, %v4051
      %v4053 = vpop.f32.mrf.mxu0
      %v4054 = vadd.f32 0.0, %v4053
      %4055 = vmatmul.bf16.gmra.mxu0 %v3970
      %v4056 = vpop.f32.mrf.mxu0
      %v4057 = vadd.f32 0.0, %v4056
      %v4058 = vpop.f32.mrf.mxu0
      %v4059 = vadd.f32 0.0, %v4058
      %4060 = vmatmul.bf16.gmra.mxu0 %v3973
      %v4061 = vpop.f32.mrf.mxu0
      %v4062 = vadd.f32 0.0, %v4061
      %v4063 = vpop.f32.mrf.mxu0
      %v4064 = vadd.f32 0.0, %v4063
      %4065 = vmatmul.bf16.gmra.mxu0 %v3976
      %v4066 = vpop.f32.mrf.mxu0
      %v4067 = vadd.f32 0.0, %v4066
      %v4068 = vpop.f32.mrf.mxu0
      %v4069 = vadd.f32 0.0, %v4068
      %4070 = vmatmul.bf16.gmra.mxu0 %v3979
      %v4071 = vpop.f32.mrf.mxu0
      %v4072 = vadd.f32 0.0, %v4071
      %v4073 = vpop.f32.mrf.mxu0
      %v4074 = vadd.f32 0.0, %v4073
      %4075 = vmatmul.bf16.gmra.mxu0 %v3982
      %v4076 = vpop.f32.mrf.mxu0
      %v4077 = vadd.f32 0.0, %v4076
      %v4078 = vpop.f32.mrf.mxu0
      %v4079 = vadd.f32 0.0, %v4078
      %4080 = vmatmul.bf16.gmra.mxu0 %v3985
      %v4081 = vpop.f32.mrf.mxu0
      %v4082 = vadd.f32 0.0, %v4081
      %v4083 = vpop.f32.mrf.mxu0
      %v4084 = vadd.f32 0.0, %v4083
      %4085 = vmatmul.bf16.gmra.mxu0 %v3988
      %v4086 = vpop.f32.mrf.mxu0
      %v4087 = vadd.f32 0.0, %v4086
      %v4088 = vpop.f32.mrf.mxu0
      %v4089 = vadd.f32 0.0, %v4088
      %4090 = vmatmul.bf16.gmra.mxu0 %v3991
      %v4091 = vpop.f32.mrf.mxu0
      %v4092 = vadd.f32 0.0, %v4091
      %v4093 = vpop.f32.mrf.mxu0
      %v4094 = vadd.f32 0.0, %v4093
      %4095 = vmatmul.bf16.gmra.mxu0 %v3994
      %v4096 = vpop.f32.mrf.mxu0
      %v4097 = vadd.f32 0.0, %v4096
      %v4098 = vpop.f32.mrf.mxu0
      %v4099 = vadd.f32 0.0, %v4098
      %4100 = vmatmul.bf16.gmra.mxu0 %v3997
      %v4101 = vpop.f32.mrf.mxu0
      %v4102 = vadd.f32 0.0, %v4101
      %v4103 = vpop.f32.mrf.mxu0
      %v4104 = vadd.f32 0.0, %v4103
      %4105 = vmatmul.bf16.gmra.mxu0 %v4000
      %v4106 = vpop.f32.mrf.mxu0
      %v4107 = vadd.f32 0.0, %v4106
      %v4108 = vpop.f32.mrf.mxu0
      %v4109 = vadd.f32 0.0, %v4108
      %4110 = vmatmul.bf16.gmra.mxu0 %v4003
      %v4111 = vpop.f32.mrf.mxu0
      %v4112 = vadd.f32 0.0, %v4111
      %v4113 = vpop.f32.mrf.mxu0
      %v4114 = vadd.f32 0.0, %v4113
      %4115 = vmatmul.bf16.gmra.mxu0 %v4006
      %v4116 = vpop.f32.mrf.mxu0
      %v4117 = vadd.f32 0.0, %v4116
      %v4118 = vpop.f32.mrf.mxu0
      %v4119 = vadd.f32 0.0, %v4118
      %4120 = vmatmul.bf16.gmra.mxu0 %v4009
      %v4121 = vpop.f32.mrf.mxu0
      %v4122 = vadd.f32 0.0, %v4121
      %v4123 = vpop.f32.mrf.mxu0
      %v4124 = vadd.f32 0.0, %v4123
      %4125 = vmatmul.bf16.gmra.mxu0 %v4012
      %v4126 = vpop.f32.mrf.mxu0
      %v4127 = vadd.f32 0.0, %v4126
      %v4128 = vpop.f32.mrf.mxu0
      %v4129 = vadd.f32 0.0, %v4128
      %4130 = vmatmul.bf16.gmra.mxu0 %v4015
      %v4131 = vpop.f32.mrf.mxu0
      %v4132 = vadd.f32 0.0, %v4131
      %v4133 = vpop.f32.mrf.mxu0
      %v4134 = vadd.f32 0.0, %v4133
      %4135 = vmatmul.bf16.gmra.mxu0 %v4018
      %v4136 = vpop.f32.mrf.mxu0
      %v4137 = vadd.f32 0.0, %v4136
      %v4138 = vpop.f32.mrf.mxu0
      %v4139 = vadd.f32 0.0, %v4138
      %4140 = vmatmul.bf16.gmra.mxu0 %v4021
      %v4141 = vpop.f32.mrf.mxu0
      %v4142 = vadd.f32 0.0, %v4141
      %v4143 = vpop.f32.mrf.mxu0
      %v4144 = vadd.f32 0.0, %v4143
      %4145 = vmatmul.bf16.gmra.mxu0 %v4024
      %v4146 = vpop.f32.mrf.mxu0
      %v4147 = vadd.f32 0.0, %v4146
      %v4148 = vpop.f32.mrf.mxu0
      %v4149 = vadd.f32 0.0, %v4148
      %4150 = vmatmul.bf16.gmra.mxu0 %v4027
      %v4151 = vpop.f32.mrf.mxu0
      %v4152 = vadd.f32 0.0, %v4151
      %v4153 = vpop.f32.mrf.mxu0
      %v4154 = vadd.f32 0.0, %v4153
      %4155 = vmatmul.bf16.gmra.mxu0 %v4030
      %v4156 = vpop.f32.mrf.mxu0
      %v4157 = vadd.f32 0.0, %v4156
      %v4158 = vpop.f32.mrf.mxu0
      %v4159 = vadd.f32 0.0, %v4158
      %4160 = vdwg.mxu0
      %v4161 = vadd.f32 %v3879, %v4042
      %v4162 = vadd.f32 %v3880, %v4044
      %v4163 = vadd.f32 %v3881, %v4047
      %v4164 = vadd.f32 %v3882, %v4049
      %v4165 = vadd.f32 %v3883, %v4052
      %v4166 = vadd.f32 %v3884, %v4054
      %v4167 = vadd.f32 %v3885, %v4057
      %v4168 = vadd.f32 %v3886, %v4059
      %v4169 = vadd.f32 %v3887, %v4062
      %v4170 = vadd.f32 %v3888, %v4064
      %v4171 = vadd.f32 %v3889, %v4067
      %v4172 = vadd.f32 %v3890, %v4069
      %v4173 = vadd.f32 %v3891, %v4072
      %v4174 = vadd.f32 %v3892, %v4074
      %v4175 = vadd.f32 %v3893, %v4077
      %v4176 = vadd.f32 %v3894, %v4079
      %v4177 = vadd.f32 %v3895, %v4082
      %v4178 = vadd.f32 %v3896, %v4084
      %v4179 = vadd.f32 %v3897, %v4087
      %v4180 = vadd.f32 %v3898, %v4089
      %v4181 = vadd.f32 %v3899, %v4092
      %v4182 = vadd.f32 %v3900, %v4094
      %v4183 = vadd.f32 %v3901, %v4097
      %v4184 = vadd.f32 %v3902, %v4099
      %v4185 = vadd.f32 %v3903, %v4102
      %v4186 = vadd.f32 %v3904, %v4104
      %v4187 = vadd.f32 %v3905, %v4107
      %v4188 = vadd.f32 %v3906, %v4109
      %v4189 = vadd.f32 %v3907, %v4112
      %v4190 = vadd.f32 %v3908, %v4114
      %v4191 = vadd.f32 %v3909, %v4117
      %v4192 = vadd.f32 %v3910, %v4119
      %v4193 = vadd.f32 %v3911, %v4122
      %v4194 = vadd.f32 %v3912, %v4124
      %v4195 = vadd.f32 %v3913, %v4127
      %v4196 = vadd.f32 %v3914, %v4129
      %v4197 = vadd.f32 %v3915, %v4132
      %v4198 = vadd.f32 %v3916, %v4134
      %v4199 = vadd.f32 %v3917, %v4137
      %v4200 = vadd.f32 %v3918, %v4139
      %v4201 = vadd.f32 %v3919, %v4142
      %v4202 = vadd.f32 %v3920, %v4144
      %v4203 = vadd.f32 %v3921, %v4147
      %v4204 = vadd.f32 %v3922, %v4149
      %v4205 = vadd.f32 %v3923, %v4152
      %v4206 = vadd.f32 %v3924, %v4154
      %v4207 = vadd.f32 %v3925, %v4157
      %v4208 = vadd.f32 %v3926, %v4159
      %v4209 = vld [vmem:[%s230 + $0x24] sm:$0xf]
      %v4210 = vld [vmem:[%s230 + $0x28] sm:$0xf]
      %v4211 = vld [vmem:[%s230 + $0x2c] sm:$0xf]
      %v4212 = vld [vmem:[%s230 + $0x30] sm:$0xf]
      %v4213 = vld [vmem:[%s230 + $0x34] sm:$0xf]
      %v4214 = vld [vmem:[%s230 + $0x38] sm:$0xf]
      %v4215 = vld [vmem:[%s230 + $0x3c] sm:$0xf]
      %v4216 = vld [vmem:[%s230 + $0x40] sm:$0xf]
      %v4217 = vld [vmem:[%s230 + $0x44] sm:$0xf]
      %v4218 = vld [vmem:[%s230 + $0x48] sm:$0xf]
      %v4219 = vld [vmem:[%s230 + $0x4c] sm:$0xf]
      %v4220 = vld [vmem:[%s230 + $0x50] sm:$0xf]
      %v4221 = vld [vmem:[%s230 + $0x54] sm:$0xf]
      %v4222 = vld [vmem:[%s230 + $0x58] sm:$0xf]
      %v4223 = vld [vmem:[%s230 + $0x5c] sm:$0xf]
      %v4224 = vld [vmem:[%s230 + $0x60] sm:$0xf]
      %v4225 = vld [vmem:[%s230 + $0x64] sm:$0xf]
      %v4226 = vld [vmem:[%s230 + $0x68] sm:$0xf]
      %v4227 = vld [vmem:[%s230 + $0x6c] sm:$0xf]
      %v4228 = vld [vmem:[%s230 + $0x70] sm:$0xf]
      %v4229 = vld [vmem:[%s230 + $0x74] sm:$0xf]
      %v4230 = vld [vmem:[%s230 + $0x78] sm:$0xf]
      %v4231 = vld [vmem:[%s230 + $0x7c] sm:$0xf]
      %v4232 = vld [vmem:[%s230 + $0x80] sm:$0xf]
      %v4233 = vld [vmem:[%s230 + $0x84] sm:$0xf]
      %v4234 = vld [vmem:[%s230 + $0x88] sm:$0xf]
      %v4235 = vld [vmem:[%s230 + $0x8c] sm:$0xf]
      %v4236 = vld [vmem:[%s230 + $0x90] sm:$0xf]
      %v4237 = vld [vmem:[%s230 + $0x94] sm:$0xf]
      %v4238 = vld [vmem:[%s230 + $0x98] sm:$0xf]
      %v4239 = vld [vmem:[%s230 + $0x9c] sm:$0xf]
      %v4240 = vld [vmem:[%s230 + $0xa0] sm:$0xf]
      %v4241 = vld [vmem:[%s230 + $0xa4] sm:$0xf]
      %v4242 = vld [vmem:[%s230 + $0xa8] sm:$0xf]
      %v4243 = vld [vmem:[%s230 + $0xac] sm:$0xf]
      %v4244 = vld [vmem:[%s230 + $0xb0] sm:$0xf]
      %v4245 = vld [vmem:[%s230 + $0xb4] sm:$0xf]
      %v4246 = vld [vmem:[%s230 + $0xb8] sm:$0xf]
      %v4247 = vld [vmem:[%s230 + $0xbc] sm:$0xf]
      %v4248 = vld [vmem:[%s230 + $0xc0] sm:$0xf]
      %v4249 = vld [vmem:[%s230 + $0xc4] sm:$0xf]
      %v4250 = vld [vmem:[%s230 + $0xc8] sm:$0xf]
      %v4251 = vld [vmem:[%s230 + $0xcc] sm:$0xf]
      %v4252 = vld [vmem:[%s230 + $0xd0] sm:$0xf]
      %v4253 = vld [vmem:[%s230 + $0xd4] sm:$0xf]
      %v4254 = vld [vmem:[%s230 + $0xd8] sm:$0xf]
      %v4255 = vld [vmem:[%s230 + $0xdc] sm:$0xf]
      %v4256 = vld [vmem:[%s230 + $0xe0] sm:$0xf]
      %v4257 = vld [vmem:[%s230 + $0xe4] sm:$0x1]
      %s4258 = scalar_lea.vmem %s2, 64
      %v4259 = vld [vmem:[%s4258] sm:$0xf]
      %v4260 = vld [vmem:[%s4258 + $0x4] sm:$0xf]
      %v4310 = vunpack.c.l.b16 %v4209
      %v4311 = vunpack.c.l.b16 %v4210
      %v4312 = vunpack.c.l.b16 %v4211
      %v4313 = vunpack.c.l.b16 %v4212
      %v4314 = vunpack.c.l.b16 %v4213
      %v4315 = vunpack.c.l.b16 %v4214
      %v4316 = vunpack.c.l.b16 %v4215
      %v4317 = vunpack.c.l.b16 %v4216
      %v4318 = vunpack.c.l.b16 %v4217
      %v4319 = vunpack.c.l.b16 %v4218
      %v4320 = vunpack.c.l.b16 %v4219
      %v4321 = vunpack.c.l.b16 %v4220
      %v4322 = vunpack.c.l.b16 %v4221
      %v4323 = vunpack.c.l.b16 %v4222
      %v4324 = vunpack.c.l.b16 %v4223
      %v4325 = vunpack.c.l.b16 %v4224
      %v4326 = vunpack.c.l.b16 %v4225
      %v4327 = vunpack.c.l.b16 %v4226
      %v4328 = vunpack.c.l.b16 %v4227
      %v4329 = vunpack.c.l.b16 %v4228
      %v4330 = vunpack.c.l.b16 %v4229
      %v4331 = vunpack.c.l.b16 %v4230
      %v4332 = vunpack.c.l.b16 %v4231
      %v4333 = vunpack.c.l.b16 %v4232
      %v4334 = vunpack.c.l.b16 %v4233
      %v4335 = vunpack.c.l.b16 %v4234
      %v4336 = vunpack.c.l.b16 %v4235
      %v4337 = vunpack.c.l.b16 %v4236
      %v4338 = vunpack.c.l.b16 %v4237
      %v4339 = vunpack.c.l.b16 %v4238
      %v4340 = vunpack.c.l.b16 %v4239
      %v4341 = vunpack.c.l.b16 %v4240
      %v4342 = vunpack.c.l.b16 %v4241
      %v4343 = vunpack.c.l.b16 %v4242
      %v4344 = vunpack.c.l.b16 %v4243
      %v4345 = vunpack.c.l.b16 %v4244
      %v4346 = vunpack.c.l.b16 %v4245
      %v4347 = vunpack.c.l.b16 %v4246
      %v4348 = vunpack.c.l.b16 %v4247
      %v4349 = vunpack.c.l.b16 %v4248
      %v4350 = vunpack.c.l.b16 %v4249
      %v4351 = vunpack.c.l.b16 %v4250
      %v4352 = vunpack.c.l.b16 %v4251
      %v4353 = vunpack.c.l.b16 %v4252
      %v4354 = vunpack.c.l.b16 %v4253
      %v4355 = vunpack.c.l.b16 %v4254
      %v4356 = vunpack.c.l.b16 %v4255
      %v4357 = vunpack.c.l.b16 %v4256
      %v4358 = vunpack.c.l.b16 %v4257
      %v4359 = vpack.c.b16 %v4311, %v4310
      %v4360 = vpack.c.b16 %v4313, %v4312
      %v4361 = vpack.c.b16 %v4315, %v4314
      %v4362 = vpack.c.b16 %v4317, %v4316
      %v4363 = vpack.c.b16 %v4319, %v4318
      %v4364 = vpack.c.b16 %v4321, %v4320
      %v4365 = vpack.c.b16 %v4323, %v4322
      %v4366 = vpack.c.b16 %v4325, %v4324
      %v4367 = vpack.c.b16 %v4327, %v4326
      %v4368 = vpack.c.b16 %v4329, %v4328
      %v4369 = vpack.c.b16 %v4331, %v4330
      %v4370 = vpack.c.b16 %v4333, %v4332
      %v4371 = vpack.c.b16 %v4335, %v4334
      %v4372 = vpack.c.b16 %v4337, %v4336
      %v4373 = vpack.c.b16 %v4339, %v4338
      %v4374 = vpack.c.b16 %v4341, %v4340
      %v4375 = vpack.c.b16 %v4343, %v4342
      %v4376 = vpack.c.b16 %v4345, %v4344
      %v4377 = vpack.c.b16 %v4347, %v4346
      %v4378 = vpack.c.b16 %v4349, %v4348
      %v4379 = vpack.c.b16 %v4351, %v4350
      %v4380 = vpack.c.b16 %v4353, %v4352
      %v4381 = vpack.c.b16 %v4355, %v4354
      %v4382 = vpack.c.b16 %v4357, %v4356
      %v4383 = vpack.c.b16 %v4358, %v4358
      %v4385 = vshrl.u32 %v4359, 16
      %v4387 = vshll.u32 %v4359, 16
      %v4389 = vrot.slane %v4387, 1
      %v4390 = vor.u32 %v4385, %v4389
      %v4392 = vshll.u32 %v4360, 16
      %v4394 = vrot.slane %v4392, 1
      %v4395 = vsel %vm1259, %v4390, %v4394
      %v4396 = vshrl.u32 %v4360, 16
      %v4398 = vor.u32 %v4396, %v4394
      %v4400 = vshll.u32 %v4361, 16
      %v4402 = vrot.slane %v4400, 1
      %v4403 = vsel %vm1259, %v4398, %v4402
      %v4404 = vshrl.u32 %v4361, 16
      %v4406 = vor.u32 %v4404, %v4402
      %v4408 = vshll.u32 %v4362, 16
      %v4410 = vrot.slane %v4408, 1
      %v4411 = vsel %vm1259, %v4406, %v4410
      %v4412 = vshrl.u32 %v4362, 16
      %v4414 = vor.u32 %v4412, %v4410
      %v4416 = vshll.u32 %v4363, 16
      %v4418 = vrot.slane %v4416, 1
      %v4419 = vsel %vm1259, %v4414, %v4418
      %v4420 = vshrl.u32 %v4363, 16
      %v4422 = vor.u32 %v4420, %v4418
      %v4424 = vshll.u32 %v4364, 16
      %v4426 = vrot.slane %v4424, 1
      %v4427 = vsel %vm1259, %v4422, %v4426
      %v4428 = vshrl.u32 %v4364, 16
      %v4430 = vor.u32 %v4428, %v4426
      %v4432 = vshll.u32 %v4365, 16
      %v4434 = vrot.slane %v4432, 1
      %v4435 = vsel %vm1259, %v4430, %v4434
      %v4436 = vshrl.u32 %v4365, 16
      %v4438 = vor.u32 %v4436, %v4434
      %v4440 = vshll.u32 %v4366, 16
      %v4442 = vrot.slane %v4440, 1
      %v4443 = vsel %vm1259, %v4438, %v4442
      %v4444 = vshrl.u32 %v4366, 16
      %v4446 = vor.u32 %v4444, %v4442
      %v4448 = vshll.u32 %v4367, 16
      %v4450 = vrot.slane %v4448, 1
      %v4451 = vsel %vm1259, %v4446, %v4450
      %v4452 = vshrl.u32 %v4367, 16
      %v4454 = vor.u32 %v4452, %v4450
      %v4456 = vshll.u32 %v4368, 16
      %v4458 = vrot.slane %v4456, 1
      %v4459 = vsel %vm1259, %v4454, %v4458
      %v4460 = vshrl.u32 %v4368, 16
      %v4462 = vor.u32 %v4460, %v4458
      %v4464 = vshll.u32 %v4369, 16
      %v4466 = vrot.slane %v4464, 1
      %v4467 = vsel %vm1259, %v4462, %v4466
      %v4468 = vshrl.u32 %v4369, 16
      %v4470 = vor.u32 %v4468, %v4466
      %v4472 = vshll.u32 %v4370, 16
      %v4474 = vrot.slane %v4472, 1
      %v4475 = vsel %vm1259, %v4470, %v4474
      %v4476 = vshrl.u32 %v4370, 16
      %v4478 = vor.u32 %v4476, %v4474
      %v4480 = vshll.u32 %v4371, 16
      %v4482 = vrot.slane %v4480, 1
      %v4483 = vsel %vm1259, %v4478, %v4482
      %v4484 = vshrl.u32 %v4371, 16
      %v4486 = vor.u32 %v4484, %v4482
      %v4488 = vshll.u32 %v4372, 16
      %v4490 = vrot.slane %v4488, 1
      %v4491 = vsel %vm1259, %v4486, %v4490
      %v4492 = vshrl.u32 %v4372, 16
      %v4494 = vor.u32 %v4492, %v4490
      %v4496 = vshll.u32 %v4373, 16
      %v4498 = vrot.slane %v4496, 1
      %v4499 = vsel %vm1259, %v4494, %v4498
      %v4500 = vshrl.u32 %v4373, 16
      %v4502 = vor.u32 %v4500, %v4498
      %v4504 = vshll.u32 %v4374, 16
      %v4506 = vrot.slane %v4504, 1
      %v4507 = vsel %vm1259, %v4502, %v4506
      %v4508 = vshrl.u32 %v4374, 16
      %v4510 = vor.u32 %v4508, %v4506
      %v4512 = vshll.u32 %v4375, 16
      %v4514 = vrot.slane %v4512, 1
      %v4515 = vsel %vm1259, %v4510, %v4514
      %v4516 = vshrl.u32 %v4375, 16
      %v4518 = vor.u32 %v4516, %v4514
      %v4520 = vshll.u32 %v4376, 16
      %v4522 = vrot.slane %v4520, 1
      %v4523 = vsel %vm1259, %v4518, %v4522
      %v4524 = vshrl.u32 %v4376, 16
      %v4526 = vor.u32 %v4524, %v4522
      %v4528 = vshll.u32 %v4377, 16
      %v4530 = vrot.slane %v4528, 1
      %v4531 = vsel %vm1259, %v4526, %v4530
      %v4532 = vshrl.u32 %v4377, 16
      %v4534 = vor.u32 %v4532, %v4530
      %v4536 = vshll.u32 %v4378, 16
      %v4538 = vrot.slane %v4536, 1
      %v4539 = vsel %vm1259, %v4534, %v4538
      %v4540 = vshrl.u32 %v4378, 16
      %v4542 = vor.u32 %v4540, %v4538
      %v4544 = vshll.u32 %v4379, 16
      %v4546 = vrot.slane %v4544, 1
      %v4547 = vsel %vm1259, %v4542, %v4546
      %v4548 = vshrl.u32 %v4379, 16
      %v4550 = vor.u32 %v4548, %v4546
      %v4552 = vshll.u32 %v4380, 16
      %v4554 = vrot.slane %v4552, 1
      %v4555 = vsel %vm1259, %v4550, %v4554
      %v4556 = vshrl.u32 %v4380, 16
      %v4558 = vor.u32 %v4556, %v4554
      %v4560 = vshll.u32 %v4381, 16
      %v4562 = vrot.slane %v4560, 1
      %v4563 = vsel %vm1259, %v4558, %v4562
      %v4564 = vshrl.u32 %v4381, 16
      %v4566 = vor.u32 %v4564, %v4562
      %v4568 = vshll.u32 %v4382, 16
      %v4570 = vrot.slane %v4568, 1
      %v4571 = vsel %vm1259, %v4566, %v4570
      %v4572 = vshrl.u32 %v4382, 16
      %v4574 = vor.u32 %v4572, %v4570
      %v4576 = vshll.u32 %v4383, 16
      %v4578 = vrot.slane %v4576, 1
      %v4579 = vsel %vm1259, %v4574, %v4578
      %v4582 = vunpack.c.l.b16 %v4259
      %v4583 = vunpack.c.l.b16 %v4260
      %v4584 = vpack.c.b16 %v4583, %v4582
      %v4587 = vsel %vm423, %v4395, 0
      %v4590 = vsel %vm423, %v4403, 0
      %v4593 = vsel %vm423, %v4411, 0
      %v4596 = vsel %vm423, %v4419, 0
      %v4599 = vsel %vm423, %v4427, 0
      %v4602 = vsel %vm423, %v4435, 0
      %v4605 = vsel %vm423, %v4443, 0
      %v4608 = vsel %vm423, %v4451, 0
      %v4611 = vsel %vm423, %v4459, 0
      %v4614 = vsel %vm423, %v4467, 0
      %v4617 = vsel %vm423, %v4475, 0
      %v4620 = vsel %vm423, %v4483, 0
      %v4623 = vsel %vm423, %v4491, 0
      %v4626 = vsel %vm423, %v4499, 0
      %v4629 = vsel %vm423, %v4507, 0
      %v4632 = vsel %vm423, %v4515, 0
      %v4635 = vsel %vm423, %v4523, 0
      %v4638 = vsel %vm423, %v4531, 0
      %v4641 = vsel %vm423, %v4539, 0
      %v4644 = vsel %vm423, %v4547, 0
      %v4647 = vsel %vm423, %v4555, 0
      %v4650 = vsel %vm423, %v4563, 0
      %v4653 = vsel %vm423, %v4571, 0
      %v4656 = vsel %vm423, %v4579, 0
      %4658 = vmatpush.bf16.msra.mxu0 0
      %4659 = vmatpush.bf16.msra.mxu0 0
      %4660 = vmatpush.bf16.msra.mxu0 0
      %4661 = vmatpush.bf16.msra.mxu0 0
      %4662 = vmatpush.bf16.msra.mxu0 0
      %4663 = vmatpush.bf16.msra.mxu0 0
      %4664 = vmatpush.bf16.msra.mxu0 0
      %4665 = vmatpush.bf16.msra.mxu0 %v4584
      %4666 = vmatmul.bf16.gmra.mxu0 %v4587
      %v4667 = vpop.f32.mrf.mxu0
      %v4668 = vadd.f32 0.0, %v4667
      %v4669 = vpop.f32.mrf.mxu0
      %v4670 = vadd.f32 0.0, %v4669
      %4671 = vmatmul.bf16.gmra.mxu0 %v4590
      %v4672 = vpop.f32.mrf.mxu0
      %v4673 = vadd.f32 0.0, %v4672
      %v4674 = vpop.f32.mrf.mxu0
      %v4675 = vadd.f32 0.0, %v4674
      %4676 = vmatmul.bf16.gmra.mxu0 %v4593
      %v4677 = vpop.f32.mrf.mxu0
      %v4678 = vadd.f32 0.0, %v4677
      %v4679 = vpop.f32.mrf.mxu0
      %v4680 = vadd.f32 0.0, %v4679
      %4681 = vmatmul.bf16.gmra.mxu0 %v4596
      %v4682 = vpop.f32.mrf.mxu0
      %v4683 = vadd.f32 0.0, %v4682
      %v4684 = vpop.f32.mrf.mxu0
      %v4685 = vadd.f32 0.0, %v4684
      %4686 = vmatmul.bf16.gmra.mxu0 %v4599
      %v4687 = vpop.f32.mrf.mxu0
      %v4688 = vadd.f32 0.0, %v4687
      %v4689 = vpop.f32.mrf.mxu0
      %v4690 = vadd.f32 0.0, %v4689
      %4691 = vmatmul.bf16.gmra.mxu0 %v4602
      %v4692 = vpop.f32.mrf.mxu0
      %v4693 = vadd.f32 0.0, %v4692
      %v4694 = vpop.f32.mrf.mxu0
      %v4695 = vadd.f32 0.0, %v4694
      %4696 = vmatmul.bf16.gmra.mxu0 %v4605
      %v4697 = vpop.f32.mrf.mxu0
      %v4698 = vadd.f32 0.0, %v4697
      %v4699 = vpop.f32.mrf.mxu0
      %v4700 = vadd.f32 0.0, %v4699
      %4701 = vmatmul.bf16.gmra.mxu0 %v4608
      %v4702 = vpop.f32.mrf.mxu0
      %v4703 = vadd.f32 0.0, %v4702
      %v4704 = vpop.f32.mrf.mxu0
      %v4705 = vadd.f32 0.0, %v4704
      %4706 = vmatmul.bf16.gmra.mxu0 %v4611
      %v4707 = vpop.f32.mrf.mxu0
      %v4708 = vadd.f32 0.0, %v4707
      %v4709 = vpop.f32.mrf.mxu0
      %v4710 = vadd.f32 0.0, %v4709
      %4711 = vmatmul.bf16.gmra.mxu0 %v4614
      %v4712 = vpop.f32.mrf.mxu0
      %v4713 = vadd.f32 0.0, %v4712
      %v4714 = vpop.f32.mrf.mxu0
      %v4715 = vadd.f32 0.0, %v4714
      %4716 = vmatmul.bf16.gmra.mxu0 %v4617
      %v4717 = vpop.f32.mrf.mxu0
      %v4718 = vadd.f32 0.0, %v4717
      %v4719 = vpop.f32.mrf.mxu0
      %v4720 = vadd.f32 0.0, %v4719
      %4721 = vmatmul.bf16.gmra.mxu0 %v4620
      %v4722 = vpop.f32.mrf.mxu0
      %v4723 = vadd.f32 0.0, %v4722
      %v4724 = vpop.f32.mrf.mxu0
      %v4725 = vadd.f32 0.0, %v4724
      %4726 = vmatmul.bf16.gmra.mxu0 %v4623
      %v4727 = vpop.f32.mrf.mxu0
      %v4728 = vadd.f32 0.0, %v4727
      %v4729 = vpop.f32.mrf.mxu0
      %v4730 = vadd.f32 0.0, %v4729
      %4731 = vmatmul.bf16.gmra.mxu0 %v4626
      %v4732 = vpop.f32.mrf.mxu0
      %v4733 = vadd.f32 0.0, %v4732
      %v4734 = vpop.f32.mrf.mxu0
      %v4735 = vadd.f32 0.0, %v4734
      %4736 = vmatmul.bf16.gmra.mxu0 %v4629
      %v4737 = vpop.f32.mrf.mxu0
      %v4738 = vadd.f32 0.0, %v4737
      %v4739 = vpop.f32.mrf.mxu0
      %v4740 = vadd.f32 0.0, %v4739
      %4741 = vmatmul.bf16.gmra.mxu0 %v4632
      %v4742 = vpop.f32.mrf.mxu0
      %v4743 = vadd.f32 0.0, %v4742
      %v4744 = vpop.f32.mrf.mxu0
      %v4745 = vadd.f32 0.0, %v4744
      %4746 = vmatmul.bf16.gmra.mxu0 %v4635
      %v4747 = vpop.f32.mrf.mxu0
      %v4748 = vadd.f32 0.0, %v4747
      %v4749 = vpop.f32.mrf.mxu0
      %v4750 = vadd.f32 0.0, %v4749
      %4751 = vmatmul.bf16.gmra.mxu0 %v4638
      %v4752 = vpop.f32.mrf.mxu0
      %v4753 = vadd.f32 0.0, %v4752
      %v4754 = vpop.f32.mrf.mxu0
      %v4755 = vadd.f32 0.0, %v4754
      %4756 = vmatmul.bf16.gmra.mxu0 %v4641
      %v4757 = vpop.f32.mrf.mxu0
      %v4758 = vadd.f32 0.0, %v4757
      %v4759 = vpop.f32.mrf.mxu0
      %v4760 = vadd.f32 0.0, %v4759
      %4761 = vmatmul.bf16.gmra.mxu0 %v4644
      %v4762 = vpop.f32.mrf.mxu0
      %v4763 = vadd.f32 0.0, %v4762
      %v4764 = vpop.f32.mrf.mxu0
      %v4765 = vadd.f32 0.0, %v4764
      %4766 = vmatmul.bf16.gmra.mxu0 %v4647
      %v4767 = vpop.f32.mrf.mxu0
      %v4768 = vadd.f32 0.0, %v4767
      %v4769 = vpop.f32.mrf.mxu0
      %v4770 = vadd.f32 0.0, %v4769
      %4771 = vmatmul.bf16.gmra.mxu0 %v4650
      %v4772 = vpop.f32.mrf.mxu0
      %v4773 = vadd.f32 0.0, %v4772
      %v4774 = vpop.f32.mrf.mxu0
      %v4775 = vadd.f32 0.0, %v4774
      %4776 = vmatmul.bf16.gmra.mxu0 %v4653
      %v4777 = vpop.f32.mrf.mxu0
      %v4778 = vadd.f32 0.0, %v4777
      %v4779 = vpop.f32.mrf.mxu0
      %v4780 = vadd.f32 0.0, %v4779
      %4781 = vmatmul.bf16.gmra.mxu0 %v4656
      %v4782 = vpop.f32.mrf.mxu0
      %v4783 = vadd.f32 0.0, %v4782
      %v4784 = vpop.f32.mrf.mxu0
      %v4785 = vadd.f32 0.0, %v4784
      %4786 = vdwg.mxu0
      %v4787 = vadd.f32 %v4161, %v4668
      %v4788 = vadd.f32 %v4162, %v4670
      %v4789 = vadd.f32 %v4163, %v4673
      %v4790 = vadd.f32 %v4164, %v4675
      %v4791 = vadd.f32 %v4165, %v4678
      %v4792 = vadd.f32 %v4166, %v4680
      %v4793 = vadd.f32 %v4167, %v4683
      %v4794 = vadd.f32 %v4168, %v4685
      %v4795 = vadd.f32 %v4169, %v4688
      %v4796 = vadd.f32 %v4170, %v4690
      %v4797 = vadd.f32 %v4171, %v4693
      %v4798 = vadd.f32 %v4172, %v4695
      %v4799 = vadd.f32 %v4173, %v4698
      %v4800 = vadd.f32 %v4174, %v4700
      %v4801 = vadd.f32 %v4175, %v4703
      %v4802 = vadd.f32 %v4176, %v4705
      %v4803 = vadd.f32 %v4177, %v4708
      %v4804 = vadd.f32 %v4178, %v4710
      %v4805 = vadd.f32 %v4179, %v4713
      %v4806 = vadd.f32 %v4180, %v4715
      %v4807 = vadd.f32 %v4181, %v4718
      %v4808 = vadd.f32 %v4182, %v4720
      %v4809 = vadd.f32 %v4183, %v4723
      %v4810 = vadd.f32 %v4184, %v4725
      %v4811 = vadd.f32 %v4185, %v4728
      %v4812 = vadd.f32 %v4186, %v4730
      %v4813 = vadd.f32 %v4187, %v4733
      %v4814 = vadd.f32 %v4188, %v4735
      %v4815 = vadd.f32 %v4189, %v4738
      %v4816 = vadd.f32 %v4190, %v4740
      %v4817 = vadd.f32 %v4191, %v4743
      %v4818 = vadd.f32 %v4192, %v4745
      %v4819 = vadd.f32 %v4193, %v4748
      %v4820 = vadd.f32 %v4194, %v4750
      %v4821 = vadd.f32 %v4195, %v4753
      %v4822 = vadd.f32 %v4196, %v4755
      %v4823 = vadd.f32 %v4197, %v4758
      %v4824 = vadd.f32 %v4198, %v4760
      %v4825 = vadd.f32 %v4199, %v4763
      %v4826 = vadd.f32 %v4200, %v4765
      %v4827 = vadd.f32 %v4201, %v4768
      %v4828 = vadd.f32 %v4202, %v4770
      %v4829 = vadd.f32 %v4203, %v4773
      %v4830 = vadd.f32 %v4204, %v4775
      %v4831 = vadd.f32 %v4205, %v4778
      %v4832 = vadd.f32 %v4206, %v4780
      %v4833 = vadd.f32 %v4207, %v4783
      %v4834 = vadd.f32 %v4208, %v4785
      %v4835 = vld [vmem:[%s1] sm:$0x1]
      %v4837 = vperm.slane %v4835, 0
      %v4839 = vadd.f32 %v4787, %v4837
      %v4840 = vadd.f32 %v4788, %v4837
      %v4841 = vadd.f32 %v4789, %v4837
      %v4842 = vadd.f32 %v4790, %v4837
      %v4843 = vadd.f32 %v4791, %v4837
      %v4844 = vadd.f32 %v4792, %v4837
      %v4845 = vadd.f32 %v4793, %v4837
      %v4846 = vadd.f32 %v4794, %v4837
      %v4847 = vadd.f32 %v4795, %v4837
      %v4848 = vadd.f32 %v4796, %v4837
      %v4849 = vadd.f32 %v4797, %v4837
      %v4850 = vadd.f32 %v4798, %v4837
      %v4851 = vadd.f32 %v4799, %v4837
      %v4852 = vadd.f32 %v4800, %v4837
      %v4853 = vadd.f32 %v4801, %v4837
      %v4854 = vadd.f32 %v4802, %v4837
      %v4855 = vadd.f32 %v4803, %v4837
      %v4856 = vadd.f32 %v4804, %v4837
      %v4857 = vadd.f32 %v4805, %v4837
      %v4858 = vadd.f32 %v4806, %v4837
      %v4859 = vadd.f32 %v4807, %v4837
      %v4860 = vadd.f32 %v4808, %v4837
      %v4861 = vadd.f32 %v4809, %v4837
      %v4862 = vadd.f32 %v4810, %v4837
      %v4863 = vadd.f32 %v4811, %v4837
      %v4864 = vadd.f32 %v4812, %v4837
      %v4865 = vadd.f32 %v4813, %v4837
      %v4866 = vadd.f32 %v4814, %v4837
      %v4867 = vadd.f32 %v4815, %v4837
      %v4868 = vadd.f32 %v4816, %v4837
      %v4869 = vadd.f32 %v4817, %v4837
      %v4870 = vadd.f32 %v4818, %v4837
      %v4871 = vadd.f32 %v4819, %v4837
      %v4872 = vadd.f32 %v4820, %v4837
      %v4873 = vadd.f32 %v4821, %v4837
      %v4874 = vadd.f32 %v4822, %v4837
      %v4875 = vadd.f32 %v4823, %v4837
      %v4876 = vadd.f32 %v4824, %v4837
      %v4877 = vadd.f32 %v4825, %v4837
      %v4878 = vadd.f32 %v4826, %v4837
      %v4879 = vadd.f32 %v4827, %v4837
      %v4880 = vadd.f32 %v4828, %v4837
      %v4881 = vadd.f32 %v4829, %v4837
      %v4882 = vadd.f32 %v4830, %v4837
      %v4883 = vadd.f32 %v4831, %v4837
      %v4884 = vadd.f32 %v4832, %v4837
      %v4885 = vadd.f32 %v4833, %v4837
      %v4886 = vadd.f32 %v4834, %v4837
      %v4887 = vlaneseq
      %v4888 = vshrl.u32 %v4887, 7
      %v4889 = vadd.s32 %v4888, 8
      %v4890 = vadd.s32 %v4888, 16
      %vm4891 = vcmp.ge.s32.totalorder %v4888, 2
      %vm4892 = vcmp.ge.s32.totalorder %v4889, 2
      %vm4893 = vcmp.ge.s32.totalorder %v4890, 2
      %vm4894 = vcmp.lt.s32.totalorder %v4888, 18
      %vm4895 = vcmp.lt.s32.totalorder %v4889, 18
      %vm4896 = vcmp.lt.s32.totalorder %v4890, 18
      %vm4897 = vmand %vm4891, %vm4894
      %vm4898 = vmand %vm4892, %vm4895
      %vm4899 = vmand %vm4893, %vm4896
      %v4900 = vsel %vm4897, 1, 0
      %v4901 = vsel %vm4898, 1, 0
      %v4902 = vsel %vm4899, 1, 0
      %vm4903 = vcmp.eq.s32.totalorder %v4900, 1
      %vm4904 = vcmp.eq.s32.totalorder %v4901, 1
      %vm4905 = vcmp.eq.s32.totalorder %v4902, 1
      %v4906 = vsel %vm4903, %v4839, 0.0
      %v4907 = vsel %vm4904, %v4840, 0.0
      %v4908 = vsel %vm4905, %v4841, 0.0
      %v4909 = vsel %vm4903, %v4842, 0.0
      %v4910 = vsel %vm4904, %v4843, 0.0
      %v4911 = vsel %vm4905, %v4844, 0.0
      %v4912 = vsel %vm4903, %v4845, 0.0
      %v4913 = vsel %vm4904, %v4846, 0.0
      %v4914 = vsel %vm4905, %v4847, 0.0
      %v4915 = vsel %vm4903, %v4848, 0.0
      %v4916 = vsel %vm4904, %v4849, 0.0
      %v4917 = vsel %vm4905, %v4850, 0.0
      %v4918 = vsel %vm4903, %v4851, 0.0
      %v4919 = vsel %vm4904, %v4852, 0.0
      %v4920 = vsel %vm4905, %v4853, 0.0
      %v4921 = vsel %vm4903, %v4854, 0.0
      %v4922 = vsel %vm4904, %v4855, 0.0
      %v4923 = vsel %vm4905, %v4856, 0.0
      %v4924 = vsel %vm4903, %v4857, 0.0
      %v4925 = vsel %vm4904, %v4858, 0.0
      %v4926 = vsel %vm4905, %v4859, 0.0
      %v4927 = vsel %vm4903, %v4860, 0.0
      %v4928 = vsel %vm4904, %v4861, 0.0
      %v4929 = vsel %vm4905, %v4862, 0.0
      %v4930 = vsel %vm4903, %v4863, 0.0
      %v4931 = vsel %vm4904, %v4864, 0.0
      %v4932 = vsel %vm4905, %v4865, 0.0
      %v4933 = vsel %vm4903, %v4866, 0.0
      %v4934 = vsel %vm4904, %v4867, 0.0
      %v4935 = vsel %vm4905, %v4868, 0.0
      %v4936 = vsel %vm4903, %v4869, 0.0
      %v4937 = vsel %vm4904, %v4870, 0.0
      %v4938 = vsel %vm4905, %v4871, 0.0
      %v4939 = vsel %vm4903, %v4872, 0.0
      %v4940 = vsel %vm4904, %v4873, 0.0
      %v4941 = vsel %vm4905, %v4874, 0.0
      %v4942 = vsel %vm4903, %v4875, 0.0
      %v4943 = vsel %vm4904, %v4876, 0.0
      %v4944 = vsel %vm4905, %v4877, 0.0
      %v4945 = vsel %vm4903, %v4878, 0.0
      %v4946 = vsel %vm4904, %v4879, 0.0
      %v4947 = vsel %vm4905, %v4880, 0.0
      %v4948 = vsel %vm4903, %v4881, 0.0
      %v4949 = vsel %vm4904, %v4882, 0.0
      %v4950 = vsel %vm4905, %v4883, 0.0
      %v4951 = vsel %vm4903, %v4884, 0.0
      %v4952 = vsel %vm4904, %v4885, 0.0
      %v4953 = vsel %vm4905, %v4886, 0.0
      %v4954 = vadd.f32 %v4906, %v4909
      %v4955 = vadd.f32 %v4954, %v4912
      %v4956 = vadd.f32 %v4955, %v4915
      %v4957 = vadd.f32 %v4956, %v4918
      %v4958 = vadd.f32 %v4957, %v4921
      %v4959 = vadd.f32 %v4958, %v4924
      %v4960 = vadd.f32 %v4959, %v4927
      %v4961 = vadd.f32 %v4960, %v4930
      %v4962 = vadd.f32 %v4961, %v4933
      %v4963 = vadd.f32 %v4962, %v4936
      %v4964 = vadd.f32 %v4963, %v4939
      %v4965 = vadd.f32 %v4964, %v4942
      %v4966 = vadd.f32 %v4965, %v4945
      %v4967 = vadd.f32 %v4966, %v4948
      %v4968 = vadd.f32 %v4967, %v4951
      %v4969 = vadd.f32 %v4907, %v4910
      %v4970 = vadd.f32 %v4969, %v4913
      %v4971 = vadd.f32 %v4970, %v4916
      %v4972 = vadd.f32 %v4971, %v4919
      %v4973 = vadd.f32 %v4972, %v4922
      %v4974 = vadd.f32 %v4973, %v4925
      %v4975 = vadd.f32 %v4974, %v4928
      %v4976 = vadd.f32 %v4975, %v4931
      %v4977 = vadd.f32 %v4976, %v4934
      %v4978 = vadd.f32 %v4977, %v4937
      %v4979 = vadd.f32 %v4978, %v4940
      %v4980 = vadd.f32 %v4979, %v4943
      %v4981 = vadd.f32 %v4980, %v4946
      %v4982 = vadd.f32 %v4981, %v4949
      %v4983 = vadd.f32 %v4982, %v4952
      %v4984 = vadd.f32 %v4908, %v4911
      %v4985 = vadd.f32 %v4984, %v4914
      %v4986 = vadd.f32 %v4985, %v4917
      %v4987 = vadd.f32 %v4986, %v4920
      %v4988 = vadd.f32 %v4987, %v4923
      %v4989 = vadd.f32 %v4988, %v4926
      %v4990 = vadd.f32 %v4989, %v4929
      %v4991 = vadd.f32 %v4990, %v4932
      %v4992 = vadd.f32 %v4991, %v4935
      %v4993 = vadd.f32 %v4992, %v4938
      %v4994 = vadd.f32 %v4993, %v4941
      %v4995 = vadd.f32 %v4994, %v4944
      %v4996 = vadd.f32 %v4995, %v4947
      %v4997 = vadd.f32 %v4996, %v4950
      %v4998 = vadd.f32 %v4997, %v4953
      %v4999 = vadd.f32 %v4968, %v4983
      %v5000 = vadd.f32 %v4999, %v4998
      %v5001 = vrot.slane %v5000, 4
      %v5002 = vadd.f32 %v5000, %v5001
      %v5003 = vrot.slane %v5002, 2
      %v5004 = vadd.f32 %v5002, %v5003
      %v5005 = vrot.slane %v5004, 1
      %v5006 = vadd.f32 %v5004, %v5005
      %5007 = vst [vmem:[%s238] sm:$0x1] %v5006
      %v5008 = vmul.f32 %v4906, %v4906
      %v5009 = vmul.f32 %v4907, %v4907
      %v5010 = vmul.f32 %v4908, %v4908
      %v5011 = vmul.f32 %v4909, %v4909
      %v5012 = vmul.f32 %v4910, %v4910
      %v5013 = vmul.f32 %v4911, %v4911
      %v5014 = vmul.f32 %v4912, %v4912
      %v5015 = vmul.f32 %v4913, %v4913
      %v5016 = vmul.f32 %v4914, %v4914
      %v5017 = vmul.f32 %v4915, %v4915
      %v5018 = vmul.f32 %v4916, %v4916
      %v5019 = vmul.f32 %v4917, %v4917
      %v5020 = vmul.f32 %v4918, %v4918
      %v5021 = vmul.f32 %v4919, %v4919
      %v5022 = vmul.f32 %v4920, %v4920
      %v5023 = vmul.f32 %v4921, %v4921
      %v5024 = vmul.f32 %v4922, %v4922
      %v5025 = vmul.f32 %v4923, %v4923
      %v5026 = vmul.f32 %v4924, %v4924
      %v5027 = vmul.f32 %v4925, %v4925
      %v5028 = vmul.f32 %v4926, %v4926
      %v5029 = vmul.f32 %v4927, %v4927
      %v5030 = vmul.f32 %v4928, %v4928
      %v5031 = vmul.f32 %v4929, %v4929
      %v5032 = vmul.f32 %v4930, %v4930
      %v5033 = vmul.f32 %v4931, %v4931
      %v5034 = vmul.f32 %v4932, %v4932
      %v5035 = vmul.f32 %v4933, %v4933
      %v5036 = vmul.f32 %v4934, %v4934
      %v5037 = vmul.f32 %v4935, %v4935
      %v5038 = vmul.f32 %v4936, %v4936
      %v5039 = vmul.f32 %v4937, %v4937
      %v5040 = vmul.f32 %v4938, %v4938
      %v5041 = vmul.f32 %v4939, %v4939
      %v5042 = vmul.f32 %v4940, %v4940
      %v5043 = vmul.f32 %v4941, %v4941
      %v5044 = vmul.f32 %v4942, %v4942
      %v5045 = vmul.f32 %v4943, %v4943
      %v5046 = vmul.f32 %v4944, %v4944
      %v5047 = vmul.f32 %v4945, %v4945
      %v5048 = vmul.f32 %v4946, %v4946
      %v5049 = vmul.f32 %v4947, %v4947
      %v5050 = vmul.f32 %v4948, %v4948
      %v5051 = vmul.f32 %v4949, %v4949
      %v5052 = vmul.f32 %v4950, %v4950
      %v5053 = vmul.f32 %v4951, %v4951
      %v5054 = vmul.f32 %v4952, %v4952
      %v5055 = vmul.f32 %v4953, %v4953
      %v5056 = vadd.f32 %v5008, %v5011
      %v5057 = vadd.f32 %v5056, %v5014
      %v5058 = vadd.f32 %v5057, %v5017
      %v5059 = vadd.f32 %v5058, %v5020
      %v5060 = vadd.f32 %v5059, %v5023
      %v5061 = vadd.f32 %v5060, %v5026
      %v5062 = vadd.f32 %v5061, %v5029
      %v5063 = vadd.f32 %v5062, %v5032
      %v5064 = vadd.f32 %v5063, %v5035
      %v5065 = vadd.f32 %v5064, %v5038
      %v5066 = vadd.f32 %v5065, %v5041
      %v5067 = vadd.f32 %v5066, %v5044
      %v5068 = vadd.f32 %v5067, %v5047
      %v5069 = vadd.f32 %v5068, %v5050
      %v5070 = vadd.f32 %v5069, %v5053
      %v5071 = vadd.f32 %v5009, %v5012
      %v5072 = vadd.f32 %v5071, %v5015
      %v5073 = vadd.f32 %v5072, %v5018
      %v5074 = vadd.f32 %v5073, %v5021
      %v5075 = vadd.f32 %v5074, %v5024
      %v5076 = vadd.f32 %v5075, %v5027
      %v5077 = vadd.f32 %v5076, %v5030
      %v5078 = vadd.f32 %v5077, %v5033
      %v5079 = vadd.f32 %v5078, %v5036
      %v5080 = vadd.f32 %v5079, %v5039
      %v5081 = vadd.f32 %v5080, %v5042
      %v5082 = vadd.f32 %v5081, %v5045
      %v5083 = vadd.f32 %v5082, %v5048
      %v5084 = vadd.f32 %v5083, %v5051
      %v5085 = vadd.f32 %v5084, %v5054
      %v5086 = vadd.f32 %v5010, %v5013
      %v5087 = vadd.f32 %v5086, %v5016
      %v5088 = vadd.f32 %v5087, %v5019
      %v5089 = vadd.f32 %v5088, %v5022
      %v5090 = vadd.f32 %v5089, %v5025
      %v5091 = vadd.f32 %v5090, %v5028
      %v5092 = vadd.f32 %v5091, %v5031
      %v5093 = vadd.f32 %v5092, %v5034
      %v5094 = vadd.f32 %v5093, %v5037
      %v5095 = vadd.f32 %v5094, %v5040
      %v5096 = vadd.f32 %v5095, %v5043
      %v5097 = vadd.f32 %v5096, %v5046
      %v5098 = vadd.f32 %v5097, %v5049
      %v5099 = vadd.f32 %v5098, %v5052
      %v5100 = vadd.f32 %v5099, %v5055
      %v5101 = vadd.f32 %v5070, %v5085
      %v5102 = vadd.f32 %v5101, %v5100
      %v5103 = vrot.slane %v5102, 4
      %v5104 = vadd.f32 %v5102, %v5103
      %v5105 = vrot.slane %v5104, 2
      %v5106 = vadd.f32 %v5104, %v5105
      %v5107 = vrot.slane %v5106, 1
      %v5108 = vadd.f32 %v5106, %v5107
      %5109 = vst [vmem:[%s241] sm:$0x1] %v5108
      %5110 = vst [vmem:[%s235] sm:$0xf] 0
      %5111 = vst [vmem:[%s235 + $0x4] sm:$0xf] 0
      %5112 = vst [vmem:[%s235 + $0x8] sm:$0xf] 0
      %5113 = vst [vmem:[%s235 + $0xc] sm:$0xf] 0
      %5114 = vst [vmem:[%s235 + $0x10] sm:$0xf] 0
      %5115 = vst [vmem:[%s235 + $0x14] sm:$0xf] 0
      %v5116 = vpack.c.bf16 %v4906, %v4906
      %v5117 = vpack.c.bf16 %v4907, %v4907
      %v5118 = vpack.c.bf16 %v4908, %v4908
      %v5119 = vpack.c.bf16 %v4909, %v4909
      %v5120 = vpack.c.bf16 %v4910, %v4910
      %v5121 = vpack.c.bf16 %v4911, %v4911
      %v5122 = vpack.c.bf16 %v4912, %v4912
      %v5123 = vpack.c.bf16 %v4913, %v4913
      %v5124 = vpack.c.bf16 %v4914, %v4914
      %v5125 = vpack.c.bf16 %v4915, %v4915
      %v5126 = vpack.c.bf16 %v4916, %v4916
      %v5127 = vpack.c.bf16 %v4917, %v4917
      %v5128 = vpack.c.bf16 %v4918, %v4918
      %v5129 = vpack.c.bf16 %v4919, %v4919
      %v5130 = vpack.c.bf16 %v4920, %v4920
      %v5131 = vpack.c.bf16 %v4921, %v4921
      %v5132 = vpack.c.bf16 %v4922, %v4922
      %v5133 = vpack.c.bf16 %v4923, %v4923
      %v5134 = vpack.c.bf16 %v4924, %v4924
      %v5135 = vpack.c.bf16 %v4925, %v4925
      %v5136 = vpack.c.bf16 %v4926, %v4926
      %v5137 = vpack.c.bf16 %v4927, %v4927
      %v5138 = vpack.c.bf16 %v4928, %v4928
      %v5139 = vpack.c.bf16 %v4929, %v4929
      %v5140 = vpack.c.bf16 %v4930, %v4930
      %v5141 = vpack.c.bf16 %v4931, %v4931
      %v5142 = vpack.c.bf16 %v4932, %v4932
      %v5143 = vpack.c.bf16 %v4933, %v4933
      %v5144 = vpack.c.bf16 %v4934, %v4934
      %v5145 = vpack.c.bf16 %v4935, %v4935
      %v5146 = vpack.c.bf16 %v4936, %v4936
      %v5147 = vpack.c.bf16 %v4937, %v4937
      %v5148 = vpack.c.bf16 %v4938, %v4938
      %v5149 = vpack.c.bf16 %v4939, %v4939
      %v5150 = vpack.c.bf16 %v4940, %v4940
      %v5151 = vpack.c.bf16 %v4941, %v4941
      %v5152 = vpack.c.bf16 %v4942, %v4942
      %v5153 = vpack.c.bf16 %v4943, %v4943
      %v5154 = vpack.c.bf16 %v4944, %v4944
      %v5155 = vpack.c.bf16 %v4945, %v4945
      %v5156 = vpack.c.bf16 %v4946, %v4946
      %v5157 = vpack.c.bf16 %v4947, %v4947
      %v5158 = vpack.c.bf16 %v4948, %v4948
      %v5159 = vpack.c.bf16 %v4949, %v4949
      %v5160 = vpack.c.bf16 %v4950, %v4950
      %v5161 = vpack.c.bf16 %v4951, %v4951
      %v5162 = vpack.c.bf16 %v4952, %v4952
      %v5163 = vpack.c.bf16 %v4953, %v4953
      %5164 = vst [vmem:[%s235 + $0x18] sm:$0xf] %v5116
      %5165 = vst [vmem:[%s235 + $0x1c] sm:$0xf] %v5117
      %5166 = vst [vmem:[%s235 + $0x20] sm:$0xf] %v5118
      %5167 = vst [vmem:[%s235 + $0x24] sm:$0xf] %v5119
      %5168 = vst [vmem:[%s235 + $0x28] sm:$0xf] %v5120
      %5169 = vst [vmem:[%s235 + $0x2c] sm:$0xf] %v5121
      %5170 = vst [vmem:[%s235 + $0x30] sm:$0xf] %v5122
      %5171 = vst [vmem:[%s235 + $0x34] sm:$0xf] %v5123
      %5172 = vst [vmem:[%s235 + $0x38] sm:$0xf] %v5124
      %5173 = vst [vmem:[%s235 + $0x3c] sm:$0xf] %v5125
      %5174 = vst [vmem:[%s235 + $0x40] sm:$0xf] %v5126
      %5175 = vst [vmem:[%s235 + $0x44] sm:$0xf] %v5127
      %5176 = vst [vmem:[%s235 + $0x48] sm:$0xf] %v5128
      %5177 = vst [vmem:[%s235 + $0x4c] sm:$0xf] %v5129
      %5178 = vst [vmem:[%s235 + $0x50] sm:$0xf] %v5130
      %5179 = vst [vmem:[%s235 + $0x54] sm:$0xf] %v5131
      %5180 = vst [vmem:[%s235 + $0x58] sm:$0xf] %v5132
      %5181 = vst [vmem:[%s235 + $0x5c] sm:$0xf] %v5133
      %5182 = vst [vmem:[%s235 + $0x60] sm:$0xf] %v5134
      %5183 = vst [vmem:[%s235 + $0x64] sm:$0xf] %v5135
      %5184 = vst [vmem:[%s235 + $0x68] sm:$0xf] %v5136
      %5185 = vst [vmem:[%s235 + $0x6c] sm:$0xf] %v5137
      %5186 = vst [vmem:[%s235 + $0x70] sm:$0xf] %v5138
      %5187 = vst [vmem:[%s235 + $0x74] sm:$0xf] %v5139
      %5188 = vst [vmem:[%s235 + $0x78] sm:$0xf] %v5140
      %5189 = vst [vmem:[%s235 + $0x7c] sm:$0xf] %v5141
      %5190 = vst [vmem:[%s235 + $0x80] sm:$0xf] %v5142
      %5191 = vst [vmem:[%s235 + $0x84] sm:$0xf] %v5143
      %5192 = vst [vmem:[%s235 + $0x88] sm:$0xf] %v5144
      %5193 = vst [vmem:[%s235 + $0x8c] sm:$0xf] %v5145
      %5194 = vst [vmem:[%s235 + $0x90] sm:$0xf] %v5146
      %5195 = vst [vmem:[%s235 + $0x94] sm:$0xf] %v5147
      %5196 = vst [vmem:[%s235 + $0x98] sm:$0xf] %v5148
      %5197 = vst [vmem:[%s235 + $0x9c] sm:$0xf] %v5149
      %5198 = vst [vmem:[%s235 + $0xa0] sm:$0xf] %v5150
      %5199 = vst [vmem:[%s235 + $0xa4] sm:$0xf] %v5151
      %5200 = vst [vmem:[%s235 + $0xa8] sm:$0xf] %v5152
      %5201 = vst [vmem:[%s235 + $0xac] sm:$0xf] %v5153
      %5202 = vst [vmem:[%s235 + $0xb0] sm:$0xf] %v5154
      %5203 = vst [vmem:[%s235 + $0xb4] sm:$0xf] %v5155
      %5204 = vst [vmem:[%s235 + $0xb8] sm:$0xf] %v5156
      %5205 = vst [vmem:[%s235 + $0xbc] sm:$0xf] %v5157
      %5206 = vst [vmem:[%s235 + $0xc0] sm:$0xf] %v5158
      %5207 = vst [vmem:[%s235 + $0xc4] sm:$0xf] %v5159
      %5208 = vst [vmem:[%s235 + $0xc8] sm:$0xf] %v5160
      %5209 = vst [vmem:[%s235 + $0xcc] sm:$0xf] %v5161
      %5210 = vst [vmem:[%s235 + $0xd0] sm:$0xf] %v5162
      %5211 = vst [vmem:[%s235 + $0xd4] sm:$0xf] %v5163
      %5212 = vst [vmem:[%s235 + $0xd8] sm:$0xf] 0
      %5213 = vst [vmem:[%s235 + $0xdc] sm:$0xf] 0
      %5214 = vst [vmem:[%s235 + $0xe0] sm:$0xf] 0
      %5215 = vst [vmem:[%s235 + $0xe4] sm:$0xf] 0
      %5216 = vst [vmem:[%s235 + $0xe8] sm:$0xf] 0
      %5217 = vst [vmem:[%s235 + $0xec] sm:$0xf] 0
      %p5218 = scmp.lt.s32.totalorder %s17, 1
      %s5219 = scalar_select %p5218, %s17, 1
      %s5220 = smul.addr %s5219, 60
      %s5221 = smul.addr %s5220, 4
      %s5222 = scalar_lea.vmem %s3, %s5221
      %p5223 = scmp.lt.s32.totalorder %s17, 1
      %s5224 = scalar_select %p5223, %s17, 1
      %s5225 = scalar_lea.vmem %s4, %s5224
      %p5226 = scmp.lt.s32.totalorder %s17, 1
      %s5227 = scalar_select %p5226, %s17, 1
      %s5228 = scalar_lea.vmem %s5, %s5227
      // Predicated region
      $region33: #{conv_block2.3} parent=31 // pred_check
        %p5229 = pneg %p103
      $region34: #{conv_block2.3} parent=31 // pred_check_branch
        %5231 = sbr.rel (%p5229) target = $region36
      $region35: #{conv_block2.3} parent=31 // pred_region
        _
      $region36: #{conv_block2.3} parent=31 // pred_fallthru
        _
      // Predicated region
      $region37: #{conv_block2.3} parent=31 // pred_check
        %p5232 = pneg %p129
      $region38: #{conv_block2.3} parent=31 // pred_check_branch
        %5234 = sbr.rel (%p5232) target = $region40
      $region39: #{conv_block2.3} parent=31 // pred_region
        _
      $region40: #{conv_block2.3} parent=31 // pred_fallthru
        _
      // Predicated region
      $region41: #{conv_block2.3} parent=31 // pred_check
        %p5235 = pneg %p155
      $region42: #{conv_block2.3} parent=31 // pred_check_branch
        %5237 = sbr.rel (%p5235) target = $region44
      $region43: #{conv_block2.3} parent=31 // pred_region
        _
      $region44: #{conv_block2.3} parent=31 // pred_fallthru
        _
    $region32: #{conv_block2.3} parent=5 // pred_fallthru
      _
    %p5238 = scmp.le.s32.totalorder 2, %s12
    // Predicated region
    $region45: #{conv_block2.3} parent=5 // pred_check
      %p5239 = pneg %p5238
    $region46: #{conv_block2.3} parent=5 // pred_check_branch
      %5241 = sbr.rel (%p5239) target = $region48
    $region47: #{conv_block2.3} parent=5 // pred_region
      %s5242 = ssub.s32 %s12, 2
      // Predicated region
      $region49: #{conv_block2.3} parent=47 // pred_check
        %p5243 = pneg %p109
      $region50: #{conv_block2.3} parent=47 // pred_check_branch
        %5245 = sbr.rel (%p5243) target = $region52
      $region51: #{conv_block2.3} parent=47 // pred_region
        %p5246 = scmp.lt.s32.totalorder %s18, 1
        %s5247 = scalar_select %p5246, %s18, 1
        %s5248 = smul.addr %s5247, 60
        %s5249 = smul.addr %s5248, 4
        %s5250 = scalar_lea.vmem %s3, %s5249
      $region52: #{conv_block2.3} parent=47 // pred_fallthru
        _
      // Predicated region
      $region53: #{conv_block2.3} parent=47 // pred_check
        %p5251 = pneg %p135
      $region54: #{conv_block2.3} parent=47 // pred_check_branch
        %5253 = sbr.rel (%p5251) target = $region56
      $region55: #{conv_block2.3} parent=47 // pred_region
        %p5254 = scmp.lt.s32.totalorder %s18, 1
        %s5255 = scalar_select %p5254, %s18, 1
        %s5256 = scalar_lea.vmem %s4, %s5255
      $region56: #{conv_block2.3} parent=47 // pred_fallthru
        _
      // Predicated region
      $region57: #{conv_block2.3} parent=47 // pred_check
        %p5257 = pneg %p161
      $region58: #{conv_block2.3} parent=47 // pred_check_branch
        %5259 = sbr.rel (%p5257) target = $region60
      $region59: #{conv_block2.3} parent=47 // pred_region
        %p5260 = scmp.lt.s32.totalorder %s18, 1
        %s5261 = scalar_select %p5260, %s18, 1
        %s5262 = scalar_lea.vmem %s5, %s5261
      $region60: #{conv_block2.3} parent=47 // pred_fallthru
        _
    $region48: #{conv_block2.3} parent=5 // pred_fallthru
      _
  $region6: #{conv_block2.3} parent=0 // loop_footer
    %s16 = sadd.s32 1, %s12
  $region7: #{conv_block2.3} parent=0 // loop_footer_branch
    %11 = sbr.rel target = $region3
  $region8: #{conv_block2.3} parent=0 // loop_exit
    _

// kernel: conv_block2.4
$region0: #{conv_block2.4}
  #allocation0 [shape = 'u32[]', space=smem, size = 0x4, offset = 0x4, fixed_abs, tag = 'smem constant byte address 0x4 - core index']
  #allocation1 [shape = 'u32[72,128]{1,0:T(1,128)}', space=vmem, size = 0x9000, scoped, tag = 'internal scratch']
  #allocation2 [shape = 'bf16[480,128]{1,0:T(8,128)(2,1)}', space=vmem, size = 0x1e000, scoped, tag = 'scratch operand']
  %s0 = inlined_call_operand.vmem [shape: bf16[2,480,128], index: 0, kind: input, shape index: {}]
  %s1 = inlined_call_operand.vmem [shape: f32[1,128], index: 1, kind: input, shape index: {}]
  %s2 = inlined_call_operand.vmem [shape: f32[1,128], index: 2, kind: input, shape index: {}]
  %s3 = inlined_call_operand.vmem [shape: f32[1,128], index: 3, kind: input, shape index: {}]
  %s4 = inlined_call_operand.vmem [shape: bf16[9,128,128], index: 4, kind: input, shape index: {}]
  %s5 = inlined_call_operand.vmem [shape: bf16[2,480,128], index: 5, kind: output, shape index: {0}]
  %s6 = inlined_call_operand.vmem [shape: f32[2,1,128], index: 6, kind: output, shape index: {1}]
  %s7 = inlined_call_operand.vmem [shape: f32[2,1,128], index: 7, kind: output, shape index: {2}]
  %8 = xla_tuple %s5, %s6, %s7
  %s9 = sld [smem:[#allocation0]]
  $region69: #{conv_block2.4} parent=0
    _
  %s11 = ssub.s32 1, %s9
  %s12 = scalar_select 0, %s11, %s9
  loop: start=0, step=1, limit=4
  $region2: #{conv_block2.4} parent=0 // loop_pre_header
    _
  $region3: #{conv_block2.4} parent=0 // loop_header
    %s14 = sphi 0, %s18
    %p15 = scmp.ge.s32.totalorder %s14, 4
    %s24 = sphi 0, %s26
    %s27 = sphi 0, %s24
    %s28 = sphi 0, %s27
    %s44 = sphi 0, %s28
    %s48 = sphi 0, %s48
    %s50 = sphi 0, %s48
    %s51 = sphi 0, %s50
    %s65 = sphi 0, %s51
    %s69 = sphi 0, %s69
    %s71 = sphi 0, %s69
    %s72 = sphi 0, %s71
    %s86 = sphi 0, %s72
    %s90 = sphi 0, %s90
    %s92 = sphi 0, %s90
    %s93 = sphi 0, %s92
    %s107 = sphi 0, %s93
    %s111 = sphi 0, %s111
    %s113 = sphi 0, %s111
    %s114 = sphi 0, %s113
    %s128 = sphi 0, %s114
    %s134 = sphi 0, %s136
    %s137 = sphi 0, %s134
    %s138 = sphi 0, %s137
    %s154 = sphi 0, %s138
    %s160 = sphi 0, %s162
    %s163 = sphi 0, %s160
    %s164 = sphi 0, %s163
    %s180 = sphi 0, %s164
    %s186 = sphi 0, %s188
    %s189 = sphi 0, %s186
    %s190 = sphi 0, %s189
    %s206 = sphi 0, %s190
  $region4: #{conv_block2.4} parent=0 // loop_header_branch
    %17 = sbr.rel (%p15) target = $region8
  $region5: #{conv_block2.4} parent=0 // loop_body
    %s19 = ssub.s32 %s14, 1
    %s20 = ssub.s32 %s14, 2
    %s21 = sadd.s32 %s14, 1
    %s22 = ssub.s32 %s14, %s21
    %p23 = scmp.eq.s32.totalorder %s22, 0
    %s25 = sadd.s32 %s24, 1
    %s26 = scalar_select %p23, %s24, %s25
    %p29 = pneg %p23
    %p30 = scmp.eq.s32.totalorder %s14, 1
    %p31 = por %p29, %p30
    %p32 = scmp.ne.s32.totalorder %s24, %s27
    %p33 = scmp.eq.s32.totalorder %s14, 0
    %p34 = por %p32, %p33
    %p35 = scmp.ne.s32.totalorder %s24, %s27
    %p36 = scmp.eq.s32.totalorder %s19, 1
    %p37 = por %p35, %p36
    %p38 = scmp.ne.s32.totalorder %s27, %s28
    %p39 = scmp.eq.s32.totalorder %s19, 0
    %p40 = por %p38, %p39
    %p41 = scmp.ne.s32.totalorder %s27, %s28
    %p42 = scmp.eq.s32.totalorder %s20, 1
    %p43 = por %p41, %p42
    %p45 = scmp.ne.s32.totalorder %s28, %s44
    %p46 = scmp.eq.s32.totalorder %s20, 0
    %p47 = por %p45, %p46
    %s49 = sadd.s32 %s48, 1
    %p52 = scmp.eq.s32.totalorder %s14, 1
    %p53 = scmp.ne.s32.totalorder %s48, %s50
    %p54 = scmp.eq.s32.totalorder %s14, 0
    %p55 = por %p53, %p54
    %p56 = scmp.ne.s32.totalorder %s48, %s50
    %p57 = scmp.eq.s32.totalorder %s19, 1
    %p58 = por %p56, %p57
    %p59 = scmp.ne.s32.totalorder %s50, %s51
    %p60 = scmp.eq.s32.totalorder %s19, 0
    %p61 = por %p59, %p60
    %p62 = scmp.ne.s32.totalorder %s50, %s51
    %p63 = scmp.eq.s32.totalorder %s20, 1
    %p64 = por %p62, %p63
    %p66 = scmp.ne.s32.totalorder %s51, %s65
    %p67 = scmp.eq.s32.totalorder %s20, 0
    %p68 = por %p66, %p67
    %s70 = sadd.s32 %s69, 1
    %p73 = scmp.eq.s32.totalorder %s14, 1
    %p74 = scmp.ne.s32.totalorder %s69, %s71
    %p75 = scmp.eq.s32.totalorder %s14, 0
    %p76 = por %p74, %p75
    %p77 = scmp.ne.s32.totalorder %s69, %s71
    %p78 = scmp.eq.s32.totalorder %s19, 1
    %p79 = por %p77, %p78
    %p80 = scmp.ne.s32.totalorder %s71, %s72
    %p81 = scmp.eq.s32.totalorder %s19, 0
    %p82 = por %p80, %p81
    %p83 = scmp.ne.s32.totalorder %s71, %s72
    %p84 = scmp.eq.s32.totalorder %s20, 1
    %p85 = por %p83, %p84
    %p87 = scmp.ne.s32.totalorder %s72, %s86
    %p88 = scmp.eq.s32.totalorder %s20, 0
    %p89 = por %p87, %p88
    %s91 = sadd.s32 %s90, 1
    %p94 = scmp.eq.s32.totalorder %s14, 1
    %p95 = scmp.ne.s32.totalorder %s90, %s92
    %p96 = scmp.eq.s32.totalorder %s14, 0
    %p97 = por %p95, %p96
    %p98 = scmp.ne.s32.totalorder %s90, %s92
    %p99 = scmp.eq.s32.totalorder %s19, 1
    %p100 = por %p98, %p99
    %p101 = scmp.ne.s32.totalorder %s92, %s93
    %p102 = scmp.eq.s32.totalorder %s19, 0
    %p103 = por %p101, %p102
    %p104 = scmp.ne.s32.totalorder %s92, %s93
    %p105 = scmp.eq.s32.totalorder %s20, 1
    %p106 = por %p104, %p105
    %p108 = scmp.ne.s32.totalorder %s93, %s107
    %p109 = scmp.eq.s32.totalorder %s20, 0
    %p110 = por %p108, %p109
    %s112 = sadd.s32 %s111, 1
    %p115 = scmp.eq.s32.totalorder %s14, 1
    %p116 = scmp.ne.s32.totalorder %s111, %s113
    %p117 = scmp.eq.s32.totalorder %s14, 0
    %p118 = por %p116, %p117
    %p119 = scmp.ne.s32.totalorder %s111, %s113
    %p120 = scmp.eq.s32.totalorder %s19, 1
    %p121 = por %p119, %p120
    %p122 = scmp.ne.s32.totalorder %s113, %s114
    %p123 = scmp.eq.s32.totalorder %s19, 0
    %p124 = por %p122, %p123
    %p125 = scmp.ne.s32.totalorder %s113, %s114
    %p126 = scmp.eq.s32.totalorder %s20, 1
    %p127 = por %p125, %p126
    %p129 = scmp.ne.s32.totalorder %s114, %s128
    %p130 = scmp.eq.s32.totalorder %s20, 0
    %p131 = por %p129, %p130
    %s132 = ssub.s32 %s14, %s21
    %p133 = scmp.eq.s32.totalorder %s132, 0
    %s135 = sadd.s32 %s134, 1
    %s136 = scalar_select %p133, %s134, %s135
    %p139 = pneg %p133
    %p140 = scmp.eq.s32.totalorder %s14, 1
    %p141 = por %p139, %p140
    %p142 = scmp.ne.s32.totalorder %s134, %s137
    %p143 = scmp.eq.s32.totalorder %s14, 0
    %p144 = por %p142, %p143
    %p145 = scmp.ne.s32.totalorder %s134, %s137
    %p146 = scmp.eq.s32.totalorder %s19, 1
    %p147 = por %p145, %p146
    %p148 = scmp.ne.s32.totalorder %s137, %s138
    %p149 = scmp.eq.s32.totalorder %s19, 0
    %p150 = por %p148, %p149
    %p151 = scmp.ne.s32.totalorder %s137, %s138
    %p152 = scmp.eq.s32.totalorder %s20, 1
    %p153 = por %p151, %p152
    %p155 = scmp.ne.s32.totalorder %s138, %s154
    %p156 = scmp.eq.s32.totalorder %s20, 0
    %p157 = por %p155, %p156
    %s158 = ssub.s32 %s14, %s21
    %p159 = scmp.eq.s32.totalorder %s158, 0
    %s161 = sadd.s32 %s160, 1
    %s162 = scalar_select %p159, %s160, %s161
    %p165 = pneg %p159
    %p166 = scmp.eq.s32.totalorder %s14, 1
    %p167 = por %p165, %p166
    %p168 = scmp.ne.s32.totalorder %s160, %s163
    %p169 = scmp.eq.s32.totalorder %s14, 0
    %p170 = por %p168, %p169
    %p171 = scmp.ne.s32.totalorder %s160, %s163
    %p172 = scmp.eq.s32.totalorder %s19, 1
    %p173 = por %p171, %p172
    %p174 = scmp.ne.s32.totalorder %s163, %s164
    %p175 = scmp.eq.s32.totalorder %s19, 0
    %p176 = por %p174, %p175
    %p177 = scmp.ne.s32.totalorder %s163, %s164
    %p178 = scmp.eq.s32.totalorder %s20, 1
    %p179 = por %p177, %p178
    %p181 = scmp.ne.s32.totalorder %s164, %s180
    %p182 = scmp.eq.s32.totalorder %s20, 0
    %p183 = por %p181, %p182
    %s184 = ssub.s32 %s14, %s21
    %p185 = scmp.eq.s32.totalorder %s184, 0
    %s187 = sadd.s32 %s186, 1
    %s188 = scalar_select %p185, %s186, %s187
    %p191 = pneg %p185
    %p192 = scmp.eq.s32.totalorder %s14, 1
    %p193 = por %p191, %p192
    %p194 = scmp.ne.s32.totalorder %s186, %s189
    %p195 = scmp.eq.s32.totalorder %s14, 0
    %p196 = por %p194, %p195
    %p197 = scmp.ne.s32.totalorder %s186, %s189
    %p198 = scmp.eq.s32.totalorder %s19, 1
    %p199 = por %p197, %p198
    %p200 = scmp.ne.s32.totalorder %s189, %s190
    %p201 = scmp.eq.s32.totalorder %s19, 0
    %p202 = por %p200, %p201
    %p203 = scmp.ne.s32.totalorder %s189, %s190
    %p204 = scmp.eq.s32.totalorder %s20, 1
    %p205 = por %p203, %p204
    %p207 = scmp.ne.s32.totalorder %s190, %s206
    %p208 = scmp.eq.s32.totalorder %s20, 0
    %p209 = por %p207, %p208
    %p210 = scmp.le.s32.totalorder 1, %s14
    %p211 = scmp.lt.s32.totalorder %s14, 3
    %p212 = pnand %p210, %p211
    %p213 = pneg %p212
    // Predicated region
    $region9: #{conv_block2.4} parent=5 // pred_check
      _
    $region10: #{conv_block2.4} parent=5 // pred_check_branch
      %215 = sbr.rel (%p212) target = $region12
    $region11: #{conv_block2.4} parent=5 // pred_region
      %s216 = ssub.s32 %s14, 1
      // Predicated region
      $region13: #{conv_block2.4} parent=11 // pred_check
        %p217 = pneg %p61
      $region14: #{conv_block2.4} parent=11 // pred_check_branch
        %219 = sbr.rel (%p217) target = $region16
      $region15: #{conv_block2.4} parent=11 // pred_region
        _
      $region16: #{conv_block2.4} parent=11 // pred_fallthru
        _
      // Predicated region
      $region17: #{conv_block2.4} parent=11 // pred_check
        %p220 = pneg %p82
      $region18: #{conv_block2.4} parent=11 // pred_check_branch
        %222 = sbr.rel (%p220) target = $region20
      $region19: #{conv_block2.4} parent=11 // pred_region
        _
      $region20: #{conv_block2.4} parent=11 // pred_fallthru
        _
      // Predicated region
      $region21: #{conv_block2.4} parent=11 // pred_check
        %p223 = pneg %p103
      $region22: #{conv_block2.4} parent=11 // pred_check_branch
        %225 = sbr.rel (%p223) target = $region24
      $region23: #{conv_block2.4} parent=11 // pred_region
        _
      $region24: #{conv_block2.4} parent=11 // pred_fallthru
        _
      // Predicated region
      $region25: #{conv_block2.4} parent=11 // pred_check
        %p226 = pneg %p124
      $region26: #{conv_block2.4} parent=11 // pred_check_branch
        %228 = sbr.rel (%p226) target = $region28
      $region27: #{conv_block2.4} parent=11 // pred_region
        _
      $region28: #{conv_block2.4} parent=11 // pred_fallthru
        _
    $region12: #{conv_block2.4} parent=5 // pred_fallthru
      _
    %p229 = scmp.lt.s32.totalorder %s14, 2
    // Predicated region
    $region29: #{conv_block2.4} parent=5 // pred_check
      %p230 = pneg %p229
    $region30: #{conv_block2.4} parent=5 // pred_check_branch
      %232 = sbr.rel (%p230) target = $region32
    $region31: #{conv_block2.4} parent=5 // pred_region
      // Predicated region
      $region33: #{conv_block2.4} parent=31 // pred_check
        %p233 = pneg %p34
      $region34: #{conv_block2.4} parent=31 // pred_check_branch
        %235 = sbr.rel (%p233) target = $region36
      $region35: #{conv_block2.4} parent=31 // pred_region
        %p236 = scmp.lt.s32.totalorder %s14, 1
        %s237 = scalar_select %p236, %s14, 1
        %s238 = smul.addr %s237, 60
        %s239 = smul.addr %s238, 4
        %s240 = scalar_lea.vmem %s0, %s239
      $region36: #{conv_block2.4} parent=31 // pred_fallthru
        _
    $region32: #{conv_block2.4} parent=5 // pred_fallthru
      _
    %p241 = scmp.le.s32.totalorder 1, %s14
    %p242 = scmp.lt.s32.totalorder %s14, 3
    %p243 = pnand %p241, %p242
    %p244 = pneg %p243
    // Predicated region
    $region37: #{conv_block2.4} parent=5 // pred_check
      _
    $region38: #{conv_block2.4} parent=5 // pred_check_branch
      %246 = sbr.rel (%p243) target = $region40
    $region39: #{conv_block2.4} parent=5 // pred_region
      %s247 = ssub.s32 %s14, 1
      %p248 = scmp.lt.s32.totalorder %s19, 1
      %s249 = scalar_select %p248, %s19, 1
      %s250 = smul.addr %s249, 60
      %s251 = smul.addr %s250, 4
      %s252 = scalar_lea.vmem %s0, %s251
      %p253 = pneg %p40
      %p254 = pneg %p37
      %p255 = pneg %p61
      %p256 = pneg %p58
      %p257 = pneg %p82
      %p258 = pneg %p79
      %p259 = pneg %p103
      %p260 = pneg %p100
      %p261 = pneg %p124
      %p262 = pneg %p121
      %p263 = pneg %p150
      %p264 = pneg %p147
      %p265 = scmp.lt.s32.totalorder %s19, 1
      %s266 = scalar_select %p265, %s19, 1
      %s267 = smul.addr %s266, 60
      %s268 = smul.addr %s267, 4
      %s269 = scalar_lea.vmem %s5, %s268
      %p270 = pneg %p176
      %p271 = pneg %p173
      %p272 = scmp.lt.s32.totalorder %s19, 1
      %s273 = scalar_select %p272, %s19, 1
      %s274 = scalar_lea.vmem %s6, %s273
      %p275 = pneg %p202
      %p276 = pneg %p199
      %p277 = scmp.lt.s32.totalorder %s19, 1
      %s278 = scalar_select %p277, %s19, 1
      %s279 = scalar_lea.vmem %s7, %s278
      %p280 = scmp.lt.s32.totalorder %s19, 1
      %s281 = scalar_select %p280, %s19, 1
      %s282 = smul.addr %s281, 60
      %s283 = smul.addr %s282, 4
      %s284 = scalar_lea.vmem %s0, %s283
      %p285 = scmp.lt.s32.totalorder %s19, 1
      %s286 = scalar_select %p285, %s19, 1
      %s287 = smul.addr %s286, 60
      %s288 = smul.addr %s287, 4
      %s289 = scalar_lea.vmem %s5, %s288
      %p290 = scmp.lt.s32.totalorder %s19, 1
      %s291 = scalar_select %p290, %s19, 1
      %s292 = scalar_lea.vmem %s6, %s291
      %p293 = scmp.lt.s32.totalorder %s19, 1
      %s294 = scalar_select %p293, %s19, 1
      %s295 = scalar_lea.vmem %s7, %s294
      %v297 = vld [vmem:[%s284 + $0x18] sm:$0xf]
      %v298 = vld [vmem:[%s284 + $0x1c] sm:$0xf]
      %v299 = vld [vmem:[%s284 + $0x20] sm:$0xf]
      %v300 = vld [vmem:[%s284 + $0x24] sm:$0xf]
      %v301 = vld [vmem:[%s284 + $0x28] sm:$0xf]
      %v302 = vld [vmem:[%s284 + $0x2c] sm:$0xf]
      %v303 = vld [vmem:[%s284 + $0x30] sm:$0xf]
      %v304 = vld [vmem:[%s284 + $0x34] sm:$0xf]
      %v305 = vld [vmem:[%s284 + $0x38] sm:$0xf]
      %v306 = vld [vmem:[%s284 + $0x3c] sm:$0xf]
      %v307 = vld [vmem:[%s284 + $0x40] sm:$0xf]
      %v308 = vld [vmem:[%s284 + $0x44] sm:$0xf]
      %v309 = vld [vmem:[%s284 + $0x48] sm:$0xf]
      %v310 = vld [vmem:[%s284 + $0x4c] sm:$0xf]
      %v311 = vld [vmem:[%s284 + $0x50] sm:$0xf]
      %v312 = vld [vmem:[%s284 + $0x54] sm:$0xf]
      %v313 = vld [vmem:[%s284 + $0x58] sm:$0xf]
      %v314 = vld [vmem:[%s284 + $0x5c] sm:$0xf]
      %v315 = vld [vmem:[%s284 + $0x60] sm:$0xf]
      %v316 = vld [vmem:[%s284 + $0x64] sm:$0xf]
      %v317 = vld [vmem:[%s284 + $0x68] sm:$0xf]
      %v318 = vld [vmem:[%s284 + $0x6c] sm:$0xf]
      %v319 = vld [vmem:[%s284 + $0x70] sm:$0xf]
      %v320 = vld [vmem:[%s284 + $0x74] sm:$0xf]
      %v321 = vld [vmem:[%s284 + $0x78] sm:$0xf]
      %v322 = vld [vmem:[%s284 + $0x7c] sm:$0xf]
      %v323 = vld [vmem:[%s284 + $0x80] sm:$0xf]
      %v324 = vld [vmem:[%s284 + $0x84] sm:$0xf]
      %v325 = vld [vmem:[%s284 + $0x88] sm:$0xf]
      %v326 = vld [vmem:[%s284 + $0x8c] sm:$0xf]
      %v327 = vld [vmem:[%s284 + $0x90] sm:$0xf]
      %v328 = vld [vmem:[%s284 + $0x94] sm:$0xf]
      %v329 = vld [vmem:[%s284 + $0x98] sm:$0xf]
      %v330 = vld [vmem:[%s284 + $0x9c] sm:$0xf]
      %v331 = vld [vmem:[%s284 + $0xa0] sm:$0xf]
      %v332 = vld [vmem:[%s284 + $0xa4] sm:$0xf]
      %v333 = vld [vmem:[%s284 + $0xa8] sm:$0xf]
      %v334 = vld [vmem:[%s284 + $0xac] sm:$0xf]
      %v335 = vld [vmem:[%s284 + $0xb0] sm:$0xf]
      %v336 = vld [vmem:[%s284 + $0xb4] sm:$0xf]
      %v337 = vld [vmem:[%s284 + $0xb8] sm:$0xf]
      %v338 = vld [vmem:[%s284 + $0xbc] sm:$0xf]
      %v339 = vld [vmem:[%s284 + $0xc0] sm:$0xf]
      %v340 = vld [vmem:[%s284 + $0xc4] sm:$0xf]
      %v341 = vld [vmem:[%s284 + $0xc8] sm:$0xf]
      %v342 = vld [vmem:[%s284 + $0xcc] sm:$0xf]
      %v343 = vld [vmem:[%s284 + $0xd0] sm:$0xf]
      %v344 = vld [vmem:[%s284 + $0xd4] sm:$0xf]
      %v345 = vunpack.c.l.bf16 %v297
      %v346 = vunpack.c.l.bf16 %v298
      %v347 = vunpack.c.l.bf16 %v299
      %v348 = vunpack.c.l.bf16 %v300
      %v349 = vunpack.c.l.bf16 %v301
      %v350 = vunpack.c.l.bf16 %v302
      %v351 = vunpack.c.l.bf16 %v303
      %v352 = vunpack.c.l.bf16 %v304
      %v353 = vunpack.c.l.bf16 %v305
      %v354 = vunpack.c.l.bf16 %v306
      %v355 = vunpack.c.l.bf16 %v307
      %v356 = vunpack.c.l.bf16 %v308
      %v357 = vunpack.c.l.bf16 %v309
      %v358 = vunpack.c.l.bf16 %v310
      %v359 = vunpack.c.l.bf16 %v311
      %v360 = vunpack.c.l.bf16 %v312
      %v361 = vunpack.c.l.bf16 %v313
      %v362 = vunpack.c.l.bf16 %v314
      %v363 = vunpack.c.l.bf16 %v315
      %v364 = vunpack.c.l.bf16 %v316
      %v365 = vunpack.c.l.bf16 %v317
      %v366 = vunpack.c.l.bf16 %v318
      %v367 = vunpack.c.l.bf16 %v319
      %v368 = vunpack.c.l.bf16 %v320
      %v369 = vunpack.c.l.bf16 %v321
      %v370 = vunpack.c.l.bf16 %v322
      %v371 = vunpack.c.l.bf16 %v323
      %v372 = vunpack.c.l.bf16 %v324
      %v373 = vunpack.c.l.bf16 %v325
      %v374 = vunpack.c.l.bf16 %v326
      %v375 = vunpack.c.l.bf16 %v327
      %v376 = vunpack.c.l.bf16 %v328
      %v377 = vunpack.c.l.bf16 %v329
      %v378 = vunpack.c.l.bf16 %v330
      %v379 = vunpack.c.l.bf16 %v331
      %v380 = vunpack.c.l.bf16 %v332
      %v381 = vunpack.c.l.bf16 %v333
      %v382 = vunpack.c.l.bf16 %v334
      %v383 = vunpack.c.l.bf16 %v335
      %v384 = vunpack.c.l.bf16 %v336
      %v385 = vunpack.c.l.bf16 %v337
      %v386 = vunpack.c.l.bf16 %v338
      %v387 = vunpack.c.l.bf16 %v339
      %v388 = vunpack.c.l.bf16 %v340
      %v389 = vunpack.c.l.bf16 %v341
      %v390 = vunpack.c.l.bf16 %v342
      %v391 = vunpack.c.l.bf16 %v343
      %v392 = vunpack.c.l.bf16 %v344
      %v393 = vld [vmem:[%s1] sm:$0x1]
      %v395 = vperm.slane %v393, 0
      %v397 = vmul.f32 %v345, %v395
      %v398 = vmul.f32 %v346, %v395
      %v399 = vmul.f32 %v347, %v395
      %v400 = vmul.f32 %v348, %v395
      %v401 = vmul.f32 %v349, %v395
      %v402 = vmul.f32 %v350, %v395
      %v403 = vmul.f32 %v351, %v395
      %v404 = vmul.f32 %v352, %v395
      %v405 = vmul.f32 %v353, %v395
      %v406 = vmul.f32 %v354, %v395
      %v407 = vmul.f32 %v355, %v395
      %v408 = vmul.f32 %v356, %v395
      %v409 = vmul.f32 %v357, %v395
      %v410 = vmul.f32 %v358, %v395
      %v411 = vmul.f32 %v359, %v395
      %v412 = vmul.f32 %v360, %v395
      %v413 = vmul.f32 %v361, %v395
      %v414 = vmul.f32 %v362, %v395
      %v415 = vmul.f32 %v363, %v395
      %v416 = vmul.f32 %v364, %v395
      %v417 = vmul.f32 %v365, %v395
      %v418 = vmul.f32 %v366, %v395
      %v419 = vmul.f32 %v367, %v395
      %v420 = vmul.f32 %v368, %v395
      %v421 = vmul.f32 %v369, %v395
      %v422 = vmul.f32 %v370, %v395
      %v423 = vmul.f32 %v371, %v395
      %v424 = vmul.f32 %v372, %v395
      %v425 = vmul.f32 %v373, %v395
      %v426 = vmul.f32 %v374, %v395
      %v427 = vmul.f32 %v375, %v395
      %v428 = vmul.f32 %v376, %v395
      %v429 = vmul.f32 %v377, %v395
      %v430 = vmul.f32 %v378, %v395
      %v431 = vmul.f32 %v379, %v395
      %v432 = vmul.f32 %v380, %v395
      %v433 = vmul.f32 %v381, %v395
      %v434 = vmul.f32 %v382, %v395
      %v435 = vmul.f32 %v383, %v395
      %v436 = vmul.f32 %v384, %v395
      %v437 = vmul.f32 %v385, %v395
      %v438 = vmul.f32 %v386, %v395
      %v439 = vmul.f32 %v387, %v395
      %v440 = vmul.f32 %v388, %v395
      %v441 = vmul.f32 %v389, %v395
      %v442 = vmul.f32 %v390, %v395
      %v443 = vmul.f32 %v391, %v395
      %v444 = vmul.f32 %v392, %v395
      %v445 = vld [vmem:[%s2] sm:$0x1]
      %v447 = vperm.slane %v445, 0
      %v449 = vadd.f32 %v397, %v447
      %v450 = vadd.f32 %v398, %v447
      %v451 = vadd.f32 %v399, %v447
      %v452 = vadd.f32 %v400, %v447
      %v453 = vadd.f32 %v401, %v447
      %v454 = vadd.f32 %v402, %v447
      %v455 = vadd.f32 %v403, %v447
      %v456 = vadd.f32 %v404, %v447
      %v457 = vadd.f32 %v405, %v447
      %v458 = vadd.f32 %v406, %v447
      %v459 = vadd.f32 %v407, %v447
      %v460 = vadd.f32 %v408, %v447
      %v461 = vadd.f32 %v409, %v447
      %v462 = vadd.f32 %v410, %v447
      %v463 = vadd.f32 %v411, %v447
      %v464 = vadd.f32 %v412, %v447
      %v465 = vadd.f32 %v413, %v447
      %v466 = vadd.f32 %v414, %v447
      %v467 = vadd.f32 %v415, %v447
      %v468 = vadd.f32 %v416, %v447
      %v469 = vadd.f32 %v417, %v447
      %v470 = vadd.f32 %v418, %v447
      %v471 = vadd.f32 %v419, %v447
      %v472 = vadd.f32 %v420, %v447
      %v473 = vadd.f32 %v421, %v447
      %v474 = vadd.f32 %v422, %v447
      %v475 = vadd.f32 %v423, %v447
      %v476 = vadd.f32 %v424, %v447
      %v477 = vadd.f32 %v425, %v447
      %v478 = vadd.f32 %v426, %v447
      %v479 = vadd.f32 %v427, %v447
      %v480 = vadd.f32 %v428, %v447
      %v481 = vadd.f32 %v429, %v447
      %v482 = vadd.f32 %v430, %v447
      %v483 = vadd.f32 %v431, %v447
      %v484 = vadd.f32 %v432, %v447
      %v485 = vadd.f32 %v433, %v447
      %v486 = vadd.f32 %v434, %v447
      %v487 = vadd.f32 %v435, %v447
      %v488 = vadd.f32 %v436, %v447
      %v489 = vadd.f32 %v437, %v447
      %v490 = vadd.f32 %v438, %v447
      %v491 = vadd.f32 %v439, %v447
      %v492 = vadd.f32 %v440, %v447
      %v493 = vadd.f32 %v441, %v447
      %v494 = vadd.f32 %v442, %v447
      %v495 = vadd.f32 %v443, %v447
      %v496 = vadd.f32 %v444, %v447
      %v497 = vmax.f32 %v449, 0.0
      %v498 = vmax.f32 %v450, 0.0
      %v499 = vmax.f32 %v451, 0.0
      %v500 = vmax.f32 %v452, 0.0
      %v501 = vmax.f32 %v453, 0.0
      %v502 = vmax.f32 %v454, 0.0
      %v503 = vmax.f32 %v455, 0.0
      %v504 = vmax.f32 %v456, 0.0
      %v505 = vmax.f32 %v457, 0.0
      %v506 = vmax.f32 %v458, 0.0
      %v507 = vmax.f32 %v459, 0.0
      %v508 = vmax.f32 %v460, 0.0
      %v509 = vmax.f32 %v461, 0.0
      %v510 = vmax.f32 %v462, 0.0
      %v511 = vmax.f32 %v463, 0.0
      %v512 = vmax.f32 %v464, 0.0
      %v513 = vmax.f32 %v465, 0.0
      %v514 = vmax.f32 %v466, 0.0
      %v515 = vmax.f32 %v467, 0.0
      %v516 = vmax.f32 %v468, 0.0
      %v517 = vmax.f32 %v469, 0.0
      %v518 = vmax.f32 %v470, 0.0
      %v519 = vmax.f32 %v471, 0.0
      %v520 = vmax.f32 %v472, 0.0
      %v521 = vmax.f32 %v473, 0.0
      %v522 = vmax.f32 %v474, 0.0
      %v523 = vmax.f32 %v475, 0.0
      %v524 = vmax.f32 %v476, 0.0
      %v525 = vmax.f32 %v477, 0.0
      %v526 = vmax.f32 %v478, 0.0
      %v527 = vmax.f32 %v479, 0.0
      %v528 = vmax.f32 %v480, 0.0
      %v529 = vmax.f32 %v481, 0.0
      %v530 = vmax.f32 %v482, 0.0
      %v531 = vmax.f32 %v483, 0.0
      %v532 = vmax.f32 %v484, 0.0
      %v533 = vmax.f32 %v485, 0.0
      %v534 = vmax.f32 %v486, 0.0
      %v535 = vmax.f32 %v487, 0.0
      %v536 = vmax.f32 %v488, 0.0
      %v537 = vmax.f32 %v489, 0.0
      %v538 = vmax.f32 %v490, 0.0
      %v539 = vmax.f32 %v491, 0.0
      %v540 = vmax.f32 %v492, 0.0
      %v541 = vmax.f32 %v493, 0.0
      %v542 = vmax.f32 %v494, 0.0
      %v543 = vmax.f32 %v495, 0.0
      %v544 = vmax.f32 %v496, 0.0
      %v545 = vlaneseq
      %v546 = vshrl.u32 %v545, 7
      %v547 = vadd.s32 %v546, 8
      %v548 = vadd.s32 %v546, 16
      %vm549 = vcmp.ge.s32.totalorder %v546, 2
      %vm550 = vcmp.ge.s32.totalorder %v547, 2
      %vm551 = vcmp.ge.s32.totalorder %v548, 2
      %vm552 = vcmp.lt.s32.totalorder %v546, 18
      %vm553 = vcmp.lt.s32.totalorder %v547, 18
      %vm554 = vcmp.lt.s32.totalorder %v548, 18
      %vm555 = vmand %vm549, %vm552
      %vm556 = vmand %vm550, %vm553
      %vm557 = vmand %vm551, %vm554
      %v558 = vsel %vm555, 1, 0
      %v559 = vsel %vm556, 1, 0
      %v560 = vsel %vm557, 1, 0
      %vm561 = vcmp.eq.s32.totalorder %v558, 1
      %vm562 = vcmp.eq.s32.totalorder %v559, 1
      %vm563 = vcmp.eq.s32.totalorder %v560, 1
      %v564 = vsel %vm561, %v497, 0.0
      %v565 = vsel %vm562, %v498, 0.0
      %v566 = vsel %vm563, %v499, 0.0
      %v567 = vsel %vm561, %v500, 0.0
      %v568 = vsel %vm562, %v501, 0.0
      %v569 = vsel %vm563, %v502, 0.0
      %v570 = vsel %vm561, %v503, 0.0
      %v571 = vsel %vm562, %v504, 0.0
      %v572 = vsel %vm563, %v505, 0.0
      %v573 = vsel %vm561, %v506, 0.0
      %v574 = vsel %vm562, %v507, 0.0
      %v575 = vsel %vm563, %v508, 0.0
      %v576 = vsel %vm561, %v509, 0.0
      %v577 = vsel %vm562, %v510, 0.0
      %v578 = vsel %vm563, %v511, 0.0
      %v579 = vsel %vm561, %v512, 0.0
      %v580 = vsel %vm562, %v513, 0.0
      %v581 = vsel %vm563, %v514, 0.0
      %v582 = vsel %vm561, %v515, 0.0
      %v583 = vsel %vm562, %v516, 0.0
      %v584 = vsel %vm563, %v517, 0.0
      %v585 = vsel %vm561, %v518, 0.0
      %v586 = vsel %vm562, %v519, 0.0
      %v587 = vsel %vm563, %v520, 0.0
      %v588 = vsel %vm561, %v521, 0.0
      %v589 = vsel %vm562, %v522, 0.0
      %v590 = vsel %vm563, %v523, 0.0
      %v591 = vsel %vm561, %v524, 0.0
      %v592 = vsel %vm562, %v525, 0.0
      %v593 = vsel %vm563, %v526, 0.0
      %v594 = vsel %vm561, %v527, 0.0
      %v595 = vsel %vm562, %v528, 0.0
      %v596 = vsel %vm563, %v529, 0.0
      %v597 = vsel %vm561, %v530, 0.0
      %v598 = vsel %vm562, %v531, 0.0
      %v599 = vsel %vm563, %v532, 0.0
      %v600 = vsel %vm561, %v533, 0.0
      %v601 = vsel %vm562, %v534, 0.0
      %v602 = vsel %vm563, %v535, 0.0
      %v603 = vsel %vm561, %v536, 0.0
      %v604 = vsel %vm562, %v537, 0.0
      %v605 = vsel %vm563, %v538, 0.0
      %v606 = vsel %vm561, %v539, 0.0
      %v607 = vsel %vm562, %v540, 0.0
      %v608 = vsel %vm563, %v541, 0.0
      %v609 = vsel %vm561, %v542, 0.0
      %v610 = vsel %vm562, %v543, 0.0
      %v611 = vsel %vm563, %v544, 0.0
      %612 = vst [vmem:[#allocation2] sm:$0xf] 0
      %613 = vst [vmem:[#allocation2 + $0x4] sm:$0xf] 0
      %614 = vst [vmem:[#allocation2 + $0x8] sm:$0xf] 0
      %615 = vst [vmem:[#allocation2 + $0xc] sm:$0xf] 0
      %616 = vst [vmem:[#allocation2 + $0x10] sm:$0xf] 0
      %617 = vst [vmem:[#allocation2 + $0x14] sm:$0xf] 0
      %v618 = vpack.c.bf16 %v564, %v564
      %v619 = vpack.c.bf16 %v565, %v565
      %v620 = vpack.c.bf16 %v566, %v566
      %v621 = vpack.c.bf16 %v567, %v567
      %v622 = vpack.c.bf16 %v568, %v568
      %v623 = vpack.c.bf16 %v569, %v569
      %v624 = vpack.c.bf16 %v570, %v570
      %v625 = vpack.c.bf16 %v571, %v571
      %v626 = vpack.c.bf16 %v572, %v572
      %v627 = vpack.c.bf16 %v573, %v573
      %v628 = vpack.c.bf16 %v574, %v574
      %v629 = vpack.c.bf16 %v575, %v575
      %v630 = vpack.c.bf16 %v576, %v576
      %v631 = vpack.c.bf16 %v577, %v577
      %v632 = vpack.c.bf16 %v578, %v578
      %v633 = vpack.c.bf16 %v579, %v579
      %v634 = vpack.c.bf16 %v580, %v580
      %v635 = vpack.c.bf16 %v581, %v581
      %v636 = vpack.c.bf16 %v582, %v582
      %v637 = vpack.c.bf16 %v583, %v583
      %v638 = vpack.c.bf16 %v584, %v584
      %v639 = vpack.c.bf16 %v585, %v585
      %v640 = vpack.c.bf16 %v586, %v586
      %v641 = vpack.c.bf16 %v587, %v587
      %v642 = vpack.c.bf16 %v588, %v588
      %v643 = vpack.c.bf16 %v589, %v589
      %v644 = vpack.c.bf16 %v590, %v590
      %v645 = vpack.c.bf16 %v591, %v591
      %v646 = vpack.c.bf16 %v592, %v592
      %v647 = vpack.c.bf16 %v593, %v593
      %v648 = vpack.c.bf16 %v594, %v594
      %v649 = vpack.c.bf16 %v595, %v595
      %v650 = vpack.c.bf16 %v596, %v596
      %v651 = vpack.c.bf16 %v597, %v597
      %v652 = vpack.c.bf16 %v598, %v598
      %v653 = vpack.c.bf16 %v599, %v599
      %v654 = vpack.c.bf16 %v600, %v600
      %v655 = vpack.c.bf16 %v601, %v601
      %v656 = vpack.c.bf16 %v602, %v602
      %v657 = vpack.c.bf16 %v603, %v603
      %v658 = vpack.c.bf16 %v604, %v604
      %v659 = vpack.c.bf16 %v605, %v605
      %v660 = vpack.c.bf16 %v606, %v606
      %v661 = vpack.c.bf16 %v607, %v607
      %v662 = vpack.c.bf16 %v608, %v608
      %v663 = vpack.c.bf16 %v609, %v609
      %v664 = vpack.c.bf16 %v610, %v610
      %v665 = vpack.c.bf16 %v611, %v611
      %666 = vst [vmem:[#allocation2 + $0x18] sm:$0xf] %v618
      %667 = vst [vmem:[#allocation2 + $0x1c] sm:$0xf] %v619
      %668 = vst [vmem:[#allocation2 + $0x20] sm:$0xf] %v620
      %669 = vst [vmem:[#allocation2 + $0x24] sm:$0xf] %v621
      %670 = vst [vmem:[#allocation2 + $0x28] sm:$0xf] %v622
      %671 = vst [vmem:[#allocation2 + $0x2c] sm:$0xf] %v623
      %672 = vst [vmem:[#allocation2 + $0x30] sm:$0xf] %v624
      %673 = vst [vmem:[#allocation2 + $0x34] sm:$0xf] %v625
      %674 = vst [vmem:[#allocation2 + $0x38] sm:$0xf] %v626
      %675 = vst [vmem:[#allocation2 + $0x3c] sm:$0xf] %v627
      %676 = vst [vmem:[#allocation2 + $0x40] sm:$0xf] %v628
      %677 = vst [vmem:[#allocation2 + $0x44] sm:$0xf] %v629
      %678 = vst [vmem:[#allocation2 + $0x48] sm:$0xf] %v630
      %679 = vst [vmem:[#allocation2 + $0x4c] sm:$0xf] %v631
      %680 = vst [vmem:[#allocation2 + $0x50] sm:$0xf] %v632
      %681 = vst [vmem:[#allocation2 + $0x54] sm:$0xf] %v633
      %682 = vst [vmem:[#allocation2 + $0x58] sm:$0xf] %v634
      %683 = vst [vmem:[#allocation2 + $0x5c] sm:$0xf] %v635
      %684 = vst [vmem:[#allocation2 + $0x60] sm:$0xf] %v636
      %685 = vst [vmem:[#allocation2 + $0x64] sm:$0xf] %v637
      %686 = vst [vmem:[#allocation2 + $0x68] sm:$0xf] %v638
      %687 = vst [vmem:[#allocation2 + $0x6c] sm:$0xf] %v639
      %688 = vst [vmem:[#allocation2 + $0x70] sm:$0xf] %v640
      %689 = vst [vmem:[#allocation2 + $0x74] sm:$0xf] %v641
      %690 = vst [vmem:[#allocation2 + $0x78] sm:$0xf] %v642
      %691 = vst [vmem:[#allocation2 + $0x7c] sm:$0xf] %v643
      %692 = vst [vmem:[#allocation2 + $0x80] sm:$0xf] %v644
      %693 = vst [vmem:[#allocation2 + $0x84] sm:$0xf] %v645
      %694 = vst [vmem:[#allocation2 + $0x88] sm:$0xf] %v646
      %695 = vst [vmem:[#allocation2 + $0x8c] sm:$0xf] %v647
      %696 = vst [vmem:[#allocation2 + $0x90] sm:$0xf] %v648
      %697 = vst [vmem:[#allocation2 + $0x94] sm:$0xf] %v649
      %698 = vst [vmem:[#allocation2 + $0x98] sm:$0xf] %v650
      %699 = vst [vmem:[#allocation2 + $0x9c] sm:$0xf] %v651
      %700 = vst [vmem:[#allocation2 + $0xa0] sm:$0xf] %v652
      %701 = vst [vmem:[#allocation2 + $0xa4] sm:$0xf] %v653
      %702 = vst [vmem:[#allocation2 + $0xa8] sm:$0xf] %v654
      %703 = vst [vmem:[#allocation2 + $0xac] sm:$0xf] %v655
      %704 = vst [vmem:[#allocation2 + $0xb0] sm:$0xf] %v656
      %705 = vst [vmem:[#allocation2 + $0xb4] sm:$0xf] %v657
      %706 = vst [vmem:[#allocation2 + $0xb8] sm:$0xf] %v658
      %707 = vst [vmem:[#allocation2 + $0xbc] sm:$0xf] %v659
      %708 = vst [vmem:[#allocation2 + $0xc0] sm:$0xf] %v660
      %709 = vst [vmem:[#allocation2 + $0xc4] sm:$0xf] %v661
      %710 = vst [vmem:[#allocation2 + $0xc8] sm:$0xf] %v662
      %711 = vst [vmem:[#allocation2 + $0xcc] sm:$0xf] %v663
      %712 = vst [vmem:[#allocation2 + $0xd0] sm:$0xf] %v664
      %713 = vst [vmem:[#allocation2 + $0xd4] sm:$0xf] %v665
      %714 = vst [vmem:[#allocation2 + $0xd8] sm:$0xf] 0
      %715 = vst [vmem:[#allocation2 + $0xdc] sm:$0xf] 0
      %716 = vst [vmem:[#allocation2 + $0xe0] sm:$0xf] 0
      %717 = vst [vmem:[#allocation2 + $0xe4] sm:$0xf] 0
      %718 = vst [vmem:[#allocation2 + $0xe8] sm:$0xf] 0
      %719 = vst [vmem:[#allocation2 + $0xec] sm:$0xf] 0
      %v720 = vld [vmem:[#allocation2 + $0x8] sm:$0x8]
      %v721 = vld [vmem:[#allocation2 + $0xc] sm:$0xf]
      %v722 = vld [vmem:[#allocation2 + $0x10] sm:$0xf]
      %v723 = vld [vmem:[#allocation2 + $0x14] sm:$0xf]
      %v724 = vld [vmem:[#allocation2 + $0x18] sm:$0xf]
      %v725 = vld [vmem:[#allocation2 + $0x1c] sm:$0xf]
      %v726 = vld [vmem:[#allocation2 + $0x20] sm:$0xf]
      %v727 = vld [vmem:[#allocation2 + $0x24] sm:$0xf]
      %v728 = vld [vmem:[#allocation2 + $0x28] sm:$0xf]
      %v729 = vld [vmem:[#allocation2 + $0x2c] sm:$0xf]
      %v730 = vld [vmem:[#allocation2 + $0x30] sm:$0xf]
      %v731 = vld [vmem:[#allocation2 + $0x34] sm:$0xf]
      %v732 = vld [vmem:[#allocation2 + $0x38] sm:$0xf]
      %v733 = vld [vmem:[#allocation2 + $0x3c] sm:$0xf]
      %v734 = vld [vmem:[#allocation2 + $0x40] sm:$0xf]
      %v735 = vld [vmem:[#allocation2 + $0x44] sm:$0xf]
      %v736 = vld [vmem:[#allocation2 + $0x48] sm:$0xf]
      %v737 = vld [vmem:[#allocation2 + $0x4c] sm:$0xf]
      %v738 = vld [vmem:[#allocation2 + $0x50] sm:$0xf]
      %v739 = vld [vmem:[#allocation2 + $0x54] sm:$0xf]
      %v740 = vld [vmem:[#allocation2 + $0x58] sm:$0xf]
      %v741 = vld [vmem:[#allocation2 + $0x5c] sm:$0xf]
      %v742 = vld [vmem:[#allocation2 + $0x60] sm:$0xf]
      %v743 = vld [vmem:[#allocation2 + $0x64] sm:$0xf]
      %v744 = vld [vmem:[#allocation2 + $0x68] sm:$0xf]
      %v745 = vld [vmem:[#allocation2 + $0x6c] sm:$0xf]
      %v746 = vld [vmem:[#allocation2 + $0x70] sm:$0xf]
      %v747 = vld [vmem:[#allocation2 + $0x74] sm:$0xf]
      %v748 = vld [vmem:[#allocation2 + $0x78] sm:$0xf]
      %v749 = vld [vmem:[#allocation2 + $0x7c] sm:$0xf]
      %v750 = vld [vmem:[#allocation2 + $0x80] sm:$0xf]
      %v751 = vld [vmem:[#allocation2 + $0x84] sm:$0xf]
      %v752 = vld [vmem:[#allocation2 + $0x88] sm:$0xf]
      %v753 = vld [vmem:[#allocation2 + $0x8c] sm:$0xf]
      %v754 = vld [vmem:[#allocation2 + $0x90] sm:$0xf]
      %v755 = vld [vmem:[#allocation2 + $0x94] sm:$0xf]
      %v756 = vld [vmem:[#allocation2 + $0x98] sm:$0xf]
      %v757 = vld [vmem:[#allocation2 + $0x9c] sm:$0xf]
      %v758 = vld [vmem:[#allocation2 + $0xa0] sm:$0xf]
      %v759 = vld [vmem:[#allocation2 + $0xa4] sm:$0xf]
      %v760 = vld [vmem:[#allocation2 + $0xa8] sm:$0xf]
      %v761 = vld [vmem:[#allocation2 + $0xac] sm:$0xf]
      %v762 = vld [vmem:[#allocation2 + $0xb0] sm:$0xf]
      %v763 = vld [vmem:[#allocation2 + $0xb4] sm:$0xf]
      %v764 = vld [vmem:[#allocation2 + $0xb8] sm:$0xf]
      %v765 = vld [vmem:[#allocation2 + $0xbc] sm:$0xf]
      %v766 = vld [vmem:[#allocation2 + $0xc0] sm:$0xf]
      %v767 = vld [vmem:[#allocation2 + $0xc4] sm:$0xf]
      %v768 = vld [vmem:[#allocation2 + $0xc8] sm:$0xf]
      %v769 = vld [vmem:[%s4] sm:$0xf]
      %v770 = vld [vmem:[%s4 + $0x4] sm:$0xf]
      %v771 = vld [vmem:[%s4 + $0x8] sm:$0xf]
      %v772 = vld [vmem:[%s4 + $0xc] sm:$0xf]
      %v773 = vld [vmem:[%s4 + $0x10] sm:$0xf]
      %v774 = vld [vmem:[%s4 + $0x14] sm:$0xf]
      %v775 = vld [vmem:[%s4 + $0x18] sm:$0xf]
      %v776 = vld [vmem:[%s4 + $0x1c] sm:$0xf]
      %v777 = vld [vmem:[%s4 + $0x20] sm:$0xf]
      %v778 = vld [vmem:[%s4 + $0x24] sm:$0xf]
      %v779 = vld [vmem:[%s4 + $0x28] sm:$0xf]
      %v780 = vld [vmem:[%s4 + $0x2c] sm:$0xf]
      %v781 = vld [vmem:[%s4 + $0x30] sm:$0xf]
      %v782 = vld [vmem:[%s4 + $0x34] sm:$0xf]
      %v783 = vld [vmem:[%s4 + $0x38] sm:$0xf]
      %v784 = vld [vmem:[%s4 + $0x3c] sm:$0xf]
      %s785 = scalar_lea.vmem %s4, 64
      %v786 = vld [vmem:[%s785] sm:$0xf]
      %v787 = vld [vmem:[%s785 + $0x4] sm:$0xf]
      %v788 = vld [vmem:[%s785 + $0x8] sm:$0xf]
      %v789 = vld [vmem:[%s785 + $0xc] sm:$0xf]
      %v790 = vld [vmem:[%s785 + $0x10] sm:$0xf]
      %v791 = vld [vmem:[%s785 + $0x14] sm:$0xf]
      %v792 = vld [vmem:[%s785 + $0x18] sm:$0xf]
      %v793 = vld [vmem:[%s785 + $0x1c] sm:$0xf]
      %v794 = vld [vmem:[%s785 + $0x20] sm:$0xf]
      %v795 = vld [vmem:[%s785 + $0x24] sm:$0xf]
      %v796 = vld [vmem:[%s785 + $0x28] sm:$0xf]
      %v797 = vld [vmem:[%s785 + $0x2c] sm:$0xf]
      %v798 = vld [vmem:[%s785 + $0x30] sm:$0xf]
      %v799 = vld [vmem:[%s785 + $0x34] sm:$0xf]
      %v800 = vld [vmem:[%s785 + $0x38] sm:$0xf]
      %v801 = vld [vmem:[%s785 + $0x3c] sm:$0xf]
      %v850 = vunpack.c.l.b16 %v721
      %v851 = vunpack.c.l.b16 %v722
      %v852 = vunpack.c.l.b16 %v723
      %v853 = vunpack.c.l.b16 %v724
      %v854 = vunpack.c.l.b16 %v725
      %v855 = vunpack.c.l.b16 %v726
      %v856 = vunpack.c.l.b16 %v727
      %v857 = vunpack.c.l.b16 %v728
      %v858 = vunpack.c.l.b16 %v729
      %v859 = vunpack.c.l.b16 %v730
      %v860 = vunpack.c.l.b16 %v731
      %v861 = vunpack.c.l.b16 %v732
      %v862 = vunpack.c.l.b16 %v733
      %v863 = vunpack.c.l.b16 %v734
      %v864 = vunpack.c.l.b16 %v735
      %v865 = vunpack.c.l.b16 %v736
      %v866 = vunpack.c.l.b16 %v737
      %v867 = vunpack.c.l.b16 %v738
      %v868 = vunpack.c.l.b16 %v739
      %v869 = vunpack.c.l.b16 %v740
      %v870 = vunpack.c.l.b16 %v741
      %v871 = vunpack.c.l.b16 %v742
      %v872 = vunpack.c.l.b16 %v743
      %v873 = vunpack.c.l.b16 %v744
      %v874 = vunpack.c.l.b16 %v745
      %v875 = vunpack.c.l.b16 %v746
      %v876 = vunpack.c.l.b16 %v747
      %v877 = vunpack.c.l.b16 %v748
      %v878 = vunpack.c.l.b16 %v749
      %v879 = vunpack.c.l.b16 %v750
      %v880 = vunpack.c.l.b16 %v751
      %v881 = vunpack.c.l.b16 %v752
      %v882 = vunpack.c.l.b16 %v753
      %v883 = vunpack.c.l.b16 %v754
      %v884 = vunpack.c.l.b16 %v755
      %v885 = vunpack.c.l.b16 %v756
      %v886 = vunpack.c.l.b16 %v757
      %v887 = vunpack.c.l.b16 %v758
      %v888 = vunpack.c.l.b16 %v759
      %v889 = vunpack.c.l.b16 %v760
      %v890 = vunpack.c.l.b16 %v761
      %v891 = vunpack.c.l.b16 %v762
      %v892 = vunpack.c.l.b16 %v763
      %v893 = vunpack.c.l.b16 %v764
      %v894 = vunpack.c.l.b16 %v765
      %v895 = vunpack.c.l.b16 %v766
      %v896 = vunpack.c.l.b16 %v767
      %v897 = vunpack.c.l.b16 %v768
      %v898 = vpack.c.b16 %v851, %v850
      %v899 = vpack.c.b16 %v853, %v852
      %v900 = vpack.c.b16 %v855, %v854
      %v901 = vpack.c.b16 %v857, %v856
      %v902 = vpack.c.b16 %v859, %v858
      %v903 = vpack.c.b16 %v861, %v860
      %v904 = vpack.c.b16 %v863, %v862
      %v905 = vpack.c.b16 %v865, %v864
      %v906 = vpack.c.b16 %v867, %v866
      %v907 = vpack.c.b16 %v869, %v868
      %v908 = vpack.c.b16 %v871, %v870
      %v909 = vpack.c.b16 %v873, %v872
      %v910 = vpack.c.b16 %v875, %v874
      %v911 = vpack.c.b16 %v877, %v876
      %v912 = vpack.c.b16 %v879, %v878
      %v913 = vpack.c.b16 %v881, %v880
      %v914 = vpack.c.b16 %v883, %v882
      %v915 = vpack.c.b16 %v885, %v884
      %v916 = vpack.c.b16 %v887, %v886
      %v917 = vpack.c.b16 %v889, %v888
      %v918 = vpack.c.b16 %v891, %v890
      %v919 = vpack.c.b16 %v893, %v892
      %v920 = vpack.c.b16 %v895, %v894
      %v921 = vpack.c.b16 %v897, %v896
      %v962 = vunpack.c.l.b16 %v786
      %v963 = vunpack.c.l.b16 %v787
      %v964 = vunpack.c.l.b16 %v788
      %v965 = vunpack.c.l.b16 %v789
      %v966 = vunpack.c.l.b16 %v790
      %v967 = vunpack.c.l.b16 %v791
      %v968 = vunpack.c.l.b16 %v792
      %v969 = vunpack.c.l.b16 %v793
      %v970 = vunpack.c.l.b16 %v794
      %v971 = vunpack.c.l.b16 %v795
      %v972 = vunpack.c.l.b16 %v796
      %v973 = vunpack.c.l.b16 %v797
      %v974 = vunpack.c.l.b16 %v798
      %v975 = vunpack.c.l.b16 %v799
      %v976 = vunpack.c.l.b16 %v800
      %v977 = vunpack.c.l.b16 %v801
      %v978 = vpack.c.b16 %v963, %v962
      %v979 = vpack.c.b16 %v965, %v964
      %v980 = vpack.c.b16 %v967, %v966
      %v981 = vpack.c.b16 %v969, %v968
      %v982 = vpack.c.b16 %v971, %v970
      %v983 = vpack.c.b16 %v973, %v972
      %v984 = vpack.c.b16 %v975, %v974
      %v985 = vpack.c.b16 %v977, %v976
      %994 = vmatpush.bf16.msra.mxu0 %v985
      %995 = vmatpush.bf16.msra.mxu0 %v984
      %996 = vmatpush.bf16.msra.mxu0 %v983
      %997 = vmatpush.bf16.msra.mxu0 %v982
      %998 = vmatpush.bf16.msra.mxu0 %v981
      %999 = vmatpush.bf16.msra.mxu0 %v980
      %1000 = vmatpush.bf16.msra.mxu0 %v979
      %1001 = vmatpush.bf16.msra.mxu0 %v978
      %1002 = vmatmul.bf16.gmra.mxu0 %v898
      %v1003 = vpop.f32.mrf.mxu0
      %v1004 = vadd.f32 0.0, %v1003
      %v1005 = vpop.f32.mrf.mxu0
      %v1006 = vadd.f32 0.0, %v1005
      %1007 = vmatmul.bf16.gmra.mxu0 %v899
      %v1008 = vpop.f32.mrf.mxu0
      %v1009 = vadd.f32 0.0, %v1008
      %v1010 = vpop.f32.mrf.mxu0
      %v1011 = vadd.f32 0.0, %v1010
      %1012 = vmatmul.bf16.gmra.mxu0 %v900
      %v1013 = vpop.f32.mrf.mxu0
      %v1014 = vadd.f32 0.0, %v1013
      %v1015 = vpop.f32.mrf.mxu0
      %v1016 = vadd.f32 0.0, %v1015
      %1017 = vmatmul.bf16.gmra.mxu0 %v901
      %v1018 = vpop.f32.mrf.mxu0
      %v1019 = vadd.f32 0.0, %v1018
      %v1020 = vpop.f32.mrf.mxu0
      %v1021 = vadd.f32 0.0, %v1020
      %1022 = vmatmul.bf16.gmra.mxu0 %v902
      %v1023 = vpop.f32.mrf.mxu0
      %v1024 = vadd.f32 0.0, %v1023
      %v1025 = vpop.f32.mrf.mxu0
      %v1026 = vadd.f32 0.0, %v1025
      %1027 = vmatmul.bf16.gmra.mxu0 %v903
      %v1028 = vpop.f32.mrf.mxu0
      %v1029 = vadd.f32 0.0, %v1028
      %v1030 = vpop.f32.mrf.mxu0
      %v1031 = vadd.f32 0.0, %v1030
      %1032 = vmatmul.bf16.gmra.mxu0 %v904
      %v1033 = vpop.f32.mrf.mxu0
      %v1034 = vadd.f32 0.0, %v1033
      %v1035 = vpop.f32.mrf.mxu0
      %v1036 = vadd.f32 0.0, %v1035
      %1037 = vmatmul.bf16.gmra.mxu0 %v905
      %v1038 = vpop.f32.mrf.mxu0
      %v1039 = vadd.f32 0.0, %v1038
      %v1040 = vpop.f32.mrf.mxu0
      %v1041 = vadd.f32 0.0, %v1040
      %1042 = vmatmul.bf16.gmra.mxu0 %v906
      %v1043 = vpop.f32.mrf.mxu0
      %v1044 = vadd.f32 0.0, %v1043
      %v1045 = vpop.f32.mrf.mxu0
      %v1046 = vadd.f32 0.0, %v1045
      %1047 = vmatmul.bf16.gmra.mxu0 %v907
      %v1048 = vpop.f32.mrf.mxu0
      %v1049 = vadd.f32 0.0, %v1048
      %v1050 = vpop.f32.mrf.mxu0
      %v1051 = vadd.f32 0.0, %v1050
      %1052 = vmatmul.bf16.gmra.mxu0 %v908
      %v1053 = vpop.f32.mrf.mxu0
      %v1054 = vadd.f32 0.0, %v1053
      %v1055 = vpop.f32.mrf.mxu0
      %v1056 = vadd.f32 0.0, %v1055
      %1057 = vmatmul.bf16.gmra.mxu0 %v909
      %v1058 = vpop.f32.mrf.mxu0
      %v1059 = vadd.f32 0.0, %v1058
      %v1060 = vpop.f32.mrf.mxu0
      %v1061 = vadd.f32 0.0, %v1060
      %1062 = vmatmul.bf16.gmra.mxu0 %v910
      %v1063 = vpop.f32.mrf.mxu0
      %v1064 = vadd.f32 0.0, %v1063
      %v1065 = vpop.f32.mrf.mxu0
      %v1066 = vadd.f32 0.0, %v1065
      %1067 = vmatmul.bf16.gmra.mxu0 %v911
      %v1068 = vpop.f32.mrf.mxu0
      %v1069 = vadd.f32 0.0, %v1068
      %v1070 = vpop.f32.mrf.mxu0
      %v1071 = vadd.f32 0.0, %v1070
      %1072 = vmatmul.bf16.gmra.mxu0 %v912
      %v1073 = vpop.f32.mrf.mxu0
      %v1074 = vadd.f32 0.0, %v1073
      %v1075 = vpop.f32.mrf.mxu0
      %v1076 = vadd.f32 0.0, %v1075
      %1077 = vmatmul.bf16.gmra.mxu0 %v913
      %v1078 = vpop.f32.mrf.mxu0
      %v1079 = vadd.f32 0.0, %v1078
      %v1080 = vpop.f32.mrf.mxu0
      %v1081 = vadd.f32 0.0, %v1080
      %1082 = vmatmul.bf16.gmra.mxu0 %v914
      %v1083 = vpop.f32.mrf.mxu0
      %v1084 = vadd.f32 0.0, %v1083
      %v1085 = vpop.f32.mrf.mxu0
      %v1086 = vadd.f32 0.0, %v1085
      %1087 = vmatmul.bf16.gmra.mxu0 %v915
      %v1088 = vpop.f32.mrf.mxu0
      %v1089 = vadd.f32 0.0, %v1088
      %v1090 = vpop.f32.mrf.mxu0
      %v1091 = vadd.f32 0.0, %v1090
      %1092 = vmatmul.bf16.gmra.mxu0 %v916
      %v1093 = vpop.f32.mrf.mxu0
      %v1094 = vadd.f32 0.0, %v1093
      %v1095 = vpop.f32.mrf.mxu0
      %v1096 = vadd.f32 0.0, %v1095
      %1097 = vmatmul.bf16.gmra.mxu0 %v917
      %v1098 = vpop.f32.mrf.mxu0
      %v1099 = vadd.f32 0.0, %v1098
      %v1100 = vpop.f32.mrf.mxu0
      %v1101 = vadd.f32 0.0, %v1100
      %1102 = vmatmul.bf16.gmra.mxu0 %v918
      %v1103 = vpop.f32.mrf.mxu0
      %v1104 = vadd.f32 0.0, %v1103
      %v1105 = vpop.f32.mrf.mxu0
      %v1106 = vadd.f32 0.0, %v1105
      %1107 = vmatmul.bf16.gmra.mxu0 %v919
      %v1108 = vpop.f32.mrf.mxu0
      %v1109 = vadd.f32 0.0, %v1108
      %v1110 = vpop.f32.mrf.mxu0
      %v1111 = vadd.f32 0.0, %v1110
      %1112 = vmatmul.bf16.gmra.mxu0 %v920
      %v1113 = vpop.f32.mrf.mxu0
      %v1114 = vadd.f32 0.0, %v1113
      %v1115 = vpop.f32.mrf.mxu0
      %v1116 = vadd.f32 0.0, %v1115
      %1117 = vmatmul.bf16.gmra.mxu0 %v921
      %v1118 = vpop.f32.mrf.mxu0
      %v1119 = vadd.f32 0.0, %v1118
      %v1120 = vpop.f32.mrf.mxu0
      %v1121 = vadd.f32 0.0, %v1120
      %1122 = vdwg.mxu0
      %v1124 = vunpack.c.l.b16 %v720
      %v1125 = vpack.c.b16 %v850, %v1124
      %v1126 = vpack.c.b16 %v852, %v851
      %v1127 = vpack.c.b16 %v854, %v853
      %v1128 = vpack.c.b16 %v856, %v855
      %v1129 = vpack.c.b16 %v858, %v857
      %v1130 = vpack.c.b16 %v860, %v859
      %v1131 = vpack.c.b16 %v862, %v861
      %v1132 = vpack.c.b16 %v864, %v863
      %v1133 = vpack.c.b16 %v866, %v865
      %v1134 = vpack.c.b16 %v868, %v867
      %v1135 = vpack.c.b16 %v870, %v869
      %v1136 = vpack.c.b16 %v872, %v871
      %v1137 = vpack.c.b16 %v874, %v873
      %v1138 = vpack.c.b16 %v876, %v875
      %v1139 = vpack.c.b16 %v878, %v877
      %v1140 = vpack.c.b16 %v880, %v879
      %v1141 = vpack.c.b16 %v882, %v881
      %v1142 = vpack.c.b16 %v884, %v883
      %v1143 = vpack.c.b16 %v886, %v885
      %v1144 = vpack.c.b16 %v888, %v887
      %v1145 = vpack.c.b16 %v890, %v889
      %v1146 = vpack.c.b16 %v892, %v891
      %v1147 = vpack.c.b16 %v894, %v893
      %v1148 = vpack.c.b16 %v896, %v895
      %v1149 = vpack.c.b16 %v897, %v897
      %vm1150 = vsmask.f32 4352
      %v1152 = vshrl.u32 %v1125, 16
      %v1154 = vrot.slane %v1152, 3
      %v1155 = vshll.u32 %v1125, 16
      %v1157 = vrot.slane %v1155, 4
      %v1158 = vor.u32 %v1154, %v1157
      %v1160 = vshrl.u32 %v1126, 16
      %v1162 = vrot.slane %v1160, 3
      %v1163 = vshll.u32 %v1126, 16
      %v1165 = vrot.slane %v1163, 4
      %v1166 = vor.u32 %v1162, %v1165
      %v1167 = vsel %vm1150, %v1158, %v1166
      %v1169 = vshrl.u32 %v1127, 16
      %v1171 = vrot.slane %v1169, 3
      %v1172 = vshll.u32 %v1127, 16
      %v1174 = vrot.slane %v1172, 4
      %v1175 = vor.u32 %v1171, %v1174
      %v1176 = vsel %vm1150, %v1166, %v1175
      %v1178 = vshrl.u32 %v1128, 16
      %v1180 = vrot.slane %v1178, 3
      %v1181 = vshll.u32 %v1128, 16
      %v1183 = vrot.slane %v1181, 4
      %v1184 = vor.u32 %v1180, %v1183
      %v1185 = vsel %vm1150, %v1175, %v1184
      %v1187 = vshrl.u32 %v1129, 16
      %v1189 = vrot.slane %v1187, 3
      %v1190 = vshll.u32 %v1129, 16
      %v1192 = vrot.slane %v1190, 4
      %v1193 = vor.u32 %v1189, %v1192
      %v1194 = vsel %vm1150, %v1184, %v1193
      %v1196 = vshrl.u32 %v1130, 16
      %v1198 = vrot.slane %v1196, 3
      %v1199 = vshll.u32 %v1130, 16
      %v1201 = vrot.slane %v1199, 4
      %v1202 = vor.u32 %v1198, %v1201
      %v1203 = vsel %vm1150, %v1193, %v1202
      %v1205 = vshrl.u32 %v1131, 16
      %v1207 = vrot.slane %v1205, 3
      %v1208 = vshll.u32 %v1131, 16
      %v1210 = vrot.slane %v1208, 4
      %v1211 = vor.u32 %v1207, %v1210
      %v1212 = vsel %vm1150, %v1202, %v1211
      %v1214 = vshrl.u32 %v1132, 16
      %v1216 = vrot.slane %v1214, 3
      %v1217 = vshll.u32 %v1132, 16
      %v1219 = vrot.slane %v1217, 4
      %v1220 = vor.u32 %v1216, %v1219
      %v1221 = vsel %vm1150, %v1211, %v1220
      %v1223 = vshrl.u32 %v1133, 16
      %v1225 = vrot.slane %v1223, 3
      %v1226 = vshll.u32 %v1133, 16
      %v1228 = vrot.slane %v1226, 4
      %v1229 = vor.u32 %v1225, %v1228
      %v1230 = vsel %vm1150, %v1220, %v1229
      %v1232 = vshrl.u32 %v1134, 16
      %v1234 = vrot.slane %v1232, 3
      %v1235 = vshll.u32 %v1134, 16
      %v1237 = vrot.slane %v1235, 4
      %v1238 = vor.u32 %v1234, %v1237
      %v1239 = vsel %vm1150, %v1229, %v1238
      %v1241 = vshrl.u32 %v1135, 16
      %v1243 = vrot.slane %v1241, 3
      %v1244 = vshll.u32 %v1135, 16
      %v1246 = vrot.slane %v1244, 4
      %v1247 = vor.u32 %v1243, %v1246
      %v1248 = vsel %vm1150, %v1238, %v1247
      %v1250 = vshrl.u32 %v1136, 16
      %v1252 = vrot.slane %v1250, 3
      %v1253 = vshll.u32 %v1136, 16
      %v1255 = vrot.slane %v1253, 4
      %v1256 = vor.u32 %v1252, %v1255
      %v1257 = vsel %vm1150, %v1247, %v1256
      %v1259 = vshrl.u32 %v1137, 16
      %v1261 = vrot.slane %v1259, 3
      %v1262 = vshll.u32 %v1137, 16
      %v1264 = vrot.slane %v1262, 4
      %v1265 = vor.u32 %v1261, %v1264
      %v1266 = vsel %vm1150, %v1256, %v1265
      %v1268 = vshrl.u32 %v1138, 16
      %v1270 = vrot.slane %v1268, 3
      %v1271 = vshll.u32 %v1138, 16
      %v1273 = vrot.slane %v1271, 4
      %v1274 = vor.u32 %v1270, %v1273
      %v1275 = vsel %vm1150, %v1265, %v1274
      %v1277 = vshrl.u32 %v1139, 16
      %v1279 = vrot.slane %v1277, 3
      %v1280 = vshll.u32 %v1139, 16
      %v1282 = vrot.slane %v1280, 4
      %v1283 = vor.u32 %v1279, %v1282
      %v1284 = vsel %vm1150, %v1274, %v1283
      %v1286 = vshrl.u32 %v1140, 16
      %v1288 = vrot.slane %v1286, 3
      %v1289 = vshll.u32 %v1140, 16
      %v1291 = vrot.slane %v1289, 4
      %v1292 = vor.u32 %v1288, %v1291
      %v1293 = vsel %vm1150, %v1283, %v1292
      %v1295 = vshrl.u32 %v1141, 16
      %v1297 = vrot.slane %v1295, 3
      %v1298 = vshll.u32 %v1141, 16
      %v1300 = vrot.slane %v1298, 4
      %v1301 = vor.u32 %v1297, %v1300
      %v1302 = vsel %vm1150, %v1292, %v1301
      %v1304 = vshrl.u32 %v1142, 16
      %v1306 = vrot.slane %v1304, 3
      %v1307 = vshll.u32 %v1142, 16
      %v1309 = vrot.slane %v1307, 4
      %v1310 = vor.u32 %v1306, %v1309
      %v1311 = vsel %vm1150, %v1301, %v1310
      %v1313 = vshrl.u32 %v1143, 16
      %v1315 = vrot.slane %v1313, 3
      %v1316 = vshll.u32 %v1143, 16
      %v1318 = vrot.slane %v1316, 4
      %v1319 = vor.u32 %v1315, %v1318
      %v1320 = vsel %vm1150, %v1310, %v1319
      %v1322 = vshrl.u32 %v1144, 16
      %v1324 = vrot.slane %v1322, 3
      %v1325 = vshll.u32 %v1144, 16
      %v1327 = vrot.slane %v1325, 4
      %v1328 = vor.u32 %v1324, %v1327
      %v1329 = vsel %vm1150, %v1319, %v1328
      %v1331 = vshrl.u32 %v1145, 16
      %v1333 = vrot.slane %v1331, 3
      %v1334 = vshll.u32 %v1145, 16
      %v1336 = vrot.slane %v1334, 4
      %v1337 = vor.u32 %v1333, %v1336
      %v1338 = vsel %vm1150, %v1328, %v1337
      %v1340 = vshrl.u32 %v1146, 16
      %v1342 = vrot.slane %v1340, 3
      %v1343 = vshll.u32 %v1146, 16
      %v1345 = vrot.slane %v1343, 4
      %v1346 = vor.u32 %v1342, %v1345
      %v1347 = vsel %vm1150, %v1337, %v1346
      %v1349 = vshrl.u32 %v1147, 16
      %v1351 = vrot.slane %v1349, 3
      %v1352 = vshll.u32 %v1147, 16
      %v1354 = vrot.slane %v1352, 4
      %v1355 = vor.u32 %v1351, %v1354
      %v1356 = vsel %vm1150, %v1346, %v1355
      %v1358 = vshrl.u32 %v1148, 16
      %v1360 = vrot.slane %v1358, 3
      %v1361 = vshll.u32 %v1148, 16
      %v1363 = vrot.slane %v1361, 4
      %v1364 = vor.u32 %v1360, %v1363
      %v1365 = vsel %vm1150, %v1355, %v1364
      %v1367 = vshrl.u32 %v1149, 16
      %v1369 = vrot.slane %v1367, 3
      %v1370 = vshll.u32 %v1149, 16
      %v1372 = vrot.slane %v1370, 4
      %v1373 = vor.u32 %v1369, %v1372
      %v1374 = vsel %vm1150, %v1364, %v1373
      %v1415 = vunpack.c.l.b16 %v769
      %v1416 = vunpack.c.l.b16 %v770
      %v1417 = vunpack.c.l.b16 %v771
      %v1418 = vunpack.c.l.b16 %v772
      %v1419 = vunpack.c.l.b16 %v773
      %v1420 = vunpack.c.l.b16 %v774
      %v1421 = vunpack.c.l.b16 %v775
      %v1422 = vunpack.c.l.b16 %v776
      %v1423 = vunpack.c.l.b16 %v777
      %v1424 = vunpack.c.l.b16 %v778
      %v1425 = vunpack.c.l.b16 %v779
      %v1426 = vunpack.c.l.b16 %v780
      %v1427 = vunpack.c.l.b16 %v781
      %v1428 = vunpack.c.l.b16 %v782
      %v1429 = vunpack.c.l.b16 %v783
      %v1430 = vunpack.c.l.b16 %v784
      %v1431 = vpack.c.b16 %v1416, %v1415
      %v1432 = vpack.c.b16 %v1418, %v1417
      %v1433 = vpack.c.b16 %v1420, %v1419
      %v1434 = vpack.c.b16 %v1422, %v1421
      %v1435 = vpack.c.b16 %v1424, %v1423
      %v1436 = vpack.c.b16 %v1426, %v1425
      %v1437 = vpack.c.b16 %v1428, %v1427
      %v1438 = vpack.c.b16 %v1430, %v1429
      %1447 = vmatpush.bf16.msra.mxu0 %v1438
      %1448 = vmatpush.bf16.msra.mxu0 %v1437
      %1449 = vmatpush.bf16.msra.mxu0 %v1436
      %1450 = vmatpush.bf16.msra.mxu0 %v1435
      %1451 = vmatpush.bf16.msra.mxu0 %v1434
      %1452 = vmatpush.bf16.msra.mxu0 %v1433
      %1453 = vmatpush.bf16.msra.mxu0 %v1432
      %1454 = vmatpush.bf16.msra.mxu0 %v1431
      %1455 = vmatmul.bf16.gmra.mxu0 %v1167
      %v1456 = vpop.f32.mrf.mxu0
      %v1457 = vadd.f32 %v1004, %v1456
      %v1458 = vpop.f32.mrf.mxu0
      %v1459 = vadd.f32 %v1006, %v1458
      %1460 = vmatmul.bf16.gmra.mxu0 %v1176
      %v1461 = vpop.f32.mrf.mxu0
      %v1462 = vadd.f32 %v1009, %v1461
      %v1463 = vpop.f32.mrf.mxu0
      %v1464 = vadd.f32 %v1011, %v1463
      %1465 = vmatmul.bf16.gmra.mxu0 %v1185
      %v1466 = vpop.f32.mrf.mxu0
      %v1467 = vadd.f32 %v1014, %v1466
      %v1468 = vpop.f32.mrf.mxu0
      %v1469 = vadd.f32 %v1016, %v1468
      %1470 = vmatmul.bf16.gmra.mxu0 %v1194
      %v1471 = vpop.f32.mrf.mxu0
      %v1472 = vadd.f32 %v1019, %v1471
      %v1473 = vpop.f32.mrf.mxu0
      %v1474 = vadd.f32 %v1021, %v1473
      %1475 = vmatmul.bf16.gmra.mxu0 %v1203
      %v1476 = vpop.f32.mrf.mxu0
      %v1477 = vadd.f32 %v1024, %v1476
      %v1478 = vpop.f32.mrf.mxu0
      %v1479 = vadd.f32 %v1026, %v1478
      %1480 = vmatmul.bf16.gmra.mxu0 %v1212
      %v1481 = vpop.f32.mrf.mxu0
      %v1482 = vadd.f32 %v1029, %v1481
      %v1483 = vpop.f32.mrf.mxu0
      %v1484 = vadd.f32 %v1031, %v1483
      %1485 = vmatmul.bf16.gmra.mxu0 %v1221
      %v1486 = vpop.f32.mrf.mxu0
      %v1487 = vadd.f32 %v1034, %v1486
      %v1488 = vpop.f32.mrf.mxu0
      %v1489 = vadd.f32 %v1036, %v1488
      %1490 = vmatmul.bf16.gmra.mxu0 %v1230
      %v1491 = vpop.f32.mrf.mxu0
      %v1492 = vadd.f32 %v1039, %v1491
      %v1493 = vpop.f32.mrf.mxu0
      %v1494 = vadd.f32 %v1041, %v1493
      %1495 = vmatmul.bf16.gmra.mxu0 %v1239
      %v1496 = vpop.f32.mrf.mxu0
      %v1497 = vadd.f32 %v1044, %v1496
      %v1498 = vpop.f32.mrf.mxu0
      %v1499 = vadd.f32 %v1046, %v1498
      %1500 = vmatmul.bf16.gmra.mxu0 %v1248
      %v1501 = vpop.f32.mrf.mxu0
      %v1502 = vadd.f32 %v1049, %v1501
      %v1503 = vpop.f32.mrf.mxu0
      %v1504 = vadd.f32 %v1051, %v1503
      %1505 = vmatmul.bf16.gmra.mxu0 %v1257
      %v1506 = vpop.f32.mrf.mxu0
      %v1507 = vadd.f32 %v1054, %v1506
      %v1508 = vpop.f32.mrf.mxu0
      %v1509 = vadd.f32 %v1056, %v1508
      %1510 = vmatmul.bf16.gmra.mxu0 %v1266
      %v1511 = vpop.f32.mrf.mxu0
      %v1512 = vadd.f32 %v1059, %v1511
      %v1513 = vpop.f32.mrf.mxu0
      %v1514 = vadd.f32 %v1061, %v1513
      %1515 = vmatmul.bf16.gmra.mxu0 %v1275
      %v1516 = vpop.f32.mrf.mxu0
      %v1517 = vadd.f32 %v1064, %v1516
      %v1518 = vpop.f32.mrf.mxu0
      %v1519 = vadd.f32 %v1066, %v1518
      %1520 = vmatmul.bf16.gmra.mxu0 %v1284
      %v1521 = vpop.f32.mrf.mxu0
      %v1522 = vadd.f32 %v1069, %v1521
      %v1523 = vpop.f32.mrf.mxu0
      %v1524 = vadd.f32 %v1071, %v1523
      %1525 = vmatmul.bf16.gmra.mxu0 %v1293
      %v1526 = vpop.f32.mrf.mxu0
      %v1527 = vadd.f32 %v1074, %v1526
      %v1528 = vpop.f32.mrf.mxu0
      %v1529 = vadd.f32 %v1076, %v1528
      %1530 = vmatmul.bf16.gmra.mxu0 %v1302
      %v1531 = vpop.f32.mrf.mxu0
      %v1532 = vadd.f32 %v1079, %v1531
      %v1533 = vpop.f32.mrf.mxu0
      %v1534 = vadd.f32 %v1081, %v1533
      %1535 = vmatmul.bf16.gmra.mxu0 %v1311
      %v1536 = vpop.f32.mrf.mxu0
      %v1537 = vadd.f32 %v1084, %v1536
      %v1538 = vpop.f32.mrf.mxu0
      %v1539 = vadd.f32 %v1086, %v1538
      %1540 = vmatmul.bf16.gmra.mxu0 %v1320
      %v1541 = vpop.f32.mrf.mxu0
      %v1542 = vadd.f32 %v1089, %v1541
      %v1543 = vpop.f32.mrf.mxu0
      %v1544 = vadd.f32 %v1091, %v1543
      %1545 = vmatmul.bf16.gmra.mxu0 %v1329
      %v1546 = vpop.f32.mrf.mxu0
      %v1547 = vadd.f32 %v1094, %v1546
      %v1548 = vpop.f32.mrf.mxu0
      %v1549 = vadd.f32 %v1096, %v1548
      %1550 = vmatmul.bf16.gmra.mxu0 %v1338
      %v1551 = vpop.f32.mrf.mxu0
      %v1552 = vadd.f32 %v1099, %v1551
      %v1553 = vpop.f32.mrf.mxu0
      %v1554 = vadd.f32 %v1101, %v1553
      %1555 = vmatmul.bf16.gmra.mxu0 %v1347
      %v1556 = vpop.f32.mrf.mxu0
      %v1557 = vadd.f32 %v1104, %v1556
      %v1558 = vpop.f32.mrf.mxu0
      %v1559 = vadd.f32 %v1106, %v1558
      %1560 = vmatmul.bf16.gmra.mxu0 %v1356
      %v1561 = vpop.f32.mrf.mxu0
      %v1562 = vadd.f32 %v1109, %v1561
      %v1563 = vpop.f32.mrf.mxu0
      %v1564 = vadd.f32 %v1111, %v1563
      %1565 = vmatmul.bf16.gmra.mxu0 %v1365
      %v1566 = vpop.f32.mrf.mxu0
      %v1567 = vadd.f32 %v1114, %v1566
      %v1568 = vpop.f32.mrf.mxu0
      %v1569 = vadd.f32 %v1116, %v1568
      %1570 = vmatmul.bf16.gmra.mxu0 %v1374
      %v1571 = vpop.f32.mrf.mxu0
      %v1572 = vadd.f32 %v1119, %v1571
      %v1573 = vpop.f32.mrf.mxu0
      %v1574 = vadd.f32 %v1121, %v1573
      %1575 = vdwg.mxu0
      %v1576 = vld [vmem:[#allocation2 + $0xc] sm:$0xf]
      %v1577 = vld [vmem:[#allocation2 + $0x10] sm:$0xf]
      %v1578 = vld [vmem:[#allocation2 + $0x14] sm:$0xf]
      %v1579 = vld [vmem:[#allocation2 + $0x18] sm:$0xf]
      %v1580 = vld [vmem:[#allocation2 + $0x1c] sm:$0xf]
      %v1581 = vld [vmem:[#allocation2 + $0x20] sm:$0xf]
      %v1582 = vld [vmem:[#allocation2 + $0x24] sm:$0xf]
      %v1583 = vld [vmem:[#allocation2 + $0x28] sm:$0xf]
      %v1584 = vld [vmem:[#allocation2 + $0x2c] sm:$0xf]
      %v1585 = vld [vmem:[#allocation2 + $0x30] sm:$0xf]
      %v1586 = vld [vmem:[#allocation2 + $0x34] sm:$0xf]
      %v1587 = vld [vmem:[#allocation2 + $0x38] sm:$0xf]
      %v1588 = vld [vmem:[#allocation2 + $0x3c] sm:$0xf]
      %v1589 = vld [vmem:[#allocation2 + $0x40] sm:$0xf]
      %v1590 = vld [vmem:[#allocation2 + $0x44] sm:$0xf]
      %v1591 = vld [vmem:[#allocation2 + $0x48] sm:$0xf]
      %v1592 = vld [vmem:[#allocation2 + $0x4c] sm:$0xf]
      %v1593 = vld [vmem:[#allocation2 + $0x50] sm:$0xf]
      %v1594 = vld [vmem:[#allocation2 + $0x54] sm:$0xf]
      %v1595 = vld [vmem:[#allocation2 + $0x58] sm:$0xf]
      %v1596 = vld [vmem:[#allocation2 + $0x5c] sm:$0xf]
      %v1597 = vld [vmem:[#allocation2 + $0x60] sm:$0xf]
      %v1598 = vld [vmem:[#allocation2 + $0x64] sm:$0xf]
      %v1599 = vld [vmem:[#allocation2 + $0x68] sm:$0xf]
      %v1600 = vld [vmem:[#allocation2 + $0x6c] sm:$0xf]
      %v1601 = vld [vmem:[#allocation2 + $0x70] sm:$0xf]
      %v1602 = vld [vmem:[#allocation2 + $0x74] sm:$0xf]
      %v1603 = vld [vmem:[#allocation2 + $0x78] sm:$0xf]
      %v1604 = vld [vmem:[#allocation2 + $0x7c] sm:$0xf]
      %v1605 = vld [vmem:[#allocation2 + $0x80] sm:$0xf]
      %v1606 = vld [vmem:[#allocation2 + $0x84] sm:$0xf]
      %v1607 = vld [vmem:[#allocation2 + $0x88] sm:$0xf]
      %v1608 = vld [vmem:[#allocation2 + $0x8c] sm:$0xf]
      %v1609 = vld [vmem:[#allocation2 + $0x90] sm:$0xf]
      %v1610 = vld [vmem:[#allocation2 + $0x94] sm:$0xf]
      %v1611 = vld [vmem:[#allocation2 + $0x98] sm:$0xf]
      %v1612 = vld [vmem:[#allocation2 + $0x9c] sm:$0xf]
      %v1613 = vld [vmem:[#allocation2 + $0xa0] sm:$0xf]
      %v1614 = vld [vmem:[#allocation2 + $0xa4] sm:$0xf]
      %v1615 = vld [vmem:[#allocation2 + $0xa8] sm:$0xf]
      %v1616 = vld [vmem:[#allocation2 + $0xac] sm:$0xf]
      %v1617 = vld [vmem:[#allocation2 + $0xb0] sm:$0xf]
      %v1618 = vld [vmem:[#allocation2 + $0xb4] sm:$0xf]
      %v1619 = vld [vmem:[#allocation2 + $0xb8] sm:$0xf]
      %v1620 = vld [vmem:[#allocation2 + $0xbc] sm:$0xf]
      %v1621 = vld [vmem:[#allocation2 + $0xc0] sm:$0xf]
      %v1622 = vld [vmem:[#allocation2 + $0xc4] sm:$0xf]
      %v1623 = vld [vmem:[#allocation2 + $0xc8] sm:$0xf]
      %v1624 = vld [vmem:[#allocation2 + $0xcc] sm:$0x1]
      %s1625 = scalar_lea.vmem %s4, 128
      %v1626 = vld [vmem:[%s1625] sm:$0xf]
      %v1627 = vld [vmem:[%s1625 + $0x4] sm:$0xf]
      %v1628 = vld [vmem:[%s1625 + $0x8] sm:$0xf]
      %v1629 = vld [vmem:[%s1625 + $0xc] sm:$0xf]
      %v1630 = vld [vmem:[%s1625 + $0x10] sm:$0xf]
      %v1631 = vld [vmem:[%s1625 + $0x14] sm:$0xf]
      %v1632 = vld [vmem:[%s1625 + $0x18] sm:$0xf]
      %v1633 = vld [vmem:[%s1625 + $0x1c] sm:$0xf]
      %v1634 = vld [vmem:[%s1625 + $0x20] sm:$0xf]
      %v1635 = vld [vmem:[%s1625 + $0x24] sm:$0xf]
      %v1636 = vld [vmem:[%s1625 + $0x28] sm:$0xf]
      %v1637 = vld [vmem:[%s1625 + $0x2c] sm:$0xf]
      %v1638 = vld [vmem:[%s1625 + $0x30] sm:$0xf]
      %v1639 = vld [vmem:[%s1625 + $0x34] sm:$0xf]
      %v1640 = vld [vmem:[%s1625 + $0x38] sm:$0xf]
      %v1641 = vld [vmem:[%s1625 + $0x3c] sm:$0xf]
      %v1691 = vunpack.c.l.b16 %v1576
      %v1692 = vunpack.c.l.b16 %v1577
      %v1693 = vunpack.c.l.b16 %v1578
      %v1694 = vunpack.c.l.b16 %v1579
      %v1695 = vunpack.c.l.b16 %v1580
      %v1696 = vunpack.c.l.b16 %v1581
      %v1697 = vunpack.c.l.b16 %v1582
      %v1698 = vunpack.c.l.b16 %v1583
      %v1699 = vunpack.c.l.b16 %v1584
      %v1700 = vunpack.c.l.b16 %v1585
      %v1701 = vunpack.c.l.b16 %v1586
      %v1702 = vunpack.c.l.b16 %v1587
      %v1703 = vunpack.c.l.b16 %v1588
      %v1704 = vunpack.c.l.b16 %v1589
      %v1705 = vunpack.c.l.b16 %v1590
      %v1706 = vunpack.c.l.b16 %v1591
      %v1707 = vunpack.c.l.b16 %v1592
      %v1708 = vunpack.c.l.b16 %v1593
      %v1709 = vunpack.c.l.b16 %v1594
      %v1710 = vunpack.c.l.b16 %v1595
      %v1711 = vunpack.c.l.b16 %v1596
      %v1712 = vunpack.c.l.b16 %v1597
      %v1713 = vunpack.c.l.b16 %v1598
      %v1714 = vunpack.c.l.b16 %v1599
      %v1715 = vunpack.c.l.b16 %v1600
      %v1716 = vunpack.c.l.b16 %v1601
      %v1717 = vunpack.c.l.b16 %v1602
      %v1718 = vunpack.c.l.b16 %v1603
      %v1719 = vunpack.c.l.b16 %v1604
      %v1720 = vunpack.c.l.b16 %v1605
      %v1721 = vunpack.c.l.b16 %v1606
      %v1722 = vunpack.c.l.b16 %v1607
      %v1723 = vunpack.c.l.b16 %v1608
      %v1724 = vunpack.c.l.b16 %v1609
      %v1725 = vunpack.c.l.b16 %v1610
      %v1726 = vunpack.c.l.b16 %v1611
      %v1727 = vunpack.c.l.b16 %v1612
      %v1728 = vunpack.c.l.b16 %v1613
      %v1729 = vunpack.c.l.b16 %v1614
      %v1730 = vunpack.c.l.b16 %v1615
      %v1731 = vunpack.c.l.b16 %v1616
      %v1732 = vunpack.c.l.b16 %v1617
      %v1733 = vunpack.c.l.b16 %v1618
      %v1734 = vunpack.c.l.b16 %v1619
      %v1735 = vunpack.c.l.b16 %v1620
      %v1736 = vunpack.c.l.b16 %v1621
      %v1737 = vunpack.c.l.b16 %v1622
      %v1738 = vunpack.c.l.b16 %v1623
      %v1739 = vunpack.c.l.b16 %v1624
      %v1740 = vpack.c.b16 %v1692, %v1691
      %v1741 = vpack.c.b16 %v1694, %v1693
      %v1742 = vpack.c.b16 %v1696, %v1695
      %v1743 = vpack.c.b16 %v1698, %v1697
      %v1744 = vpack.c.b16 %v1700, %v1699
      %v1745 = vpack.c.b16 %v1702, %v1701
      %v1746 = vpack.c.b16 %v1704, %v1703
      %v1747 = vpack.c.b16 %v1706, %v1705
      %v1748 = vpack.c.b16 %v1708, %v1707
      %v1749 = vpack.c.b16 %v1710, %v1709
      %v1750 = vpack.c.b16 %v1712, %v1711
      %v1751 = vpack.c.b16 %v1714, %v1713
      %v1752 = vpack.c.b16 %v1716, %v1715
      %v1753 = vpack.c.b16 %v1718, %v1717
      %v1754 = vpack.c.b16 %v1720, %v1719
      %v1755 = vpack.c.b16 %v1722, %v1721
      %v1756 = vpack.c.b16 %v1724, %v1723
      %v1757 = vpack.c.b16 %v1726, %v1725
      %v1758 = vpack.c.b16 %v1728, %v1727
      %v1759 = vpack.c.b16 %v1730, %v1729
      %v1760 = vpack.c.b16 %v1732, %v1731
      %v1761 = vpack.c.b16 %v1734, %v1733
      %v1762 = vpack.c.b16 %v1736, %v1735
      %v1763 = vpack.c.b16 %v1738, %v1737
      %v1764 = vpack.c.b16 %v1739, %v1739
      %vm1765 = vsmask.f32 7424
      %v1767 = vshrl.u32 %v1740, 16
      %v1769 = vshll.u32 %v1740, 16
      %v1771 = vrot.slane %v1769, 1
      %v1772 = vor.u32 %v1767, %v1771
      %v1774 = vshll.u32 %v1741, 16
      %v1776 = vrot.slane %v1774, 1
      %v1777 = vsel %vm1765, %v1772, %v1776
      %v1778 = vshrl.u32 %v1741, 16
      %v1780 = vor.u32 %v1778, %v1776
      %v1782 = vshll.u32 %v1742, 16
      %v1784 = vrot.slane %v1782, 1
      %v1785 = vsel %vm1765, %v1780, %v1784
      %v1786 = vshrl.u32 %v1742, 16
      %v1788 = vor.u32 %v1786, %v1784
      %v1790 = vshll.u32 %v1743, 16
      %v1792 = vrot.slane %v1790, 1
      %v1793 = vsel %vm1765, %v1788, %v1792
      %v1794 = vshrl.u32 %v1743, 16
      %v1796 = vor.u32 %v1794, %v1792
      %v1798 = vshll.u32 %v1744, 16
      %v1800 = vrot.slane %v1798, 1
      %v1801 = vsel %vm1765, %v1796, %v1800
      %v1802 = vshrl.u32 %v1744, 16
      %v1804 = vor.u32 %v1802, %v1800
      %v1806 = vshll.u32 %v1745, 16
      %v1808 = vrot.slane %v1806, 1
      %v1809 = vsel %vm1765, %v1804, %v1808
      %v1810 = vshrl.u32 %v1745, 16
      %v1812 = vor.u32 %v1810, %v1808
      %v1814 = vshll.u32 %v1746, 16
      %v1816 = vrot.slane %v1814, 1
      %v1817 = vsel %vm1765, %v1812, %v1816
      %v1818 = vshrl.u32 %v1746, 16
      %v1820 = vor.u32 %v1818, %v1816
      %v1822 = vshll.u32 %v1747, 16
      %v1824 = vrot.slane %v1822, 1
      %v1825 = vsel %vm1765, %v1820, %v1824
      %v1826 = vshrl.u32 %v1747, 16
      %v1828 = vor.u32 %v1826, %v1824
      %v1830 = vshll.u32 %v1748, 16
      %v1832 = vrot.slane %v1830, 1
      %v1833 = vsel %vm1765, %v1828, %v1832
      %v1834 = vshrl.u32 %v1748, 16
      %v1836 = vor.u32 %v1834, %v1832
      %v1838 = vshll.u32 %v1749, 16
      %v1840 = vrot.slane %v1838, 1
      %v1841 = vsel %vm1765, %v1836, %v1840
      %v1842 = vshrl.u32 %v1749, 16
      %v1844 = vor.u32 %v1842, %v1840
      %v1846 = vshll.u32 %v1750, 16
      %v1848 = vrot.slane %v1846, 1
      %v1849 = vsel %vm1765, %v1844, %v1848
      %v1850 = vshrl.u32 %v1750, 16
      %v1852 = vor.u32 %v1850, %v1848
      %v1854 = vshll.u32 %v1751, 16
      %v1856 = vrot.slane %v1854, 1
      %v1857 = vsel %vm1765, %v1852, %v1856
      %v1858 = vshrl.u32 %v1751, 16
      %v1860 = vor.u32 %v1858, %v1856
      %v1862 = vshll.u32 %v1752, 16
      %v1864 = vrot.slane %v1862, 1
      %v1865 = vsel %vm1765, %v1860, %v1864
      %v1866 = vshrl.u32 %v1752, 16
      %v1868 = vor.u32 %v1866, %v1864
      %v1870 = vshll.u32 %v1753, 16
      %v1872 = vrot.slane %v1870, 1
      %v1873 = vsel %vm1765, %v1868, %v1872
      %v1874 = vshrl.u32 %v1753, 16
      %v1876 = vor.u32 %v1874, %v1872
      %v1878 = vshll.u32 %v1754, 16
      %v1880 = vrot.slane %v1878, 1
      %v1881 = vsel %vm1765, %v1876, %v1880
      %v1882 = vshrl.u32 %v1754, 16
      %v1884 = vor.u32 %v1882, %v1880
      %v1886 = vshll.u32 %v1755, 16
      %v1888 = vrot.slane %v1886, 1
      %v1889 = vsel %vm1765, %v1884, %v1888
      %v1890 = vshrl.u32 %v1755, 16
      %v1892 = vor.u32 %v1890, %v1888
      %v1894 = vshll.u32 %v1756, 16
      %v1896 = vrot.slane %v1894, 1
      %v1897 = vsel %vm1765, %v1892, %v1896
      %v1898 = vshrl.u32 %v1756, 16
      %v1900 = vor.u32 %v1898, %v1896
      %v1902 = vshll.u32 %v1757, 16
      %v1904 = vrot.slane %v1902, 1
      %v1905 = vsel %vm1765, %v1900, %v1904
      %v1906 = vshrl.u32 %v1757, 16
      %v1908 = vor.u32 %v1906, %v1904
      %v1910 = vshll.u32 %v1758, 16
      %v1912 = vrot.slane %v1910, 1
      %v1913 = vsel %vm1765, %v1908, %v1912
      %v1914 = vshrl.u32 %v1758, 16
      %v1916 = vor.u32 %v1914, %v1912
      %v1918 = vshll.u32 %v1759, 16
      %v1920 = vrot.slane %v1918, 1
      %v1921 = vsel %vm1765, %v1916, %v1920
      %v1922 = vshrl.u32 %v1759, 16
      %v1924 = vor.u32 %v1922, %v1920
      %v1926 = vshll.u32 %v1760, 16
      %v1928 = vrot.slane %v1926, 1
      %v1929 = vsel %vm1765, %v1924, %v1928
      %v1930 = vshrl.u32 %v1760, 16
      %v1932 = vor.u32 %v1930, %v1928
      %v1934 = vshll.u32 %v1761, 16
      %v1936 = vrot.slane %v1934, 1
      %v1937 = vsel %vm1765, %v1932, %v1936
      %v1938 = vshrl.u32 %v1761, 16
      %v1940 = vor.u32 %v1938, %v1936
      %v1942 = vshll.u32 %v1762, 16
      %v1944 = vrot.slane %v1942, 1
      %v1945 = vsel %vm1765, %v1940, %v1944
      %v1946 = vshrl.u32 %v1762, 16
      %v1948 = vor.u32 %v1946, %v1944
      %v1950 = vshll.u32 %v1763, 16
      %v1952 = vrot.slane %v1950, 1
      %v1953 = vsel %vm1765, %v1948, %v1952
      %v1954 = vshrl.u32 %v1763, 16
      %v1956 = vor.u32 %v1954, %v1952
      %v1958 = vshll.u32 %v1764, 16
      %v1960 = vrot.slane %v1958, 1
      %v1961 = vsel %vm1765, %v1956, %v1960
      %v2002 = vunpack.c.l.b16 %v1626
      %v2003 = vunpack.c.l.b16 %v1627
      %v2004 = vunpack.c.l.b16 %v1628
      %v2005 = vunpack.c.l.b16 %v1629
      %v2006 = vunpack.c.l.b16 %v1630
      %v2007 = vunpack.c.l.b16 %v1631
      %v2008 = vunpack.c.l.b16 %v1632
      %v2009 = vunpack.c.l.b16 %v1633
      %v2010 = vunpack.c.l.b16 %v1634
      %v2011 = vunpack.c.l.b16 %v1635
      %v2012 = vunpack.c.l.b16 %v1636
      %v2013 = vunpack.c.l.b16 %v1637
      %v2014 = vunpack.c.l.b16 %v1638
      %v2015 = vunpack.c.l.b16 %v1639
      %v2016 = vunpack.c.l.b16 %v1640
      %v2017 = vunpack.c.l.b16 %v1641
      %v2018 = vpack.c.b16 %v2003, %v2002
      %v2019 = vpack.c.b16 %v2005, %v2004
      %v2020 = vpack.c.b16 %v2007, %v2006
      %v2021 = vpack.c.b16 %v2009, %v2008
      %v2022 = vpack.c.b16 %v2011, %v2010
      %v2023 = vpack.c.b16 %v2013, %v2012
      %v2024 = vpack.c.b16 %v2015, %v2014
      %v2025 = vpack.c.b16 %v2017, %v2016
      %2034 = vmatpush.bf16.msra.mxu0 %v2025
      %2035 = vmatpush.bf16.msra.mxu0 %v2024
      %2036 = vmatpush.bf16.msra.mxu0 %v2023
      %2037 = vmatpush.bf16.msra.mxu0 %v2022
      %2038 = vmatpush.bf16.msra.mxu0 %v2021
      %2039 = vmatpush.bf16.msra.mxu0 %v2020
      %2040 = vmatpush.bf16.msra.mxu0 %v2019
      %2041 = vmatpush.bf16.msra.mxu0 %v2018
      %2042 = vmatmul.bf16.gmra.mxu0 %v1777
      %v2043 = vpop.f32.mrf.mxu0
      %v2044 = vadd.f32 0.0, %v2043
      %v2045 = vpop.f32.mrf.mxu0
      %v2046 = vadd.f32 0.0, %v2045
      %2047 = vmatmul.bf16.gmra.mxu0 %v1785
      %v2048 = vpop.f32.mrf.mxu0
      %v2049 = vadd.f32 0.0, %v2048
      %v2050 = vpop.f32.mrf.mxu0
      %v2051 = vadd.f32 0.0, %v2050
      %2052 = vmatmul.bf16.gmra.mxu0 %v1793
      %v2053 = vpop.f32.mrf.mxu0
      %v2054 = vadd.f32 0.0, %v2053
      %v2055 = vpop.f32.mrf.mxu0
      %v2056 = vadd.f32 0.0, %v2055
      %2057 = vmatmul.bf16.gmra.mxu0 %v1801
      %v2058 = vpop.f32.mrf.mxu0
      %v2059 = vadd.f32 0.0, %v2058
      %v2060 = vpop.f32.mrf.mxu0
      %v2061 = vadd.f32 0.0, %v2060
      %2062 = vmatmul.bf16.gmra.mxu0 %v1809
      %v2063 = vpop.f32.mrf.mxu0
      %v2064 = vadd.f32 0.0, %v2063
      %v2065 = vpop.f32.mrf.mxu0
      %v2066 = vadd.f32 0.0, %v2065
      %2067 = vmatmul.bf16.gmra.mxu0 %v1817
      %v2068 = vpop.f32.mrf.mxu0
      %v2069 = vadd.f32 0.0, %v2068
      %v2070 = vpop.f32.mrf.mxu0
      %v2071 = vadd.f32 0.0, %v2070
      %2072 = vmatmul.bf16.gmra.mxu0 %v1825
      %v2073 = vpop.f32.mrf.mxu0
      %v2074 = vadd.f32 0.0, %v2073
      %v2075 = vpop.f32.mrf.mxu0
      %v2076 = vadd.f32 0.0, %v2075
      %2077 = vmatmul.bf16.gmra.mxu0 %v1833
      %v2078 = vpop.f32.mrf.mxu0
      %v2079 = vadd.f32 0.0, %v2078
      %v2080 = vpop.f32.mrf.mxu0
      %v2081 = vadd.f32 0.0, %v2080
      %2082 = vmatmul.bf16.gmra.mxu0 %v1841
      %v2083 = vpop.f32.mrf.mxu0
      %v2084 = vadd.f32 0.0, %v2083
      %v2085 = vpop.f32.mrf.mxu0
      %v2086 = vadd.f32 0.0, %v2085
      %2087 = vmatmul.bf16.gmra.mxu0 %v1849
      %v2088 = vpop.f32.mrf.mxu0
      %v2089 = vadd.f32 0.0, %v2088
      %v2090 = vpop.f32.mrf.mxu0
      %v2091 = vadd.f32 0.0, %v2090
      %2092 = vmatmul.bf16.gmra.mxu0 %v1857
      %v2093 = vpop.f32.mrf.mxu0
      %v2094 = vadd.f32 0.0, %v2093
      %v2095 = vpop.f32.mrf.mxu0
      %v2096 = vadd.f32 0.0, %v2095
      %2097 = vmatmul.bf16.gmra.mxu0 %v1865
      %v2098 = vpop.f32.mrf.mxu0
      %v2099 = vadd.f32 0.0, %v2098
      %v2100 = vpop.f32.mrf.mxu0
      %v2101 = vadd.f32 0.0, %v2100
      %2102 = vmatmul.bf16.gmra.mxu0 %v1873
      %v2103 = vpop.f32.mrf.mxu0
      %v2104 = vadd.f32 0.0, %v2103
      %v2105 = vpop.f32.mrf.mxu0
      %v2106 = vadd.f32 0.0, %v2105
      %2107 = vmatmul.bf16.gmra.mxu0 %v1881
      %v2108 = vpop.f32.mrf.mxu0
      %v2109 = vadd.f32 0.0, %v2108
      %v2110 = vpop.f32.mrf.mxu0
      %v2111 = vadd.f32 0.0, %v2110
      %2112 = vmatmul.bf16.gmra.mxu0 %v1889
      %v2113 = vpop.f32.mrf.mxu0
      %v2114 = vadd.f32 0.0, %v2113
      %v2115 = vpop.f32.mrf.mxu0
      %v2116 = vadd.f32 0.0, %v2115
      %2117 = vmatmul.bf16.gmra.mxu0 %v1897
      %v2118 = vpop.f32.mrf.mxu0
      %v2119 = vadd.f32 0.0, %v2118
      %v2120 = vpop.f32.mrf.mxu0
      %v2121 = vadd.f32 0.0, %v2120
      %2122 = vmatmul.bf16.gmra.mxu0 %v1905
      %v2123 = vpop.f32.mrf.mxu0
      %v2124 = vadd.f32 0.0, %v2123
      %v2125 = vpop.f32.mrf.mxu0
      %v2126 = vadd.f32 0.0, %v2125
      %2127 = vmatmul.bf16.gmra.mxu0 %v1913
      %v2128 = vpop.f32.mrf.mxu0
      %v2129 = vadd.f32 0.0, %v2128
      %v2130 = vpop.f32.mrf.mxu0
      %v2131 = vadd.f32 0.0, %v2130
      %2132 = vmatmul.bf16.gmra.mxu0 %v1921
      %v2133 = vpop.f32.mrf.mxu0
      %v2134 = vadd.f32 0.0, %v2133
      %v2135 = vpop.f32.mrf.mxu0
      %v2136 = vadd.f32 0.0, %v2135
      %2137 = vmatmul.bf16.gmra.mxu0 %v1929
      %v2138 = vpop.f32.mrf.mxu0
      %v2139 = vadd.f32 0.0, %v2138
      %v2140 = vpop.f32.mrf.mxu0
      %v2141 = vadd.f32 0.0, %v2140
      %2142 = vmatmul.bf16.gmra.mxu0 %v1937
      %v2143 = vpop.f32.mrf.mxu0
      %v2144 = vadd.f32 0.0, %v2143
      %v2145 = vpop.f32.mrf.mxu0
      %v2146 = vadd.f32 0.0, %v2145
      %2147 = vmatmul.bf16.gmra.mxu0 %v1945
      %v2148 = vpop.f32.mrf.mxu0
      %v2149 = vadd.f32 0.0, %v2148
      %v2150 = vpop.f32.mrf.mxu0
      %v2151 = vadd.f32 0.0, %v2150
      %2152 = vmatmul.bf16.gmra.mxu0 %v1953
      %v2153 = vpop.f32.mrf.mxu0
      %v2154 = vadd.f32 0.0, %v2153
      %v2155 = vpop.f32.mrf.mxu0
      %v2156 = vadd.f32 0.0, %v2155
      %2157 = vmatmul.bf16.gmra.mxu0 %v1961
      %v2158 = vpop.f32.mrf.mxu0
      %v2159 = vadd.f32 0.0, %v2158
      %v2160 = vpop.f32.mrf.mxu0
      %v2161 = vadd.f32 0.0, %v2160
      %2162 = vdwg.mxu0
      %v2163 = vadd.f32 %v1457, %v2044
      %v2164 = vadd.f32 %v1459, %v2046
      %v2165 = vadd.f32 %v1462, %v2049
      %v2166 = vadd.f32 %v1464, %v2051
      %v2167 = vadd.f32 %v1467, %v2054
      %v2168 = vadd.f32 %v1469, %v2056
      %v2169 = vadd.f32 %v1472, %v2059
      %v2170 = vadd.f32 %v1474, %v2061
      %v2171 = vadd.f32 %v1477, %v2064
      %v2172 = vadd.f32 %v1479, %v2066
      %v2173 = vadd.f32 %v1482, %v2069
      %v2174 = vadd.f32 %v1484, %v2071
      %v2175 = vadd.f32 %v1487, %v2074
      %v2176 = vadd.f32 %v1489, %v2076
      %v2177 = vadd.f32 %v1492, %v2079
      %v2178 = vadd.f32 %v1494, %v2081
      %v2179 = vadd.f32 %v1497, %v2084
      %v2180 = vadd.f32 %v1499, %v2086
      %v2181 = vadd.f32 %v1502, %v2089
      %v2182 = vadd.f32 %v1504, %v2091
      %v2183 = vadd.f32 %v1507, %v2094
      %v2184 = vadd.f32 %v1509, %v2096
      %v2185 = vadd.f32 %v1512, %v2099
      %v2186 = vadd.f32 %v1514, %v2101
      %v2187 = vadd.f32 %v1517, %v2104
      %v2188 = vadd.f32 %v1519, %v2106
      %v2189 = vadd.f32 %v1522, %v2109
      %v2190 = vadd.f32 %v1524, %v2111
      %v2191 = vadd.f32 %v1527, %v2114
      %v2192 = vadd.f32 %v1529, %v2116
      %v2193 = vadd.f32 %v1532, %v2119
      %v2194 = vadd.f32 %v1534, %v2121
      %v2195 = vadd.f32 %v1537, %v2124
      %v2196 = vadd.f32 %v1539, %v2126
      %v2197 = vadd.f32 %v1542, %v2129
      %v2198 = vadd.f32 %v1544, %v2131
      %v2199 = vadd.f32 %v1547, %v2134
      %v2200 = vadd.f32 %v1549, %v2136
      %v2201 = vadd.f32 %v1552, %v2139
      %v2202 = vadd.f32 %v1554, %v2141
      %v2203 = vadd.f32 %v1557, %v2144
      %v2204 = vadd.f32 %v1559, %v2146
      %v2205 = vadd.f32 %v1562, %v2149
      %v2206 = vadd.f32 %v1564, %v2151
      %v2207 = vadd.f32 %v1567, %v2154
      %v2208 = vadd.f32 %v1569, %v2156
      %v2209 = vadd.f32 %v1572, %v2159
      %v2210 = vadd.f32 %v1574, %v2161
      %v2211 = vld [vmem:[#allocation2 + $0x14] sm:$0x8]
      %v2212 = vld [vmem:[#allocation2 + $0x18] sm:$0xf]
      %v2213 = vld [vmem:[#allocation2 + $0x1c] sm:$0xf]
      %v2214 = vld [vmem:[#allocation2 + $0x20] sm:$0xf]
      %v2215 = vld [vmem:[#allocation2 + $0x24] sm:$0xf]
      %v2216 = vld [vmem:[#allocation2 + $0x28] sm:$0xf]
      %v2217 = vld [vmem:[#allocation2 + $0x2c] sm:$0xf]
      %v2218 = vld [vmem:[#allocation2 + $0x30] sm:$0xf]
      %v2219 = vld [vmem:[#allocation2 + $0x34] sm:$0xf]
      %v2220 = vld [vmem:[#allocation2 + $0x38] sm:$0xf]
      %v2221 = vld [vmem:[#allocation2 + $0x3c] sm:$0xf]
      %v2222 = vld [vmem:[#allocation2 + $0x40] sm:$0xf]
      %v2223 = vld [vmem:[#allocation2 + $0x44] sm:$0xf]
      %v2224 = vld [vmem:[#allocation2 + $0x48] sm:$0xf]
      %v2225 = vld [vmem:[#allocation2 + $0x4c] sm:$0xf]
      %v2226 = vld [vmem:[#allocation2 + $0x50] sm:$0xf]
      %v2227 = vld [vmem:[#allocation2 + $0x54] sm:$0xf]
      %v2228 = vld [vmem:[#allocation2 + $0x58] sm:$0xf]
      %v2229 = vld [vmem:[#allocation2 + $0x5c] sm:$0xf]
      %v2230 = vld [vmem:[#allocation2 + $0x60] sm:$0xf]
      %v2231 = vld [vmem:[#allocation2 + $0x64] sm:$0xf]
      %v2232 = vld [vmem:[#allocation2 + $0x68] sm:$0xf]
      %v2233 = vld [vmem:[#allocation2 + $0x6c] sm:$0xf]
      %v2234 = vld [vmem:[#allocation2 + $0x70] sm:$0xf]
      %v2235 = vld [vmem:[#allocation2 + $0x74] sm:$0xf]
      %v2236 = vld [vmem:[#allocation2 + $0x78] sm:$0xf]
      %v2237 = vld [vmem:[#allocation2 + $0x7c] sm:$0xf]
      %v2238 = vld [vmem:[#allocation2 + $0x80] sm:$0xf]
      %v2239 = vld [vmem:[#allocation2 + $0x84] sm:$0xf]
      %v2240 = vld [vmem:[#allocation2 + $0x88] sm:$0xf]
      %v2241 = vld [vmem:[#allocation2 + $0x8c] sm:$0xf]
      %v2242 = vld [vmem:[#allocation2 + $0x90] sm:$0xf]
      %v2243 = vld [vmem:[#allocation2 + $0x94] sm:$0xf]
      %v2244 = vld [vmem:[#allocation2 + $0x98] sm:$0xf]
      %v2245 = vld [vmem:[#allocation2 + $0x9c] sm:$0xf]
      %v2246 = vld [vmem:[#allocation2 + $0xa0] sm:$0xf]
      %v2247 = vld [vmem:[#allocation2 + $0xa4] sm:$0xf]
      %v2248 = vld [vmem:[#allocation2 + $0xa8] sm:$0xf]
      %v2249 = vld [vmem:[#allocation2 + $0xac] sm:$0xf]
      %v2250 = vld [vmem:[#allocation2 + $0xb0] sm:$0xf]
      %v2251 = vld [vmem:[#allocation2 + $0xb4] sm:$0xf]
      %v2252 = vld [vmem:[#allocation2 + $0xb8] sm:$0xf]
      %v2253 = vld [vmem:[#allocation2 + $0xbc] sm:$0xf]
      %v2254 = vld [vmem:[#allocation2 + $0xc0] sm:$0xf]
      %v2255 = vld [vmem:[#allocation2 + $0xc4] sm:$0xf]
      %v2256 = vld [vmem:[#allocation2 + $0xc8] sm:$0xf]
      %v2257 = vld [vmem:[#allocation2 + $0xcc] sm:$0xf]
      %v2258 = vld [vmem:[#allocation2 + $0xd0] sm:$0xf]
      %v2259 = vld [vmem:[#allocation2 + $0xd4] sm:$0xf]
      %s2260 = scalar_lea.vmem %s4, 192
      %v2261 = vld [vmem:[%s2260] sm:$0xf]
      %v2262 = vld [vmem:[%s2260 + $0x4] sm:$0xf]
      %v2263 = vld [vmem:[%s2260 + $0x8] sm:$0xf]
      %v2264 = vld [vmem:[%s2260 + $0xc] sm:$0xf]
      %v2265 = vld [vmem:[%s2260 + $0x10] sm:$0xf]
      %v2266 = vld [vmem:[%s2260 + $0x14] sm:$0xf]
      %v2267 = vld [vmem:[%s2260 + $0x18] sm:$0xf]
      %v2268 = vld [vmem:[%s2260 + $0x1c] sm:$0xf]
      %v2269 = vld [vmem:[%s2260 + $0x20] sm:$0xf]
      %v2270 = vld [vmem:[%s2260 + $0x24] sm:$0xf]
      %v2271 = vld [vmem:[%s2260 + $0x28] sm:$0xf]
      %v2272 = vld [vmem:[%s2260 + $0x2c] sm:$0xf]
      %v2273 = vld [vmem:[%s2260 + $0x30] sm:$0xf]
      %v2274 = vld [vmem:[%s2260 + $0x34] sm:$0xf]
      %v2275 = vld [vmem:[%s2260 + $0x38] sm:$0xf]
      %v2276 = vld [vmem:[%s2260 + $0x3c] sm:$0xf]
      %v2326 = vunpack.c.l.b16 %v2211
      %v2327 = vunpack.c.l.b16 %v2212
      %v2328 = vunpack.c.l.b16 %v2213
      %v2329 = vunpack.c.l.b16 %v2214
      %v2330 = vunpack.c.l.b16 %v2215
      %v2331 = vunpack.c.l.b16 %v2216
      %v2332 = vunpack.c.l.b16 %v2217
      %v2333 = vunpack.c.l.b16 %v2218
      %v2334 = vunpack.c.l.b16 %v2219
      %v2335 = vunpack.c.l.b16 %v2220
      %v2336 = vunpack.c.l.b16 %v2221
      %v2337 = vunpack.c.l.b16 %v2222
      %v2338 = vunpack.c.l.b16 %v2223
      %v2339 = vunpack.c.l.b16 %v2224
      %v2340 = vunpack.c.l.b16 %v2225
      %v2341 = vunpack.c.l.b16 %v2226
      %v2342 = vunpack.c.l.b16 %v2227
      %v2343 = vunpack.c.l.b16 %v2228
      %v2344 = vunpack.c.l.b16 %v2229
      %v2345 = vunpack.c.l.b16 %v2230
      %v2346 = vunpack.c.l.b16 %v2231
      %v2347 = vunpack.c.l.b16 %v2232
      %v2348 = vunpack.c.l.b16 %v2233
      %v2349 = vunpack.c.l.b16 %v2234
      %v2350 = vunpack.c.l.b16 %v2235
      %v2351 = vunpack.c.l.b16 %v2236
      %v2352 = vunpack.c.l.b16 %v2237
      %v2353 = vunpack.c.l.b16 %v2238
      %v2354 = vunpack.c.l.b16 %v2239
      %v2355 = vunpack.c.l.b16 %v2240
      %v2356 = vunpack.c.l.b16 %v2241
      %v2357 = vunpack.c.l.b16 %v2242
      %v2358 = vunpack.c.l.b16 %v2243
      %v2359 = vunpack.c.l.b16 %v2244
      %v2360 = vunpack.c.l.b16 %v2245
      %v2361 = vunpack.c.l.b16 %v2246
      %v2362 = vunpack.c.l.b16 %v2247
      %v2363 = vunpack.c.l.b16 %v2248
      %v2364 = vunpack.c.l.b16 %v2249
      %v2365 = vunpack.c.l.b16 %v2250
      %v2366 = vunpack.c.l.b16 %v2251
      %v2367 = vunpack.c.l.b16 %v2252
      %v2368 = vunpack.c.l.b16 %v2253
      %v2369 = vunpack.c.l.b16 %v2254
      %v2370 = vunpack.c.l.b16 %v2255
      %v2371 = vunpack.c.l.b16 %v2256
      %v2372 = vunpack.c.l.b16 %v2257
      %v2373 = vunpack.c.l.b16 %v2258
      %v2374 = vunpack.c.l.b16 %v2259
      %v2375 = vpack.c.b16 %v2327, %v2326
      %v2376 = vpack.c.b16 %v2329, %v2328
      %v2377 = vpack.c.b16 %v2331, %v2330
      %v2378 = vpack.c.b16 %v2333, %v2332
      %v2379 = vpack.c.b16 %v2335, %v2334
      %v2380 = vpack.c.b16 %v2337, %v2336
      %v2381 = vpack.c.b16 %v2339, %v2338
      %v2382 = vpack.c.b16 %v2341, %v2340
      %v2383 = vpack.c.b16 %v2343, %v2342
      %v2384 = vpack.c.b16 %v2345, %v2344
      %v2385 = vpack.c.b16 %v2347, %v2346
      %v2386 = vpack.c.b16 %v2349, %v2348
      %v2387 = vpack.c.b16 %v2351, %v2350
      %v2388 = vpack.c.b16 %v2353, %v2352
      %v2389 = vpack.c.b16 %v2355, %v2354
      %v2390 = vpack.c.b16 %v2357, %v2356
      %v2391 = vpack.c.b16 %v2359, %v2358
      %v2392 = vpack.c.b16 %v2361, %v2360
      %v2393 = vpack.c.b16 %v2363, %v2362
      %v2394 = vpack.c.b16 %v2365, %v2364
      %v2395 = vpack.c.b16 %v2367, %v2366
      %v2396 = vpack.c.b16 %v2369, %v2368
      %v2397 = vpack.c.b16 %v2371, %v2370
      %v2398 = vpack.c.b16 %v2373, %v2372
      %v2399 = vpack.c.b16 %v2374, %v2374
      %v2401 = vshrl.u32 %v2375, 16
      %v2403 = vrot.slane %v2401, 3
      %v2404 = vshll.u32 %v2375, 16
      %v2406 = vrot.slane %v2404, 4
      %v2407 = vor.u32 %v2403, %v2406
      %v2409 = vshrl.u32 %v2376, 16
      %v2411 = vrot.slane %v2409, 3
      %v2412 = vshll.u32 %v2376, 16
      %v2414 = vrot.slane %v2412, 4
      %v2415 = vor.u32 %v2411, %v2414
      %v2416 = vsel %vm1150, %v2407, %v2415
      %v2418 = vshrl.u32 %v2377, 16
      %v2420 = vrot.slane %v2418, 3
      %v2421 = vshll.u32 %v2377, 16
      %v2423 = vrot.slane %v2421, 4
      %v2424 = vor.u32 %v2420, %v2423
      %v2425 = vsel %vm1150, %v2415, %v2424
      %v2427 = vshrl.u32 %v2378, 16
      %v2429 = vrot.slane %v2427, 3
      %v2430 = vshll.u32 %v2378, 16
      %v2432 = vrot.slane %v2430, 4
      %v2433 = vor.u32 %v2429, %v2432
      %v2434 = vsel %vm1150, %v2424, %v2433
      %v2436 = vshrl.u32 %v2379, 16
      %v2438 = vrot.slane %v2436, 3
      %v2439 = vshll.u32 %v2379, 16
      %v2441 = vrot.slane %v2439, 4
      %v2442 = vor.u32 %v2438, %v2441
      %v2443 = vsel %vm1150, %v2433, %v2442
      %v2445 = vshrl.u32 %v2380, 16
      %v2447 = vrot.slane %v2445, 3
      %v2448 = vshll.u32 %v2380, 16
      %v2450 = vrot.slane %v2448, 4
      %v2451 = vor.u32 %v2447, %v2450
      %v2452 = vsel %vm1150, %v2442, %v2451
      %v2454 = vshrl.u32 %v2381, 16
      %v2456 = vrot.slane %v2454, 3
      %v2457 = vshll.u32 %v2381, 16
      %v2459 = vrot.slane %v2457, 4
      %v2460 = vor.u32 %v2456, %v2459
      %v2461 = vsel %vm1150, %v2451, %v2460
      %v2463 = vshrl.u32 %v2382, 16
      %v2465 = vrot.slane %v2463, 3
      %v2466 = vshll.u32 %v2382, 16
      %v2468 = vrot.slane %v2466, 4
      %v2469 = vor.u32 %v2465, %v2468
      %v2470 = vsel %vm1150, %v2460, %v2469
      %v2472 = vshrl.u32 %v2383, 16
      %v2474 = vrot.slane %v2472, 3
      %v2475 = vshll.u32 %v2383, 16
      %v2477 = vrot.slane %v2475, 4
      %v2478 = vor.u32 %v2474, %v2477
      %v2479 = vsel %vm1150, %v2469, %v2478
      %v2481 = vshrl.u32 %v2384, 16
      %v2483 = vrot.slane %v2481, 3
      %v2484 = vshll.u32 %v2384, 16
      %v2486 = vrot.slane %v2484, 4
      %v2487 = vor.u32 %v2483, %v2486
      %v2488 = vsel %vm1150, %v2478, %v2487
      %v2490 = vshrl.u32 %v2385, 16
      %v2492 = vrot.slane %v2490, 3
      %v2493 = vshll.u32 %v2385, 16
      %v2495 = vrot.slane %v2493, 4
      %v2496 = vor.u32 %v2492, %v2495
      %v2497 = vsel %vm1150, %v2487, %v2496
      %v2499 = vshrl.u32 %v2386, 16
      %v2501 = vrot.slane %v2499, 3
      %v2502 = vshll.u32 %v2386, 16
      %v2504 = vrot.slane %v2502, 4
      %v2505 = vor.u32 %v2501, %v2504
      %v2506 = vsel %vm1150, %v2496, %v2505
      %v2508 = vshrl.u32 %v2387, 16
      %v2510 = vrot.slane %v2508, 3
      %v2511 = vshll.u32 %v2387, 16
      %v2513 = vrot.slane %v2511, 4
      %v2514 = vor.u32 %v2510, %v2513
      %v2515 = vsel %vm1150, %v2505, %v2514
      %v2517 = vshrl.u32 %v2388, 16
      %v2519 = vrot.slane %v2517, 3
      %v2520 = vshll.u32 %v2388, 16
      %v2522 = vrot.slane %v2520, 4
      %v2523 = vor.u32 %v2519, %v2522
      %v2524 = vsel %vm1150, %v2514, %v2523
      %v2526 = vshrl.u32 %v2389, 16
      %v2528 = vrot.slane %v2526, 3
      %v2529 = vshll.u32 %v2389, 16
      %v2531 = vrot.slane %v2529, 4
      %v2532 = vor.u32 %v2528, %v2531
      %v2533 = vsel %vm1150, %v2523, %v2532
      %v2535 = vshrl.u32 %v2390, 16
      %v2537 = vrot.slane %v2535, 3
      %v2538 = vshll.u32 %v2390, 16
      %v2540 = vrot.slane %v2538, 4
      %v2541 = vor.u32 %v2537, %v2540
      %v2542 = vsel %vm1150, %v2532, %v2541
      %v2544 = vshrl.u32 %v2391, 16
      %v2546 = vrot.slane %v2544, 3
      %v2547 = vshll.u32 %v2391, 16
      %v2549 = vrot.slane %v2547, 4
      %v2550 = vor.u32 %v2546, %v2549
      %v2551 = vsel %vm1150, %v2541, %v2550
      %v2553 = vshrl.u32 %v2392, 16
      %v2555 = vrot.slane %v2553, 3
      %v2556 = vshll.u32 %v2392, 16
      %v2558 = vrot.slane %v2556, 4
      %v2559 = vor.u32 %v2555, %v2558
      %v2560 = vsel %vm1150, %v2550, %v2559
      %v2562 = vshrl.u32 %v2393, 16
      %v2564 = vrot.slane %v2562, 3
      %v2565 = vshll.u32 %v2393, 16
      %v2567 = vrot.slane %v2565, 4
      %v2568 = vor.u32 %v2564, %v2567
      %v2569 = vsel %vm1150, %v2559, %v2568
      %v2571 = vshrl.u32 %v2394, 16
      %v2573 = vrot.slane %v2571, 3
      %v2574 = vshll.u32 %v2394, 16
      %v2576 = vrot.slane %v2574, 4
      %v2577 = vor.u32 %v2573, %v2576
      %v2578 = vsel %vm1150, %v2568, %v2577
      %v2580 = vshrl.u32 %v2395, 16
      %v2582 = vrot.slane %v2580, 3
      %v2583 = vshll.u32 %v2395, 16
      %v2585 = vrot.slane %v2583, 4
      %v2586 = vor.u32 %v2582, %v2585
      %v2587 = vsel %vm1150, %v2577, %v2586
      %v2589 = vshrl.u32 %v2396, 16
      %v2591 = vrot.slane %v2589, 3
      %v2592 = vshll.u32 %v2396, 16
      %v2594 = vrot.slane %v2592, 4
      %v2595 = vor.u32 %v2591, %v2594
      %v2596 = vsel %vm1150, %v2586, %v2595
      %v2598 = vshrl.u32 %v2397, 16
      %v2600 = vrot.slane %v2598, 3
      %v2601 = vshll.u32 %v2397, 16
      %v2603 = vrot.slane %v2601, 4
      %v2604 = vor.u32 %v2600, %v2603
      %v2605 = vsel %vm1150, %v2595, %v2604
      %v2607 = vshrl.u32 %v2398, 16
      %v2609 = vrot.slane %v2607, 3
      %v2610 = vshll.u32 %v2398, 16
      %v2612 = vrot.slane %v2610, 4
      %v2613 = vor.u32 %v2609, %v2612
      %v2614 = vsel %vm1150, %v2604, %v2613
      %v2616 = vshrl.u32 %v2399, 16
      %v2618 = vrot.slane %v2616, 3
      %v2619 = vshll.u32 %v2399, 16
      %v2621 = vrot.slane %v2619, 4
      %v2622 = vor.u32 %v2618, %v2621
      %v2623 = vsel %vm1150, %v2613, %v2622
      %v2664 = vunpack.c.l.b16 %v2261
      %v2665 = vunpack.c.l.b16 %v2262
      %v2666 = vunpack.c.l.b16 %v2263
      %v2667 = vunpack.c.l.b16 %v2264
      %v2668 = vunpack.c.l.b16 %v2265
      %v2669 = vunpack.c.l.b16 %v2266
      %v2670 = vunpack.c.l.b16 %v2267
      %v2671 = vunpack.c.l.b16 %v2268
      %v2672 = vunpack.c.l.b16 %v2269
      %v2673 = vunpack.c.l.b16 %v2270
      %v2674 = vunpack.c.l.b16 %v2271
      %v2675 = vunpack.c.l.b16 %v2272
      %v2676 = vunpack.c.l.b16 %v2273
      %v2677 = vunpack.c.l.b16 %v2274
      %v2678 = vunpack.c.l.b16 %v2275
      %v2679 = vunpack.c.l.b16 %v2276
      %v2680 = vpack.c.b16 %v2665, %v2664
      %v2681 = vpack.c.b16 %v2667, %v2666
      %v2682 = vpack.c.b16 %v2669, %v2668
      %v2683 = vpack.c.b16 %v2671, %v2670
      %v2684 = vpack.c.b16 %v2673, %v2672
      %v2685 = vpack.c.b16 %v2675, %v2674
      %v2686 = vpack.c.b16 %v2677, %v2676
      %v2687 = vpack.c.b16 %v2679, %v2678
      %2696 = vmatpush.bf16.msra.mxu0 %v2687
      %2697 = vmatpush.bf16.msra.mxu0 %v2686
      %2698 = vmatpush.bf16.msra.mxu0 %v2685
      %2699 = vmatpush.bf16.msra.mxu0 %v2684
      %2700 = vmatpush.bf16.msra.mxu0 %v2683
      %2701 = vmatpush.bf16.msra.mxu0 %v2682
      %2702 = vmatpush.bf16.msra.mxu0 %v2681
      %2703 = vmatpush.bf16.msra.mxu0 %v2680
      %2704 = vmatmul.bf16.gmra.mxu0 %v2416
      %v2705 = vpop.f32.mrf.mxu0
      %v2706 = vadd.f32 0.0, %v2705
      %v2707 = vpop.f32.mrf.mxu0
      %v2708 = vadd.f32 0.0, %v2707
      %2709 = vmatmul.bf16.gmra.mxu0 %v2425
      %v2710 = vpop.f32.mrf.mxu0
      %v2711 = vadd.f32 0.0, %v2710
      %v2712 = vpop.f32.mrf.mxu0
      %v2713 = vadd.f32 0.0, %v2712
      %2714 = vmatmul.bf16.gmra.mxu0 %v2434
      %v2715 = vpop.f32.mrf.mxu0
      %v2716 = vadd.f32 0.0, %v2715
      %v2717 = vpop.f32.mrf.mxu0
      %v2718 = vadd.f32 0.0, %v2717
      %2719 = vmatmul.bf16.gmra.mxu0 %v2443
      %v2720 = vpop.f32.mrf.mxu0
      %v2721 = vadd.f32 0.0, %v2720
      %v2722 = vpop.f32.mrf.mxu0
      %v2723 = vadd.f32 0.0, %v2722
      %2724 = vmatmul.bf16.gmra.mxu0 %v2452
      %v2725 = vpop.f32.mrf.mxu0
      %v2726 = vadd.f32 0.0, %v2725
      %v2727 = vpop.f32.mrf.mxu0
      %v2728 = vadd.f32 0.0, %v2727
      %2729 = vmatmul.bf16.gmra.mxu0 %v2461
      %v2730 = vpop.f32.mrf.mxu0
      %v2731 = vadd.f32 0.0, %v2730
      %v2732 = vpop.f32.mrf.mxu0
      %v2733 = vadd.f32 0.0, %v2732
      %2734 = vmatmul.bf16.gmra.mxu0 %v2470
      %v2735 = vpop.f32.mrf.mxu0
      %v2736 = vadd.f32 0.0, %v2735
      %v2737 = vpop.f32.mrf.mxu0
      %v2738 = vadd.f32 0.0, %v2737
      %2739 = vmatmul.bf16.gmra.mxu0 %v2479
      %v2740 = vpop.f32.mrf.mxu0
      %v2741 = vadd.f32 0.0, %v2740
      %v2742 = vpop.f32.mrf.mxu0
      %v2743 = vadd.f32 0.0, %v2742
      %2744 = vmatmul.bf16.gmra.mxu0 %v2488
      %v2745 = vpop.f32.mrf.mxu0
      %v2746 = vadd.f32 0.0, %v2745
      %v2747 = vpop.f32.mrf.mxu0
      %v2748 = vadd.f32 0.0, %v2747
      %2749 = vmatmul.bf16.gmra.mxu0 %v2497
      %v2750 = vpop.f32.mrf.mxu0
      %v2751 = vadd.f32 0.0, %v2750
      %v2752 = vpop.f32.mrf.mxu0
      %v2753 = vadd.f32 0.0, %v2752
      %2754 = vmatmul.bf16.gmra.mxu0 %v2506
      %v2755 = vpop.f32.mrf.mxu0
      %v2756 = vadd.f32 0.0, %v2755
      %v2757 = vpop.f32.mrf.mxu0
      %v2758 = vadd.f32 0.0, %v2757
      %2759 = vmatmul.bf16.gmra.mxu0 %v2515
      %v2760 = vpop.f32.mrf.mxu0
      %v2761 = vadd.f32 0.0, %v2760
      %v2762 = vpop.f32.mrf.mxu0
      %v2763 = vadd.f32 0.0, %v2762
      %2764 = vmatmul.bf16.gmra.mxu0 %v2524
      %v2765 = vpop.f32.mrf.mxu0
      %v2766 = vadd.f32 0.0, %v2765
      %v2767 = vpop.f32.mrf.mxu0
      %v2768 = vadd.f32 0.0, %v2767
      %2769 = vmatmul.bf16.gmra.mxu0 %v2533
      %v2770 = vpop.f32.mrf.mxu0
      %v2771 = vadd.f32 0.0, %v2770
      %v2772 = vpop.f32.mrf.mxu0
      %v2773 = vadd.f32 0.0, %v2772
      %2774 = vmatmul.bf16.gmra.mxu0 %v2542
      %v2775 = vpop.f32.mrf.mxu0
      %v2776 = vadd.f32 0.0, %v2775
      %v2777 = vpop.f32.mrf.mxu0
      %v2778 = vadd.f32 0.0, %v2777
      %2779 = vmatmul.bf16.gmra.mxu0 %v2551
      %v2780 = vpop.f32.mrf.mxu0
      %v2781 = vadd.f32 0.0, %v2780
      %v2782 = vpop.f32.mrf.mxu0
      %v2783 = vadd.f32 0.0, %v2782
      %2784 = vmatmul.bf16.gmra.mxu0 %v2560
      %v2785 = vpop.f32.mrf.mxu0
      %v2786 = vadd.f32 0.0, %v2785
      %v2787 = vpop.f32.mrf.mxu0
      %v2788 = vadd.f32 0.0, %v2787
      %2789 = vmatmul.bf16.gmra.mxu0 %v2569
      %v2790 = vpop.f32.mrf.mxu0
      %v2791 = vadd.f32 0.0, %v2790
      %v2792 = vpop.f32.mrf.mxu0
      %v2793 = vadd.f32 0.0, %v2792
      %2794 = vmatmul.bf16.gmra.mxu0 %v2578
      %v2795 = vpop.f32.mrf.mxu0
      %v2796 = vadd.f32 0.0, %v2795
      %v2797 = vpop.f32.mrf.mxu0
      %v2798 = vadd.f32 0.0, %v2797
      %2799 = vmatmul.bf16.gmra.mxu0 %v2587
      %v2800 = vpop.f32.mrf.mxu0
      %v2801 = vadd.f32 0.0, %v2800
      %v2802 = vpop.f32.mrf.mxu0
      %v2803 = vadd.f32 0.0, %v2802
      %2804 = vmatmul.bf16.gmra.mxu0 %v2596
      %v2805 = vpop.f32.mrf.mxu0
      %v2806 = vadd.f32 0.0, %v2805
      %v2807 = vpop.f32.mrf.mxu0
      %v2808 = vadd.f32 0.0, %v2807
      %2809 = vmatmul.bf16.gmra.mxu0 %v2605
      %v2810 = vpop.f32.mrf.mxu0
      %v2811 = vadd.f32 0.0, %v2810
      %v2812 = vpop.f32.mrf.mxu0
      %v2813 = vadd.f32 0.0, %v2812
      %2814 = vmatmul.bf16.gmra.mxu0 %v2614
      %v2815 = vpop.f32.mrf.mxu0
      %v2816 = vadd.f32 0.0, %v2815
      %v2817 = vpop.f32.mrf.mxu0
      %v2818 = vadd.f32 0.0, %v2817
      %2819 = vmatmul.bf16.gmra.mxu0 %v2623
      %v2820 = vpop.f32.mrf.mxu0
      %v2821 = vadd.f32 0.0, %v2820
      %v2822 = vpop.f32.mrf.mxu0
      %v2823 = vadd.f32 0.0, %v2822
      %2824 = vdwg.mxu0
      %v2825 = vadd.f32 %v2163, %v2706
      %v2826 = vadd.f32 %v2164, %v2708
      %v2827 = vadd.f32 %v2165, %v2711
      %v2828 = vadd.f32 %v2166, %v2713
      %v2829 = vadd.f32 %v2167, %v2716
      %v2830 = vadd.f32 %v2168, %v2718
      %v2831 = vadd.f32 %v2169, %v2721
      %v2832 = vadd.f32 %v2170, %v2723
      %v2833 = vadd.f32 %v2171, %v2726
      %v2834 = vadd.f32 %v2172, %v2728
      %v2835 = vadd.f32 %v2173, %v2731
      %v2836 = vadd.f32 %v2174, %v2733
      %v2837 = vadd.f32 %v2175, %v2736
      %v2838 = vadd.f32 %v2176, %v2738
      %v2839 = vadd.f32 %v2177, %v2741
      %v2840 = vadd.f32 %v2178, %v2743
      %v2841 = vadd.f32 %v2179, %v2746
      %v2842 = vadd.f32 %v2180, %v2748
      %v2843 = vadd.f32 %v2181, %v2751
      %v2844 = vadd.f32 %v2182, %v2753
      %v2845 = vadd.f32 %v2183, %v2756
      %v2846 = vadd.f32 %v2184, %v2758
      %v2847 = vadd.f32 %v2185, %v2761
      %v2848 = vadd.f32 %v2186, %v2763
      %v2849 = vadd.f32 %v2187, %v2766
      %v2850 = vadd.f32 %v2188, %v2768
      %v2851 = vadd.f32 %v2189, %v2771
      %v2852 = vadd.f32 %v2190, %v2773
      %v2853 = vadd.f32 %v2191, %v2776
      %v2854 = vadd.f32 %v2192, %v2778
      %v2855 = vadd.f32 %v2193, %v2781
      %v2856 = vadd.f32 %v2194, %v2783
      %v2857 = vadd.f32 %v2195, %v2786
      %v2858 = vadd.f32 %v2196, %v2788
      %v2859 = vadd.f32 %v2197, %v2791
      %v2860 = vadd.f32 %v2198, %v2793
      %v2861 = vadd.f32 %v2199, %v2796
      %v2862 = vadd.f32 %v2200, %v2798
      %v2863 = vadd.f32 %v2201, %v2801
      %v2864 = vadd.f32 %v2202, %v2803
      %v2865 = vadd.f32 %v2203, %v2806
      %v2866 = vadd.f32 %v2204, %v2808
      %v2867 = vadd.f32 %v2205, %v2811
      %v2868 = vadd.f32 %v2206, %v2813
      %v2869 = vadd.f32 %v2207, %v2816
      %v2870 = vadd.f32 %v2208, %v2818
      %v2871 = vadd.f32 %v2209, %v2821
      %v2872 = vadd.f32 %v2210, %v2823
      %s2873 = scalar_lea.vmem %s4, 256
      %v2874 = vld [vmem:[%s2873] sm:$0xf]
      %v2875 = vld [vmem:[%s2873 + $0x4] sm:$0xf]
      %v2876 = vld [vmem:[%s2873 + $0x8] sm:$0xf]
      %v2877 = vld [vmem:[%s2873 + $0xc] sm:$0xf]
      %v2878 = vld [vmem:[%s2873 + $0x10] sm:$0xf]
      %v2879 = vld [vmem:[%s2873 + $0x14] sm:$0xf]
      %v2880 = vld [vmem:[%s2873 + $0x18] sm:$0xf]
      %v2881 = vld [vmem:[%s2873 + $0x1c] sm:$0xf]
      %v2882 = vld [vmem:[%s2873 + $0x20] sm:$0xf]
      %v2883 = vld [vmem:[%s2873 + $0x24] sm:$0xf]
      %v2884 = vld [vmem:[%s2873 + $0x28] sm:$0xf]
      %v2885 = vld [vmem:[%s2873 + $0x2c] sm:$0xf]
      %v2886 = vld [vmem:[%s2873 + $0x30] sm:$0xf]
      %v2887 = vld [vmem:[%s2873 + $0x34] sm:$0xf]
      %v2888 = vld [vmem:[%s2873 + $0x38] sm:$0xf]
      %v2889 = vld [vmem:[%s2873 + $0x3c] sm:$0xf]
      %v2890 = vpack.c.b16 %v2328, %v2327
      %v2891 = vpack.c.b16 %v2330, %v2329
      %v2892 = vpack.c.b16 %v2332, %v2331
      %v2893 = vpack.c.b16 %v2334, %v2333
      %v2894 = vpack.c.b16 %v2336, %v2335
      %v2895 = vpack.c.b16 %v2338, %v2337
      %v2896 = vpack.c.b16 %v2340, %v2339
      %v2897 = vpack.c.b16 %v2342, %v2341
      %v2898 = vpack.c.b16 %v2344, %v2343
      %v2899 = vpack.c.b16 %v2346, %v2345
      %v2900 = vpack.c.b16 %v2348, %v2347
      %v2901 = vpack.c.b16 %v2350, %v2349
      %v2902 = vpack.c.b16 %v2352, %v2351
      %v2903 = vpack.c.b16 %v2354, %v2353
      %v2904 = vpack.c.b16 %v2356, %v2355
      %v2905 = vpack.c.b16 %v2358, %v2357
      %v2906 = vpack.c.b16 %v2360, %v2359
      %v2907 = vpack.c.b16 %v2362, %v2361
      %v2908 = vpack.c.b16 %v2364, %v2363
      %v2909 = vpack.c.b16 %v2366, %v2365
      %v2910 = vpack.c.b16 %v2368, %v2367
      %v2911 = vpack.c.b16 %v2370, %v2369
      %v2912 = vpack.c.b16 %v2372, %v2371
      %v2913 = vpack.c.b16 %v2374, %v2373
      %v2954 = vunpack.c.l.b16 %v2874
      %v2955 = vunpack.c.l.b16 %v2875
      %v2956 = vunpack.c.l.b16 %v2876
      %v2957 = vunpack.c.l.b16 %v2877
      %v2958 = vunpack.c.l.b16 %v2878
      %v2959 = vunpack.c.l.b16 %v2879
      %v2960 = vunpack.c.l.b16 %v2880
      %v2961 = vunpack.c.l.b16 %v2881
      %v2962 = vunpack.c.l.b16 %v2882
      %v2963 = vunpack.c.l.b16 %v2883
      %v2964 = vunpack.c.l.b16 %v2884
      %v2965 = vunpack.c.l.b16 %v2885
      %v2966 = vunpack.c.l.b16 %v2886
      %v2967 = vunpack.c.l.b16 %v2887
      %v2968 = vunpack.c.l.b16 %v2888
      %v2969 = vunpack.c.l.b16 %v2889
      %v2970 = vpack.c.b16 %v2955, %v2954
      %v2971 = vpack.c.b16 %v2957, %v2956
      %v2972 = vpack.c.b16 %v2959, %v2958
      %v2973 = vpack.c.b16 %v2961, %v2960
      %v2974 = vpack.c.b16 %v2963, %v2962
      %v2975 = vpack.c.b16 %v2965, %v2964
      %v2976 = vpack.c.b16 %v2967, %v2966
      %v2977 = vpack.c.b16 %v2969, %v2968
      %2986 = vmatpush.bf16.msra.mxu0 %v2977
      %2987 = vmatpush.bf16.msra.mxu0 %v2976
      %2988 = vmatpush.bf16.msra.mxu0 %v2975
      %2989 = vmatpush.bf16.msra.mxu0 %v2974
      %2990 = vmatpush.bf16.msra.mxu0 %v2973
      %2991 = vmatpush.bf16.msra.mxu0 %v2972
      %2992 = vmatpush.bf16.msra.mxu0 %v2971
      %2993 = vmatpush.bf16.msra.mxu0 %v2970
      %2994 = vmatmul.bf16.gmra.mxu0 %v2890
      %v2995 = vpop.f32.mrf.mxu0
      %v2996 = vadd.f32 0.0, %v2995
      %v2997 = vpop.f32.mrf.mxu0
      %v2998 = vadd.f32 0.0, %v2997
      %2999 = vmatmul.bf16.gmra.mxu0 %v2891
      %v3000 = vpop.f32.mrf.mxu0
      %v3001 = vadd.f32 0.0, %v3000
      %v3002 = vpop.f32.mrf.mxu0
      %v3003 = vadd.f32 0.0, %v3002
      %3004 = vmatmul.bf16.gmra.mxu0 %v2892
      %v3005 = vpop.f32.mrf.mxu0
      %v3006 = vadd.f32 0.0, %v3005
      %v3007 = vpop.f32.mrf.mxu0
      %v3008 = vadd.f32 0.0, %v3007
      %3009 = vmatmul.bf16.gmra.mxu0 %v2893
      %v3010 = vpop.f32.mrf.mxu0
      %v3011 = vadd.f32 0.0, %v3010
      %v3012 = vpop.f32.mrf.mxu0
      %v3013 = vadd.f32 0.0, %v3012
      %3014 = vmatmul.bf16.gmra.mxu0 %v2894
      %v3015 = vpop.f32.mrf.mxu0
      %v3016 = vadd.f32 0.0, %v3015
      %v3017 = vpop.f32.mrf.mxu0
      %v3018 = vadd.f32 0.0, %v3017
      %3019 = vmatmul.bf16.gmra.mxu0 %v2895
      %v3020 = vpop.f32.mrf.mxu0
      %v3021 = vadd.f32 0.0, %v3020
      %v3022 = vpop.f32.mrf.mxu0
      %v3023 = vadd.f32 0.0, %v3022
      %3024 = vmatmul.bf16.gmra.mxu0 %v2896
      %v3025 = vpop.f32.mrf.mxu0
      %v3026 = vadd.f32 0.0, %v3025
      %v3027 = vpop.f32.mrf.mxu0
      %v3028 = vadd.f32 0.0, %v3027
      %3029 = vmatmul.bf16.gmra.mxu0 %v2897
      %v3030 = vpop.f32.mrf.mxu0
      %v3031 = vadd.f32 0.0, %v3030
      %v3032 = vpop.f32.mrf.mxu0
      %v3033 = vadd.f32 0.0, %v3032
      %3034 = vmatmul.bf16.gmra.mxu0 %v2898
      %v3035 = vpop.f32.mrf.mxu0
      %v3036 = vadd.f32 0.0, %v3035
      %v3037 = vpop.f32.mrf.mxu0
      %v3038 = vadd.f32 0.0, %v3037
      %3039 = vmatmul.bf16.gmra.mxu0 %v2899
      %v3040 = vpop.f32.mrf.mxu0
      %v3041 = vadd.f32 0.0, %v3040
      %v3042 = vpop.f32.mrf.mxu0
      %v3043 = vadd.f32 0.0, %v3042
      %3044 = vmatmul.bf16.gmra.mxu0 %v2900
      %v3045 = vpop.f32.mrf.mxu0
      %v3046 = vadd.f32 0.0, %v3045
      %v3047 = vpop.f32.mrf.mxu0
      %v3048 = vadd.f32 0.0, %v3047
      %3049 = vmatmul.bf16.gmra.mxu0 %v2901
      %v3050 = vpop.f32.mrf.mxu0
      %v3051 = vadd.f32 0.0, %v3050
      %v3052 = vpop.f32.mrf.mxu0
      %v3053 = vadd.f32 0.0, %v3052
      %3054 = vmatmul.bf16.gmra.mxu0 %v2902
      %v3055 = vpop.f32.mrf.mxu0
      %v3056 = vadd.f32 0.0, %v3055
      %v3057 = vpop.f32.mrf.mxu0
      %v3058 = vadd.f32 0.0, %v3057
      %3059 = vmatmul.bf16.gmra.mxu0 %v2903
      %v3060 = vpop.f32.mrf.mxu0
      %v3061 = vadd.f32 0.0, %v3060
      %v3062 = vpop.f32.mrf.mxu0
      %v3063 = vadd.f32 0.0, %v3062
      %3064 = vmatmul.bf16.gmra.mxu0 %v2904
      %v3065 = vpop.f32.mrf.mxu0
      %v3066 = vadd.f32 0.0, %v3065
      %v3067 = vpop.f32.mrf.mxu0
      %v3068 = vadd.f32 0.0, %v3067
      %3069 = vmatmul.bf16.gmra.mxu0 %v2905
      %v3070 = vpop.f32.mrf.mxu0
      %v3071 = vadd.f32 0.0, %v3070
      %v3072 = vpop.f32.mrf.mxu0
      %v3073 = vadd.f32 0.0, %v3072
      %3074 = vmatmul.bf16.gmra.mxu0 %v2906
      %v3075 = vpop.f32.mrf.mxu0
      %v3076 = vadd.f32 0.0, %v3075
      %v3077 = vpop.f32.mrf.mxu0
      %v3078 = vadd.f32 0.0, %v3077
      %3079 = vmatmul.bf16.gmra.mxu0 %v2907
      %v3080 = vpop.f32.mrf.mxu0
      %v3081 = vadd.f32 0.0, %v3080
      %v3082 = vpop.f32.mrf.mxu0
      %v3083 = vadd.f32 0.0, %v3082
      %3084 = vmatmul.bf16.gmra.mxu0 %v2908
      %v3085 = vpop.f32.mrf.mxu0
      %v3086 = vadd.f32 0.0, %v3085
      %v3087 = vpop.f32.mrf.mxu0
      %v3088 = vadd.f32 0.0, %v3087
      %3089 = vmatmul.bf16.gmra.mxu0 %v2909
      %v3090 = vpop.f32.mrf.mxu0
      %v3091 = vadd.f32 0.0, %v3090
      %v3092 = vpop.f32.mrf.mxu0
      %v3093 = vadd.f32 0.0, %v3092
      %3094 = vmatmul.bf16.gmra.mxu0 %v2910
      %v3095 = vpop.f32.mrf.mxu0
      %v3096 = vadd.f32 0.0, %v3095
      %v3097 = vpop.f32.mrf.mxu0
      %v3098 = vadd.f32 0.0, %v3097
      %3099 = vmatmul.bf16.gmra.mxu0 %v2911
      %v3100 = vpop.f32.mrf.mxu0
      %v3101 = vadd.f32 0.0, %v3100
      %v3102 = vpop.f32.mrf.mxu0
      %v3103 = vadd.f32 0.0, %v3102
      %3104 = vmatmul.bf16.gmra.mxu0 %v2912
      %v3105 = vpop.f32.mrf.mxu0
      %v3106 = vadd.f32 0.0, %v3105
      %v3107 = vpop.f32.mrf.mxu0
      %v3108 = vadd.f32 0.0, %v3107
      %3109 = vmatmul.bf16.gmra.mxu0 %v2913
      %v3110 = vpop.f32.mrf.mxu0
      %v3111 = vadd.f32 0.0, %v3110
      %v3112 = vpop.f32.mrf.mxu0
      %v3113 = vadd.f32 0.0, %v3112
      %3114 = vdwg.mxu0
      %v3115 = vadd.f32 %v2825, %v2996
      %v3116 = vadd.f32 %v2826, %v2998
      %v3117 = vadd.f32 %v2827, %v3001
      %v3118 = vadd.f32 %v2828, %v3003
      %v3119 = vadd.f32 %v2829, %v3006
      %v3120 = vadd.f32 %v2830, %v3008
      %v3121 = vadd.f32 %v2831, %v3011
      %v3122 = vadd.f32 %v2832, %v3013
      %v3123 = vadd.f32 %v2833, %v3016
      %v3124 = vadd.f32 %v2834, %v3018
      %v3125 = vadd.f32 %v2835, %v3021
      %v3126 = vadd.f32 %v2836, %v3023
      %v3127 = vadd.f32 %v2837, %v3026
      %v3128 = vadd.f32 %v2838, %v3028
      %v3129 = vadd.f32 %v2839, %v3031
      %v3130 = vadd.f32 %v2840, %v3033
      %v3131 = vadd.f32 %v2841, %v3036
      %v3132 = vadd.f32 %v2842, %v3038
      %v3133 = vadd.f32 %v2843, %v3041
      %v3134 = vadd.f32 %v2844, %v3043
      %v3135 = vadd.f32 %v2845, %v3046
      %v3136 = vadd.f32 %v2846, %v3048
      %v3137 = vadd.f32 %v2847, %v3051
      %v3138 = vadd.f32 %v2848, %v3053
      %v3139 = vadd.f32 %v2849, %v3056
      %v3140 = vadd.f32 %v2850, %v3058
      %v3141 = vadd.f32 %v2851, %v3061
      %v3142 = vadd.f32 %v2852, %v3063
      %v3143 = vadd.f32 %v2853, %v3066
      %v3144 = vadd.f32 %v2854, %v3068
      %v3145 = vadd.f32 %v2855, %v3071
      %v3146 = vadd.f32 %v2856, %v3073
      %v3147 = vadd.f32 %v2857, %v3076
      %v3148 = vadd.f32 %v2858, %v3078
      %v3149 = vadd.f32 %v2859, %v3081
      %v3150 = vadd.f32 %v2860, %v3083
      %v3151 = vadd.f32 %v2861, %v3086
      %v3152 = vadd.f32 %v2862, %v3088
      %v3153 = vadd.f32 %v2863, %v3091
      %v3154 = vadd.f32 %v2864, %v3093
      %v3155 = vadd.f32 %v2865, %v3096
      %v3156 = vadd.f32 %v2866, %v3098
      %v3157 = vadd.f32 %v2867, %v3101
      %v3158 = vadd.f32 %v2868, %v3103
      %v3159 = vadd.f32 %v2869, %v3106
      %v3160 = vadd.f32 %v2870, %v3108
      %v3161 = vadd.f32 %v2871, %v3111
      %v3162 = vadd.f32 %v2872, %v3113
      %v3163 = vld [vmem:[#allocation2 + $0x18] sm:$0xf]
      %v3164 = vld [vmem:[#allocation2 + $0x1c] sm:$0xf]
      %v3165 = vld [vmem:[#allocation2 + $0x20] sm:$0xf]
      %v3166 = vld [vmem:[#allocation2 + $0x24] sm:$0xf]
      %v3167 = vld [vmem:[#allocation2 + $0x28] sm:$0xf]
      %v3168 = vld [vmem:[#allocation2 + $0x2c] sm:$0xf]
      %v3169 = vld [vmem:[#allocation2 + $0x30] sm:$0xf]
      %v3170 = vld [vmem:[#allocation2 + $0x34] sm:$0xf]
      %v3171 = vld [vmem:[#allocation2 + $0x38] sm:$0xf]
      %v3172 = vld [vmem:[#allocation2 + $0x3c] sm:$0xf]
      %v3173 = vld [vmem:[#allocation2 + $0x40] sm:$0xf]
      %v3174 = vld [vmem:[#allocation2 + $0x44] sm:$0xf]
      %v3175 = vld [vmem:[#allocation2 + $0x48] sm:$0xf]
      %v3176 = vld [vmem:[#allocation2 + $0x4c] sm:$0xf]
      %v3177 = vld [vmem:[#allocation2 + $0x50] sm:$0xf]
      %v3178 = vld [vmem:[#allocation2 + $0x54] sm:$0xf]
      %v3179 = vld [vmem:[#allocation2 + $0x58] sm:$0xf]
      %v3180 = vld [vmem:[#allocation2 + $0x5c] sm:$0xf]
      %v3181 = vld [vmem:[#allocation2 + $0x60] sm:$0xf]
      %v3182 = vld [vmem:[#allocation2 + $0x64] sm:$0xf]
      %v3183 = vld [vmem:[#allocation2 + $0x68] sm:$0xf]
      %v3184 = vld [vmem:[#allocation2 + $0x6c] sm:$0xf]
      %v3185 = vld [vmem:[#allocation2 + $0x70] sm:$0xf]
      %v3186 = vld [vmem:[#allocation2 + $0x74] sm:$0xf]
      %v3187 = vld [vmem:[#allocation2 + $0x78] sm:$0xf]
      %v3188 = vld [vmem:[#allocation2 + $0x7c] sm:$0xf]
      %v3189 = vld [vmem:[#allocation2 + $0x80] sm:$0xf]
      %v3190 = vld [vmem:[#allocation2 + $0x84] sm:$0xf]
      %v3191 = vld [vmem:[#allocation2 + $0x88] sm:$0xf]
      %v3192 = vld [vmem:[#allocation2 + $0x8c] sm:$0xf]
      %v3193 = vld [vmem:[#allocation2 + $0x90] sm:$0xf]
      %v3194 = vld [vmem:[#allocation2 + $0x94] sm:$0xf]
      %v3195 = vld [vmem:[#allocation2 + $0x98] sm:$0xf]
      %v3196 = vld [vmem:[#allocation2 + $0x9c] sm:$0xf]
      %v3197 = vld [vmem:[#allocation2 + $0xa0] sm:$0xf]
      %v3198 = vld [vmem:[#allocation2 + $0xa4] sm:$0xf]
      %v3199 = vld [vmem:[#allocation2 + $0xa8] sm:$0xf]
      %v3200 = vld [vmem:[#allocation2 + $0xac] sm:$0xf]
      %v3201 = vld [vmem:[#allocation2 + $0xb0] sm:$0xf]
      %v3202 = vld [vmem:[#allocation2 + $0xb4] sm:$0xf]
      %v3203 = vld [vmem:[#allocation2 + $0xb8] sm:$0xf]
      %v3204 = vld [vmem:[#allocation2 + $0xbc] sm:$0xf]
      %v3205 = vld [vmem:[#allocation2 + $0xc0] sm:$0xf]
      %v3206 = vld [vmem:[#allocation2 + $0xc4] sm:$0xf]
      %v3207 = vld [vmem:[#allocation2 + $0xc8] sm:$0xf]
      %v3208 = vld [vmem:[#allocation2 + $0xcc] sm:$0xf]
      %v3209 = vld [vmem:[#allocation2 + $0xd0] sm:$0xf]
      %v3210 = vld [vmem:[#allocation2 + $0xd4] sm:$0xf]
      %v3211 = vld [vmem:[#allocation2 + $0xd8] sm:$0x1]
      %s3212 = scalar_lea.vmem %s4, 320
      %v3213 = vld [vmem:[%s3212] sm:$0xf]
      %v3214 = vld [vmem:[%s3212 + $0x4] sm:$0xf]
      %v3215 = vld [vmem:[%s3212 + $0x8] sm:$0xf]
      %v3216 = vld [vmem:[%s3212 + $0xc] sm:$0xf]
      %v3217 = vld [vmem:[%s3212 + $0x10] sm:$0xf]
      %v3218 = vld [vmem:[%s3212 + $0x14] sm:$0xf]
      %v3219 = vld [vmem:[%s3212 + $0x18] sm:$0xf]
      %v3220 = vld [vmem:[%s3212 + $0x1c] sm:$0xf]
      %v3221 = vld [vmem:[%s3212 + $0x20] sm:$0xf]
      %v3222 = vld [vmem:[%s3212 + $0x24] sm:$0xf]
      %v3223 = vld [vmem:[%s3212 + $0x28] sm:$0xf]
      %v3224 = vld [vmem:[%s3212 + $0x2c] sm:$0xf]
      %v3225 = vld [vmem:[%s3212 + $0x30] sm:$0xf]
      %v3226 = vld [vmem:[%s3212 + $0x34] sm:$0xf]
      %v3227 = vld [vmem:[%s3212 + $0x38] sm:$0xf]
      %v3228 = vld [vmem:[%s3212 + $0x3c] sm:$0xf]
      %v3278 = vunpack.c.l.b16 %v3163
      %v3279 = vunpack.c.l.b16 %v3164
      %v3280 = vunpack.c.l.b16 %v3165
      %v3281 = vunpack.c.l.b16 %v3166
      %v3282 = vunpack.c.l.b16 %v3167
      %v3283 = vunpack.c.l.b16 %v3168
      %v3284 = vunpack.c.l.b16 %v3169
      %v3285 = vunpack.c.l.b16 %v3170
      %v3286 = vunpack.c.l.b16 %v3171
      %v3287 = vunpack.c.l.b16 %v3172
      %v3288 = vunpack.c.l.b16 %v3173
      %v3289 = vunpack.c.l.b16 %v3174
      %v3290 = vunpack.c.l.b16 %v3175
      %v3291 = vunpack.c.l.b16 %v3176
      %v3292 = vunpack.c.l.b16 %v3177
      %v3293 = vunpack.c.l.b16 %v3178
      %v3294 = vunpack.c.l.b16 %v3179
      %v3295 = vunpack.c.l.b16 %v3180
      %v3296 = vunpack.c.l.b16 %v3181
      %v3297 = vunpack.c.l.b16 %v3182
      %v3298 = vunpack.c.l.b16 %v3183
      %v3299 = vunpack.c.l.b16 %v3184
      %v3300 = vunpack.c.l.b16 %v3185
      %v3301 = vunpack.c.l.b16 %v3186
      %v3302 = vunpack.c.l.b16 %v3187
      %v3303 = vunpack.c.l.b16 %v3188
      %v3304 = vunpack.c.l.b16 %v3189
      %v3305 = vunpack.c.l.b16 %v3190
      %v3306 = vunpack.c.l.b16 %v3191
      %v3307 = vunpack.c.l.b16 %v3192
      %v3308 = vunpack.c.l.b16 %v3193
      %v3309 = vunpack.c.l.b16 %v3194
      %v3310 = vunpack.c.l.b16 %v3195
      %v3311 = vunpack.c.l.b16 %v3196
      %v3312 = vunpack.c.l.b16 %v3197
      %v3313 = vunpack.c.l.b16 %v3198
      %v3314 = vunpack.c.l.b16 %v3199
      %v3315 = vunpack.c.l.b16 %v3200
      %v3316 = vunpack.c.l.b16 %v3201
      %v3317 = vunpack.c.l.b16 %v3202
      %v3318 = vunpack.c.l.b16 %v3203
      %v3319 = vunpack.c.l.b16 %v3204
      %v3320 = vunpack.c.l.b16 %v3205
      %v3321 = vunpack.c.l.b16 %v3206
      %v3322 = vunpack.c.l.b16 %v3207
      %v3323 = vunpack.c.l.b16 %v3208
      %v3324 = vunpack.c.l.b16 %v3209
      %v3325 = vunpack.c.l.b16 %v3210
      %v3326 = vunpack.c.l.b16 %v3211
      %v3327 = vpack.c.b16 %v3279, %v3278
      %v3328 = vpack.c.b16 %v3281, %v3280
      %v3329 = vpack.c.b16 %v3283, %v3282
      %v3330 = vpack.c.b16 %v3285, %v3284
      %v3331 = vpack.c.b16 %v3287, %v3286
      %v3332 = vpack.c.b16 %v3289, %v3288
      %v3333 = vpack.c.b16 %v3291, %v3290
      %v3334 = vpack.c.b16 %v3293, %v3292
      %v3335 = vpack.c.b16 %v3295, %v3294
      %v3336 = vpack.c.b16 %v3297, %v3296
      %v3337 = vpack.c.b16 %v3299, %v3298
      %v3338 = vpack.c.b16 %v3301, %v3300
      %v3339 = vpack.c.b16 %v3303, %v3302
      %v3340 = vpack.c.b16 %v3305, %v3304
      %v3341 = vpack.c.b16 %v3307, %v3306
      %v3342 = vpack.c.b16 %v3309, %v3308
      %v3343 = vpack.c.b16 %v3311, %v3310
      %v3344 = vpack.c.b16 %v3313, %v3312
      %v3345 = vpack.c.b16 %v3315, %v3314
      %v3346 = vpack.c.b16 %v3317, %v3316
      %v3347 = vpack.c.b16 %v3319, %v3318
      %v3348 = vpack.c.b16 %v3321, %v3320
      %v3349 = vpack.c.b16 %v3323, %v3322
      %v3350 = vpack.c.b16 %v3325, %v3324
      %v3351 = vpack.c.b16 %v3326, %v3326
      %v3353 = vshrl.u32 %v3327, 16
      %v3355 = vshll.u32 %v3327, 16
      %v3357 = vrot.slane %v3355, 1
      %v3358 = vor.u32 %v3353, %v3357
      %v3360 = vshll.u32 %v3328, 16
      %v3362 = vrot.slane %v3360, 1
      %v3363 = vsel %vm1765, %v3358, %v3362
      %v3364 = vshrl.u32 %v3328, 16
      %v3366 = vor.u32 %v3364, %v3362
      %v3368 = vshll.u32 %v3329, 16
      %v3370 = vrot.slane %v3368, 1
      %v3371 = vsel %vm1765, %v3366, %v3370
      %v3372 = vshrl.u32 %v3329, 16
      %v3374 = vor.u32 %v3372, %v3370
      %v3376 = vshll.u32 %v3330, 16
      %v3378 = vrot.slane %v3376, 1
      %v3379 = vsel %vm1765, %v3374, %v3378
      %v3380 = vshrl.u32 %v3330, 16
      %v3382 = vor.u32 %v3380, %v3378
      %v3384 = vshll.u32 %v3331, 16
      %v3386 = vrot.slane %v3384, 1
      %v3387 = vsel %vm1765, %v3382, %v3386
      %v3388 = vshrl.u32 %v3331, 16
      %v3390 = vor.u32 %v3388, %v3386
      %v3392 = vshll.u32 %v3332, 16
      %v3394 = vrot.slane %v3392, 1
      %v3395 = vsel %vm1765, %v3390, %v3394
      %v3396 = vshrl.u32 %v3332, 16
      %v3398 = vor.u32 %v3396, %v3394
      %v3400 = vshll.u32 %v3333, 16
      %v3402 = vrot.slane %v3400, 1
      %v3403 = vsel %vm1765, %v3398, %v3402
      %v3404 = vshrl.u32 %v3333, 16
      %v3406 = vor.u32 %v3404, %v3402
      %v3408 = vshll.u32 %v3334, 16
      %v3410 = vrot.slane %v3408, 1
      %v3411 = vsel %vm1765, %v3406, %v3410
      %v3412 = vshrl.u32 %v3334, 16
      %v3414 = vor.u32 %v3412, %v3410
      %v3416 = vshll.u32 %v3335, 16
      %v3418 = vrot.slane %v3416, 1
      %v3419 = vsel %vm1765, %v3414, %v3418
      %v3420 = vshrl.u32 %v3335, 16
      %v3422 = vor.u32 %v3420, %v3418
      %v3424 = vshll.u32 %v3336, 16
      %v3426 = vrot.slane %v3424, 1
      %v3427 = vsel %vm1765, %v3422, %v3426
      %v3428 = vshrl.u32 %v3336, 16
      %v3430 = vor.u32 %v3428, %v3426
      %v3432 = vshll.u32 %v3337, 16
      %v3434 = vrot.slane %v3432, 1
      %v3435 = vsel %vm1765, %v3430, %v3434
      %v3436 = vshrl.u32 %v3337, 16
      %v3438 = vor.u32 %v3436, %v3434
      %v3440 = vshll.u32 %v3338, 16
      %v3442 = vrot.slane %v3440, 1
      %v3443 = vsel %vm1765, %v3438, %v3442
      %v3444 = vshrl.u32 %v3338, 16
      %v3446 = vor.u32 %v3444, %v3442
      %v3448 = vshll.u32 %v3339, 16
      %v3450 = vrot.slane %v3448, 1
      %v3451 = vsel %vm1765, %v3446, %v3450
      %v3452 = vshrl.u32 %v3339, 16
      %v3454 = vor.u32 %v3452, %v3450
      %v3456 = vshll.u32 %v3340, 16
      %v3458 = vrot.slane %v3456, 1
      %v3459 = vsel %vm1765, %v3454, %v3458
      %v3460 = vshrl.u32 %v3340, 16
      %v3462 = vor.u32 %v3460, %v3458
      %v3464 = vshll.u32 %v3341, 16
      %v3466 = vrot.slane %v3464, 1
      %v3467 = vsel %vm1765, %v3462, %v3466
      %v3468 = vshrl.u32 %v3341, 16
      %v3470 = vor.u32 %v3468, %v3466
      %v3472 = vshll.u32 %v3342, 16
      %v3474 = vrot.slane %v3472, 1
      %v3475 = vsel %vm1765, %v3470, %v3474
      %v3476 = vshrl.u32 %v3342, 16
      %v3478 = vor.u32 %v3476, %v3474
      %v3480 = vshll.u32 %v3343, 16
      %v3482 = vrot.slane %v3480, 1
      %v3483 = vsel %vm1765, %v3478, %v3482
      %v3484 = vshrl.u32 %v3343, 16
      %v3486 = vor.u32 %v3484, %v3482
      %v3488 = vshll.u32 %v3344, 16
      %v3490 = vrot.slane %v3488, 1
      %v3491 = vsel %vm1765, %v3486, %v3490
      %v3492 = vshrl.u32 %v3344, 16
      %v3494 = vor.u32 %v3492, %v3490
      %v3496 = vshll.u32 %v3345, 16
      %v3498 = vrot.slane %v3496, 1
      %v3499 = vsel %vm1765, %v3494, %v3498
      %v3500 = vshrl.u32 %v3345, 16
      %v3502 = vor.u32 %v3500, %v3498
      %v3504 = vshll.u32 %v3346, 16
      %v3506 = vrot.slane %v3504, 1
      %v3507 = vsel %vm1765, %v3502, %v3506
      %v3508 = vshrl.u32 %v3346, 16
      %v3510 = vor.u32 %v3508, %v3506
      %v3512 = vshll.u32 %v3347, 16
      %v3514 = vrot.slane %v3512, 1
      %v3515 = vsel %vm1765, %v3510, %v3514
      %v3516 = vshrl.u32 %v3347, 16
      %v3518 = vor.u32 %v3516, %v3514
      %v3520 = vshll.u32 %v3348, 16
      %v3522 = vrot.slane %v3520, 1
      %v3523 = vsel %vm1765, %v3518, %v3522
      %v3524 = vshrl.u32 %v3348, 16
      %v3526 = vor.u32 %v3524, %v3522
      %v3528 = vshll.u32 %v3349, 16
      %v3530 = vrot.slane %v3528, 1
      %v3531 = vsel %vm1765, %v3526, %v3530
      %v3532 = vshrl.u32 %v3349, 16
      %v3534 = vor.u32 %v3532, %v3530
      %v3536 = vshll.u32 %v3350, 16
      %v3538 = vrot.slane %v3536, 1
      %v3539 = vsel %vm1765, %v3534, %v3538
      %v3540 = vshrl.u32 %v3350, 16
      %v3542 = vor.u32 %v3540, %v3538
      %v3544 = vshll.u32 %v3351, 16
      %v3546 = vrot.slane %v3544, 1
      %v3547 = vsel %vm1765, %v3542, %v3546
      %v3588 = vunpack.c.l.b16 %v3213
      %v3589 = vunpack.c.l.b16 %v3214
      %v3590 = vunpack.c.l.b16 %v3215
      %v3591 = vunpack.c.l.b16 %v3216
      %v3592 = vunpack.c.l.b16 %v3217
      %v3593 = vunpack.c.l.b16 %v3218
      %v3594 = vunpack.c.l.b16 %v3219
      %v3595 = vunpack.c.l.b16 %v3220
      %v3596 = vunpack.c.l.b16 %v3221
      %v3597 = vunpack.c.l.b16 %v3222
      %v3598 = vunpack.c.l.b16 %v3223
      %v3599 = vunpack.c.l.b16 %v3224
      %v3600 = vunpack.c.l.b16 %v3225
      %v3601 = vunpack.c.l.b16 %v3226
      %v3602 = vunpack.c.l.b16 %v3227
      %v3603 = vunpack.c.l.b16 %v3228
      %v3604 = vpack.c.b16 %v3589, %v3588
      %v3605 = vpack.c.b16 %v3591, %v3590
      %v3606 = vpack.c.b16 %v3593, %v3592
      %v3607 = vpack.c.b16 %v3595, %v3594
      %v3608 = vpack.c.b16 %v3597, %v3596
      %v3609 = vpack.c.b16 %v3599, %v3598
      %v3610 = vpack.c.b16 %v3601, %v3600
      %v3611 = vpack.c.b16 %v3603, %v3602
      %3620 = vmatpush.bf16.msra.mxu0 %v3611
      %3621 = vmatpush.bf16.msra.mxu0 %v3610
      %3622 = vmatpush.bf16.msra.mxu0 %v3609
      %3623 = vmatpush.bf16.msra.mxu0 %v3608
      %3624 = vmatpush.bf16.msra.mxu0 %v3607
      %3625 = vmatpush.bf16.msra.mxu0 %v3606
      %3626 = vmatpush.bf16.msra.mxu0 %v3605
      %3627 = vmatpush.bf16.msra.mxu0 %v3604
      %3628 = vmatmul.bf16.gmra.mxu0 %v3363
      %v3629 = vpop.f32.mrf.mxu0
      %v3630 = vadd.f32 0.0, %v3629
      %v3631 = vpop.f32.mrf.mxu0
      %v3632 = vadd.f32 0.0, %v3631
      %3633 = vmatmul.bf16.gmra.mxu0 %v3371
      %v3634 = vpop.f32.mrf.mxu0
      %v3635 = vadd.f32 0.0, %v3634
      %v3636 = vpop.f32.mrf.mxu0
      %v3637 = vadd.f32 0.0, %v3636
      %3638 = vmatmul.bf16.gmra.mxu0 %v3379
      %v3639 = vpop.f32.mrf.mxu0
      %v3640 = vadd.f32 0.0, %v3639
      %v3641 = vpop.f32.mrf.mxu0
      %v3642 = vadd.f32 0.0, %v3641
      %3643 = vmatmul.bf16.gmra.mxu0 %v3387
      %v3644 = vpop.f32.mrf.mxu0
      %v3645 = vadd.f32 0.0, %v3644
      %v3646 = vpop.f32.mrf.mxu0
      %v3647 = vadd.f32 0.0, %v3646
      %3648 = vmatmul.bf16.gmra.mxu0 %v3395
      %v3649 = vpop.f32.mrf.mxu0
      %v3650 = vadd.f32 0.0, %v3649
      %v3651 = vpop.f32.mrf.mxu0
      %v3652 = vadd.f32 0.0, %v3651
      %3653 = vmatmul.bf16.gmra.mxu0 %v3403
      %v3654 = vpop.f32.mrf.mxu0
      %v3655 = vadd.f32 0.0, %v3654
      %v3656 = vpop.f32.mrf.mxu0
      %v3657 = vadd.f32 0.0, %v3656
      %3658 = vmatmul.bf16.gmra.mxu0 %v3411
      %v3659 = vpop.f32.mrf.mxu0
      %v3660 = vadd.f32 0.0, %v3659
      %v3661 = vpop.f32.mrf.mxu0
      %v3662 = vadd.f32 0.0, %v3661
      %3663 = vmatmul.bf16.gmra.mxu0 %v3419
      %v3664 = vpop.f32.mrf.mxu0
      %v3665 = vadd.f32 0.0, %v3664
      %v3666 = vpop.f32.mrf.mxu0
      %v3667 = vadd.f32 0.0, %v3666
      %3668 = vmatmul.bf16.gmra.mxu0 %v3427
      %v3669 = vpop.f32.mrf.mxu0
      %v3670 = vadd.f32 0.0, %v3669
      %v3671 = vpop.f32.mrf.mxu0
      %v3672 = vadd.f32 0.0, %v3671
      %3673 = vmatmul.bf16.gmra.mxu0 %v3435
      %v3674 = vpop.f32.mrf.mxu0
      %v3675 = vadd.f32 0.0, %v3674
      %v3676 = vpop.f32.mrf.mxu0
      %v3677 = vadd.f32 0.0, %v3676
      %3678 = vmatmul.bf16.gmra.mxu0 %v3443
      %v3679 = vpop.f32.mrf.mxu0
      %v3680 = vadd.f32 0.0, %v3679
      %v3681 = vpop.f32.mrf.mxu0
      %v3682 = vadd.f32 0.0, %v3681
      %3683 = vmatmul.bf16.gmra.mxu0 %v3451
      %v3684 = vpop.f32.mrf.mxu0
      %v3685 = vadd.f32 0.0, %v3684
      %v3686 = vpop.f32.mrf.mxu0
      %v3687 = vadd.f32 0.0, %v3686
      %3688 = vmatmul.bf16.gmra.mxu0 %v3459
      %v3689 = vpop.f32.mrf.mxu0
      %v3690 = vadd.f32 0.0, %v3689
      %v3691 = vpop.f32.mrf.mxu0
      %v3692 = vadd.f32 0.0, %v3691
      %3693 = vmatmul.bf16.gmra.mxu0 %v3467
      %v3694 = vpop.f32.mrf.mxu0
      %v3695 = vadd.f32 0.0, %v3694
      %v3696 = vpop.f32.mrf.mxu0
      %v3697 = vadd.f32 0.0, %v3696
      %3698 = vmatmul.bf16.gmra.mxu0 %v3475
      %v3699 = vpop.f32.mrf.mxu0
      %v3700 = vadd.f32 0.0, %v3699
      %v3701 = vpop.f32.mrf.mxu0
      %v3702 = vadd.f32 0.0, %v3701
      %3703 = vmatmul.bf16.gmra.mxu0 %v3483
      %v3704 = vpop.f32.mrf.mxu0
      %v3705 = vadd.f32 0.0, %v3704
      %v3706 = vpop.f32.mrf.mxu0
      %v3707 = vadd.f32 0.0, %v3706
      %3708 = vmatmul.bf16.gmra.mxu0 %v3491
      %v3709 = vpop.f32.mrf.mxu0
      %v3710 = vadd.f32 0.0, %v3709
      %v3711 = vpop.f32.mrf.mxu0
      %v3712 = vadd.f32 0.0, %v3711
      %3713 = vmatmul.bf16.gmra.mxu0 %v3499
      %v3714 = vpop.f32.mrf.mxu0
      %v3715 = vadd.f32 0.0, %v3714
      %v3716 = vpop.f32.mrf.mxu0
      %v3717 = vadd.f32 0.0, %v3716
      %3718 = vmatmul.bf16.gmra.mxu0 %v3507
      %v3719 = vpop.f32.mrf.mxu0
      %v3720 = vadd.f32 0.0, %v3719
      %v3721 = vpop.f32.mrf.mxu0
      %v3722 = vadd.f32 0.0, %v3721
      %3723 = vmatmul.bf16.gmra.mxu0 %v3515
      %v3724 = vpop.f32.mrf.mxu0
      %v3725 = vadd.f32 0.0, %v3724
      %v3726 = vpop.f32.mrf.mxu0
      %v3727 = vadd.f32 0.0, %v3726
      %3728 = vmatmul.bf16.gmra.mxu0 %v3523
      %v3729 = vpop.f32.mrf.mxu0
      %v3730 = vadd.f32 0.0, %v3729
      %v3731 = vpop.f32.mrf.mxu0
      %v3732 = vadd.f32 0.0, %v3731
      %3733 = vmatmul.bf16.gmra.mxu0 %v3531
      %v3734 = vpop.f32.mrf.mxu0
      %v3735 = vadd.f32 0.0, %v3734
      %v3736 = vpop.f32.mrf.mxu0
      %v3737 = vadd.f32 0.0, %v3736
      %3738 = vmatmul.bf16.gmra.mxu0 %v3539
      %v3739 = vpop.f32.mrf.mxu0
      %v3740 = vadd.f32 0.0, %v3739
      %v3741 = vpop.f32.mrf.mxu0
      %v3742 = vadd.f32 0.0, %v3741
      %3743 = vmatmul.bf16.gmra.mxu0 %v3547
      %v3744 = vpop.f32.mrf.mxu0
      %v3745 = vadd.f32 0.0, %v3744
      %v3746 = vpop.f32.mrf.mxu0
      %v3747 = vadd.f32 0.0, %v3746
      %3748 = vdwg.mxu0
      %v3749 = vadd.f32 %v3115, %v3630
      %v3750 = vadd.f32 %v3116, %v3632
      %v3751 = vadd.f32 %v3117, %v3635
      %v3752 = vadd.f32 %v3118, %v3637
      %v3753 = vadd.f32 %v3119, %v3640
      %v3754 = vadd.f32 %v3120, %v3642
      %v3755 = vadd.f32 %v3121, %v3645
      %v3756 = vadd.f32 %v3122, %v3647
      %v3757 = vadd.f32 %v3123, %v3650
      %v3758 = vadd.f32 %v3124, %v3652
      %v3759 = vadd.f32 %v3125, %v3655
      %v3760 = vadd.f32 %v3126, %v3657
      %v3761 = vadd.f32 %v3127, %v3660
      %v3762 = vadd.f32 %v3128, %v3662
      %v3763 = vadd.f32 %v3129, %v3665
      %v3764 = vadd.f32 %v3130, %v3667
      %v3765 = vadd.f32 %v3131, %v3670
      %v3766 = vadd.f32 %v3132, %v3672
      %v3767 = vadd.f32 %v3133, %v3675
      %v3768 = vadd.f32 %v3134, %v3677
      %v3769 = vadd.f32 %v3135, %v3680
      %v3770 = vadd.f32 %v3136, %v3682
      %v3771 = vadd.f32 %v3137, %v3685
      %v3772 = vadd.f32 %v3138, %v3687
      %v3773 = vadd.f32 %v3139, %v3690
      %v3774 = vadd.f32 %v3140, %v3692
      %v3775 = vadd.f32 %v3141, %v3695
      %v3776 = vadd.f32 %v3142, %v3697
      %v3777 = vadd.f32 %v3143, %v3700
      %v3778 = vadd.f32 %v3144, %v3702
      %v3779 = vadd.f32 %v3145, %v3705
      %v3780 = vadd.f32 %v3146, %v3707
      %v3781 = vadd.f32 %v3147, %v3710
      %v3782 = vadd.f32 %v3148, %v3712
      %v3783 = vadd.f32 %v3149, %v3715
      %v3784 = vadd.f32 %v3150, %v3717
      %v3785 = vadd.f32 %v3151, %v3720
      %v3786 = vadd.f32 %v3152, %v3722
      %v3787 = vadd.f32 %v3153, %v3725
      %v3788 = vadd.f32 %v3154, %v3727
      %v3789 = vadd.f32 %v3155, %v3730
      %v3790 = vadd.f32 %v3156, %v3732
      %v3791 = vadd.f32 %v3157, %v3735
      %v3792 = vadd.f32 %v3158, %v3737
      %v3793 = vadd.f32 %v3159, %v3740
      %v3794 = vadd.f32 %v3160, %v3742
      %v3795 = vadd.f32 %v3161, %v3745
      %v3796 = vadd.f32 %v3162, %v3747
      %v3797 = vld [vmem:[#allocation2 + $0x20] sm:$0x8]
      %v3798 = vld [vmem:[#allocation2 + $0x24] sm:$0xf]
      %v3799 = vld [vmem:[#allocation2 + $0x28] sm:$0xf]
      %v3800 = vld [vmem:[#allocation2 + $0x2c] sm:$0xf]
      %v3801 = vld [vmem:[#allocation2 + $0x30] sm:$0xf]
      %v3802 = vld [vmem:[#allocation2 + $0x34] sm:$0xf]
      %v3803 = vld [vmem:[#allocation2 + $0x38] sm:$0xf]
      %v3804 = vld [vmem:[#allocation2 + $0x3c] sm:$0xf]
      %v3805 = vld [vmem:[#allocation2 + $0x40] sm:$0xf]
      %v3806 = vld [vmem:[#allocation2 + $0x44] sm:$0xf]
      %v3807 = vld [vmem:[#allocation2 + $0x48] sm:$0xf]
      %v3808 = vld [vmem:[#allocation2 + $0x4c] sm:$0xf]
      %v3809 = vld [vmem:[#allocation2 + $0x50] sm:$0xf]
      %v3810 = vld [vmem:[#allocation2 + $0x54] sm:$0xf]
      %v3811 = vld [vmem:[#allocation2 + $0x58] sm:$0xf]
      %v3812 = vld [vmem:[#allocation2 + $0x5c] sm:$0xf]
      %v3813 = vld [vmem:[#allocation2 + $0x60] sm:$0xf]
      %v3814 = vld [vmem:[#allocation2 + $0x64] sm:$0xf]
      %v3815 = vld [vmem:[#allocation2 + $0x68] sm:$0xf]
      %v3816 = vld [vmem:[#allocation2 + $0x6c] sm:$0xf]
      %v3817 = vld [vmem:[#allocation2 + $0x70] sm:$0xf]
      %v3818 = vld [vmem:[#allocation2 + $0x74] sm:$0xf]
      %v3819 = vld [vmem:[#allocation2 + $0x78] sm:$0xf]
      %v3820 = vld [vmem:[#allocation2 + $0x7c] sm:$0xf]
      %v3821 = vld [vmem:[#allocation2 + $0x80] sm:$0xf]
      %v3822 = vld [vmem:[#allocation2 + $0x84] sm:$0xf]
      %v3823 = vld [vmem:[#allocation2 + $0x88] sm:$0xf]
      %v3824 = vld [vmem:[#allocation2 + $0x8c] sm:$0xf]
      %v3825 = vld [vmem:[#allocation2 + $0x90] sm:$0xf]
      %v3826 = vld [vmem:[#allocation2 + $0x94] sm:$0xf]
      %v3827 = vld [vmem:[#allocation2 + $0x98] sm:$0xf]
      %v3828 = vld [vmem:[#allocation2 + $0x9c] sm:$0xf]
      %v3829 = vld [vmem:[#allocation2 + $0xa0] sm:$0xf]
      %v3830 = vld [vmem:[#allocation2 + $0xa4] sm:$0xf]
      %v3831 = vld [vmem:[#allocation2 + $0xa8] sm:$0xf]
      %v3832 = vld [vmem:[#allocation2 + $0xac] sm:$0xf]
      %v3833 = vld [vmem:[#allocation2 + $0xb0] sm:$0xf]
      %v3834 = vld [vmem:[#allocation2 + $0xb4] sm:$0xf]
      %v3835 = vld [vmem:[#allocation2 + $0xb8] sm:$0xf]
      %v3836 = vld [vmem:[#allocation2 + $0xbc] sm:$0xf]
      %v3837 = vld [vmem:[#allocation2 + $0xc0] sm:$0xf]
      %v3838 = vld [vmem:[#allocation2 + $0xc4] sm:$0xf]
      %v3839 = vld [vmem:[#allocation2 + $0xc8] sm:$0xf]
      %v3840 = vld [vmem:[#allocation2 + $0xcc] sm:$0xf]
      %v3841 = vld [vmem:[#allocation2 + $0xd0] sm:$0xf]
      %v3842 = vld [vmem:[#allocation2 + $0xd4] sm:$0xf]
      %v3843 = vld [vmem:[#allocation2 + $0xd8] sm:$0xf]
      %v3844 = vld [vmem:[#allocation2 + $0xdc] sm:$0xf]
      %v3845 = vld [vmem:[#allocation2 + $0xe0] sm:$0xf]
      %s3846 = scalar_lea.vmem %s4, 384
      %v3847 = vld [vmem:[%s3846] sm:$0xf]
      %v3848 = vld [vmem:[%s3846 + $0x4] sm:$0xf]
      %v3849 = vld [vmem:[%s3846 + $0x8] sm:$0xf]
      %v3850 = vld [vmem:[%s3846 + $0xc] sm:$0xf]
      %v3851 = vld [vmem:[%s3846 + $0x10] sm:$0xf]
      %v3852 = vld [vmem:[%s3846 + $0x14] sm:$0xf]
      %v3853 = vld [vmem:[%s3846 + $0x18] sm:$0xf]
      %v3854 = vld [vmem:[%s3846 + $0x1c] sm:$0xf]
      %v3855 = vld [vmem:[%s3846 + $0x20] sm:$0xf]
      %v3856 = vld [vmem:[%s3846 + $0x24] sm:$0xf]
      %v3857 = vld [vmem:[%s3846 + $0x28] sm:$0xf]
      %v3858 = vld [vmem:[%s3846 + $0x2c] sm:$0xf]
      %v3859 = vld [vmem:[%s3846 + $0x30] sm:$0xf]
      %v3860 = vld [vmem:[%s3846 + $0x34] sm:$0xf]
      %v3861 = vld [vmem:[%s3846 + $0x38] sm:$0xf]
      %v3862 = vld [vmem:[%s3846 + $0x3c] sm:$0xf]
      %v3912 = vunpack.c.l.b16 %v3797
      %v3913 = vunpack.c.l.b16 %v3798
      %v3914 = vunpack.c.l.b16 %v3799
      %v3915 = vunpack.c.l.b16 %v3800
      %v3916 = vunpack.c.l.b16 %v3801
      %v3917 = vunpack.c.l.b16 %v3802
      %v3918 = vunpack.c.l.b16 %v3803
      %v3919 = vunpack.c.l.b16 %v3804
      %v3920 = vunpack.c.l.b16 %v3805
      %v3921 = vunpack.c.l.b16 %v3806
      %v3922 = vunpack.c.l.b16 %v3807
      %v3923 = vunpack.c.l.b16 %v3808
      %v3924 = vunpack.c.l.b16 %v3809
      %v3925 = vunpack.c.l.b16 %v3810
      %v3926 = vunpack.c.l.b16 %v3811
      %v3927 = vunpack.c.l.b16 %v3812
      %v3928 = vunpack.c.l.b16 %v3813
      %v3929 = vunpack.c.l.b16 %v3814
      %v3930 = vunpack.c.l.b16 %v3815
      %v3931 = vunpack.c.l.b16 %v3816
      %v3932 = vunpack.c.l.b16 %v3817
      %v3933 = vunpack.c.l.b16 %v3818
      %v3934 = vunpack.c.l.b16 %v3819
      %v3935 = vunpack.c.l.b16 %v3820
      %v3936 = vunpack.c.l.b16 %v3821
      %v3937 = vunpack.c.l.b16 %v3822
      %v3938 = vunpack.c.l.b16 %v3823
      %v3939 = vunpack.c.l.b16 %v3824
      %v3940 = vunpack.c.l.b16 %v3825
      %v3941 = vunpack.c.l.b16 %v3826
      %v3942 = vunpack.c.l.b16 %v3827
      %v3943 = vunpack.c.l.b16 %v3828
      %v3944 = vunpack.c.l.b16 %v3829
      %v3945 = vunpack.c.l.b16 %v3830
      %v3946 = vunpack.c.l.b16 %v3831
      %v3947 = vunpack.c.l.b16 %v3832
      %v3948 = vunpack.c.l.b16 %v3833
      %v3949 = vunpack.c.l.b16 %v3834
      %v3950 = vunpack.c.l.b16 %v3835
      %v3951 = vunpack.c.l.b16 %v3836
      %v3952 = vunpack.c.l.b16 %v3837
      %v3953 = vunpack.c.l.b16 %v3838
      %v3954 = vunpack.c.l.b16 %v3839
      %v3955 = vunpack.c.l.b16 %v3840
      %v3956 = vunpack.c.l.b16 %v3841
      %v3957 = vunpack.c.l.b16 %v3842
      %v3958 = vunpack.c.l.b16 %v3843
      %v3959 = vunpack.c.l.b16 %v3844
      %v3960 = vunpack.c.l.b16 %v3845
      %v3961 = vpack.c.b16 %v3913, %v3912
      %v3962 = vpack.c.b16 %v3915, %v3914
      %v3963 = vpack.c.b16 %v3917, %v3916
      %v3964 = vpack.c.b16 %v3919, %v3918
      %v3965 = vpack.c.b16 %v3921, %v3920
      %v3966 = vpack.c.b16 %v3923, %v3922
      %v3967 = vpack.c.b16 %v3925, %v3924
      %v3968 = vpack.c.b16 %v3927, %v3926
      %v3969 = vpack.c.b16 %v3929, %v3928
      %v3970 = vpack.c.b16 %v3931, %v3930
      %v3971 = vpack.c.b16 %v3933, %v3932
      %v3972 = vpack.c.b16 %v3935, %v3934
      %v3973 = vpack.c.b16 %v3937, %v3936
      %v3974 = vpack.c.b16 %v3939, %v3938
      %v3975 = vpack.c.b16 %v3941, %v3940
      %v3976 = vpack.c.b16 %v3943, %v3942
      %v3977 = vpack.c.b16 %v3945, %v3944
      %v3978 = vpack.c.b16 %v3947, %v3946
      %v3979 = vpack.c.b16 %v3949, %v3948
      %v3980 = vpack.c.b16 %v3951, %v3950
      %v3981 = vpack.c.b16 %v3953, %v3952
      %v3982 = vpack.c.b16 %v3955, %v3954
      %v3983 = vpack.c.b16 %v3957, %v3956
      %v3984 = vpack.c.b16 %v3959, %v3958
      %v3985 = vpack.c.b16 %v3960, %v3960
      %v3987 = vshrl.u32 %v3961, 16
      %v3989 = vrot.slane %v3987, 3
      %v3990 = vshll.u32 %v3961, 16
      %v3992 = vrot.slane %v3990, 4
      %v3993 = vor.u32 %v3989, %v3992
      %v3995 = vshrl.u32 %v3962, 16
      %v3997 = vrot.slane %v3995, 3
      %v3998 = vshll.u32 %v3962, 16
      %v4000 = vrot.slane %v3998, 4
      %v4001 = vor.u32 %v3997, %v4000
      %v4002 = vsel %vm1150, %v3993, %v4001
      %v4004 = vshrl.u32 %v3963, 16
      %v4006 = vrot.slane %v4004, 3
      %v4007 = vshll.u32 %v3963, 16
      %v4009 = vrot.slane %v4007, 4
      %v4010 = vor.u32 %v4006, %v4009
      %v4011 = vsel %vm1150, %v4001, %v4010
      %v4013 = vshrl.u32 %v3964, 16
      %v4015 = vrot.slane %v4013, 3
      %v4016 = vshll.u32 %v3964, 16
      %v4018 = vrot.slane %v4016, 4
      %v4019 = vor.u32 %v4015, %v4018
      %v4020 = vsel %vm1150, %v4010, %v4019
      %v4022 = vshrl.u32 %v3965, 16
      %v4024 = vrot.slane %v4022, 3
      %v4025 = vshll.u32 %v3965, 16
      %v4027 = vrot.slane %v4025, 4
      %v4028 = vor.u32 %v4024, %v4027
      %v4029 = vsel %vm1150, %v4019, %v4028
      %v4031 = vshrl.u32 %v3966, 16
      %v4033 = vrot.slane %v4031, 3
      %v4034 = vshll.u32 %v3966, 16
      %v4036 = vrot.slane %v4034, 4
      %v4037 = vor.u32 %v4033, %v4036
      %v4038 = vsel %vm1150, %v4028, %v4037
      %v4040 = vshrl.u32 %v3967, 16
      %v4042 = vrot.slane %v4040, 3
      %v4043 = vshll.u32 %v3967, 16
      %v4045 = vrot.slane %v4043, 4
      %v4046 = vor.u32 %v4042, %v4045
      %v4047 = vsel %vm1150, %v4037, %v4046
      %v4049 = vshrl.u32 %v3968, 16
      %v4051 = vrot.slane %v4049, 3
      %v4052 = vshll.u32 %v3968, 16
      %v4054 = vrot.slane %v4052, 4
      %v4055 = vor.u32 %v4051, %v4054
      %v4056 = vsel %vm1150, %v4046, %v4055
      %v4058 = vshrl.u32 %v3969, 16
      %v4060 = vrot.slane %v4058, 3
      %v4061 = vshll.u32 %v3969, 16
      %v4063 = vrot.slane %v4061, 4
      %v4064 = vor.u32 %v4060, %v4063
      %v4065 = vsel %vm1150, %v4055, %v4064
      %v4067 = vshrl.u32 %v3970, 16
      %v4069 = vrot.slane %v4067, 3
      %v4070 = vshll.u32 %v3970, 16
      %v4072 = vrot.slane %v4070, 4
      %v4073 = vor.u32 %v4069, %v4072
      %v4074 = vsel %vm1150, %v4064, %v4073
      %v4076 = vshrl.u32 %v3971, 16
      %v4078 = vrot.slane %v4076, 3
      %v4079 = vshll.u32 %v3971, 16
      %v4081 = vrot.slane %v4079, 4
      %v4082 = vor.u32 %v4078, %v4081
      %v4083 = vsel %vm1150, %v4073, %v4082
      %v4085 = vshrl.u32 %v3972, 16
      %v4087 = vrot.slane %v4085, 3
      %v4088 = vshll.u32 %v3972, 16
      %v4090 = vrot.slane %v4088, 4
      %v4091 = vor.u32 %v4087, %v4090
      %v4092 = vsel %vm1150, %v4082, %v4091
      %v4094 = vshrl.u32 %v3973, 16
      %v4096 = vrot.slane %v4094, 3
      %v4097 = vshll.u32 %v3973, 16
      %v4099 = vrot.slane %v4097, 4
      %v4100 = vor.u32 %v4096, %v4099
      %v4101 = vsel %vm1150, %v4091, %v4100
      %v4103 = vshrl.u32 %v3974, 16
      %v4105 = vrot.slane %v4103, 3
      %v4106 = vshll.u32 %v3974, 16
      %v4108 = vrot.slane %v4106, 4
      %v4109 = vor.u32 %v4105, %v4108
      %v4110 = vsel %vm1150, %v4100, %v4109
      %v4112 = vshrl.u32 %v3975, 16
      %v4114 = vrot.slane %v4112, 3
      %v4115 = vshll.u32 %v3975, 16
      %v4117 = vrot.slane %v4115, 4
      %v4118 = vor.u32 %v4114, %v4117
      %v4119 = vsel %vm1150, %v4109, %v4118
      %v4121 = vshrl.u32 %v3976, 16
      %v4123 = vrot.slane %v4121, 3
      %v4124 = vshll.u32 %v3976, 16
      %v4126 = vrot.slane %v4124, 4
      %v4127 = vor.u32 %v4123, %v4126
      %v4128 = vsel %vm1150, %v4118, %v4127
      %v4130 = vshrl.u32 %v3977, 16
      %v4132 = vrot.slane %v4130, 3
      %v4133 = vshll.u32 %v3977, 16
      %v4135 = vrot.slane %v4133, 4
      %v4136 = vor.u32 %v4132, %v4135
      %v4137 = vsel %vm1150, %v4127, %v4136
      %v4139 = vshrl.u32 %v3978, 16
      %v4141 = vrot.slane %v4139, 3
      %v4142 = vshll.u32 %v3978, 16
      %v4144 = vrot.slane %v4142, 4
      %v4145 = vor.u32 %v4141, %v4144
      %v4146 = vsel %vm1150, %v4136, %v4145
      %v4148 = vshrl.u32 %v3979, 16
      %v4150 = vrot.slane %v4148, 3
      %v4151 = vshll.u32 %v3979, 16
      %v4153 = vrot.slane %v4151, 4
      %v4154 = vor.u32 %v4150, %v4153
      %v4155 = vsel %vm1150, %v4145, %v4154
      %v4157 = vshrl.u32 %v3980, 16
      %v4159 = vrot.slane %v4157, 3
      %v4160 = vshll.u32 %v3980, 16
      %v4162 = vrot.slane %v4160, 4
      %v4163 = vor.u32 %v4159, %v4162
      %v4164 = vsel %vm1150, %v4154, %v4163
      %v4166 = vshrl.u32 %v3981, 16
      %v4168 = vrot.slane %v4166, 3
      %v4169 = vshll.u32 %v3981, 16
      %v4171 = vrot.slane %v4169, 4
      %v4172 = vor.u32 %v4168, %v4171
      %v4173 = vsel %vm1150, %v4163, %v4172
      %v4175 = vshrl.u32 %v3982, 16
      %v4177 = vrot.slane %v4175, 3
      %v4178 = vshll.u32 %v3982, 16
      %v4180 = vrot.slane %v4178, 4
      %v4181 = vor.u32 %v4177, %v4180
      %v4182 = vsel %vm1150, %v4172, %v4181
      %v4184 = vshrl.u32 %v3983, 16
      %v4186 = vrot.slane %v4184, 3
      %v4187 = vshll.u32 %v3983, 16
      %v4189 = vrot.slane %v4187, 4
      %v4190 = vor.u32 %v4186, %v4189
      %v4191 = vsel %vm1150, %v4181, %v4190
      %v4193 = vshrl.u32 %v3984, 16
      %v4195 = vrot.slane %v4193, 3
      %v4196 = vshll.u32 %v3984, 16
      %v4198 = vrot.slane %v4196, 4
      %v4199 = vor.u32 %v4195, %v4198
      %v4200 = vsel %vm1150, %v4190, %v4199
      %v4202 = vshrl.u32 %v3985, 16
      %v4204 = vrot.slane %v4202, 3
      %v4205 = vshll.u32 %v3985, 16
      %v4207 = vrot.slane %v4205, 4
      %v4208 = vor.u32 %v4204, %v4207
      %v4209 = vsel %vm1150, %v4199, %v4208
      %v4250 = vunpack.c.l.b16 %v3847
      %v4251 = vunpack.c.l.b16 %v3848
      %v4252 = vunpack.c.l.b16 %v3849
      %v4253 = vunpack.c.l.b16 %v3850
      %v4254 = vunpack.c.l.b16 %v3851
      %v4255 = vunpack.c.l.b16 %v3852
      %v4256 = vunpack.c.l.b16 %v3853
      %v4257 = vunpack.c.l.b16 %v3854
      %v4258 = vunpack.c.l.b16 %v3855
      %v4259 = vunpack.c.l.b16 %v3856
      %v4260 = vunpack.c.l.b16 %v3857
      %v4261 = vunpack.c.l.b16 %v3858
      %v4262 = vunpack.c.l.b16 %v3859
      %v4263 = vunpack.c.l.b16 %v3860
      %v4264 = vunpack.c.l.b16 %v3861
      %v4265 = vunpack.c.l.b16 %v3862
      %v4266 = vpack.c.b16 %v4251, %v4250
      %v4267 = vpack.c.b16 %v4253, %v4252
      %v4268 = vpack.c.b16 %v4255, %v4254
      %v4269 = vpack.c.b16 %v4257, %v4256
      %v4270 = vpack.c.b16 %v4259, %v4258
      %v4271 = vpack.c.b16 %v4261, %v4260
      %v4272 = vpack.c.b16 %v4263, %v4262
      %v4273 = vpack.c.b16 %v4265, %v4264
      %4282 = vmatpush.bf16.msra.mxu0 %v4273
      %4283 = vmatpush.bf16.msra.mxu0 %v4272
      %4284 = vmatpush.bf16.msra.mxu0 %v4271
      %4285 = vmatpush.bf16.msra.mxu0 %v4270
      %4286 = vmatpush.bf16.msra.mxu0 %v4269
      %4287 = vmatpush.bf16.msra.mxu0 %v4268
      %4288 = vmatpush.bf16.msra.mxu0 %v4267
      %4289 = vmatpush.bf16.msra.mxu0 %v4266
      %4290 = vmatmul.bf16.gmra.mxu0 %v4002
      %v4291 = vpop.f32.mrf.mxu0
      %v4292 = vadd.f32 0.0, %v4291
      %v4293 = vpop.f32.mrf.mxu0
      %v4294 = vadd.f32 0.0, %v4293
      %4295 = vmatmul.bf16.gmra.mxu0 %v4011
      %v4296 = vpop.f32.mrf.mxu0
      %v4297 = vadd.f32 0.0, %v4296
      %v4298 = vpop.f32.mrf.mxu0
      %v4299 = vadd.f32 0.0, %v4298
      %4300 = vmatmul.bf16.gmra.mxu0 %v4020
      %v4301 = vpop.f32.mrf.mxu0
      %v4302 = vadd.f32 0.0, %v4301
      %v4303 = vpop.f32.mrf.mxu0
      %v4304 = vadd.f32 0.0, %v4303
      %4305 = vmatmul.bf16.gmra.mxu0 %v4029
      %v4306 = vpop.f32.mrf.mxu0
      %v4307 = vadd.f32 0.0, %v4306
      %v4308 = vpop.f32.mrf.mxu0
      %v4309 = vadd.f32 0.0, %v4308
      %4310 = vmatmul.bf16.gmra.mxu0 %v4038
      %v4311 = vpop.f32.mrf.mxu0
      %v4312 = vadd.f32 0.0, %v4311
      %v4313 = vpop.f32.mrf.mxu0
      %v4314 = vadd.f32 0.0, %v4313
      %4315 = vmatmul.bf16.gmra.mxu0 %v4047
      %v4316 = vpop.f32.mrf.mxu0
      %v4317 = vadd.f32 0.0, %v4316
      %v4318 = vpop.f32.mrf.mxu0
      %v4319 = vadd.f32 0.0, %v4318
      %4320 = vmatmul.bf16.gmra.mxu0 %v4056
      %v4321 = vpop.f32.mrf.mxu0
      %v4322 = vadd.f32 0.0, %v4321
      %v4323 = vpop.f32.mrf.mxu0
      %v4324 = vadd.f32 0.0, %v4323
      %4325 = vmatmul.bf16.gmra.mxu0 %v4065
      %v4326 = vpop.f32.mrf.mxu0
      %v4327 = vadd.f32 0.0, %v4326
      %v4328 = vpop.f32.mrf.mxu0
      %v4329 = vadd.f32 0.0, %v4328
      %4330 = vmatmul.bf16.gmra.mxu0 %v4074
      %v4331 = vpop.f32.mrf.mxu0
      %v4332 = vadd.f32 0.0, %v4331
      %v4333 = vpop.f32.mrf.mxu0
      %v4334 = vadd.f32 0.0, %v4333
      %4335 = vmatmul.bf16.gmra.mxu0 %v4083
      %v4336 = vpop.f32.mrf.mxu0
      %v4337 = vadd.f32 0.0, %v4336
      %v4338 = vpop.f32.mrf.mxu0
      %v4339 = vadd.f32 0.0, %v4338
      %4340 = vmatmul.bf16.gmra.mxu0 %v4092
      %v4341 = vpop.f32.mrf.mxu0
      %v4342 = vadd.f32 0.0, %v4341
      %v4343 = vpop.f32.mrf.mxu0
      %v4344 = vadd.f32 0.0, %v4343
      %4345 = vmatmul.bf16.gmra.mxu0 %v4101
      %v4346 = vpop.f32.mrf.mxu0
      %v4347 = vadd.f32 0.0, %v4346
      %v4348 = vpop.f32.mrf.mxu0
      %v4349 = vadd.f32 0.0, %v4348
      %4350 = vmatmul.bf16.gmra.mxu0 %v4110
      %v4351 = vpop.f32.mrf.mxu0
      %v4352 = vadd.f32 0.0, %v4351
      %v4353 = vpop.f32.mrf.mxu0
      %v4354 = vadd.f32 0.0, %v4353
      %4355 = vmatmul.bf16.gmra.mxu0 %v4119
      %v4356 = vpop.f32.mrf.mxu0
      %v4357 = vadd.f32 0.0, %v4356
      %v4358 = vpop.f32.mrf.mxu0
      %v4359 = vadd.f32 0.0, %v4358
      %4360 = vmatmul.bf16.gmra.mxu0 %v4128
      %v4361 = vpop.f32.mrf.mxu0
      %v4362 = vadd.f32 0.0, %v4361
      %v4363 = vpop.f32.mrf.mxu0
      %v4364 = vadd.f32 0.0, %v4363
      %4365 = vmatmul.bf16.gmra.mxu0 %v4137
      %v4366 = vpop.f32.mrf.mxu0
      %v4367 = vadd.f32 0.0, %v4366
      %v4368 = vpop.f32.mrf.mxu0
      %v4369 = vadd.f32 0.0, %v4368
      %4370 = vmatmul.bf16.gmra.mxu0 %v4146
      %v4371 = vpop.f32.mrf.mxu0
      %v4372 = vadd.f32 0.0, %v4371
      %v4373 = vpop.f32.mrf.mxu0
      %v4374 = vadd.f32 0.0, %v4373
      %4375 = vmatmul.bf16.gmra.mxu0 %v4155
      %v4376 = vpop.f32.mrf.mxu0
      %v4377 = vadd.f32 0.0, %v4376
      %v4378 = vpop.f32.mrf.mxu0
      %v4379 = vadd.f32 0.0, %v4378
      %4380 = vmatmul.bf16.gmra.mxu0 %v4164
      %v4381 = vpop.f32.mrf.mxu0
      %v4382 = vadd.f32 0.0, %v4381
      %v4383 = vpop.f32.mrf.mxu0
      %v4384 = vadd.f32 0.0, %v4383
      %4385 = vmatmul.bf16.gmra.mxu0 %v4173
      %v4386 = vpop.f32.mrf.mxu0
      %v4387 = vadd.f32 0.0, %v4386
      %v4388 = vpop.f32.mrf.mxu0
      %v4389 = vadd.f32 0.0, %v4388
      %4390 = vmatmul.bf16.gmra.mxu0 %v4182
      %v4391 = vpop.f32.mrf.mxu0
      %v4392 = vadd.f32 0.0, %v4391
      %v4393 = vpop.f32.mrf.mxu0
      %v4394 = vadd.f32 0.0, %v4393
      %4395 = vmatmul.bf16.gmra.mxu0 %v4191
      %v4396 = vpop.f32.mrf.mxu0
      %v4397 = vadd.f32 0.0, %v4396
      %v4398 = vpop.f32.mrf.mxu0
      %v4399 = vadd.f32 0.0, %v4398
      %4400 = vmatmul.bf16.gmra.mxu0 %v4200
      %v4401 = vpop.f32.mrf.mxu0
      %v4402 = vadd.f32 0.0, %v4401
      %v4403 = vpop.f32.mrf.mxu0
      %v4404 = vadd.f32 0.0, %v4403
      %4405 = vmatmul.bf16.gmra.mxu0 %v4209
      %v4406 = vpop.f32.mrf.mxu0
      %v4407 = vadd.f32 0.0, %v4406
      %v4408 = vpop.f32.mrf.mxu0
      %v4409 = vadd.f32 0.0, %v4408
      %4410 = vdwg.mxu0
      %v4411 = vadd.f32 %v3749, %v4292
      %v4412 = vadd.f32 %v3750, %v4294
      %v4413 = vadd.f32 %v3751, %v4297
      %v4414 = vadd.f32 %v3752, %v4299
      %v4415 = vadd.f32 %v3753, %v4302
      %v4416 = vadd.f32 %v3754, %v4304
      %v4417 = vadd.f32 %v3755, %v4307
      %v4418 = vadd.f32 %v3756, %v4309
      %v4419 = vadd.f32 %v3757, %v4312
      %v4420 = vadd.f32 %v3758, %v4314
      %v4421 = vadd.f32 %v3759, %v4317
      %v4422 = vadd.f32 %v3760, %v4319
      %v4423 = vadd.f32 %v3761, %v4322
      %v4424 = vadd.f32 %v3762, %v4324
      %v4425 = vadd.f32 %v3763, %v4327
      %v4426 = vadd.f32 %v3764, %v4329
      %v4427 = vadd.f32 %v3765, %v4332
      %v4428 = vadd.f32 %v3766, %v4334
      %v4429 = vadd.f32 %v3767, %v4337
      %v4430 = vadd.f32 %v3768, %v4339
      %v4431 = vadd.f32 %v3769, %v4342
      %v4432 = vadd.f32 %v3770, %v4344
      %v4433 = vadd.f32 %v3771, %v4347
      %v4434 = vadd.f32 %v3772, %v4349
      %v4435 = vadd.f32 %v3773, %v4352
      %v4436 = vadd.f32 %v3774, %v4354
      %v4437 = vadd.f32 %v3775, %v4357
      %v4438 = vadd.f32 %v3776, %v4359
      %v4439 = vadd.f32 %v3777, %v4362
      %v4440 = vadd.f32 %v3778, %v4364
      %v4441 = vadd.f32 %v3779, %v4367
      %v4442 = vadd.f32 %v3780, %v4369
      %v4443 = vadd.f32 %v3781, %v4372
      %v4444 = vadd.f32 %v3782, %v4374
      %v4445 = vadd.f32 %v3783, %v4377
      %v4446 = vadd.f32 %v3784, %v4379
      %v4447 = vadd.f32 %v3785, %v4382
      %v4448 = vadd.f32 %v3786, %v4384
      %v4449 = vadd.f32 %v3787, %v4387
      %v4450 = vadd.f32 %v3788, %v4389
      %v4451 = vadd.f32 %v3789, %v4392
      %v4452 = vadd.f32 %v3790, %v4394
      %v4453 = vadd.f32 %v3791, %v4397
      %v4454 = vadd.f32 %v3792, %v4399
      %v4455 = vadd.f32 %v3793, %v4402
      %v4456 = vadd.f32 %v3794, %v4404
      %v4457 = vadd.f32 %v3795, %v4407
      %v4458 = vadd.f32 %v3796, %v4409
      %s4459 = scalar_lea.vmem %s4, 448
      %v4460 = vld [vmem:[%s4459] sm:$0xf]
      %v4461 = vld [vmem:[%s4459 + $0x4] sm:$0xf]
      %v4462 = vld [vmem:[%s4459 + $0x8] sm:$0xf]
      %v4463 = vld [vmem:[%s4459 + $0xc] sm:$0xf]
      %v4464 = vld [vmem:[%s4459 + $0x10] sm:$0xf]
      %v4465 = vld [vmem:[%s4459 + $0x14] sm:$0xf]
      %v4466 = vld [vmem:[%s4459 + $0x18] sm:$0xf]
      %v4467 = vld [vmem:[%s4459 + $0x1c] sm:$0xf]
      %v4468 = vld [vmem:[%s4459 + $0x20] sm:$0xf]
      %v4469 = vld [vmem:[%s4459 + $0x24] sm:$0xf]
      %v4470 = vld [vmem:[%s4459 + $0x28] sm:$0xf]
      %v4471 = vld [vmem:[%s4459 + $0x2c] sm:$0xf]
      %v4472 = vld [vmem:[%s4459 + $0x30] sm:$0xf]
      %v4473 = vld [vmem:[%s4459 + $0x34] sm:$0xf]
      %v4474 = vld [vmem:[%s4459 + $0x38] sm:$0xf]
      %v4475 = vld [vmem:[%s4459 + $0x3c] sm:$0xf]
      %v4476 = vpack.c.b16 %v3914, %v3913
      %v4477 = vpack.c.b16 %v3916, %v3915
      %v4478 = vpack.c.b16 %v3918, %v3917
      %v4479 = vpack.c.b16 %v3920, %v3919
      %v4480 = vpack.c.b16 %v3922, %v3921
      %v4481 = vpack.c.b16 %v3924, %v3923
      %v4482 = vpack.c.b16 %v3926, %v3925
      %v4483 = vpack.c.b16 %v3928, %v3927
      %v4484 = vpack.c.b16 %v3930, %v3929
      %v4485 = vpack.c.b16 %v3932, %v3931
      %v4486 = vpack.c.b16 %v3934, %v3933
      %v4487 = vpack.c.b16 %v3936, %v3935
      %v4488 = vpack.c.b16 %v3938, %v3937
      %v4489 = vpack.c.b16 %v3940, %v3939
      %v4490 = vpack.c.b16 %v3942, %v3941
      %v4491 = vpack.c.b16 %v3944, %v3943
      %v4492 = vpack.c.b16 %v3946, %v3945
      %v4493 = vpack.c.b16 %v3948, %v3947
      %v4494 = vpack.c.b16 %v3950, %v3949
      %v4495 = vpack.c.b16 %v3952, %v3951
      %v4496 = vpack.c.b16 %v3954, %v3953
      %v4497 = vpack.c.b16 %v3956, %v3955
      %v4498 = vpack.c.b16 %v3958, %v3957
      %v4499 = vpack.c.b16 %v3960, %v3959
      %v4540 = vunpack.c.l.b16 %v4460
      %v4541 = vunpack.c.l.b16 %v4461
      %v4542 = vunpack.c.l.b16 %v4462
      %v4543 = vunpack.c.l.b16 %v4463
      %v4544 = vunpack.c.l.b16 %v4464
      %v4545 = vunpack.c.l.b16 %v4465
      %v4546 = vunpack.c.l.b16 %v4466
      %v4547 = vunpack.c.l.b16 %v4467
      %v4548 = vunpack.c.l.b16 %v4468
      %v4549 = vunpack.c.l.b16 %v4469
      %v4550 = vunpack.c.l.b16 %v4470
      %v4551 = vunpack.c.l.b16 %v4471
      %v4552 = vunpack.c.l.b16 %v4472
      %v4553 = vunpack.c.l.b16 %v4473
      %v4554 = vunpack.c.l.b16 %v4474
      %v4555 = vunpack.c.l.b16 %v4475
      %v4556 = vpack.c.b16 %v4541, %v4540
      %v4557 = vpack.c.b16 %v4543, %v4542
      %v4558 = vpack.c.b16 %v4545, %v4544
      %v4559 = vpack.c.b16 %v4547, %v4546
      %v4560 = vpack.c.b16 %v4549, %v4548
      %v4561 = vpack.c.b16 %v4551, %v4550
      %v4562 = vpack.c.b16 %v4553, %v4552
      %v4563 = vpack.c.b16 %v4555, %v4554
      %4572 = vmatpush.bf16.msra.mxu0 %v4563
      %4573 = vmatpush.bf16.msra.mxu0 %v4562
      %4574 = vmatpush.bf16.msra.mxu0 %v4561
      %4575 = vmatpush.bf16.msra.mxu0 %v4560
      %4576 = vmatpush.bf16.msra.mxu0 %v4559
      %4577 = vmatpush.bf16.msra.mxu0 %v4558
      %4578 = vmatpush.bf16.msra.mxu0 %v4557
      %4579 = vmatpush.bf16.msra.mxu0 %v4556
      %4580 = vmatmul.bf16.gmra.mxu0 %v4476
      %v4581 = vpop.f32.mrf.mxu0
      %v4582 = vadd.f32 0.0, %v4581
      %v4583 = vpop.f32.mrf.mxu0
      %v4584 = vadd.f32 0.0, %v4583
      %4585 = vmatmul.bf16.gmra.mxu0 %v4477
      %v4586 = vpop.f32.mrf.mxu0
      %v4587 = vadd.f32 0.0, %v4586
      %v4588 = vpop.f32.mrf.mxu0
      %v4589 = vadd.f32 0.0, %v4588
      %4590 = vmatmul.bf16.gmra.mxu0 %v4478
      %v4591 = vpop.f32.mrf.mxu0
      %v4592 = vadd.f32 0.0, %v4591
      %v4593 = vpop.f32.mrf.mxu0
      %v4594 = vadd.f32 0.0, %v4593
      %4595 = vmatmul.bf16.gmra.mxu0 %v4479
      %v4596 = vpop.f32.mrf.mxu0
      %v4597 = vadd.f32 0.0, %v4596
      %v4598 = vpop.f32.mrf.mxu0
      %v4599 = vadd.f32 0.0, %v4598
      %4600 = vmatmul.bf16.gmra.mxu0 %v4480
      %v4601 = vpop.f32.mrf.mxu0
      %v4602 = vadd.f32 0.0, %v4601
      %v4603 = vpop.f32.mrf.mxu0
      %v4604 = vadd.f32 0.0, %v4603
      %4605 = vmatmul.bf16.gmra.mxu0 %v4481
      %v4606 = vpop.f32.mrf.mxu0
      %v4607 = vadd.f32 0.0, %v4606
      %v4608 = vpop.f32.mrf.mxu0
      %v4609 = vadd.f32 0.0, %v4608
      %4610 = vmatmul.bf16.gmra.mxu0 %v4482
      %v4611 = vpop.f32.mrf.mxu0
      %v4612 = vadd.f32 0.0, %v4611
      %v4613 = vpop.f32.mrf.mxu0
      %v4614 = vadd.f32 0.0, %v4613
      %4615 = vmatmul.bf16.gmra.mxu0 %v4483
      %v4616 = vpop.f32.mrf.mxu0
      %v4617 = vadd.f32 0.0, %v4616
      %v4618 = vpop.f32.mrf.mxu0
      %v4619 = vadd.f32 0.0, %v4618
      %4620 = vmatmul.bf16.gmra.mxu0 %v4484
      %v4621 = vpop.f32.mrf.mxu0
      %v4622 = vadd.f32 0.0, %v4621
      %v4623 = vpop.f32.mrf.mxu0
      %v4624 = vadd.f32 0.0, %v4623
      %4625 = vmatmul.bf16.gmra.mxu0 %v4485
      %v4626 = vpop.f32.mrf.mxu0
      %v4627 = vadd.f32 0.0, %v4626
      %v4628 = vpop.f32.mrf.mxu0
      %v4629 = vadd.f32 0.0, %v4628
      %4630 = vmatmul.bf16.gmra.mxu0 %v4486
      %v4631 = vpop.f32.mrf.mxu0
      %v4632 = vadd.f32 0.0, %v4631
      %v4633 = vpop.f32.mrf.mxu0
      %v4634 = vadd.f32 0.0, %v4633
      %4635 = vmatmul.bf16.gmra.mxu0 %v4487
      %v4636 = vpop.f32.mrf.mxu0
      %v4637 = vadd.f32 0.0, %v4636
      %v4638 = vpop.f32.mrf.mxu0
      %v4639 = vadd.f32 0.0, %v4638
      %4640 = vmatmul.bf16.gmra.mxu0 %v4488
      %v4641 = vpop.f32.mrf.mxu0
      %v4642 = vadd.f32 0.0, %v4641
      %v4643 = vpop.f32.mrf.mxu0
      %v4644 = vadd.f32 0.0, %v4643
      %4645 = vmatmul.bf16.gmra.mxu0 %v4489
      %v4646 = vpop.f32.mrf.mxu0
      %v4647 = vadd.f32 0.0, %v4646
      %v4648 = vpop.f32.mrf.mxu0
      %v4649 = vadd.f32 0.0, %v4648
      %4650 = vmatmul.bf16.gmra.mxu0 %v4490
      %v4651 = vpop.f32.mrf.mxu0
      %v4652 = vadd.f32 0.0, %v4651
      %v4653 = vpop.f32.mrf.mxu0
      %v4654 = vadd.f32 0.0, %v4653
      %4655 = vmatmul.bf16.gmra.mxu0 %v4491
      %v4656 = vpop.f32.mrf.mxu0
      %v4657 = vadd.f32 0.0, %v4656
      %v4658 = vpop.f32.mrf.mxu0
      %v4659 = vadd.f32 0.0, %v4658
      %4660 = vmatmul.bf16.gmra.mxu0 %v4492
      %v4661 = vpop.f32.mrf.mxu0
      %v4662 = vadd.f32 0.0, %v4661
      %v4663 = vpop.f32.mrf.mxu0
      %v4664 = vadd.f32 0.0, %v4663
      %4665 = vmatmul.bf16.gmra.mxu0 %v4493
      %v4666 = vpop.f32.mrf.mxu0
      %v4667 = vadd.f32 0.0, %v4666
      %v4668 = vpop.f32.mrf.mxu0
      %v4669 = vadd.f32 0.0, %v4668
      %4670 = vmatmul.bf16.gmra.mxu0 %v4494
      %v4671 = vpop.f32.mrf.mxu0
      %v4672 = vadd.f32 0.0, %v4671
      %v4673 = vpop.f32.mrf.mxu0
      %v4674 = vadd.f32 0.0, %v4673
      %4675 = vmatmul.bf16.gmra.mxu0 %v4495
      %v4676 = vpop.f32.mrf.mxu0
      %v4677 = vadd.f32 0.0, %v4676
      %v4678 = vpop.f32.mrf.mxu0
      %v4679 = vadd.f32 0.0, %v4678
      %4680 = vmatmul.bf16.gmra.mxu0 %v4496
      %v4681 = vpop.f32.mrf.mxu0
      %v4682 = vadd.f32 0.0, %v4681
      %v4683 = vpop.f32.mrf.mxu0
      %v4684 = vadd.f32 0.0, %v4683
      %4685 = vmatmul.bf16.gmra.mxu0 %v4497
      %v4686 = vpop.f32.mrf.mxu0
      %v4687 = vadd.f32 0.0, %v4686
      %v4688 = vpop.f32.mrf.mxu0
      %v4689 = vadd.f32 0.0, %v4688
      %4690 = vmatmul.bf16.gmra.mxu0 %v4498
      %v4691 = vpop.f32.mrf.mxu0
      %v4692 = vadd.f32 0.0, %v4691
      %v4693 = vpop.f32.mrf.mxu0
      %v4694 = vadd.f32 0.0, %v4693
      %4695 = vmatmul.bf16.gmra.mxu0 %v4499
      %v4696 = vpop.f32.mrf.mxu0
      %v4697 = vadd.f32 0.0, %v4696
      %v4698 = vpop.f32.mrf.mxu0
      %v4699 = vadd.f32 0.0, %v4698
      %4700 = vdwg.mxu0
      %v4701 = vadd.f32 %v4411, %v4582
      %v4702 = vadd.f32 %v4412, %v4584
      %v4703 = vadd.f32 %v4413, %v4587
      %v4704 = vadd.f32 %v4414, %v4589
      %v4705 = vadd.f32 %v4415, %v4592
      %v4706 = vadd.f32 %v4416, %v4594
      %v4707 = vadd.f32 %v4417, %v4597
      %v4708 = vadd.f32 %v4418, %v4599
      %v4709 = vadd.f32 %v4419, %v4602
      %v4710 = vadd.f32 %v4420, %v4604
      %v4711 = vadd.f32 %v4421, %v4607
      %v4712 = vadd.f32 %v4422, %v4609
      %v4713 = vadd.f32 %v4423, %v4612
      %v4714 = vadd.f32 %v4424, %v4614
      %v4715 = vadd.f32 %v4425, %v4617
      %v4716 = vadd.f32 %v4426, %v4619
      %v4717 = vadd.f32 %v4427, %v4622
      %v4718 = vadd.f32 %v4428, %v4624
      %v4719 = vadd.f32 %v4429, %v4627
      %v4720 = vadd.f32 %v4430, %v4629
      %v4721 = vadd.f32 %v4431, %v4632
      %v4722 = vadd.f32 %v4432, %v4634
      %v4723 = vadd.f32 %v4433, %v4637
      %v4724 = vadd.f32 %v4434, %v4639
      %v4725 = vadd.f32 %v4435, %v4642
      %v4726 = vadd.f32 %v4436, %v4644
      %v4727 = vadd.f32 %v4437, %v4647
      %v4728 = vadd.f32 %v4438, %v4649
      %v4729 = vadd.f32 %v4439, %v4652
      %v4730 = vadd.f32 %v4440, %v4654
      %v4731 = vadd.f32 %v4441, %v4657
      %v4732 = vadd.f32 %v4442, %v4659
      %v4733 = vadd.f32 %v4443, %v4662
      %v4734 = vadd.f32 %v4444, %v4664
      %v4735 = vadd.f32 %v4445, %v4667
      %v4736 = vadd.f32 %v4446, %v4669
      %v4737 = vadd.f32 %v4447, %v4672
      %v4738 = vadd.f32 %v4448, %v4674
      %v4739 = vadd.f32 %v4449, %v4677
      %v4740 = vadd.f32 %v4450, %v4679
      %v4741 = vadd.f32 %v4451, %v4682
      %v4742 = vadd.f32 %v4452, %v4684
      %v4743 = vadd.f32 %v4453, %v4687
      %v4744 = vadd.f32 %v4454, %v4689
      %v4745 = vadd.f32 %v4455, %v4692
      %v4746 = vadd.f32 %v4456, %v4694
      %v4747 = vadd.f32 %v4457, %v4697
      %v4748 = vadd.f32 %v4458, %v4699
      %v4749 = vld [vmem:[#allocation2 + $0x24] sm:$0xf]
      %v4750 = vld [vmem:[#allocation2 + $0x28] sm:$0xf]
      %v4751 = vld [vmem:[#allocation2 + $0x2c] sm:$0xf]
      %v4752 = vld [vmem:[#allocation2 + $0x30] sm:$0xf]
      %v4753 = vld [vmem:[#allocation2 + $0x34] sm:$0xf]
      %v4754 = vld [vmem:[#allocation2 + $0x38] sm:$0xf]
      %v4755 = vld [vmem:[#allocation2 + $0x3c] sm:$0xf]
      %v4756 = vld [vmem:[#allocation2 + $0x40] sm:$0xf]
      %v4757 = vld [vmem:[#allocation2 + $0x44] sm:$0xf]
      %v4758 = vld [vmem:[#allocation2 + $0x48] sm:$0xf]
      %v4759 = vld [vmem:[#allocation2 + $0x4c] sm:$0xf]
      %v4760 = vld [vmem:[#allocation2 + $0x50] sm:$0xf]
      %v4761 = vld [vmem:[#allocation2 + $0x54] sm:$0xf]
      %v4762 = vld [vmem:[#allocation2 + $0x58] sm:$0xf]
      %v4763 = vld [vmem:[#allocation2 + $0x5c] sm:$0xf]
      %v4764 = vld [vmem:[#allocation2 + $0x60] sm:$0xf]
      %v4765 = vld [vmem:[#allocation2 + $0x64] sm:$0xf]
      %v4766 = vld [vmem:[#allocation2 + $0x68] sm:$0xf]
      %v4767 = vld [vmem:[#allocation2 + $0x6c] sm:$0xf]
      %v4768 = vld [vmem:[#allocation2 + $0x70] sm:$0xf]
      %v4769 = vld [vmem:[#allocation2 + $0x74] sm:$0xf]
      %v4770 = vld [vmem:[#allocation2 + $0x78] sm:$0xf]
      %v4771 = vld [vmem:[#allocation2 + $0x7c] sm:$0xf]
      %v4772 = vld [vmem:[#allocation2 + $0x80] sm:$0xf]
      %v4773 = vld [vmem:[#allocation2 + $0x84] sm:$0xf]
      %v4774 = vld [vmem:[#allocation2 + $0x88] sm:$0xf]
      %v4775 = vld [vmem:[#allocation2 + $0x8c] sm:$0xf]
      %v4776 = vld [vmem:[#allocation2 + $0x90] sm:$0xf]
      %v4777 = vld [vmem:[#allocation2 + $0x94] sm:$0xf]
      %v4778 = vld [vmem:[#allocation2 + $0x98] sm:$0xf]
      %v4779 = vld [vmem:[#allocation2 + $0x9c] sm:$0xf]
      %v4780 = vld [vmem:[#allocation2 + $0xa0] sm:$0xf]
      %v4781 = vld [vmem:[#allocation2 + $0xa4] sm:$0xf]
      %v4782 = vld [vmem:[#allocation2 + $0xa8] sm:$0xf]
      %v4783 = vld [vmem:[#allocation2 + $0xac] sm:$0xf]
      %v4784 = vld [vmem:[#allocation2 + $0xb0] sm:$0xf]
      %v4785 = vld [vmem:[#allocation2 + $0xb4] sm:$0xf]
      %v4786 = vld [vmem:[#allocation2 + $0xb8] sm:$0xf]
      %v4787 = vld [vmem:[#allocation2 + $0xbc] sm:$0xf]
      %v4788 = vld [vmem:[#allocation2 + $0xc0] sm:$0xf]
      %v4789 = vld [vmem:[#allocation2 + $0xc4] sm:$0xf]
      %v4790 = vld [vmem:[#allocation2 + $0xc8] sm:$0xf]
      %v4791 = vld [vmem:[#allocation2 + $0xcc] sm:$0xf]
      %v4792 = vld [vmem:[#allocation2 + $0xd0] sm:$0xf]
      %v4793 = vld [vmem:[#allocation2 + $0xd4] sm:$0xf]
      %v4794 = vld [vmem:[#allocation2 + $0xd8] sm:$0xf]
      %v4795 = vld [vmem:[#allocation2 + $0xdc] sm:$0xf]
      %v4796 = vld [vmem:[#allocation2 + $0xe0] sm:$0xf]
      %v4797 = vld [vmem:[#allocation2 + $0xe4] sm:$0x1]
      %s4798 = scalar_lea.vmem %s4, 512
      %v4799 = vld [vmem:[%s4798] sm:$0xf]
      %v4800 = vld [vmem:[%s4798 + $0x4] sm:$0xf]
      %v4801 = vld [vmem:[%s4798 + $0x8] sm:$0xf]
      %v4802 = vld [vmem:[%s4798 + $0xc] sm:$0xf]
      %v4803 = vld [vmem:[%s4798 + $0x10] sm:$0xf]
      %v4804 = vld [vmem:[%s4798 + $0x14] sm:$0xf]
      %v4805 = vld [vmem:[%s4798 + $0x18] sm:$0xf]
      %v4806 = vld [vmem:[%s4798 + $0x1c] sm:$0xf]
      %v4807 = vld [vmem:[%s4798 + $0x20] sm:$0xf]
      %v4808 = vld [vmem:[%s4798 + $0x24] sm:$0xf]
      %v4809 = vld [vmem:[%s4798 + $0x28] sm:$0xf]
      %v4810 = vld [vmem:[%s4798 + $0x2c] sm:$0xf]
      %v4811 = vld [vmem:[%s4798 + $0x30] sm:$0xf]
      %v4812 = vld [vmem:[%s4798 + $0x34] sm:$0xf]
      %v4813 = vld [vmem:[%s4798 + $0x38] sm:$0xf]
      %v4814 = vld [vmem:[%s4798 + $0x3c] sm:$0xf]
      %v4864 = vunpack.c.l.b16 %v4749
      %v4865 = vunpack.c.l.b16 %v4750
      %v4866 = vunpack.c.l.b16 %v4751
      %v4867 = vunpack.c.l.b16 %v4752
      %v4868 = vunpack.c.l.b16 %v4753
      %v4869 = vunpack.c.l.b16 %v4754
      %v4870 = vunpack.c.l.b16 %v4755
      %v4871 = vunpack.c.l.b16 %v4756
      %v4872 = vunpack.c.l.b16 %v4757
      %v4873 = vunpack.c.l.b16 %v4758
      %v4874 = vunpack.c.l.b16 %v4759
      %v4875 = vunpack.c.l.b16 %v4760
      %v4876 = vunpack.c.l.b16 %v4761
      %v4877 = vunpack.c.l.b16 %v4762
      %v4878 = vunpack.c.l.b16 %v4763
      %v4879 = vunpack.c.l.b16 %v4764
      %v4880 = vunpack.c.l.b16 %v4765
      %v4881 = vunpack.c.l.b16 %v4766
      %v4882 = vunpack.c.l.b16 %v4767
      %v4883 = vunpack.c.l.b16 %v4768
      %v4884 = vunpack.c.l.b16 %v4769
      %v4885 = vunpack.c.l.b16 %v4770
      %v4886 = vunpack.c.l.b16 %v4771
      %v4887 = vunpack.c.l.b16 %v4772
      %v4888 = vunpack.c.l.b16 %v4773
      %v4889 = vunpack.c.l.b16 %v4774
      %v4890 = vunpack.c.l.b16 %v4775
      %v4891 = vunpack.c.l.b16 %v4776
      %v4892 = vunpack.c.l.b16 %v4777
      %v4893 = vunpack.c.l.b16 %v4778
      %v4894 = vunpack.c.l.b16 %v4779
      %v4895 = vunpack.c.l.b16 %v4780
      %v4896 = vunpack.c.l.b16 %v4781
      %v4897 = vunpack.c.l.b16 %v4782
      %v4898 = vunpack.c.l.b16 %v4783
      %v4899 = vunpack.c.l.b16 %v4784
      %v4900 = vunpack.c.l.b16 %v4785
      %v4901 = vunpack.c.l.b16 %v4786
      %v4902 = vunpack.c.l.b16 %v4787
      %v4903 = vunpack.c.l.b16 %v4788
      %v4904 = vunpack.c.l.b16 %v4789
      %v4905 = vunpack.c.l.b16 %v4790
      %v4906 = vunpack.c.l.b16 %v4791
      %v4907 = vunpack.c.l.b16 %v4792
      %v4908 = vunpack.c.l.b16 %v4793
      %v4909 = vunpack.c.l.b16 %v4794
      %v4910 = vunpack.c.l.b16 %v4795
      %v4911 = vunpack.c.l.b16 %v4796
      %v4912 = vunpack.c.l.b16 %v4797
      %v4913 = vpack.c.b16 %v4865, %v4864
      %v4914 = vpack.c.b16 %v4867, %v4866
      %v4915 = vpack.c.b16 %v4869, %v4868
      %v4916 = vpack.c.b16 %v4871, %v4870
      %v4917 = vpack.c.b16 %v4873, %v4872
      %v4918 = vpack.c.b16 %v4875, %v4874
      %v4919 = vpack.c.b16 %v4877, %v4876
      %v4920 = vpack.c.b16 %v4879, %v4878
      %v4921 = vpack.c.b16 %v4881, %v4880
      %v4922 = vpack.c.b16 %v4883, %v4882
      %v4923 = vpack.c.b16 %v4885, %v4884
      %v4924 = vpack.c.b16 %v4887, %v4886
      %v4925 = vpack.c.b16 %v4889, %v4888
      %v4926 = vpack.c.b16 %v4891, %v4890
      %v4927 = vpack.c.b16 %v4893, %v4892
      %v4928 = vpack.c.b16 %v4895, %v4894
      %v4929 = vpack.c.b16 %v4897, %v4896
      %v4930 = vpack.c.b16 %v4899, %v4898
      %v4931 = vpack.c.b16 %v4901, %v4900
      %v4932 = vpack.c.b16 %v4903, %v4902
      %v4933 = vpack.c.b16 %v4905, %v4904
      %v4934 = vpack.c.b16 %v4907, %v4906
      %v4935 = vpack.c.b16 %v4909, %v4908
      %v4936 = vpack.c.b16 %v4911, %v4910
      %v4937 = vpack.c.b16 %v4912, %v4912
      %v4939 = vshrl.u32 %v4913, 16
      %v4941 = vshll.u32 %v4913, 16
      %v4943 = vrot.slane %v4941, 1
      %v4944 = vor.u32 %v4939, %v4943
      %v4946 = vshll.u32 %v4914, 16
      %v4948 = vrot.slane %v4946, 1
      %v4949 = vsel %vm1765, %v4944, %v4948
      %v4950 = vshrl.u32 %v4914, 16
      %v4952 = vor.u32 %v4950, %v4948
      %v4954 = vshll.u32 %v4915, 16
      %v4956 = vrot.slane %v4954, 1
      %v4957 = vsel %vm1765, %v4952, %v4956
      %v4958 = vshrl.u32 %v4915, 16
      %v4960 = vor.u32 %v4958, %v4956
      %v4962 = vshll.u32 %v4916, 16
      %v4964 = vrot.slane %v4962, 1
      %v4965 = vsel %vm1765, %v4960, %v4964
      %v4966 = vshrl.u32 %v4916, 16
      %v4968 = vor.u32 %v4966, %v4964
      %v4970 = vshll.u32 %v4917, 16
      %v4972 = vrot.slane %v4970, 1
      %v4973 = vsel %vm1765, %v4968, %v4972
      %v4974 = vshrl.u32 %v4917, 16
      %v4976 = vor.u32 %v4974, %v4972
      %v4978 = vshll.u32 %v4918, 16
      %v4980 = vrot.slane %v4978, 1
      %v4981 = vsel %vm1765, %v4976, %v4980
      %v4982 = vshrl.u32 %v4918, 16
      %v4984 = vor.u32 %v4982, %v4980
      %v4986 = vshll.u32 %v4919, 16
      %v4988 = vrot.slane %v4986, 1
      %v4989 = vsel %vm1765, %v4984, %v4988
      %v4990 = vshrl.u32 %v4919, 16
      %v4992 = vor.u32 %v4990, %v4988
      %v4994 = vshll.u32 %v4920, 16
      %v4996 = vrot.slane %v4994, 1
      %v4997 = vsel %vm1765, %v4992, %v4996
      %v4998 = vshrl.u32 %v4920, 16
      %v5000 = vor.u32 %v4998, %v4996
      %v5002 = vshll.u32 %v4921, 16
      %v5004 = vrot.slane %v5002, 1
      %v5005 = vsel %vm1765, %v5000, %v5004
      %v5006 = vshrl.u32 %v4921, 16
      %v5008 = vor.u32 %v5006, %v5004
      %v5010 = vshll.u32 %v4922, 16
      %v5012 = vrot.slane %v5010, 1
      %v5013 = vsel %vm1765, %v5008, %v5012
      %v5014 = vshrl.u32 %v4922, 16
      %v5016 = vor.u32 %v5014, %v5012
      %v5018 = vshll.u32 %v4923, 16
      %v5020 = vrot.slane %v5018, 1
      %v5021 = vsel %vm1765, %v5016, %v5020
      %v5022 = vshrl.u32 %v4923, 16
      %v5024 = vor.u32 %v5022, %v5020
      %v5026 = vshll.u32 %v4924, 16
      %v5028 = vrot.slane %v5026, 1
      %v5029 = vsel %vm1765, %v5024, %v5028
      %v5030 = vshrl.u32 %v4924, 16
      %v5032 = vor.u32 %v5030, %v5028
      %v5034 = vshll.u32 %v4925, 16
      %v5036 = vrot.slane %v5034, 1
      %v5037 = vsel %vm1765, %v5032, %v5036
      %v5038 = vshrl.u32 %v4925, 16
      %v5040 = vor.u32 %v5038, %v5036
      %v5042 = vshll.u32 %v4926, 16
      %v5044 = vrot.slane %v5042, 1
      %v5045 = vsel %vm1765, %v5040, %v5044
      %v5046 = vshrl.u32 %v4926, 16
      %v5048 = vor.u32 %v5046, %v5044
      %v5050 = vshll.u32 %v4927, 16
      %v5052 = vrot.slane %v5050, 1
      %v5053 = vsel %vm1765, %v5048, %v5052
      %v5054 = vshrl.u32 %v4927, 16
      %v5056 = vor.u32 %v5054, %v5052
      %v5058 = vshll.u32 %v4928, 16
      %v5060 = vrot.slane %v5058, 1
      %v5061 = vsel %vm1765, %v5056, %v5060
      %v5062 = vshrl.u32 %v4928, 16
      %v5064 = vor.u32 %v5062, %v5060
      %v5066 = vshll.u32 %v4929, 16
      %v5068 = vrot.slane %v5066, 1
      %v5069 = vsel %vm1765, %v5064, %v5068
      %v5070 = vshrl.u32 %v4929, 16
      %v5072 = vor.u32 %v5070, %v5068
      %v5074 = vshll.u32 %v4930, 16
      %v5076 = vrot.slane %v5074, 1
      %v5077 = vsel %vm1765, %v5072, %v5076
      %v5078 = vshrl.u32 %v4930, 16
      %v5080 = vor.u32 %v5078, %v5076
      %v5082 = vshll.u32 %v4931, 16
      %v5084 = vrot.slane %v5082, 1
      %v5085 = vsel %vm1765, %v5080, %v5084
      %v5086 = vshrl.u32 %v4931, 16
      %v5088 = vor.u32 %v5086, %v5084
      %v5090 = vshll.u32 %v4932, 16
      %v5092 = vrot.slane %v5090, 1
      %v5093 = vsel %vm1765, %v5088, %v5092
      %v5094 = vshrl.u32 %v4932, 16
      %v5096 = vor.u32 %v5094, %v5092
      %v5098 = vshll.u32 %v4933, 16
      %v5100 = vrot.slane %v5098, 1
      %v5101 = vsel %vm1765, %v5096, %v5100
      %v5102 = vshrl.u32 %v4933, 16
      %v5104 = vor.u32 %v5102, %v5100
      %v5106 = vshll.u32 %v4934, 16
      %v5108 = vrot.slane %v5106, 1
      %v5109 = vsel %vm1765, %v5104, %v5108
      %v5110 = vshrl.u32 %v4934, 16
      %v5112 = vor.u32 %v5110, %v5108
      %v5114 = vshll.u32 %v4935, 16
      %v5116 = vrot.slane %v5114, 1
      %v5117 = vsel %vm1765, %v5112, %v5116
      %v5118 = vshrl.u32 %v4935, 16
      %v5120 = vor.u32 %v5118, %v5116
      %v5122 = vshll.u32 %v4936, 16
      %v5124 = vrot.slane %v5122, 1
      %v5125 = vsel %vm1765, %v5120, %v5124
      %v5126 = vshrl.u32 %v4936, 16
      %v5128 = vor.u32 %v5126, %v5124
      %v5130 = vshll.u32 %v4937, 16
      %v5132 = vrot.slane %v5130, 1
      %v5133 = vsel %vm1765, %v5128, %v5132
      %v5174 = vunpack.c.l.b16 %v4799
      %v5175 = vunpack.c.l.b16 %v4800
      %v5176 = vunpack.c.l.b16 %v4801
      %v5177 = vunpack.c.l.b16 %v4802
      %v5178 = vunpack.c.l.b16 %v4803
      %v5179 = vunpack.c.l.b16 %v4804
      %v5180 = vunpack.c.l.b16 %v4805
      %v5181 = vunpack.c.l.b16 %v4806
      %v5182 = vunpack.c.l.b16 %v4807
      %v5183 = vunpack.c.l.b16 %v4808
      %v5184 = vunpack.c.l.b16 %v4809
      %v5185 = vunpack.c.l.b16 %v4810
      %v5186 = vunpack.c.l.b16 %v4811
      %v5187 = vunpack.c.l.b16 %v4812
      %v5188 = vunpack.c.l.b16 %v4813
      %v5189 = vunpack.c.l.b16 %v4814
      %v5190 = vpack.c.b16 %v5175, %v5174
      %v5191 = vpack.c.b16 %v5177, %v5176
      %v5192 = vpack.c.b16 %v5179, %v5178
      %v5193 = vpack.c.b16 %v5181, %v5180
      %v5194 = vpack.c.b16 %v5183, %v5182
      %v5195 = vpack.c.b16 %v5185, %v5184
      %v5196 = vpack.c.b16 %v5187, %v5186
      %v5197 = vpack.c.b16 %v5189, %v5188
      %5206 = vmatpush.bf16.msra.mxu0 %v5197
      %5207 = vmatpush.bf16.msra.mxu0 %v5196
      %5208 = vmatpush.bf16.msra.mxu0 %v5195
      %5209 = vmatpush.bf16.msra.mxu0 %v5194
      %5210 = vmatpush.bf16.msra.mxu0 %v5193
      %5211 = vmatpush.bf16.msra.mxu0 %v5192
      %5212 = vmatpush.bf16.msra.mxu0 %v5191
      %5213 = vmatpush.bf16.msra.mxu0 %v5190
      %5214 = vmatmul.bf16.gmra.mxu0 %v4949
      %v5215 = vpop.f32.mrf.mxu0
      %v5216 = vadd.f32 0.0, %v5215
      %v5217 = vpop.f32.mrf.mxu0
      %v5218 = vadd.f32 0.0, %v5217
      %5219 = vmatmul.bf16.gmra.mxu0 %v4957
      %v5220 = vpop.f32.mrf.mxu0
      %v5221 = vadd.f32 0.0, %v5220
      %v5222 = vpop.f32.mrf.mxu0
      %v5223 = vadd.f32 0.0, %v5222
      %5224 = vmatmul.bf16.gmra.mxu0 %v4965
      %v5225 = vpop.f32.mrf.mxu0
      %v5226 = vadd.f32 0.0, %v5225
      %v5227 = vpop.f32.mrf.mxu0
      %v5228 = vadd.f32 0.0, %v5227
      %5229 = vmatmul.bf16.gmra.mxu0 %v4973
      %v5230 = vpop.f32.mrf.mxu0
      %v5231 = vadd.f32 0.0, %v5230
      %v5232 = vpop.f32.mrf.mxu0
      %v5233 = vadd.f32 0.0, %v5232
      %5234 = vmatmul.bf16.gmra.mxu0 %v4981
      %v5235 = vpop.f32.mrf.mxu0
      %v5236 = vadd.f32 0.0, %v5235
      %v5237 = vpop.f32.mrf.mxu0
      %v5238 = vadd.f32 0.0, %v5237
      %5239 = vmatmul.bf16.gmra.mxu0 %v4989
      %v5240 = vpop.f32.mrf.mxu0
      %v5241 = vadd.f32 0.0, %v5240
      %v5242 = vpop.f32.mrf.mxu0
      %v5243 = vadd.f32 0.0, %v5242
      %5244 = vmatmul.bf16.gmra.mxu0 %v4997
      %v5245 = vpop.f32.mrf.mxu0
      %v5246 = vadd.f32 0.0, %v5245
      %v5247 = vpop.f32.mrf.mxu0
      %v5248 = vadd.f32 0.0, %v5247
      %5249 = vmatmul.bf16.gmra.mxu0 %v5005
      %v5250 = vpop.f32.mrf.mxu0
      %v5251 = vadd.f32 0.0, %v5250
      %v5252 = vpop.f32.mrf.mxu0
      %v5253 = vadd.f32 0.0, %v5252
      %5254 = vmatmul.bf16.gmra.mxu0 %v5013
      %v5255 = vpop.f32.mrf.mxu0
      %v5256 = vadd.f32 0.0, %v5255
      %v5257 = vpop.f32.mrf.mxu0
      %v5258 = vadd.f32 0.0, %v5257
      %5259 = vmatmul.bf16.gmra.mxu0 %v5021
      %v5260 = vpop.f32.mrf.mxu0
      %v5261 = vadd.f32 0.0, %v5260
      %v5262 = vpop.f32.mrf.mxu0
      %v5263 = vadd.f32 0.0, %v5262
      %5264 = vmatmul.bf16.gmra.mxu0 %v5029
      %v5265 = vpop.f32.mrf.mxu0
      %v5266 = vadd.f32 0.0, %v5265
      %v5267 = vpop.f32.mrf.mxu0
      %v5268 = vadd.f32 0.0, %v5267
      %5269 = vmatmul.bf16.gmra.mxu0 %v5037
      %v5270 = vpop.f32.mrf.mxu0
      %v5271 = vadd.f32 0.0, %v5270
      %v5272 = vpop.f32.mrf.mxu0
      %v5273 = vadd.f32 0.0, %v5272
      %5274 = vmatmul.bf16.gmra.mxu0 %v5045
      %v5275 = vpop.f32.mrf.mxu0
      %v5276 = vadd.f32 0.0, %v5275
      %v5277 = vpop.f32.mrf.mxu0
      %v5278 = vadd.f32 0.0, %v5277
      %5279 = vmatmul.bf16.gmra.mxu0 %v5053
      %v5280 = vpop.f32.mrf.mxu0
      %v5281 = vadd.f32 0.0, %v5280
      %v5282 = vpop.f32.mrf.mxu0
      %v5283 = vadd.f32 0.0, %v5282
      %5284 = vmatmul.bf16.gmra.mxu0 %v5061
      %v5285 = vpop.f32.mrf.mxu0
      %v5286 = vadd.f32 0.0, %v5285
      %v5287 = vpop.f32.mrf.mxu0
      %v5288 = vadd.f32 0.0, %v5287
      %5289 = vmatmul.bf16.gmra.mxu0 %v5069
      %v5290 = vpop.f32.mrf.mxu0
      %v5291 = vadd.f32 0.0, %v5290
      %v5292 = vpop.f32.mrf.mxu0
      %v5293 = vadd.f32 0.0, %v5292
      %5294 = vmatmul.bf16.gmra.mxu0 %v5077
      %v5295 = vpop.f32.mrf.mxu0
      %v5296 = vadd.f32 0.0, %v5295
      %v5297 = vpop.f32.mrf.mxu0
      %v5298 = vadd.f32 0.0, %v5297
      %5299 = vmatmul.bf16.gmra.mxu0 %v5085
      %v5300 = vpop.f32.mrf.mxu0
      %v5301 = vadd.f32 0.0, %v5300
      %v5302 = vpop.f32.mrf.mxu0
      %v5303 = vadd.f32 0.0, %v5302
      %5304 = vmatmul.bf16.gmra.mxu0 %v5093
      %v5305 = vpop.f32.mrf.mxu0
      %v5306 = vadd.f32 0.0, %v5305
      %v5307 = vpop.f32.mrf.mxu0
      %v5308 = vadd.f32 0.0, %v5307
      %5309 = vmatmul.bf16.gmra.mxu0 %v5101
      %v5310 = vpop.f32.mrf.mxu0
      %v5311 = vadd.f32 0.0, %v5310
      %v5312 = vpop.f32.mrf.mxu0
      %v5313 = vadd.f32 0.0, %v5312
      %5314 = vmatmul.bf16.gmra.mxu0 %v5109
      %v5315 = vpop.f32.mrf.mxu0
      %v5316 = vadd.f32 0.0, %v5315
      %v5317 = vpop.f32.mrf.mxu0
      %v5318 = vadd.f32 0.0, %v5317
      %5319 = vmatmul.bf16.gmra.mxu0 %v5117
      %v5320 = vpop.f32.mrf.mxu0
      %v5321 = vadd.f32 0.0, %v5320
      %v5322 = vpop.f32.mrf.mxu0
      %v5323 = vadd.f32 0.0, %v5322
      %5324 = vmatmul.bf16.gmra.mxu0 %v5125
      %v5325 = vpop.f32.mrf.mxu0
      %v5326 = vadd.f32 0.0, %v5325
      %v5327 = vpop.f32.mrf.mxu0
      %v5328 = vadd.f32 0.0, %v5327
      %5329 = vmatmul.bf16.gmra.mxu0 %v5133
      %v5330 = vpop.f32.mrf.mxu0
      %v5331 = vadd.f32 0.0, %v5330
      %v5332 = vpop.f32.mrf.mxu0
      %v5333 = vadd.f32 0.0, %v5332
      %5334 = vdwg.mxu0
      %v5335 = vadd.f32 %v4701, %v5216
      %v5336 = vadd.f32 %v4702, %v5218
      %v5337 = vadd.f32 %v4703, %v5221
      %v5338 = vadd.f32 %v4704, %v5223
      %v5339 = vadd.f32 %v4705, %v5226
      %v5340 = vadd.f32 %v4706, %v5228
      %v5341 = vadd.f32 %v4707, %v5231
      %v5342 = vadd.f32 %v4708, %v5233
      %v5343 = vadd.f32 %v4709, %v5236
      %v5344 = vadd.f32 %v4710, %v5238
      %v5345 = vadd.f32 %v4711, %v5241
      %v5346 = vadd.f32 %v4712, %v5243
      %v5347 = vadd.f32 %v4713, %v5246
      %v5348 = vadd.f32 %v4714, %v5248
      %v5349 = vadd.f32 %v4715, %v5251
      %v5350 = vadd.f32 %v4716, %v5253
      %v5351 = vadd.f32 %v4717, %v5256
      %v5352 = vadd.f32 %v4718, %v5258
      %v5353 = vadd.f32 %v4719, %v5261
      %v5354 = vadd.f32 %v4720, %v5263
      %v5355 = vadd.f32 %v4721, %v5266
      %v5356 = vadd.f32 %v4722, %v5268
      %v5357 = vadd.f32 %v4723, %v5271
      %v5358 = vadd.f32 %v4724, %v5273
      %v5359 = vadd.f32 %v4725, %v5276
      %v5360 = vadd.f32 %v4726, %v5278
      %v5361 = vadd.f32 %v4727, %v5281
      %v5362 = vadd.f32 %v4728, %v5283
      %v5363 = vadd.f32 %v4729, %v5286
      %v5364 = vadd.f32 %v4730, %v5288
      %v5365 = vadd.f32 %v4731, %v5291
      %v5366 = vadd.f32 %v4732, %v5293
      %v5367 = vadd.f32 %v4733, %v5296
      %v5368 = vadd.f32 %v4734, %v5298
      %v5369 = vadd.f32 %v4735, %v5301
      %v5370 = vadd.f32 %v4736, %v5303
      %v5371 = vadd.f32 %v4737, %v5306
      %v5372 = vadd.f32 %v4738, %v5308
      %v5373 = vadd.f32 %v4739, %v5311
      %v5374 = vadd.f32 %v4740, %v5313
      %v5375 = vadd.f32 %v4741, %v5316
      %v5376 = vadd.f32 %v4742, %v5318
      %v5377 = vadd.f32 %v4743, %v5321
      %v5378 = vadd.f32 %v4744, %v5323
      %v5379 = vadd.f32 %v4745, %v5326
      %v5380 = vadd.f32 %v4746, %v5328
      %v5381 = vadd.f32 %v4747, %v5331
      %v5382 = vadd.f32 %v4748, %v5333
      %v5383 = vld [vmem:[%s3] sm:$0x1]
      %v5385 = vperm.slane %v5383, 0
      %v5387 = vadd.f32 %v5335, %v5385
      %v5388 = vadd.f32 %v5336, %v5385
      %v5389 = vadd.f32 %v5337, %v5385
      %v5390 = vadd.f32 %v5338, %v5385
      %v5391 = vadd.f32 %v5339, %v5385
      %v5392 = vadd.f32 %v5340, %v5385
      %v5393 = vadd.f32 %v5341, %v5385
      %v5394 = vadd.f32 %v5342, %v5385
      %v5395 = vadd.f32 %v5343, %v5385
      %v5396 = vadd.f32 %v5344, %v5385
      %v5397 = vadd.f32 %v5345, %v5385
      %v5398 = vadd.f32 %v5346, %v5385
      %v5399 = vadd.f32 %v5347, %v5385
      %v5400 = vadd.f32 %v5348, %v5385
      %v5401 = vadd.f32 %v5349, %v5385
      %v5402 = vadd.f32 %v5350, %v5385
      %v5403 = vadd.f32 %v5351, %v5385
      %v5404 = vadd.f32 %v5352, %v5385
      %v5405 = vadd.f32 %v5353, %v5385
      %v5406 = vadd.f32 %v5354, %v5385
      %v5407 = vadd.f32 %v5355, %v5385
      %v5408 = vadd.f32 %v5356, %v5385
      %v5409 = vadd.f32 %v5357, %v5385
      %v5410 = vadd.f32 %v5358, %v5385
      %v5411 = vadd.f32 %v5359, %v5385
      %v5412 = vadd.f32 %v5360, %v5385
      %v5413 = vadd.f32 %v5361, %v5385
      %v5414 = vadd.f32 %v5362, %v5385
      %v5415 = vadd.f32 %v5363, %v5385
      %v5416 = vadd.f32 %v5364, %v5385
      %v5417 = vadd.f32 %v5365, %v5385
      %v5418 = vadd.f32 %v5366, %v5385
      %v5419 = vadd.f32 %v5367, %v5385
      %v5420 = vadd.f32 %v5368, %v5385
      %v5421 = vadd.f32 %v5369, %v5385
      %v5422 = vadd.f32 %v5370, %v5385
      %v5423 = vadd.f32 %v5371, %v5385
      %v5424 = vadd.f32 %v5372, %v5385
      %v5425 = vadd.f32 %v5373, %v5385
      %v5426 = vadd.f32 %v5374, %v5385
      %v5427 = vadd.f32 %v5375, %v5385
      %v5428 = vadd.f32 %v5376, %v5385
      %v5429 = vadd.f32 %v5377, %v5385
      %v5430 = vadd.f32 %v5378, %v5385
      %v5431 = vadd.f32 %v5379, %v5385
      %v5432 = vadd.f32 %v5380, %v5385
      %v5433 = vadd.f32 %v5381, %v5385
      %v5434 = vadd.f32 %v5382, %v5385
      %v5435 = vsel %vm561, %v5387, 0.0
      %v5436 = vsel %vm562, %v5388, 0.0
      %v5437 = vsel %vm563, %v5389, 0.0
      %v5438 = vsel %vm561, %v5390, 0.0
      %v5439 = vsel %vm562, %v5391, 0.0
      %v5440 = vsel %vm563, %v5392, 0.0
      %v5441 = vsel %vm561, %v5393, 0.0
      %v5442 = vsel %vm562, %v5394, 0.0
      %v5443 = vsel %vm563, %v5395, 0.0
      %v5444 = vsel %vm561, %v5396, 0.0
      %v5445 = vsel %vm562, %v5397, 0.0
      %v5446 = vsel %vm563, %v5398, 0.0
      %v5447 = vsel %vm561, %v5399, 0.0
      %v5448 = vsel %vm562, %v5400, 0.0
      %v5449 = vsel %vm563, %v5401, 0.0
      %v5450 = vsel %vm561, %v5402, 0.0
      %v5451 = vsel %vm562, %v5403, 0.0
      %v5452 = vsel %vm563, %v5404, 0.0
      %v5453 = vsel %vm561, %v5405, 0.0
      %v5454 = vsel %vm562, %v5406, 0.0
      %v5455 = vsel %vm563, %v5407, 0.0
      %v5456 = vsel %vm561, %v5408, 0.0
      %v5457 = vsel %vm562, %v5409, 0.0
      %v5458 = vsel %vm563, %v5410, 0.0
      %v5459 = vsel %vm561, %v5411, 0.0
      %v5460 = vsel %vm562, %v5412, 0.0
      %v5461 = vsel %vm563, %v5413, 0.0
      %v5462 = vsel %vm561, %v5414, 0.0
      %v5463 = vsel %vm562, %v5415, 0.0
      %v5464 = vsel %vm563, %v5416, 0.0
      %v5465 = vsel %vm561, %v5417, 0.0
      %v5466 = vsel %vm562, %v5418, 0.0
      %v5467 = vsel %vm563, %v5419, 0.0
      %v5468 = vsel %vm561, %v5420, 0.0
      %v5469 = vsel %vm562, %v5421, 0.0
      %v5470 = vsel %vm563, %v5422, 0.0
      %v5471 = vsel %vm561, %v5423, 0.0
      %v5472 = vsel %vm562, %v5424, 0.0
      %v5473 = vsel %vm563, %v5425, 0.0
      %v5474 = vsel %vm561, %v5426, 0.0
      %v5475 = vsel %vm562, %v5427, 0.0
      %v5476 = vsel %vm563, %v5428, 0.0
      %v5477 = vsel %vm561, %v5429, 0.0
      %v5478 = vsel %vm562, %v5430, 0.0
      %v5479 = vsel %vm563, %v5431, 0.0
      %v5480 = vsel %vm561, %v5432, 0.0
      %v5481 = vsel %vm562, %v5433, 0.0
      %v5482 = vsel %vm563, %v5434, 0.0
      %v5483 = vadd.f32 %v5435, %v5438
      %v5484 = vadd.f32 %v5483, %v5441
      %v5485 = vadd.f32 %v5484, %v5444
      %v5486 = vadd.f32 %v5485, %v5447
      %v5487 = vadd.f32 %v5486, %v5450
      %v5488 = vadd.f32 %v5487, %v5453
      %v5489 = vadd.f32 %v5488, %v5456
      %v5490 = vadd.f32 %v5489, %v5459
      %v5491 = vadd.f32 %v5490, %v5462
      %v5492 = vadd.f32 %v5491, %v5465
      %v5493 = vadd.f32 %v5492, %v5468
      %v5494 = vadd.f32 %v5493, %v5471
      %v5495 = vadd.f32 %v5494, %v5474
      %v5496 = vadd.f32 %v5495, %v5477
      %v5497 = vadd.f32 %v5496, %v5480
      %v5498 = vadd.f32 %v5436, %v5439
      %v5499 = vadd.f32 %v5498, %v5442
      %v5500 = vadd.f32 %v5499, %v5445
      %v5501 = vadd.f32 %v5500, %v5448
      %v5502 = vadd.f32 %v5501, %v5451
      %v5503 = vadd.f32 %v5502, %v5454
      %v5504 = vadd.f32 %v5503, %v5457
      %v5505 = vadd.f32 %v5504, %v5460
      %v5506 = vadd.f32 %v5505, %v5463
      %v5507 = vadd.f32 %v5506, %v5466
      %v5508 = vadd.f32 %v5507, %v5469
      %v5509 = vadd.f32 %v5508, %v5472
      %v5510 = vadd.f32 %v5509, %v5475
      %v5511 = vadd.f32 %v5510, %v5478
      %v5512 = vadd.f32 %v5511, %v5481
      %v5513 = vadd.f32 %v5437, %v5440
      %v5514 = vadd.f32 %v5513, %v5443
      %v5515 = vadd.f32 %v5514, %v5446
      %v5516 = vadd.f32 %v5515, %v5449
      %v5517 = vadd.f32 %v5516, %v5452
      %v5518 = vadd.f32 %v5517, %v5455
      %v5519 = vadd.f32 %v5518, %v5458
      %v5520 = vadd.f32 %v5519, %v5461
      %v5521 = vadd.f32 %v5520, %v5464
      %v5522 = vadd.f32 %v5521, %v5467
      %v5523 = vadd.f32 %v5522, %v5470
      %v5524 = vadd.f32 %v5523, %v5473
      %v5525 = vadd.f32 %v5524, %v5476
      %v5526 = vadd.f32 %v5525, %v5479
      %v5527 = vadd.f32 %v5526, %v5482
      %v5528 = vadd.f32 %v5497, %v5512
      %v5529 = vadd.f32 %v5528, %v5527
      %v5530 = vrot.slane %v5529, 4
      %v5531 = vadd.f32 %v5529, %v5530
      %v5532 = vrot.slane %v5531, 2
      %v5533 = vadd.f32 %v5531, %v5532
      %v5534 = vrot.slane %v5533, 1
      %v5535 = vadd.f32 %v5533, %v5534
      %5536 = vst [vmem:[%s292] sm:$0x1] %v5535
      %v5537 = vmul.f32 %v5435, %v5435
      %v5538 = vmul.f32 %v5436, %v5436
      %v5539 = vmul.f32 %v5437, %v5437
      %v5540 = vmul.f32 %v5438, %v5438
      %v5541 = vmul.f32 %v5439, %v5439
      %v5542 = vmul.f32 %v5440, %v5440
      %v5543 = vmul.f32 %v5441, %v5441
      %v5544 = vmul.f32 %v5442, %v5442
      %v5545 = vmul.f32 %v5443, %v5443
      %v5546 = vmul.f32 %v5444, %v5444
      %v5547 = vmul.f32 %v5445, %v5445
      %v5548 = vmul.f32 %v5446, %v5446
      %v5549 = vmul.f32 %v5447, %v5447
      %v5550 = vmul.f32 %v5448, %v5448
      %v5551 = vmul.f32 %v5449, %v5449
      %v5552 = vmul.f32 %v5450, %v5450
      %v5553 = vmul.f32 %v5451, %v5451
      %v5554 = vmul.f32 %v5452, %v5452
      %v5555 = vmul.f32 %v5453, %v5453
      %v5556 = vmul.f32 %v5454, %v5454
      %v5557 = vmul.f32 %v5455, %v5455
      %v5558 = vmul.f32 %v5456, %v5456
      %v5559 = vmul.f32 %v5457, %v5457
      %v5560 = vmul.f32 %v5458, %v5458
      %v5561 = vmul.f32 %v5459, %v5459
      %v5562 = vmul.f32 %v5460, %v5460
      %v5563 = vmul.f32 %v5461, %v5461
      %v5564 = vmul.f32 %v5462, %v5462
      %v5565 = vmul.f32 %v5463, %v5463
      %v5566 = vmul.f32 %v5464, %v5464
      %v5567 = vmul.f32 %v5465, %v5465
      %v5568 = vmul.f32 %v5466, %v5466
      %v5569 = vmul.f32 %v5467, %v5467
      %v5570 = vmul.f32 %v5468, %v5468
      %v5571 = vmul.f32 %v5469, %v5469
      %v5572 = vmul.f32 %v5470, %v5470
      %v5573 = vmul.f32 %v5471, %v5471
      %v5574 = vmul.f32 %v5472, %v5472
      %v5575 = vmul.f32 %v5473, %v5473
      %v5576 = vmul.f32 %v5474, %v5474
      %v5577 = vmul.f32 %v5475, %v5475
      %v5578 = vmul.f32 %v5476, %v5476
      %v5579 = vmul.f32 %v5477, %v5477
      %v5580 = vmul.f32 %v5478, %v5478
      %v5581 = vmul.f32 %v5479, %v5479
      %v5582 = vmul.f32 %v5480, %v5480
      %v5583 = vmul.f32 %v5481, %v5481
      %v5584 = vmul.f32 %v5482, %v5482
      %v5585 = vadd.f32 %v5537, %v5540
      %v5586 = vadd.f32 %v5585, %v5543
      %v5587 = vadd.f32 %v5586, %v5546
      %v5588 = vadd.f32 %v5587, %v5549
      %v5589 = vadd.f32 %v5588, %v5552
      %v5590 = vadd.f32 %v5589, %v5555
      %v5591 = vadd.f32 %v5590, %v5558
      %v5592 = vadd.f32 %v5591, %v5561
      %v5593 = vadd.f32 %v5592, %v5564
      %v5594 = vadd.f32 %v5593, %v5567
      %v5595 = vadd.f32 %v5594, %v5570
      %v5596 = vadd.f32 %v5595, %v5573
      %v5597 = vadd.f32 %v5596, %v5576
      %v5598 = vadd.f32 %v5597, %v5579
      %v5599 = vadd.f32 %v5598, %v5582
      %v5600 = vadd.f32 %v5538, %v5541
      %v5601 = vadd.f32 %v5600, %v5544
      %v5602 = vadd.f32 %v5601, %v5547
      %v5603 = vadd.f32 %v5602, %v5550
      %v5604 = vadd.f32 %v5603, %v5553
      %v5605 = vadd.f32 %v5604, %v5556
      %v5606 = vadd.f32 %v5605, %v5559
      %v5607 = vadd.f32 %v5606, %v5562
      %v5608 = vadd.f32 %v5607, %v5565
      %v5609 = vadd.f32 %v5608, %v5568
      %v5610 = vadd.f32 %v5609, %v5571
      %v5611 = vadd.f32 %v5610, %v5574
      %v5612 = vadd.f32 %v5611, %v5577
      %v5613 = vadd.f32 %v5612, %v5580
      %v5614 = vadd.f32 %v5613, %v5583
      %v5615 = vadd.f32 %v5539, %v5542
      %v5616 = vadd.f32 %v5615, %v5545
      %v5617 = vadd.f32 %v5616, %v5548
      %v5618 = vadd.f32 %v5617, %v5551
      %v5619 = vadd.f32 %v5618, %v5554
      %v5620 = vadd.f32 %v5619, %v5557
      %v5621 = vadd.f32 %v5620, %v5560
      %v5622 = vadd.f32 %v5621, %v5563
      %v5623 = vadd.f32 %v5622, %v5566
      %v5624 = vadd.f32 %v5623, %v5569
      %v5625 = vadd.f32 %v5624, %v5572
      %v5626 = vadd.f32 %v5625, %v5575
      %v5627 = vadd.f32 %v5626, %v5578
      %v5628 = vadd.f32 %v5627, %v5581
      %v5629 = vadd.f32 %v5628, %v5584
      %v5630 = vadd.f32 %v5599, %v5614
      %v5631 = vadd.f32 %v5630, %v5629
      %v5632 = vrot.slane %v5631, 4
      %v5633 = vadd.f32 %v5631, %v5632
      %v5634 = vrot.slane %v5633, 2
      %v5635 = vadd.f32 %v5633, %v5634
      %v5636 = vrot.slane %v5635, 1
      %v5637 = vadd.f32 %v5635, %v5636
      %5638 = vst [vmem:[%s295] sm:$0x1] %v5637
      %5639 = vst [vmem:[%s289] sm:$0xf] 0
      %5640 = vst [vmem:[%s289 + $0x4] sm:$0xf] 0
      %5641 = vst [vmem:[%s289 + $0x8] sm:$0xf] 0
      %5642 = vst [vmem:[%s289 + $0xc] sm:$0xf] 0
      %5643 = vst [vmem:[%s289 + $0x10] sm:$0xf] 0
      %5644 = vst [vmem:[%s289 + $0x14] sm:$0xf] 0
      %v5645 = vpack.c.bf16 %v5435, %v5435
      %v5646 = vpack.c.bf16 %v5436, %v5436
      %v5647 = vpack.c.bf16 %v5437, %v5437
      %v5648 = vpack.c.bf16 %v5438, %v5438
      %v5649 = vpack.c.bf16 %v5439, %v5439
      %v5650 = vpack.c.bf16 %v5440, %v5440
      %v5651 = vpack.c.bf16 %v5441, %v5441
      %v5652 = vpack.c.bf16 %v5442, %v5442
      %v5653 = vpack.c.bf16 %v5443, %v5443
      %v5654 = vpack.c.bf16 %v5444, %v5444
      %v5655 = vpack.c.bf16 %v5445, %v5445
      %v5656 = vpack.c.bf16 %v5446, %v5446
      %v5657 = vpack.c.bf16 %v5447, %v5447
      %v5658 = vpack.c.bf16 %v5448, %v5448
      %v5659 = vpack.c.bf16 %v5449, %v5449
      %v5660 = vpack.c.bf16 %v5450, %v5450
      %v5661 = vpack.c.bf16 %v5451, %v5451
      %v5662 = vpack.c.bf16 %v5452, %v5452
      %v5663 = vpack.c.bf16 %v5453, %v5453
      %v5664 = vpack.c.bf16 %v5454, %v5454
      %v5665 = vpack.c.bf16 %v5455, %v5455
      %v5666 = vpack.c.bf16 %v5456, %v5456
      %v5667 = vpack.c.bf16 %v5457, %v5457
      %v5668 = vpack.c.bf16 %v5458, %v5458
      %v5669 = vpack.c.bf16 %v5459, %v5459
      %v5670 = vpack.c.bf16 %v5460, %v5460
      %v5671 = vpack.c.bf16 %v5461, %v5461
      %v5672 = vpack.c.bf16 %v5462, %v5462
      %v5673 = vpack.c.bf16 %v5463, %v5463
      %v5674 = vpack.c.bf16 %v5464, %v5464
      %v5675 = vpack.c.bf16 %v5465, %v5465
      %v5676 = vpack.c.bf16 %v5466, %v5466
      %v5677 = vpack.c.bf16 %v5467, %v5467
      %v5678 = vpack.c.bf16 %v5468, %v5468
      %v5679 = vpack.c.bf16 %v5469, %v5469
      %v5680 = vpack.c.bf16 %v5470, %v5470
      %v5681 = vpack.c.bf16 %v5471, %v5471
      %v5682 = vpack.c.bf16 %v5472, %v5472
      %v5683 = vpack.c.bf16 %v5473, %v5473
      %v5684 = vpack.c.bf16 %v5474, %v5474
      %v5685 = vpack.c.bf16 %v5475, %v5475
      %v5686 = vpack.c.bf16 %v5476, %v5476
      %v5687 = vpack.c.bf16 %v5477, %v5477
      %v5688 = vpack.c.bf16 %v5478, %v5478
      %v5689 = vpack.c.bf16 %v5479, %v5479
      %v5690 = vpack.c.bf16 %v5480, %v5480
      %v5691 = vpack.c.bf16 %v5481, %v5481
      %v5692 = vpack.c.bf16 %v5482, %v5482
      %5693 = vst [vmem:[%s289 + $0x18] sm:$0xf] %v5645
      %5694 = vst [vmem:[%s289 + $0x1c] sm:$0xf] %v5646
      %5695 = vst [vmem:[%s289 + $0x20] sm:$0xf] %v5647
      %5696 = vst [vmem:[%s289 + $0x24] sm:$0xf] %v5648
      %5697 = vst [vmem:[%s289 + $0x28] sm:$0xf] %v5649
      %5698 = vst [vmem:[%s289 + $0x2c] sm:$0xf] %v5650
      %5699 = vst [vmem:[%s289 + $0x30] sm:$0xf] %v5651
      %5700 = vst [vmem:[%s289 + $0x34] sm:$0xf] %v5652
      %5701 = vst [vmem:[%s289 + $0x38] sm:$0xf] %v5653
      %5702 = vst [vmem:[%s289 + $0x3c] sm:$0xf] %v5654
      %5703 = vst [vmem:[%s289 + $0x40] sm:$0xf] %v5655
      %5704 = vst [vmem:[%s289 + $0x44] sm:$0xf] %v5656
      %5705 = vst [vmem:[%s289 + $0x48] sm:$0xf] %v5657
      %5706 = vst [vmem:[%s289 + $0x4c] sm:$0xf] %v5658
      %5707 = vst [vmem:[%s289 + $0x50] sm:$0xf] %v5659
      %5708 = vst [vmem:[%s289 + $0x54] sm:$0xf] %v5660
      %5709 = vst [vmem:[%s289 + $0x58] sm:$0xf] %v5661
      %5710 = vst [vmem:[%s289 + $0x5c] sm:$0xf] %v5662
      %5711 = vst [vmem:[%s289 + $0x60] sm:$0xf] %v5663
      %5712 = vst [vmem:[%s289 + $0x64] sm:$0xf] %v5664
      %5713 = vst [vmem:[%s289 + $0x68] sm:$0xf] %v5665
      %5714 = vst [vmem:[%s289 + $0x6c] sm:$0xf] %v5666
      %5715 = vst [vmem:[%s289 + $0x70] sm:$0xf] %v5667
      %5716 = vst [vmem:[%s289 + $0x74] sm:$0xf] %v5668
      %5717 = vst [vmem:[%s289 + $0x78] sm:$0xf] %v5669
      %5718 = vst [vmem:[%s289 + $0x7c] sm:$0xf] %v5670
      %5719 = vst [vmem:[%s289 + $0x80] sm:$0xf] %v5671
      %5720 = vst [vmem:[%s289 + $0x84] sm:$0xf] %v5672
      %5721 = vst [vmem:[%s289 + $0x88] sm:$0xf] %v5673
      %5722 = vst [vmem:[%s289 + $0x8c] sm:$0xf] %v5674
      %5723 = vst [vmem:[%s289 + $0x90] sm:$0xf] %v5675
      %5724 = vst [vmem:[%s289 + $0x94] sm:$0xf] %v5676
      %5725 = vst [vmem:[%s289 + $0x98] sm:$0xf] %v5677
      %5726 = vst [vmem:[%s289 + $0x9c] sm:$0xf] %v5678
      %5727 = vst [vmem:[%s289 + $0xa0] sm:$0xf] %v5679
      %5728 = vst [vmem:[%s289 + $0xa4] sm:$0xf] %v5680
      %5729 = vst [vmem:[%s289 + $0xa8] sm:$0xf] %v5681
      %5730 = vst [vmem:[%s289 + $0xac] sm:$0xf] %v5682
      %5731 = vst [vmem:[%s289 + $0xb0] sm:$0xf] %v5683
      %5732 = vst [vmem:[%s289 + $0xb4] sm:$0xf] %v5684
      %5733 = vst [vmem:[%s289 + $0xb8] sm:$0xf] %v5685
      %5734 = vst [vmem:[%s289 + $0xbc] sm:$0xf] %v5686
      %5735 = vst [vmem:[%s289 + $0xc0] sm:$0xf] %v5687
      %5736 = vst [vmem:[%s289 + $0xc4] sm:$0xf] %v5688
      %5737 = vst [vmem:[%s289 + $0xc8] sm:$0xf] %v5689
      %5738 = vst [vmem:[%s289 + $0xcc] sm:$0xf] %v5690
      %5739 = vst [vmem:[%s289 + $0xd0] sm:$0xf] %v5691
      %5740 = vst [vmem:[%s289 + $0xd4] sm:$0xf] %v5692
      %5741 = vst [vmem:[%s289 + $0xd8] sm:$0xf] 0
      %5742 = vst [vmem:[%s289 + $0xdc] sm:$0xf] 0
      %5743 = vst [vmem:[%s289 + $0xe0] sm:$0xf] 0
      %5744 = vst [vmem:[%s289 + $0xe4] sm:$0xf] 0
      %5745 = vst [vmem:[%s289 + $0xe8] sm:$0xf] 0
      %5746 = vst [vmem:[%s289 + $0xec] sm:$0xf] 0
      %p5747 = scmp.lt.s32.totalorder %s19, 1
      %s5748 = scalar_select %p5747, %s19, 1
      %s5749 = smul.addr %s5748, 60
      %s5750 = smul.addr %s5749, 4
      %s5751 = scalar_lea.vmem %s5, %s5750
      %p5752 = scmp.lt.s32.totalorder %s19, 1
      %s5753 = scalar_select %p5752, %s19, 1
      %s5754 = scalar_lea.vmem %s6, %s5753
      %p5755 = scmp.lt.s32.totalorder %s19, 1
      %s5756 = scalar_select %p5755, %s19, 1
      %s5757 = scalar_lea.vmem %s7, %s5756
      // Predicated region
      $region41: #{conv_block2.4} parent=39 // pred_check
        %p5758 = pneg %p147
      $region42: #{conv_block2.4} parent=39 // pred_check_branch
        %5760 = sbr.rel (%p5758) target = $region44
      $region43: #{conv_block2.4} parent=39 // pred_region
        _
      $region44: #{conv_block2.4} parent=39 // pred_fallthru
        _
      // Predicated region
      $region45: #{conv_block2.4} parent=39 // pred_check
        %p5761 = pneg %p173
      $region46: #{conv_block2.4} parent=39 // pred_check_branch
        %5763 = sbr.rel (%p5761) target = $region48
      $region47: #{conv_block2.4} parent=39 // pred_region
        _
      $region48: #{conv_block2.4} parent=39 // pred_fallthru
        _
      // Predicated region
      $region49: #{conv_block2.4} parent=39 // pred_check
        %p5764 = pneg %p199
      $region50: #{conv_block2.4} parent=39 // pred_check_branch
        %5766 = sbr.rel (%p5764) target = $region52
      $region51: #{conv_block2.4} parent=39 // pred_region
        _
      $region52: #{conv_block2.4} parent=39 // pred_fallthru
        _
    $region40: #{conv_block2.4} parent=5 // pred_fallthru
      _
    %p5767 = scmp.le.s32.totalorder 2, %s14
    // Predicated region
    $region53: #{conv_block2.4} parent=5 // pred_check
      %p5768 = pneg %p5767
    $region54: #{conv_block2.4} parent=5 // pred_check_branch
      %5770 = sbr.rel (%p5768) target = $region56
    $region55: #{conv_block2.4} parent=5 // pred_region
      %s5771 = ssub.s32 %s14, 2
      // Predicated region
      $region57: #{conv_block2.4} parent=55 // pred_check
        %p5772 = pneg %p153
      $region58: #{conv_block2.4} parent=55 // pred_check_branch
        %5774 = sbr.rel (%p5772) target = $region60
      $region59: #{conv_block2.4} parent=55 // pred_region
        %p5775 = scmp.lt.s32.totalorder %s20, 1
        %s5776 = scalar_select %p5775, %s20, 1
        %s5777 = smul.addr %s5776, 60
        %s5778 = smul.addr %s5777, 4
        %s5779 = scalar_lea.vmem %s5, %s5778
      $region60: #{conv_block2.4} parent=55 // pred_fallthru
        _
      // Predicated region
      $region61: #{conv_block2.4} parent=55 // pred_check
        %p5780 = pneg %p179
      $region62: #{conv_block2.4} parent=55 // pred_check_branch
        %5782 = sbr.rel (%p5780) target = $region64
      $region63: #{conv_block2.4} parent=55 // pred_region
        %p5783 = scmp.lt.s32.totalorder %s20, 1
        %s5784 = scalar_select %p5783, %s20, 1
        %s5785 = scalar_lea.vmem %s6, %s5784
      $region64: #{conv_block2.4} parent=55 // pred_fallthru
        _
      // Predicated region
      $region65: #{conv_block2.4} parent=55 // pred_check
        %p5786 = pneg %p205
      $region66: #{conv_block2.4} parent=55 // pred_check_branch
        %5788 = sbr.rel (%p5786) target = $region68
      $region67: #{conv_block2.4} parent=55 // pred_region
        %p5789 = scmp.lt.s32.totalorder %s20, 1
        %s5790 = scalar_select %p5789, %s20, 1
        %s5791 = scalar_lea.vmem %s7, %s5790
      $region68: #{conv_block2.4} parent=55 // pred_fallthru
        _
    $region56: #{conv_block2.4} parent=5 // pred_fallthru
      _
  $region6: #{conv_block2.4} parent=0 // loop_footer
    %s18 = sadd.s32 1, %s14
  $region7: #{conv_block2.4} parent=0 // loop_footer_branch
    %13 = sbr.rel target = $region3
  $region8: #{conv_block2.4} parent=0 // loop_exit
    _

</llo_original>
